<compile_context>
chip_gen: v7x
topology: tpu7x:2x2x1
jax: 0.10.0
libtpu: 0.0.40
codegen_flags: <defaults>
</compile_context>

<pallas_src>
import functools

import jax
import jax.numpy as jnp
from jax.experimental import pallas as pl
from jax.experimental.pallas import tpu as pltpu


def _round_up(x, m):
    return (x + m - 1) // m * m


# --------------------------------------------------------------------------
# Pallas kernels
# --------------------------------------------------------------------------

def _mm_bias_act_kernel(x_ref, w_ref, b_ref, o_ref, *, apply_relu):
    """out = relu(x @ w + b); x,w are bf16 tiles, accumulate in f32."""
    acc = jnp.dot(x_ref[...], w_ref[...], preferred_element_type=jnp.float32)
    out = acc + b_ref[...]                      # (tm, N) + (1, N) broadcast
    if apply_relu:
        out = jnp.maximum(out, 0.0)
    o_ref[...] = out.astype(o_ref.dtype)


def _maxpool_3x3_s2_kernel(x_ref, o_ref):
    """3x3 / stride-2 max-pool for one image.

    x_ref: (Ho+1, 2, Wo+1, 2*C)  -- padded input, H split into
           (row-pair, parity), W-parity folded into the channel (lane) axis.
    o_ref: (1, Ho, Wo, C)
    """
    _, Ho, Wo, C = o_ref.shape
    x = x_ref[...]
    # vertical max over input rows {2ho, 2ho+1, 2ho+2}
    a0 = x[:Ho, 0]
    a1 = x[:Ho, 1]
    a2 = x[1:Ho + 1, 0]
    v = jnp.maximum(jnp.maximum(a0, a1), a2)    # (Ho, Wo+1, 2C)
    # horizontal max over input cols {2wo, 2wo+1, 2wo+2}
    b0 = v[:, :Wo, :C]
    b1 = v[:, :Wo, C:]
    b2 = v[:, 1:Wo + 1, :C]
    o_ref[0] = jnp.maximum(jnp.maximum(b0, b1), b2)


def _global_avgpool_kernel(x_ref, o_ref):
    """x_ref: (1, H*W, C) -> o_ref: (1, 1, C) mean over spatial, f32."""
    x = x_ref[0].astype(jnp.float32)            # (HW, C)
    inv = 1.0 / x.shape[0]
    o_ref[0] = (jnp.sum(x, axis=0, keepdims=True) * inv).astype(o_ref.dtype)


# --------------------------------------------------------------------------
# Pallas wrappers
# --------------------------------------------------------------------------

def matmul_bias_act(x, w, b, *, apply_relu=True, out_dtype=jnp.bfloat16):
    """relu(x @ w + b): x (M,K) bf16, w (K,N) bf16, b (1,N) f32 -> (M,N)."""
    M, K = x.shape
    Kw, N = w.shape
    assert K == Kw and b.shape == (1, N)

    # Full-K, full-N block, 1-D grid over M only. SqueezeNet K <= 576 and
    # N <= 512, so weight + one M tile always fits VMEM comfortably.
    if M >= 4096:
        tm = 512
    elif M >= 1024:
        tm = 256
    else:
        tm = _round_up(max(M, 8), 8)
    Mp = _round_up(M, tm)
    xp = jnp.pad(x, ((0, Mp - M), (0, 0))) if Mp != M else x

    kernel = functools.partial(_mm_bias_act_kernel, apply_relu=apply_relu)
    out = pl.pallas_call(
        kernel,
        out_shape=jax.ShapeDtypeStruct((Mp, N), out_dtype),
        grid_spec=pltpu.PrefetchScalarGridSpec(
            num_scalar_prefetch=0,
            grid=(Mp // tm,),
            in_specs=[
                pl.BlockSpec((tm, K), lambda i: (i, 0)),
                pl.BlockSpec((K, N), lambda i: (0, 0)),   # resident weight
                pl.BlockSpec((1, N), lambda i: (0, 0)),   # resident bias
            ],
            out_specs=pl.BlockSpec((tm, N), lambda i: (i, 0)),
        ),
        compiler_params=pltpu.CompilerParams(
            dimension_semantics=("parallel",),
            vmem_limit_bytes=32 * 1024 * 1024),
    )(xp, w, b)
    return out[:M] if Mp != M else out


def _im2col(x, kh, kw, stride, pad):
    """x: (N,H,W,C) -> (N*Ho*Wo, kh*kw*C), column order (kh, kw, C)."""
    # TODO(synk): keep im2col in XLA; an in-kernel halo-DMA version would cut
    # the 9x read amplification of the 3x3 expand path further.
    N, H, W, C = x.shape
    if pad:
        x = jnp.pad(x, ((0, 0), (pad, pad), (pad, pad), (0, 0)))
    Ho = (H + 2 * pad - kh) // stride + 1
    Wo = (W + 2 * pad - kw) // stride + 1
    patches = [
        x[:, i:i + (Ho - 1) * stride + 1:stride,
             j:j + (Wo - 1) * stride + 1:stride, :]
        for i in range(kh) for j in range(kw)
    ]
    cols = jnp.stack(patches, axis=3).reshape(N * Ho * Wo, kh * kw * C)
    return cols, Ho, Wo


def maxpool_3x3_s2_ceil(x):
    """MaxPool2d(kernel=3, stride=2, ceil_mode=True) on NHWC bf16 input."""
    N, H, W, C = x.shape
    Ho = -(-(H - 3) // 2) + 1
    Wo = -(-(W - 3) // 2) + 1
    Hp, Wp = 2 * Ho + 2, 2 * Wo + 2
    xp = jnp.pad(x, ((0, 0), (0, Hp - H), (0, Wp - W), (0, 0)),
                 constant_values=-jnp.inf)
    # (N, 2*(Ho+1), 2*(Wo+1), C) -> (N*(Ho+1), 2, Wo+1, 2*C): row-pair parity
    # becomes a leading dim, column parity folds into the lane axis -> all
    # stride-2 selections in the kernel are cheap slices.
    xr = xp.reshape(N * (Ho + 1), 2, Wo + 1, 2 * C)

    return pl.pallas_call(
        _maxpool_3x3_s2_kernel,
        out_shape=jax.ShapeDtypeStruct((N, Ho, Wo, C), x.dtype),
        grid_spec=pltpu.PrefetchScalarGridSpec(
            num_scalar_prefetch=0,
            grid=(N,),
            in_specs=[pl.BlockSpec((Ho + 1, 2, Wo + 1, 2 * C),
                                   lambda n: (n, 0, 0, 0))],
            out_specs=pl.BlockSpec((1, Ho, Wo, C), lambda n: (n, 0, 0, 0)),
        ),
        compiler_params=pltpu.CompilerParams(
            dimension_semantics=("parallel",)),
    )(xr)


def global_avgpool(x):
    """AdaptiveAvgPool2d((1,1)) + flatten on NHWC input -> (N, C) f32."""
    N, H, W, C = x.shape
    xr = x.reshape(N, H * W, C)
    out = pl.pallas_call(
        _global_avgpool_kernel,
        out_shape=jax.ShapeDtypeStruct((N, 1, C), jnp.float32),
        grid_spec=pltpu.PrefetchScalarGridSpec(
            num_scalar_prefetch=0,
            grid=(N,),
            in_specs=[pl.BlockSpec((1, H * W, C), lambda n: (n, 0, 0))],
            out_specs=pl.BlockSpec((1, 1, C), lambda n: (n, 0, 0)),
        ),
        compiler_params=pltpu.CompilerParams(
            dimension_semantics=("parallel",)),
    )(xr)
    return out.reshape(N, C)


# --------------------------------------------------------------------------
# Parameters (deterministic synthetic init; shapes = torchvision
# squeezenet1_1 with classifier[1] replaced by Conv2d(512, num_classes, 1)).
# Weights are stored pre-fused / pre-padded in bf16, biases (1, N) f32.
# --------------------------------------------------------------------------

def _conv_init(key, kh, kw, cin, cout):
    kw_key, kb_key = jax.random.split(key)
    std = (2.0 / (kh * kw * cin)) ** 0.5
    w = jax.random.normal(kw_key, (kh, kw, cin, cout), jnp.float32) * std
    b = jax.random.normal(kb_key, (cout,), jnp.float32) * 0.01
    return w, b


def _fire_init(key, cin, sq, e):
    k1, k2, k3 = jax.random.split(key, 3)
    ws, bs = _conv_init(k1, 1, 1, cin, sq)
    w1, b1 = _conv_init(k2, 1, 1, sq, e)
    w3, b3 = _conv_init(k3, 3, 3, sq, e)
    # Fuse expand1x1 (as the center tap) + expand3x3 into one 3x3 weight with
    # 2*e output channels, ordered [expand1x1, expand3x3] to match torch cat.
    wex = jnp.zeros((3, 3, sq, 2 * e), jnp.float32)
    wex = wex.at[:, :, :, e:].set(w3)
    wex = wex.at[1, 1, :, :e].set(w1.reshape(sq, e))
    return {
        "sq_w": ws.reshape(cin, sq).astype(jnp.bfloat16),
        "sq_b": bs.reshape(1, sq),
        "ex_w": wex.reshape(9 * sq, 2 * e).astype(jnp.bfloat16),
        "ex_b": jnp.concatenate([b1, b3]).reshape(1, 2 * e),
    }


def init_params(key, num_classes=10):
    assert num_classes <= 128
    keys = jax.random.split(key, 10)
    p = {}
    w, b = _conv_init(keys[0], 3, 3, 3, 64)
    p["conv1_w"] = w.reshape(27, 64).astype(jnp.bfloat16)
    p["conv1_b"] = b.reshape(1, 64)

    cfg = [(64, 16, 64), (128, 16, 64), (128, 32, 128), (256, 32, 128),
           (256, 48, 192), (384, 48, 192), (384, 64, 256), (512, 64, 256)]
    for idx, (cin, sq, e) in enumerate(cfg, start=2):
        p[f"fire{idx}"] = _fire_init(keys[idx - 1], cin, sq, e)

    # Classifier 1x1 conv, output channels zero-padded to 128 for lane-dense
    # stores; sliced back to num_classes in the wrapper.
    wc, bc = _conv_init(keys[9], 1, 1, 512, num_classes)
    wc = wc.reshape(512, num_classes)
    cls_w = jnp.zeros((512, 128), jnp.float32).at[:, :num_classes].set(wc)
    cls_b = jnp.zeros((1, 128), jnp.float32).at[0, :num_classes].set(bc)
    p["cls_w"] = cls_w.astype(jnp.bfloat16)
    p["cls_b"] = cls_b
    return p


# --------------------------------------------------------------------------
# Forward pass (matches torchvision SqueezeNet 1.1 forward)
# --------------------------------------------------------------------------

def _fire(x, fp):
    N, H, W, C = x.shape
    s = matmul_bias_act(x.reshape(N * H * W, C), fp["sq_w"], fp["sq_b"])
    s = s.reshape(N, H, W, -1)
    cols, Ho, Wo = _im2col(s, 3, 3, 1, 1)
    y = matmul_bias_act(cols, fp["ex_w"], fp["ex_b"])
    return y.reshape(N, Ho, Wo, -1)


def squeezenet_forward(params, x_nchw, *, num_classes=10):
    x = jnp.transpose(x_nchw, (0, 2, 3, 1)).astype(jnp.bfloat16)  # NCHW->NHWC
    N = x.shape[0]

    cols, Ho, Wo = _im2col(x, 3, 3, 2, 0)
    x = matmul_bias_act(cols, params["conv1_w"], params["conv1_b"])
    x = x.reshape(N, Ho, Wo, -1)
    x = maxpool_3x3_s2_ceil(x)
    x = _fire(x, params["fire2"])
    x = _fire(x, params["fire3"])
    x = maxpool_3x3_s2_ceil(x)
    x = _fire(x, params["fire4"])
    x = _fire(x, params["fire5"])
    x = maxpool_3x3_s2_ceil(x)
    x = _fire(x, params["fire6"])
    x = _fire(x, params["fire7"])
    x = _fire(x, params["fire8"])
    x = _fire(x, params["fire9"])

    # classifier: Dropout(0.5) -> Conv2d(512, nc, 1) -> ReLU -> AvgPool(1x1)
    # TODO(synk): Dropout is identity here (inference/eval semantics, no RNG mask).
    Nb, H, W, C = x.shape
    y = matmul_bias_act(x.reshape(Nb * H * W, C), params["cls_w"],
                        params["cls_b"], apply_relu=True,
                        out_dtype=jnp.float32)
    y = y.reshape(Nb, H, W, -1)
    pooled = global_avgpool(y)                  # (N, 128) f32
    return pooled[:, :num_classes]              # (N, num_classes)


# --------------------------------------------------------------------------

if __name__ == "__main__":
    key = jax.random.PRNGKey(0)
    pkey, xkey = jax.random.split(key)

    num_classes = 10
    params = init_params(pkey, num_classes=num_classes)

    # Small NCHW input consistent with the PyTorch module (N, 3, H, W).
    x = jax.random.normal(xkey, (2, 3, 48, 48), jnp.float32)

    fwd = jax.jit(functools.partial(squeezenet_forward,
                                    num_classes=num_classes))
    out = jax.block_until_ready(fwd(params, x))

    assert out.shape == (2, num_classes), out.shape
    assert out.dtype == jnp.float32
    assert bool(jnp.all(jnp.isfinite(out)))
    print("KERNEL_OK")
</pallas_src>

<mosaic_0001>
module attributes {stable_mosaic.version = 11 : i64} {
  func.func @_mm_bias_act_kernel(%arg0: i32, %arg1: memref<256x27xbf16, #tpu.memory_space<vmem>>, %arg2: memref<27x64xbf16, #tpu.memory_space<vmem>>, %arg3: memref<1x64xf32, #tpu.memory_space<vmem>>, %arg4: memref<256x64xbf16, #tpu.memory_space<vmem>>) attributes {dimension_semantics = [#tpu.dimension_semantics<parallel>], iteration_bounds = array<i64: 5>, scalar_prefetch = 0 : i64, scratch_operands = 0 : i64, tpu.core_type = #tpu.core_type<tc>, window_params = [{transform_indices = @transform_0, window_bounds = array<i64: 256, 27>}, {pipeline_mode = #tpu.pipeline_mode<synchronous>, transform_indices = @transform_1, window_bounds = array<i64: 27, 64>}, {pipeline_mode = #tpu.pipeline_mode<synchronous>, transform_indices = @transform_2, window_bounds = array<i64: 1, 64>}, {transform_indices = @transform_3, window_bounds = array<i64: 256, 64>}]} {
    %c0 = arith.constant 0 : index
    %c0_0 = arith.constant 0 : index
    %0 = vector.load %arg1[%c0, %c0_0] : memref<256x27xbf16, #tpu.memory_space<vmem>>, vector<256x27xbf16>
    %c0_1 = arith.constant 0 : index
    %c0_2 = arith.constant 0 : index
    %1 = vector.load %arg2[%c0_1, %c0_2] : memref<27x64xbf16, #tpu.memory_space<vmem>>, vector<27x64xbf16>
    %cst = arith.constant dense<0.000000e+00> : vector<256x64xf32>
    %2 = tpu.matmul %0, %1, %cst {dimension_numbers = #tpu.dot_dimension_numbers<[1], [0], [0], [1], [0, 0, 1, 1], [], []>} : vector<256x27xbf16>, vector<27x64xbf16>, vector<256x64xf32> -> vector<256x64xf32>
    %c0_3 = arith.constant 0 : index
    %c0_4 = arith.constant 0 : index
    %3 = vector.load %arg3[%c0_3, %c0_4] : memref<1x64xf32, #tpu.memory_space<vmem>>, vector<1x64xf32>
    %4 = vector.broadcast %3 : vector<1x64xf32> to vector<256x64xf32>
    %5 = arith.addf %2, %4 : vector<256x64xf32>
    %cst_5 = arith.constant 0.000000e+00 : f32
    %6 = vector.broadcast %cst_5 : f32 to vector<256x64xf32>
    %7 = arith.maximumf %5, %6 : vector<256x64xf32>
    %8 = arith.truncf %7 : vector<256x64xf32> to vector<256x64xbf16>
    %c0_6 = arith.constant 0 : index
    %c0_7 = arith.constant 0 : index
    %9 = vector.load %arg4[%c0_6, %c0_7] : memref<256x64xbf16, #tpu.memory_space<vmem>>, vector<256x64xbf16>
    tpu.vector_store %arg4[%c0_6, %c0_7], %8 {strides = array<i32>} : memref<256x64xbf16, #tpu.memory_space<vmem>>, vector<256x64xbf16>,
    return
  }
  func.func @transform_0(%arg0: i32) -> (i32, i32) {
    %c0_i32 = arith.constant 0 : i32
    %c0_i32_0 = arith.constant 0 : i32
    return %arg0, %c0_i32 : i32, i32
  }
  func.func @transform_1(%arg0: i32) -> (i32, i32) {
    %c0_i32 = arith.constant 0 : i32
    %c0_i32_0 = arith.constant 0 : i32
    %c0_i32_1 = arith.constant 0 : i32
    return %c0_i32, %c0_i32_0 : i32, i32
  }
  func.func @transform_2(%arg0: i32) -> (i32, i32) {
    %c0_i32 = arith.constant 0 : i32
    %c0_i32_0 = arith.constant 0 : i32
    %c0_i32_1 = arith.constant 0 : i32
    return %c0_i32, %c0_i32_0 : i32, i32
  }
  func.func @transform_3(%arg0: i32) -> (i32, i32) {
    %c0_i32 = arith.constant 0 : i32
    %c0_i32_0 = arith.constant 0 : i32
    return %arg0, %c0_i32 : i32, i32
  }
}

module attributes {stable_mosaic.version = 11 : i64} {
  func.func @_maxpool_3x3_s2_kernel(%arg0: i32, %arg1: memref<12x2x12x128xbf16, #tpu.memory_space<vmem>>, %arg2: memref<1x11x11x64xbf16, #tpu.memory_space<vmem>>) attributes {dimension_semantics = [#tpu.dimension_semantics<parallel>], iteration_bounds = array<i64: 2>, scalar_prefetch = 0 : i64, scratch_operands = 0 : i64, tpu.core_type = #tpu.core_type<tc>, window_params = [{transform_indices = @transform_0, window_bounds = array<i64: 12, 2, 12, 128>}, {transform_indices = @transform_1, window_bounds = array<i64: 1, 11, 11, 64>}]} {
    %c0 = arith.constant 0 : index
    %c0_0 = arith.constant 0 : index
    %c0_1 = arith.constant 0 : index
    %c0_2 = arith.constant 0 : index
    %0 = vector.load %arg1[%c0, %c0_0, %c0_1, %c0_2] : memref<12x2x12x128xbf16, #tpu.memory_space<vmem>>, vector<12x2x12x128xbf16>
    %1 = vector.extract_strided_slice %0 {offsets = [0, 0, 0, 0], sizes = [11, 1, 12, 128], strides = [1, 1, 1, 1]} : vector<12x2x12x128xbf16> to vector<11x1x12x128xbf16>
    %2 = vector.shape_cast %1 : vector<11x1x12x128xbf16> to vector<11x12x128xbf16>
    %3 = vector.extract_strided_slice %0 {offsets = [0, 1, 0, 0], sizes = [11, 1, 12, 128], strides = [1, 1, 1, 1]} : vector<12x2x12x128xbf16> to vector<11x1x12x128xbf16>
    %4 = vector.shape_cast %3 : vector<11x1x12x128xbf16> to vector<11x12x128xbf16>
    %5 = vector.extract_strided_slice %0 {offsets = [1, 0, 0, 0], sizes = [11, 1, 12, 128], strides = [1, 1, 1, 1]} : vector<12x2x12x128xbf16> to vector<11x1x12x128xbf16>
    %6 = vector.shape_cast %5 : vector<11x1x12x128xbf16> to vector<11x12x128xbf16>
    %7 = arith.maximumf %2, %4 : vector<11x12x128xbf16>
    %8 = arith.maximumf %7, %6 : vector<11x12x128xbf16>
    %9 = vector.extract_strided_slice %8 {offsets = [0, 0, 0], sizes = [11, 11, 64], strides = [1, 1, 1]} : vector<11x12x128xbf16> to vector<11x11x64xbf16>
    %10 = vector.extract_strided_slice %8 {offsets = [0, 0, 64], sizes = [11, 11, 64], strides = [1, 1, 1]} : vector<11x12x128xbf16> to vector<11x11x64xbf16>
    %11 = vector.extract_strided_slice %8 {offsets = [0, 1, 0], sizes = [11, 11, 64], strides = [1, 1, 1]} : vector<11x12x128xbf16> to vector<11x11x64xbf16>
    %12 = arith.maximumf %9, %10 : vector<11x11x64xbf16>
    %13 = arith.maximumf %12, %11 : vector<11x11x64xbf16>
    %c0_3 = arith.constant 0 : index
    %c0_4 = arith.constant 0 : index
    %c0_5 = arith.constant 0 : index
    %c0_6 = arith.constant 0 : index
    %14 = vector.load %arg2[%c0_3, %c0_4, %c0_5, %c0_6] : memref<1x11x11x64xbf16, #tpu.memory_space<vmem>>, vector<1x11x11x64xbf16>
    %15 = vector.shape_cast %14 : vector<1x11x11x64xbf16> to vector<11x11x64xbf16>
    %16 = vector.shape_cast %13 : vector<11x11x64xbf16> to vector<1x11x11x64xbf16>
    tpu.vector_store %arg2[%c0_3, %c0_4, %c0_5, %c0_6], %16 {strides = array<i32>} : memref<1x11x11x64xbf16, #tpu.memory_space<vmem>>, vector<1x11x11x64xbf16>,
    return
  }
  func.func @transform_0(%arg0: i32) -> (i32, i32, i32, i32) {
    %c0_i32 = arith.constant 0 : i32
    %c0_i32_0 = arith.constant 0 : i32
    %c0_i32_1 = arith.constant 0 : i32
    %c0_i32_2 = arith.constant 0 : i32
    return %arg0, %c0_i32, %c0_i32_0, %c0_i32_1 : i32, i32, i32, i32
  }
  func.func @transform_1(%arg0: i32) -> (i32, i32, i32, i32) {
    %c0_i32 = arith.constant 0 : i32
    %c0_i32_0 = arith.constant 0 : i32
    %c0_i32_1 = arith.constant 0 : i32
    %c0_i32_2 = arith.constant 0 : i32
    return %arg0, %c0_i32, %c0_i32_0, %c0_i32_1 : i32, i32, i32, i32
  }
}

module attributes {stable_mosaic.version = 11 : i64} {
  func.func @_mm_bias_act_kernel(%arg0: i32, %arg1: memref<248x64xbf16, #tpu.memory_space<vmem>>, %arg2: memref<64x16xbf16, #tpu.memory_space<vmem>>, %arg3: memref<1x16xf32, #tpu.memory_space<vmem>>, %arg4: memref<248x16xbf16, #tpu.memory_space<vmem>>) attributes {dimension_semantics = [#tpu.dimension_semantics<parallel>], iteration_bounds = array<i64: 1>, scalar_prefetch = 0 : i64, scratch_operands = 0 : i64, tpu.core_type = #tpu.core_type<tc>, window_params = [{transform_indices = @transform_0, window_bounds = array<i64: 248, 64>}, {pipeline_mode = #tpu.pipeline_mode<synchronous>, transform_indices = @transform_1, window_bounds = array<i64: 64, 16>}, {pipeline_mode = #tpu.pipeline_mode<synchronous>, transform_indices = @transform_2, window_bounds = array<i64: 1, 16>}, {transform_indices = @transform_3, window_bounds = array<i64: 248, 16>}]} {
    %c0 = arith.constant 0 : index
    %c0_0 = arith.constant 0 : index
    %0 = vector.load %arg1[%c0, %c0_0] : memref<248x64xbf16, #tpu.memory_space<vmem>>, vector<248x64xbf16>
    %c0_1 = arith.constant 0 : index
    %c0_2 = arith.constant 0 : index
    %1 = vector.load %arg2[%c0_1, %c0_2] : memref<64x16xbf16, #tpu.memory_space<vmem>>, vector<64x16xbf16>
    %cst = arith.constant dense<0.000000e+00> : vector<248x16xf32>
    %2 = tpu.matmul %0, %1, %cst {dimension_numbers = #tpu.dot_dimension_numbers<[1], [0], [0], [1], [0, 0, 1, 1], [], []>} : vector<248x64xbf16>, vector<64x16xbf16>, vector<248x16xf32> -> vector<248x16xf32>
    %c0_3 = arith.constant 0 : index
    %c0_4 = arith.constant 0 : index
    %3 = vector.load %arg3[%c0_3, %c0_4] : memref<1x16xf32, #tpu.memory_space<vmem>>, vector<1x16xf32>
    %4 = vector.broadcast %3 : vector<1x16xf32> to vector<248x16xf32>
    %5 = arith.addf %2, %4 : vector<248x16xf32>
    %cst_5 = arith.constant 0.000000e+00 : f32
    %6 = vector.broadcast %cst_5 : f32 to vector<248x16xf32>
    %7 = arith.maximumf %5, %6 : vector<248x16xf32>
    %8 = arith.truncf %7 : vector<248x16xf32> to vector<248x16xbf16>
    %c0_6 = arith.constant 0 : index
    %c0_7 = arith.constant 0 : index
    %9 = vector.load %arg4[%c0_6, %c0_7] : memref<248x16xbf16, #tpu.memory_space<vmem>>, vector<248x16xbf16>
    tpu.vector_store %arg4[%c0_6, %c0_7], %8 {strides = array<i32>} : memref<248x16xbf16, #tpu.memory_space<vmem>>, vector<248x16xbf16>,
    return
  }
  func.func @transform_0(%arg0: i32) -> (i32, i32) {
    %c0_i32 = arith.constant 0 : i32
    %c0_i32_0 = arith.constant 0 : i32
    return %arg0, %c0_i32 : i32, i32
  }
  func.func @transform_1(%arg0: i32) -> (i32, i32) {
    %c0_i32 = arith.constant 0 : i32
    %c0_i32_0 = arith.constant 0 : i32
    %c0_i32_1 = arith.constant 0 : i32
    return %c0_i32, %c0_i32_0 : i32, i32
  }
  func.func @transform_2(%arg0: i32) -> (i32, i32) {
    %c0_i32 = arith.constant 0 : i32
    %c0_i32_0 = arith.constant 0 : i32
    %c0_i32_1 = arith.constant 0 : i32
    return %c0_i32, %c0_i32_0 : i32, i32
  }
  func.func @transform_3(%arg0: i32) -> (i32, i32) {
    %c0_i32 = arith.constant 0 : i32
    %c0_i32_0 = arith.constant 0 : i32
    return %arg0, %c0_i32 : i32, i32
  }
}

module attributes {stable_mosaic.version = 11 : i64} {
  func.func @_mm_bias_act_kernel(%arg0: i32, %arg1: memref<248x144xbf16, #tpu.memory_space<vmem>>, %arg2: memref<144x128xbf16, #tpu.memory_space<vmem>>, %arg3: memref<1x128xf32, #tpu.memory_space<vmem>>, %arg4: memref<248x128xbf16, #tpu.memory_space<vmem>>) attributes {dimension_semantics = [#tpu.dimension_semantics<parallel>], iteration_bounds = array<i64: 1>, scalar_prefetch = 0 : i64, scratch_operands = 0 : i64, tpu.core_type = #tpu.core_type<tc>, window_params = [{transform_indices = @transform_0, window_bounds = array<i64: 248, 144>}, {pipeline_mode = #tpu.pipeline_mode<synchronous>, transform_indices = @transform_1, window_bounds = array<i64: 144, 128>}, {pipeline_mode = #tpu.pipeline_mode<synchronous>, transform_indices = @transform_2, window_bounds = array<i64: 1, 128>}, {transform_indices = @transform_3, window_bounds = array<i64: 248, 128>}]} {
    %c0 = arith.constant 0 : index
    %c0_0 = arith.constant 0 : index
    %0 = vector.load %arg1[%c0, %c0_0] : memref<248x144xbf16, #tpu.memory_space<vmem>>, vector<248x144xbf16>
    %c0_1 = arith.constant 0 : index
    %c0_2 = arith.constant 0 : index
    %1 = vector.load %arg2[%c0_1, %c0_2] : memref<144x128xbf16, #tpu.memory_space<vmem>>, vector<144x128xbf16>
    %cst = arith.constant dense<0.000000e+00> : vector<248x128xf32>
    %2 = tpu.matmul %0, %1, %cst {dimension_numbers = #tpu.dot_dimension_numbers<[1], [0], [0], [1], [0, 0, 1, 1], [], []>} : vector<248x144xbf16>, vector<144x128xbf16>, vector<248x128xf32> -> vector<248x128xf32>
    %c0_3 = arith.constant 0 : index
    %c0_4 = arith.constant 0 : index
    %3 = vector.load %arg3[%c0_3, %c0_4] : memref<1x128xf32, #tpu.memory_space<vmem>>, vector<1x128xf32>
    %4 = vector.broadcast %3 : vector<1x128xf32> to vector<248x128xf32>
    %5 = arith.addf %2, %4 : vector<248x128xf32>
    %cst_5 = arith.constant 0.000000e+00 : f32
    %6 = vector.broadcast %cst_5 : f32 to vector<248x128xf32>
    %7 = arith.maximumf %5, %6 : vector<248x128xf32>
    %8 = arith.truncf %7 : vector<248x128xf32> to vector<248x128xbf16>
    %c0_6 = arith.constant 0 : index
    %c0_7 = arith.constant 0 : index
    %9 = vector.load %arg4[%c0_6, %c0_7] : memref<248x128xbf16, #tpu.memory_space<vmem>>, vector<248x128xbf16>
    tpu.vector_store %arg4[%c0_6, %c0_7], %8 {strides = array<i32>} : memref<248x128xbf16, #tpu.memory_space<vmem>>, vector<248x128xbf16>,
    return
  }
  func.func @transform_0(%arg0: i32) -> (i32, i32) {
    %c0_i32 = arith.constant 0 : i32
    %c0_i32_0 = arith.constant 0 : i32
    return %arg0, %c0_i32 : i32, i32
  }
  func.func @transform_1(%arg0: i32) -> (i32, i32) {
    %c0_i32 = arith.constant 0 : i32
    %c0_i32_0 = arith.constant 0 : i32
    %c0_i32_1 = arith.constant 0 : i32
    return %c0_i32, %c0_i32_0 : i32, i32
  }
  func.func @transform_2(%arg0: i32) -> (i32, i32) {
    %c0_i32 = arith.constant 0 : i32
    %c0_i32_0 = arith.constant 0 : i32
    %c0_i32_1 = arith.constant 0 : i32
    return %c0_i32, %c0_i32_0 : i32, i32
  }
  func.func @transform_3(%arg0: i32) -> (i32, i32) {
    %c0_i32 = arith.constant 0 : i32
    %c0_i32_0 = arith.constant 0 : i32
    return %arg0, %c0_i32 : i32, i32
  }
}

module attributes {stable_mosaic.version = 11 : i64} {
  func.func @_mm_bias_act_kernel(%arg0: i32, %arg1: memref<248x128xbf16, #tpu.memory_space<vmem>>, %arg2: memref<128x16xbf16, #tpu.memory_space<vmem>>, %arg3: memref<1x16xf32, #tpu.memory_space<vmem>>, %arg4: memref<248x16xbf16, #tpu.memory_space<vmem>>) attributes {dimension_semantics = [#tpu.dimension_semantics<parallel>], iteration_bounds = array<i64: 1>, scalar_prefetch = 0 : i64, scratch_operands = 0 : i64, tpu.core_type = #tpu.core_type<tc>, window_params = [{transform_indices = @transform_0, window_bounds = array<i64: 248, 128>}, {pipeline_mode = #tpu.pipeline_mode<synchronous>, transform_indices = @transform_1, window_bounds = array<i64: 128, 16>}, {pipeline_mode = #tpu.pipeline_mode<synchronous>, transform_indices = @transform_2, window_bounds = array<i64: 1, 16>}, {transform_indices = @transform_3, window_bounds = array<i64: 248, 16>}]} {
    %c0 = arith.constant 0 : index
    %c0_0 = arith.constant 0 : index
    %0 = vector.load %arg1[%c0, %c0_0] : memref<248x128xbf16, #tpu.memory_space<vmem>>, vector<248x128xbf16>
    %c0_1 = arith.constant 0 : index
    %c0_2 = arith.constant 0 : index
    %1 = vector.load %arg2[%c0_1, %c0_2] : memref<128x16xbf16, #tpu.memory_space<vmem>>, vector<128x16xbf16>
    %cst = arith.constant dense<0.000000e+00> : vector<248x16xf32>
    %2 = tpu.matmul %0, %1, %cst {dimension_numbers = #tpu.dot_dimension_numbers<[1], [0], [0], [1], [0, 0, 1, 1], [], []>} : vector<248x128xbf16>, vector<128x16xbf16>, vector<248x16xf32> -> vector<248x16xf32>
    %c0_3 = arith.constant 0 : index
    %c0_4 = arith.constant 0 : index
    %3 = vector.load %arg3[%c0_3, %c0_4] : memref<1x16xf32, #tpu.memory_space<vmem>>, vector<1x16xf32>
    %4 = vector.broadcast %3 : vector<1x16xf32> to vector<248x16xf32>
    %5 = arith.addf %2, %4 : vector<248x16xf32>
    %cst_5 = arith.constant 0.000000e+00 : f32
    %6 = vector.broadcast %cst_5 : f32 to vector<248x16xf32>
    %7 = arith.maximumf %5, %6 : vector<248x16xf32>
    %8 = arith.truncf %7 : vector<248x16xf32> to vector<248x16xbf16>
    %c0_6 = arith.constant 0 : index
    %c0_7 = arith.constant 0 : index
    %9 = vector.load %arg4[%c0_6, %c0_7] : memref<248x16xbf16, #tpu.memory_space<vmem>>, vector<248x16xbf16>
    tpu.vector_store %arg4[%c0_6, %c0_7], %8 {strides = array<i32>} : memref<248x16xbf16, #tpu.memory_space<vmem>>, vector<248x16xbf16>,
    return
  }
  func.func @transform_0(%arg0: i32) -> (i32, i32) {
    %c0_i32 = arith.constant 0 : i32
    %c0_i32_0 = arith.constant 0 : i32
    return %arg0, %c0_i32 : i32, i32
  }
  func.func @transform_1(%arg0: i32) -> (i32, i32) {
    %c0_i32 = arith.constant 0 : i32
    %c0_i32_0 = arith.constant 0 : i32
    %c0_i32_1 = arith.constant 0 : i32
    return %c0_i32, %c0_i32_0 : i32, i32
  }
  func.func @transform_2(%arg0: i32) -> (i32, i32) {
    %c0_i32 = arith.constant 0 : i32
    %c0_i32_0 = arith.constant 0 : i32
    %c0_i32_1 = arith.constant 0 : i32
    return %c0_i32, %c0_i32_0 : i32, i32
  }
  func.func @transform_3(%arg0: i32) -> (i32, i32) {
    %c0_i32 = arith.constant 0 : i32
    %c0_i32_0 = arith.constant 0 : i32
    return %arg0, %c0_i32 : i32, i32
  }
}

module attributes {stable_mosaic.version = 11 : i64} {
  func.func @_maxpool_3x3_s2_kernel(%arg0: i32, %arg1: memref<6x2x6x256xbf16, #tpu.memory_space<vmem>>, %arg2: memref<1x5x5x128xbf16, #tpu.memory_space<vmem>>) attributes {dimension_semantics = [#tpu.dimension_semantics<parallel>], iteration_bounds = array<i64: 2>, scalar_prefetch = 0 : i64, scratch_operands = 0 : i64, tpu.core_type = #tpu.core_type<tc>, window_params = [{transform_indices = @transform_0, window_bounds = array<i64: 6, 2, 6, 256>}, {transform_indices = @transform_1, window_bounds = array<i64: 1, 5, 5, 128>}]} {
    %c0 = arith.constant 0 : index
    %c0_0 = arith.constant 0 : index
    %c0_1 = arith.constant 0 : index
    %c0_2 = arith.constant 0 : index
    %0 = vector.load %arg1[%c0, %c0_0, %c0_1, %c0_2] : memref<6x2x6x256xbf16, #tpu.memory_space<vmem>>, vector<6x2x6x256xbf16>
    %1 = vector.extract_strided_slice %0 {offsets = [0, 0, 0, 0], sizes = [5, 1, 6, 256], strides = [1, 1, 1, 1]} : vector<6x2x6x256xbf16> to vector<5x1x6x256xbf16>
    %2 = vector.shape_cast %1 : vector<5x1x6x256xbf16> to vector<5x6x256xbf16>
    %3 = vector.extract_strided_slice %0 {offsets = [0, 1, 0, 0], sizes = [5, 1, 6, 256], strides = [1, 1, 1, 1]} : vector<6x2x6x256xbf16> to vector<5x1x6x256xbf16>
    %4 = vector.shape_cast %3 : vector<5x1x6x256xbf16> to vector<5x6x256xbf16>
    %5 = vector.extract_strided_slice %0 {offsets = [1, 0, 0, 0], sizes = [5, 1, 6, 256], strides = [1, 1, 1, 1]} : vector<6x2x6x256xbf16> to vector<5x1x6x256xbf16>
    %6 = vector.shape_cast %5 : vector<5x1x6x256xbf16> to vector<5x6x256xbf16>
    %7 = arith.maximumf %2, %4 : vector<5x6x256xbf16>
    %8 = arith.maximumf %7, %6 : vector<5x6x256xbf16>
    %9 = vector.extract_strided_slice %8 {offsets = [0, 0, 0], sizes = [5, 5, 128], strides = [1, 1, 1]} : vector<5x6x256xbf16> to vector<5x5x128xbf16>
    %10 = vector.extract_strided_slice %8 {offsets = [0, 0, 128], sizes = [5, 5, 128], strides = [1, 1, 1]} : vector<5x6x256xbf16> to vector<5x5x128xbf16>
    %11 = vector.extract_strided_slice %8 {offsets = [0, 1, 0], sizes = [5, 5, 128], strides = [1, 1, 1]} : vector<5x6x256xbf16> to vector<5x5x128xbf16>
    %12 = arith.maximumf %9, %10 : vector<5x5x128xbf16>
    %13 = arith.maximumf %12, %11 : vector<5x5x128xbf16>
    %c0_3 = arith.constant 0 : index
    %c0_4 = arith.constant 0 : index
    %c0_5 = arith.constant 0 : index
    %c0_6 = arith.constant 0 : index
    %14 = vector.load %arg2[%c0_3, %c0_4, %c0_5, %c0_6] : memref<1x5x5x128xbf16, #tpu.memory_space<vmem>>, vector<1x5x5x128xbf16>
    %15 = vector.shape_cast %14 : vector<1x5x5x128xbf16> to vector<5x5x128xbf16>
    %16 = vector.shape_cast %13 : vector<5x5x128xbf16> to vector<1x5x5x128xbf16>
    tpu.vector_store %arg2[%c0_3, %c0_4, %c0_5, %c0_6], %16 {strides = array<i32>} : memref<1x5x5x128xbf16, #tpu.memory_space<vmem>>, vector<1x5x5x128xbf16>,
    return
  }
  func.func @transform_0(%arg0: i32) -> (i32, i32, i32, i32) {
    %c0_i32 = arith.constant 0 : i32
    %c0_i32_0 = arith.constant 0 : i32
    %c0_i32_1 = arith.constant 0 : i32
    %c0_i32_2 = arith.constant 0 : i32
    return %arg0, %c0_i32, %c0_i32_0, %c0_i32_1 : i32, i32, i32, i32
  }
  func.func @transform_1(%arg0: i32) -> (i32, i32, i32, i32) {
    %c0_i32 = arith.constant 0 : i32
    %c0_i32_0 = arith.constant 0 : i32
    %c0_i32_1 = arith.constant 0 : i32
    %c0_i32_2 = arith.constant 0 : i32
    return %arg0, %c0_i32, %c0_i32_0, %c0_i32_1 : i32, i32, i32, i32
  }
}

module attributes {stable_mosaic.version = 11 : i64} {
  func.func @_mm_bias_act_kernel(%arg0: i32, %arg1: memref<56x128xbf16, #tpu.memory_space<vmem>>, %arg2: memref<128x32xbf16, #tpu.memory_space<vmem>>, %arg3: memref<1x32xf32, #tpu.memory_space<vmem>>, %arg4: memref<56x32xbf16, #tpu.memory_space<vmem>>) attributes {dimension_semantics = [#tpu.dimension_semantics<parallel>], iteration_bounds = array<i64: 1>, scalar_prefetch = 0 : i64, scratch_operands = 0 : i64, tpu.core_type = #tpu.core_type<tc>, window_params = [{transform_indices = @transform_0, window_bounds = array<i64: 56, 128>}, {pipeline_mode = #tpu.pipeline_mode<synchronous>, transform_indices = @transform_1, window_bounds = array<i64: 128, 32>}, {pipeline_mode = #tpu.pipeline_mode<synchronous>, transform_indices = @transform_2, window_bounds = array<i64: 1, 32>}, {transform_indices = @transform_3, window_bounds = array<i64: 56, 32>}]} {
    %c0 = arith.constant 0 : index
    %c0_0 = arith.constant 0 : index
    %0 = vector.load %arg1[%c0, %c0_0] : memref<56x128xbf16, #tpu.memory_space<vmem>>, vector<56x128xbf16>
    %c0_1 = arith.constant 0 : index
    %c0_2 = arith.constant 0 : index
    %1 = vector.load %arg2[%c0_1, %c0_2] : memref<128x32xbf16, #tpu.memory_space<vmem>>, vector<128x32xbf16>
    %cst = arith.constant dense<0.000000e+00> : vector<56x32xf32>
    %2 = tpu.matmul %0, %1, %cst {dimension_numbers = #tpu.dot_dimension_numbers<[1], [0], [0], [1], [0, 0, 1, 1], [], []>} : vector<56x128xbf16>, vector<128x32xbf16>, vector<56x32xf32> -> vector<56x32xf32>
    %c0_3 = arith.constant 0 : index
    %c0_4 = arith.constant 0 : index
    %3 = vector.load %arg3[%c0_3, %c0_4] : memref<1x32xf32, #tpu.memory_space<vmem>>, vector<1x32xf32>
    %4 = vector.broadcast %3 : vector<1x32xf32> to vector<56x32xf32>
    %5 = arith.addf %2, %4 : vector<56x32xf32>
    %cst_5 = arith.constant 0.000000e+00 : f32
    %6 = vector.broadcast %cst_5 : f32 to vector<56x32xf32>
    %7 = arith.maximumf %5, %6 : vector<56x32xf32>
    %8 = arith.truncf %7 : vector<56x32xf32> to vector<56x32xbf16>
    %c0_6 = arith.constant 0 : index
    %c0_7 = arith.constant 0 : index
    %9 = vector.load %arg4[%c0_6, %c0_7] : memref<56x32xbf16, #tpu.memory_space<vmem>>, vector<56x32xbf16>
    tpu.vector_store %arg4[%c0_6, %c0_7], %8 {strides = array<i32>} : memref<56x32xbf16, #tpu.memory_space<vmem>>, vector<56x32xbf16>,
    return
  }
  func.func @transform_0(%arg0: i32) -> (i32, i32) {
    %c0_i32 = arith.constant 0 : i32
    %c0_i32_0 = arith.constant 0 : i32
    return %arg0, %c0_i32 : i32, i32
  }
  func.func @transform_1(%arg0: i32) -> (i32, i32) {
    %c0_i32 = arith.constant 0 : i32
    %c0_i32_0 = arith.constant 0 : i32
    %c0_i32_1 = arith.constant 0 : i32
    return %c0_i32, %c0_i32_0 : i32, i32
  }
  func.func @transform_2(%arg0: i32) -> (i32, i32) {
    %c0_i32 = arith.constant 0 : i32
    %c0_i32_0 = arith.constant 0 : i32
    %c0_i32_1 = arith.constant 0 : i32
    return %c0_i32, %c0_i32_0 : i32, i32
  }
  func.func @transform_3(%arg0: i32) -> (i32, i32) {
    %c0_i32 = arith.constant 0 : i32
    %c0_i32_0 = arith.constant 0 : i32
    return %arg0, %c0_i32 : i32, i32
  }
}

module attributes {stable_mosaic.version = 11 : i64} {
  func.func @_mm_bias_act_kernel(%arg0: i32, %arg1: memref<56x288xbf16, #tpu.memory_space<vmem>>, %arg2: memref<288x256xbf16, #tpu.memory_space<vmem>>, %arg3: memref<1x256xf32, #tpu.memory_space<vmem>>, %arg4: memref<56x256xbf16, #tpu.memory_space<vmem>>) attributes {dimension_semantics = [#tpu.dimension_semantics<parallel>], iteration_bounds = array<i64: 1>, scalar_prefetch = 0 : i64, scratch_operands = 0 : i64, tpu.core_type = #tpu.core_type<tc>, window_params = [{transform_indices = @transform_0, window_bounds = array<i64: 56, 288>}, {pipeline_mode = #tpu.pipeline_mode<synchronous>, transform_indices = @transform_1, window_bounds = array<i64: 288, 256>}, {pipeline_mode = #tpu.pipeline_mode<synchronous>, transform_indices = @transform_2, window_bounds = array<i64: 1, 256>}, {transform_indices = @transform_3, window_bounds = array<i64: 56, 256>}]} {
    %c0 = arith.constant 0 : index
    %c0_0 = arith.constant 0 : index
    %0 = vector.load %arg1[%c0, %c0_0] : memref<56x288xbf16, #tpu.memory_space<vmem>>, vector<56x288xbf16>
    %c0_1 = arith.constant 0 : index
    %c0_2 = arith.constant 0 : index
    %1 = vector.load %arg2[%c0_1, %c0_2] : memref<288x256xbf16, #tpu.memory_space<vmem>>, vector<288x256xbf16>
    %cst = arith.constant dense<0.000000e+00> : vector<56x256xf32>
    %2 = tpu.matmul %0, %1, %cst {dimension_numbers = #tpu.dot_dimension_numbers<[1], [0], [0], [1], [0, 0, 1, 1], [], []>} : vector<56x288xbf16>, vector<288x256xbf16>, vector<56x256xf32> -> vector<56x256xf32>
    %c0_3 = arith.constant 0 : index
    %c0_4 = arith.constant 0 : index
    %3 = vector.load %arg3[%c0_3, %c0_4] : memref<1x256xf32, #tpu.memory_space<vmem>>, vector<1x256xf32>
    %4 = vector.broadcast %3 : vector<1x256xf32> to vector<56x256xf32>
    %5 = arith.addf %2, %4 : vector<56x256xf32>
    %cst_5 = arith.constant 0.000000e+00 : f32
    %6 = vector.broadcast %cst_5 : f32 to vector<56x256xf32>
    %7 = arith.maximumf %5, %6 : vector<56x256xf32>
    %8 = arith.truncf %7 : vector<56x256xf32> to vector<56x256xbf16>
    %c0_6 = arith.constant 0 : index
    %c0_7 = arith.constant 0 : index
    %9 = vector.load %arg4[%c0_6, %c0_7] : memref<56x256xbf16, #tpu.memory_space<vmem>>, vector<56x256xbf16>
    tpu.vector_store %arg4[%c0_6, %c0_7], %8 {strides = array<i32>} : memref<56x256xbf16, #tpu.memory_space<vmem>>, vector<56x256xbf16>,
    return
  }
  func.func @transform_0(%arg0: i32) -> (i32, i32) {
    %c0_i32 = arith.constant 0 : i32
    %c0_i32_0 = arith.constant 0 : i32
    return %arg0, %c0_i32 : i32, i32
  }
  func.func @transform_1(%arg0: i32) -> (i32, i32) {
    %c0_i32 = arith.constant 0 : i32
    %c0_i32_0 = arith.constant 0 : i32
    %c0_i32_1 = arith.constant 0 : i32
    return %c0_i32, %c0_i32_0 : i32, i32
  }
  func.func @transform_2(%arg0: i32) -> (i32, i32) {
    %c0_i32 = arith.constant 0 : i32
    %c0_i32_0 = arith.constant 0 : i32
    %c0_i32_1 = arith.constant 0 : i32
    return %c0_i32, %c0_i32_0 : i32, i32
  }
  func.func @transform_3(%arg0: i32) -> (i32, i32) {
    %c0_i32 = arith.constant 0 : i32
    %c0_i32_0 = arith.constant 0 : i32
    return %arg0, %c0_i32 : i32, i32
  }
}

module attributes {stable_mosaic.version = 11 : i64} {
  func.func @_mm_bias_act_kernel(%arg0: i32, %arg1: memref<56x256xbf16, #tpu.memory_space<vmem>>, %arg2: memref<256x32xbf16, #tpu.memory_space<vmem>>, %arg3: memref<1x32xf32, #tpu.memory_space<vmem>>, %arg4: memref<56x32xbf16, #tpu.memory_space<vmem>>) attributes {dimension_semantics = [#tpu.dimension_semantics<parallel>], iteration_bounds = array<i64: 1>, scalar_prefetch = 0 : i64, scratch_operands = 0 : i64, tpu.core_type = #tpu.core_type<tc>, window_params = [{transform_indices = @transform_0, window_bounds = array<i64: 56, 256>}, {pipeline_mode = #tpu.pipeline_mode<synchronous>, transform_indices = @transform_1, window_bounds = array<i64: 256, 32>}, {pipeline_mode = #tpu.pipeline_mode<synchronous>, transform_indices = @transform_2, window_bounds = array<i64: 1, 32>}, {transform_indices = @transform_3, window_bounds = array<i64: 56, 32>}]} {
    %c0 = arith.constant 0 : index
    %c0_0 = arith.constant 0 : index
    %0 = vector.load %arg1[%c0, %c0_0] : memref<56x256xbf16, #tpu.memory_space<vmem>>, vector<56x256xbf16>
    %c0_1 = arith.constant 0 : index
    %c0_2 = arith.constant 0 : index
    %1 = vector.load %arg2[%c0_1, %c0_2] : memref<256x32xbf16, #tpu.memory_space<vmem>>, vector<256x32xbf16>
    %cst = arith.constant dense<0.000000e+00> : vector<56x32xf32>
    %2 = tpu.matmul %0, %1, %cst {dimension_numbers = #tpu.dot_dimension_numbers<[1], [0], [0], [1], [0, 0, 1, 1], [], []>} : vector<56x256xbf16>, vector<256x32xbf16>, vector<56x32xf32> -> vector<56x32xf32>
    %c0_3 = arith.constant 0 : index
    %c0_4 = arith.constant 0 : index
    %3 = vector.load %arg3[%c0_3, %c0_4] : memref<1x32xf32, #tpu.memory_space<vmem>>, vector<1x32xf32>
    %4 = vector.broadcast %3 : vector<1x32xf32> to vector<56x32xf32>
    %5 = arith.addf %2, %4 : vector<56x32xf32>
    %cst_5 = arith.constant 0.000000e+00 : f32
    %6 = vector.broadcast %cst_5 : f32 to vector<56x32xf32>
    %7 = arith.maximumf %5, %6 : vector<56x32xf32>
    %8 = arith.truncf %7 : vector<56x32xf32> to vector<56x32xbf16>
    %c0_6 = arith.constant 0 : index
    %c0_7 = arith.constant 0 : index
    %9 = vector.load %arg4[%c0_6, %c0_7] : memref<56x32xbf16, #tpu.memory_space<vmem>>, vector<56x32xbf16>
    tpu.vector_store %arg4[%c0_6, %c0_7], %8 {strides = array<i32>} : memref<56x32xbf16, #tpu.memory_space<vmem>>, vector<56x32xbf16>,
    return
  }
  func.func @transform_0(%arg0: i32) -> (i32, i32) {
    %c0_i32 = arith.constant 0 : i32
    %c0_i32_0 = arith.constant 0 : i32
    return %arg0, %c0_i32 : i32, i32
  }
  func.func @transform_1(%arg0: i32) -> (i32, i32) {
    %c0_i32 = arith.constant 0 : i32
    %c0_i32_0 = arith.constant 0 : i32
    %c0_i32_1 = arith.constant 0 : i32
    return %c0_i32, %c0_i32_0 : i32, i32
  }
  func.func @transform_2(%arg0: i32) -> (i32, i32) {
    %c0_i32 = arith.constant 0 : i32
    %c0_i32_0 = arith.constant 0 : i32
    %c0_i32_1 = arith.constant 0 : i32
    return %c0_i32, %c0_i32_0 : i32, i32
  }
  func.func @transform_3(%arg0: i32) -> (i32, i32) {
    %c0_i32 = arith.constant 0 : i32
    %c0_i32_0 = arith.constant 0 : i32
    return %arg0, %c0_i32 : i32, i32
  }
}

module attributes {stable_mosaic.version = 11 : i64} {
  func.func @_maxpool_3x3_s2_kernel(%arg0: i32, %arg1: memref<3x2x3x512xbf16, #tpu.memory_space<vmem>>, %arg2: memref<1x2x2x256xbf16, #tpu.memory_space<vmem>>) attributes {dimension_semantics = [#tpu.dimension_semantics<parallel>], iteration_bounds = array<i64: 2>, scalar_prefetch = 0 : i64, scratch_operands = 0 : i64, tpu.core_type = #tpu.core_type<tc>, window_params = [{transform_indices = @transform_0, window_bounds = array<i64: 3, 2, 3, 512>}, {transform_indices = @transform_1, window_bounds = array<i64: 1, 2, 2, 256>}]} {
    %c0 = arith.constant 0 : index
    %c0_0 = arith.constant 0 : index
    %c0_1 = arith.constant 0 : index
    %c0_2 = arith.constant 0 : index
    %0 = vector.load %arg1[%c0, %c0_0, %c0_1, %c0_2] : memref<3x2x3x512xbf16, #tpu.memory_space<vmem>>, vector<3x2x3x512xbf16>
    %1 = vector.extract_strided_slice %0 {offsets = [0, 0, 0, 0], sizes = [2, 1, 3, 512], strides = [1, 1, 1, 1]} : vector<3x2x3x512xbf16> to vector<2x1x3x512xbf16>
    %2 = vector.shape_cast %1 : vector<2x1x3x512xbf16> to vector<2x3x512xbf16>
    %3 = vector.extract_strided_slice %0 {offsets = [0, 1, 0, 0], sizes = [2, 1, 3, 512], strides = [1, 1, 1, 1]} : vector<3x2x3x512xbf16> to vector<2x1x3x512xbf16>
    %4 = vector.shape_cast %3 : vector<2x1x3x512xbf16> to vector<2x3x512xbf16>
    %5 = vector.extract_strided_slice %0 {offsets = [1, 0, 0, 0], sizes = [2, 1, 3, 512], strides = [1, 1, 1, 1]} : vector<3x2x3x512xbf16> to vector<2x1x3x512xbf16>
    %6 = vector.shape_cast %5 : vector<2x1x3x512xbf16> to vector<2x3x512xbf16>
    %7 = arith.maximumf %2, %4 : vector<2x3x512xbf16>
    %8 = arith.maximumf %7, %6 : vector<2x3x512xbf16>
    %9 = vector.extract_strided_slice %8 {offsets = [0, 0, 0], sizes = [2, 2, 256], strides = [1, 1, 1]} : vector<2x3x512xbf16> to vector<2x2x256xbf16>
    %10 = vector.extract_strided_slice %8 {offsets = [0, 0, 256], sizes = [2, 2, 256], strides = [1, 1, 1]} : vector<2x3x512xbf16> to vector<2x2x256xbf16>
    %11 = vector.extract_strided_slice %8 {offsets = [0, 1, 0], sizes = [2, 2, 256], strides = [1, 1, 1]} : vector<2x3x512xbf16> to vector<2x2x256xbf16>
    %12 = arith.maximumf %9, %10 : vector<2x2x256xbf16>
    %13 = arith.maximumf %12, %11 : vector<2x2x256xbf16>
    %c0_3 = arith.constant 0 : index
    %c0_4 = arith.constant 0 : index
    %c0_5 = arith.constant 0 : index
    %c0_6 = arith.constant 0 : index
    %14 = vector.load %arg2[%c0_3, %c0_4, %c0_5, %c0_6] : memref<1x2x2x256xbf16, #tpu.memory_space<vmem>>, vector<1x2x2x256xbf16>
    %15 = vector.shape_cast %14 : vector<1x2x2x256xbf16> to vector<2x2x256xbf16>
    %16 = vector.shape_cast %13 : vector<2x2x256xbf16> to vector<1x2x2x256xbf16>
    tpu.vector_store %arg2[%c0_3, %c0_4, %c0_5, %c0_6], %16 {strides = array<i32>} : memref<1x2x2x256xbf16, #tpu.memory_space<vmem>>, vector<1x2x2x256xbf16>,
    return
  }
  func.func @transform_0(%arg0: i32) -> (i32, i32, i32, i32) {
    %c0_i32 = arith.constant 0 : i32
    %c0_i32_0 = arith.constant 0 : i32
    %c0_i32_1 = arith.constant 0 : i32
    %c0_i32_2 = arith.constant 0 : i32
    return %arg0, %c0_i32, %c0_i32_0, %c0_i32_1 : i32, i32, i32, i32
  }
  func.func @transform_1(%arg0: i32) -> (i32, i32, i32, i32) {
    %c0_i32 = arith.constant 0 : i32
    %c0_i32_0 = arith.constant 0 : i32
    %c0_i32_1 = arith.constant 0 : i32
    %c0_i32_2 = arith.constant 0 : i32
    return %arg0, %c0_i32, %c0_i32_0, %c0_i32_1 : i32, i32, i32, i32
  }
}

module attributes {stable_mosaic.version = 11 : i64} {
  func.func @_mm_bias_act_kernel(%arg0: i32, %arg1: memref<8x256xbf16, #tpu.memory_space<vmem>>, %arg2: memref<256x48xbf16, #tpu.memory_space<vmem>>, %arg3: memref<1x48xf32, #tpu.memory_space<vmem>>, %arg4: memref<8x48xbf16, #tpu.memory_space<vmem>>) attributes {dimension_semantics = [#tpu.dimension_semantics<parallel>], iteration_bounds = array<i64: 1>, scalar_prefetch = 0 : i64, scratch_operands = 0 : i64, tpu.core_type = #tpu.core_type<tc>, window_params = [{transform_indices = @transform_0, window_bounds = array<i64: 8, 256>}, {pipeline_mode = #tpu.pipeline_mode<synchronous>, transform_indices = @transform_1, window_bounds = array<i64: 256, 48>}, {pipeline_mode = #tpu.pipeline_mode<synchronous>, transform_indices = @transform_2, window_bounds = array<i64: 1, 48>}, {transform_indices = @transform_3, window_bounds = array<i64: 8, 48>}]} {
    %c0 = arith.constant 0 : index
    %c0_0 = arith.constant 0 : index
    %0 = vector.load %arg1[%c0, %c0_0] : memref<8x256xbf16, #tpu.memory_space<vmem>>, vector<8x256xbf16>
    %c0_1 = arith.constant 0 : index
    %c0_2 = arith.constant 0 : index
    %1 = vector.load %arg2[%c0_1, %c0_2] : memref<256x48xbf16, #tpu.memory_space<vmem>>, vector<256x48xbf16>
    %cst = arith.constant dense<0.000000e+00> : vector<8x48xf32>
    %2 = tpu.matmul %0, %1, %cst {dimension_numbers = #tpu.dot_dimension_numbers<[1], [0], [0], [1], [0, 0, 1, 1], [], []>} : vector<8x256xbf16>, vector<256x48xbf16>, vector<8x48xf32> -> vector<8x48xf32>
    %c0_3 = arith.constant 0 : index
    %c0_4 = arith.constant 0 : index
    %3 = vector.load %arg3[%c0_3, %c0_4] : memref<1x48xf32, #tpu.memory_space<vmem>>, vector<1x48xf32>
    %4 = vector.broadcast %3 : vector<1x48xf32> to vector<8x48xf32>
    %5 = arith.addf %2, %4 : vector<8x48xf32>
    %cst_5 = arith.constant 0.000000e+00 : f32
    %6 = vector.broadcast %cst_5 : f32 to vector<8x48xf32>
    %7 = arith.maximumf %5, %6 : vector<8x48xf32>
    %8 = arith.truncf %7 : vector<8x48xf32> to vector<8x48xbf16>
    %c0_6 = arith.constant 0 : index
    %c0_7 = arith.constant 0 : index
    %9 = vector.load %arg4[%c0_6, %c0_7] : memref<8x48xbf16, #tpu.memory_space<vmem>>, vector<8x48xbf16>
    tpu.vector_store %arg4[%c0_6, %c0_7], %8 {strides = array<i32>} : memref<8x48xbf16, #tpu.memory_space<vmem>>, vector<8x48xbf16>,
    return
  }
  func.func @transform_0(%arg0: i32) -> (i32, i32) {
    %c0_i32 = arith.constant 0 : i32
    %c0_i32_0 = arith.constant 0 : i32
    return %arg0, %c0_i32 : i32, i32
  }
  func.func @transform_1(%arg0: i32) -> (i32, i32) {
    %c0_i32 = arith.constant 0 : i32
    %c0_i32_0 = arith.constant 0 : i32
    %c0_i32_1 = arith.constant 0 : i32
    return %c0_i32, %c0_i32_0 : i32, i32
  }
  func.func @transform_2(%arg0: i32) -> (i32, i32) {
    %c0_i32 = arith.constant 0 : i32
    %c0_i32_0 = arith.constant 0 : i32
    %c0_i32_1 = arith.constant 0 : i32
    return %c0_i32, %c0_i32_0 : i32, i32
  }
  func.func @transform_3(%arg0: i32) -> (i32, i32) {
    %c0_i32 = arith.constant 0 : i32
    %c0_i32_0 = arith.constant 0 : i32
    return %arg0, %c0_i32 : i32, i32
  }
}

module attributes {stable_mosaic.version = 11 : i64} {
  func.func @_mm_bias_act_kernel(%arg0: i32, %arg1: memref<8x432xbf16, #tpu.memory_space<vmem>>, %arg2: memref<432x384xbf16, #tpu.memory_space<vmem>>, %arg3: memref<1x384xf32, #tpu.memory_space<vmem>>, %arg4: memref<8x384xbf16, #tpu.memory_space<vmem>>) attributes {dimension_semantics = [#tpu.dimension_semantics<parallel>], iteration_bounds = array<i64: 1>, scalar_prefetch = 0 : i64, scratch_operands = 0 : i64, tpu.core_type = #tpu.core_type<tc>, window_params = [{transform_indices = @transform_0, window_bounds = array<i64: 8, 432>}, {pipeline_mode = #tpu.pipeline_mode<synchronous>, transform_indices = @transform_1, window_bounds = array<i64: 432, 384>}, {pipeline_mode = #tpu.pipeline_mode<synchronous>, transform_indices = @transform_2, window_bounds = array<i64: 1, 384>}, {transform_indices = @transform_3, window_bounds = array<i64: 8, 384>}]} {
    %c0 = arith.constant 0 : index
    %c0_0 = arith.constant 0 : index
    %0 = vector.load %arg1[%c0, %c0_0] : memref<8x432xbf16, #tpu.memory_space<vmem>>, vector<8x432xbf16>
    %c0_1 = arith.constant 0 : index
    %c0_2 = arith.constant 0 : index
    %1 = vector.load %arg2[%c0_1, %c0_2] : memref<432x384xbf16, #tpu.memory_space<vmem>>, vector<432x384xbf16>
    %cst = arith.constant dense<0.000000e+00> : vector<8x384xf32>
    %2 = tpu.matmul %0, %1, %cst {dimension_numbers = #tpu.dot_dimension_numbers<[1], [0], [0], [1], [0, 0, 1, 1], [], []>} : vector<8x432xbf16>, vector<432x384xbf16>, vector<8x384xf32> -> vector<8x384xf32>
    %c0_3 = arith.constant 0 : index
    %c0_4 = arith.constant 0 : index
    %3 = vector.load %arg3[%c0_3, %c0_4] : memref<1x384xf32, #tpu.memory_space<vmem>>, vector<1x384xf32>
    %4 = vector.broadcast %3 : vector<1x384xf32> to vector<8x384xf32>
    %5 = arith.addf %2, %4 : vector<8x384xf32>
    %cst_5 = arith.constant 0.000000e+00 : f32
    %6 = vector.broadcast %cst_5 : f32 to vector<8x384xf32>
    %7 = arith.maximumf %5, %6 : vector<8x384xf32>
    %8 = arith.truncf %7 : vector<8x384xf32> to vector<8x384xbf16>
    %c0_6 = arith.constant 0 : index
    %c0_7 = arith.constant 0 : index
    %9 = vector.load %arg4[%c0_6, %c0_7] : memref<8x384xbf16, #tpu.memory_space<vmem>>, vector<8x384xbf16>
    tpu.vector_store %arg4[%c0_6, %c0_7], %8 {strides = array<i32>} : memref<8x384xbf16, #tpu.memory_space<vmem>>, vector<8x384xbf16>,
    return
  }
  func.func @transform_0(%arg0: i32) -> (i32, i32) {
    %c0_i32 = arith.constant 0 : i32
    %c0_i32_0 = arith.constant 0 : i32
    return %arg0, %c0_i32 : i32, i32
  }
  func.func @transform_1(%arg0: i32) -> (i32, i32) {
    %c0_i32 = arith.constant 0 : i32
    %c0_i32_0 = arith.constant 0 : i32
    %c0_i32_1 = arith.constant 0 : i32
    return %c0_i32, %c0_i32_0 : i32, i32
  }
  func.func @transform_2(%arg0: i32) -> (i32, i32) {
    %c0_i32 = arith.constant 0 : i32
    %c0_i32_0 = arith.constant 0 : i32
    %c0_i32_1 = arith.constant 0 : i32
    return %c0_i32, %c0_i32_0 : i32, i32
  }
  func.func @transform_3(%arg0: i32) -> (i32, i32) {
    %c0_i32 = arith.constant 0 : i32
    %c0_i32_0 = arith.constant 0 : i32
    return %arg0, %c0_i32 : i32, i32
  }
}

module attributes {stable_mosaic.version = 11 : i64} {
  func.func @_mm_bias_act_kernel(%arg0: i32, %arg1: memref<8x384xbf16, #tpu.memory_space<vmem>>, %arg2: memref<384x48xbf16, #tpu.memory_space<vmem>>, %arg3: memref<1x48xf32, #tpu.memory_space<vmem>>, %arg4: memref<8x48xbf16, #tpu.memory_space<vmem>>) attributes {dimension_semantics = [#tpu.dimension_semantics<parallel>], iteration_bounds = array<i64: 1>, scalar_prefetch = 0 : i64, scratch_operands = 0 : i64, tpu.core_type = #tpu.core_type<tc>, window_params = [{transform_indices = @transform_0, window_bounds = array<i64: 8, 384>}, {pipeline_mode = #tpu.pipeline_mode<synchronous>, transform_indices = @transform_1, window_bounds = array<i64: 384, 48>}, {pipeline_mode = #tpu.pipeline_mode<synchronous>, transform_indices = @transform_2, window_bounds = array<i64: 1, 48>}, {transform_indices = @transform_3, window_bounds = array<i64: 8, 48>}]} {
    %c0 = arith.constant 0 : index
    %c0_0 = arith.constant 0 : index
    %0 = vector.load %arg1[%c0, %c0_0] : memref<8x384xbf16, #tpu.memory_space<vmem>>, vector<8x384xbf16>
    %c0_1 = arith.constant 0 : index
    %c0_2 = arith.constant 0 : index
    %1 = vector.load %arg2[%c0_1, %c0_2] : memref<384x48xbf16, #tpu.memory_space<vmem>>, vector<384x48xbf16>
    %cst = arith.constant dense<0.000000e+00> : vector<8x48xf32>
    %2 = tpu.matmul %0, %1, %cst {dimension_numbers = #tpu.dot_dimension_numbers<[1], [0], [0], [1], [0, 0, 1, 1], [], []>} : vector<8x384xbf16>, vector<384x48xbf16>, vector<8x48xf32> -> vector<8x48xf32>
    %c0_3 = arith.constant 0 : index
    %c0_4 = arith.constant 0 : index
    %3 = vector.load %arg3[%c0_3, %c0_4] : memref<1x48xf32, #tpu.memory_space<vmem>>, vector<1x48xf32>
    %4 = vector.broadcast %3 : vector<1x48xf32> to vector<8x48xf32>
    %5 = arith.addf %2, %4 : vector<8x48xf32>
    %cst_5 = arith.constant 0.000000e+00 : f32
    %6 = vector.broadcast %cst_5 : f32 to vector<8x48xf32>
    %7 = arith.maximumf %5, %6 : vector<8x48xf32>
    %8 = arith.truncf %7 : vector<8x48xf32> to vector<8x48xbf16>
    %c0_6 = arith.constant 0 : index
    %c0_7 = arith.constant 0 : index
    %9 = vector.load %arg4[%c0_6, %c0_7] : memref<8x48xbf16, #tpu.memory_space<vmem>>, vector<8x48xbf16>
    tpu.vector_store %arg4[%c0_6, %c0_7], %8 {strides = array<i32>} : memref<8x48xbf16, #tpu.memory_space<vmem>>, vector<8x48xbf16>,
    return
  }
  func.func @transform_0(%arg0: i32) -> (i32, i32) {
    %c0_i32 = arith.constant 0 : i32
    %c0_i32_0 = arith.constant 0 : i32
    return %arg0, %c0_i32 : i32, i32
  }
  func.func @transform_1(%arg0: i32) -> (i32, i32) {
    %c0_i32 = arith.constant 0 : i32
    %c0_i32_0 = arith.constant 0 : i32
    %c0_i32_1 = arith.constant 0 : i32
    return %c0_i32, %c0_i32_0 : i32, i32
  }
  func.func @transform_2(%arg0: i32) -> (i32, i32) {
    %c0_i32 = arith.constant 0 : i32
    %c0_i32_0 = arith.constant 0 : i32
    %c0_i32_1 = arith.constant 0 : i32
    return %c0_i32, %c0_i32_0 : i32, i32
  }
  func.func @transform_3(%arg0: i32) -> (i32, i32) {
    %c0_i32 = arith.constant 0 : i32
    %c0_i32_0 = arith.constant 0 : i32
    return %arg0, %c0_i32 : i32, i32
  }
}

module attributes {stable_mosaic.version = 11 : i64} {
  func.func @_mm_bias_act_kernel(%arg0: i32, %arg1: memref<8x384xbf16, #tpu.memory_space<vmem>>, %arg2: memref<384x64xbf16, #tpu.memory_space<vmem>>, %arg3: memref<1x64xf32, #tpu.memory_space<vmem>>, %arg4: memref<8x64xbf16, #tpu.memory_space<vmem>>) attributes {dimension_semantics = [#tpu.dimension_semantics<parallel>], iteration_bounds = array<i64: 1>, scalar_prefetch = 0 : i64, scratch_operands = 0 : i64, tpu.core_type = #tpu.core_type<tc>, window_params = [{transform_indices = @transform_0, window_bounds = array<i64: 8, 384>}, {pipeline_mode = #tpu.pipeline_mode<synchronous>, transform_indices = @transform_1, window_bounds = array<i64: 384, 64>}, {pipeline_mode = #tpu.pipeline_mode<synchronous>, transform_indices = @transform_2, window_bounds = array<i64: 1, 64>}, {transform_indices = @transform_3, window_bounds = array<i64: 8, 64>}]} {
    %c0 = arith.constant 0 : index
    %c0_0 = arith.constant 0 : index
    %0 = vector.load %arg1[%c0, %c0_0] : memref<8x384xbf16, #tpu.memory_space<vmem>>, vector<8x384xbf16>
    %c0_1 = arith.constant 0 : index
    %c0_2 = arith.constant 0 : index
    %1 = vector.load %arg2[%c0_1, %c0_2] : memref<384x64xbf16, #tpu.memory_space<vmem>>, vector<384x64xbf16>
    %cst = arith.constant dense<0.000000e+00> : vector<8x64xf32>
    %2 = tpu.matmul %0, %1, %cst {dimension_numbers = #tpu.dot_dimension_numbers<[1], [0], [0], [1], [0, 0, 1, 1], [], []>} : vector<8x384xbf16>, vector<384x64xbf16>, vector<8x64xf32> -> vector<8x64xf32>
    %c0_3 = arith.constant 0 : index
    %c0_4 = arith.constant 0 : index
    %3 = vector.load %arg3[%c0_3, %c0_4] : memref<1x64xf32, #tpu.memory_space<vmem>>, vector<1x64xf32>
    %4 = vector.broadcast %3 : vector<1x64xf32> to vector<8x64xf32>
    %5 = arith.addf %2, %4 : vector<8x64xf32>
    %cst_5 = arith.constant 0.000000e+00 : f32
    %6 = vector.broadcast %cst_5 : f32 to vector<8x64xf32>
    %7 = arith.maximumf %5, %6 : vector<8x64xf32>
    %8 = arith.truncf %7 : vector<8x64xf32> to vector<8x64xbf16>
    %c0_6 = arith.constant 0 : index
    %c0_7 = arith.constant 0 : index
    %9 = vector.load %arg4[%c0_6, %c0_7] : memref<8x64xbf16, #tpu.memory_space<vmem>>, vector<8x64xbf16>
    tpu.vector_store %arg4[%c0_6, %c0_7], %8 {strides = array<i32>} : memref<8x64xbf16, #tpu.memory_space<vmem>>, vector<8x64xbf16>,
    return
  }
  func.func @transform_0(%arg0: i32) -> (i32, i32) {
    %c0_i32 = arith.constant 0 : i32
    %c0_i32_0 = arith.constant 0 : i32
    return %arg0, %c0_i32 : i32, i32
  }
  func.func @transform_1(%arg0: i32) -> (i32, i32) {
    %c0_i32 = arith.constant 0 : i32
    %c0_i32_0 = arith.constant 0 : i32
    %c0_i32_1 = arith.constant 0 : i32
    return %c0_i32, %c0_i32_0 : i32, i32
  }
  func.func @transform_2(%arg0: i32) -> (i32, i32) {
    %c0_i32 = arith.constant 0 : i32
    %c0_i32_0 = arith.constant 0 : i32
    %c0_i32_1 = arith.constant 0 : i32
    return %c0_i32, %c0_i32_0 : i32, i32
  }
  func.func @transform_3(%arg0: i32) -> (i32, i32) {
    %c0_i32 = arith.constant 0 : i32
    %c0_i32_0 = arith.constant 0 : i32
    return %arg0, %c0_i32 : i32, i32
  }
}

module attributes {stable_mosaic.version = 11 : i64} {
  func.func @_mm_bias_act_kernel(%arg0: i32, %arg1: memref<8x512xbf16, #tpu.memory_space<vmem>>, %arg2: memref<512x64xbf16, #tpu.memory_space<vmem>>, %arg3: memref<1x64xf32, #tpu.memory_space<vmem>>, %arg4: memref<8x64xbf16, #tpu.memory_space<vmem>>) attributes {dimension_semantics = [#tpu.dimension_semantics<parallel>], iteration_bounds = array<i64: 1>, scalar_prefetch = 0 : i64, scratch_operands = 0 : i64, tpu.core_type = #tpu.core_type<tc>, window_params = [{transform_indices = @transform_0, window_bounds = array<i64: 8, 512>}, {pipeline_mode = #tpu.pipeline_mode<synchronous>, transform_indices = @transform_1, window_bounds = array<i64: 512, 64>}, {pipeline_mode = #tpu.pipeline_mode<synchronous>, transform_indices = @transform_2, window_bounds = array<i64: 1, 64>}, {transform_indices = @transform_3, window_bounds = array<i64: 8, 64>}]} {
    %c0 = arith.constant 0 : index
    %c0_0 = arith.constant 0 : index
    %0 = vector.load %arg1[%c0, %c0_0] : memref<8x512xbf16, #tpu.memory_space<vmem>>, vector<8x512xbf16>
    %c0_1 = arith.constant 0 : index
    %c0_2 = arith.constant 0 : index
    %1 = vector.load %arg2[%c0_1, %c0_2] : memref<512x64xbf16, #tpu.memory_space<vmem>>, vector<512x64xbf16>
    %cst = arith.constant dense<0.000000e+00> : vector<8x64xf32>
    %2 = tpu.matmul %0, %1, %cst {dimension_numbers = #tpu.dot_dimension_numbers<[1], [0], [0], [1], [0, 0, 1, 1], [], []>} : vector<8x512xbf16>, vector<512x64xbf16>, vector<8x64xf32> -> vector<8x64xf32>
    %c0_3 = arith.constant 0 : index
    %c0_4 = arith.constant 0 : index
    %3 = vector.load %arg3[%c0_3, %c0_4] : memref<1x64xf32, #tpu.memory_space<vmem>>, vector<1x64xf32>
    %4 = vector.broadcast %3 : vector<1x64xf32> to vector<8x64xf32>
    %5 = arith.addf %2, %4 : vector<8x64xf32>
    %cst_5 = arith.constant 0.000000e+00 : f32
    %6 = vector.broadcast %cst_5 : f32 to vector<8x64xf32>
    %7 = arith.maximumf %5, %6 : vector<8x64xf32>
    %8 = arith.truncf %7 : vector<8x64xf32> to vector<8x64xbf16>
    %c0_6 = arith.constant 0 : index
    %c0_7 = arith.constant 0 : index
    %9 = vector.load %arg4[%c0_6, %c0_7] : memref<8x64xbf16, #tpu.memory_space<vmem>>, vector<8x64xbf16>
    tpu.vector_store %arg4[%c0_6, %c0_7], %8 {strides = array<i32>} : memref<8x64xbf16, #tpu.memory_space<vmem>>, vector<8x64xbf16>,
    return
  }
  func.func @transform_0(%arg0: i32) -> (i32, i32) {
    %c0_i32 = arith.constant 0 : i32
    %c0_i32_0 = arith.constant 0 : i32
    return %arg0, %c0_i32 : i32, i32
  }
  func.func @transform_1(%arg0: i32) -> (i32, i32) {
    %c0_i32 = arith.constant 0 : i32
    %c0_i32_0 = arith.constant 0 : i32
    %c0_i32_1 = arith.constant 0 : i32
    return %c0_i32, %c0_i32_0 : i32, i32
  }
  func.func @transform_2(%arg0: i32) -> (i32, i32) {
    %c0_i32 = arith.constant 0 : i32
    %c0_i32_0 = arith.constant 0 : i32
    %c0_i32_1 = arith.constant 0 : i32
    return %c0_i32, %c0_i32_0 : i32, i32
  }
  func.func @transform_3(%arg0: i32) -> (i32, i32) {
    %c0_i32 = arith.constant 0 : i32
    %c0_i32_0 = arith.constant 0 : i32
    return %arg0, %c0_i32 : i32, i32
  }
}

module attributes {stable_mosaic.version = 11 : i64} {
  func.func @_mm_bias_act_kernel(%arg0: i32, %arg1: memref<8x576xbf16, #tpu.memory_space<vmem>>, %arg2: memref<576x512xbf16, #tpu.memory_space<vmem>>, %arg3: memref<1x512xf32, #tpu.memory_space<vmem>>, %arg4: memref<8x512xbf16, #tpu.memory_space<vmem>>) attributes {dimension_semantics = [#tpu.dimension_semantics<parallel>], iteration_bounds = array<i64: 1>, scalar_prefetch = 0 : i64, scratch_operands = 0 : i64, tpu.core_type = #tpu.core_type<tc>, window_params = [{transform_indices = @transform_0, window_bounds = array<i64: 8, 576>}, {pipeline_mode = #tpu.pipeline_mode<synchronous>, transform_indices = @transform_1, window_bounds = array<i64: 576, 512>}, {pipeline_mode = #tpu.pipeline_mode<synchronous>, transform_indices = @transform_2, window_bounds = array<i64: 1, 512>}, {transform_indices = @transform_3, window_bounds = array<i64: 8, 512>}]} {
    %c0 = arith.constant 0 : index
    %c0_0 = arith.constant 0 : index
    %0 = vector.load %arg1[%c0, %c0_0] : memref<8x576xbf16, #tpu.memory_space<vmem>>, vector<8x576xbf16>
    %c0_1 = arith.constant 0 : index
    %c0_2 = arith.constant 0 : index
    %1 = vector.load %arg2[%c0_1, %c0_2] : memref<576x512xbf16, #tpu.memory_space<vmem>>, vector<576x512xbf16>
    %cst = arith.constant dense<0.000000e+00> : vector<8x512xf32>
    %2 = tpu.matmul %0, %1, %cst {dimension_numbers = #tpu.dot_dimension_numbers<[1], [0], [0], [1], [0, 0, 1, 1], [], []>} : vector<8x576xbf16>, vector<576x512xbf16>, vector<8x512xf32> -> vector<8x512xf32>
    %c0_3 = arith.constant 0 : index
    %c0_4 = arith.constant 0 : index
    %3 = vector.load %arg3[%c0_3, %c0_4] : memref<1x512xf32, #tpu.memory_space<vmem>>, vector<1x512xf32>
    %4 = vector.broadcast %3 : vector<1x512xf32> to vector<8x512xf32>
    %5 = arith.addf %2, %4 : vector<8x512xf32>
    %cst_5 = arith.constant 0.000000e+00 : f32
    %6 = vector.broadcast %cst_5 : f32 to vector<8x512xf32>
    %7 = arith.maximumf %5, %6 : vector<8x512xf32>
    %8 = arith.truncf %7 : vector<8x512xf32> to vector<8x512xbf16>
    %c0_6 = arith.constant 0 : index
    %c0_7 = arith.constant 0 : index
    %9 = vector.load %arg4[%c0_6, %c0_7] : memref<8x512xbf16, #tpu.memory_space<vmem>>, vector<8x512xbf16>
    tpu.vector_store %arg4[%c0_6, %c0_7], %8 {strides = array<i32>} : memref<8x512xbf16, #tpu.memory_space<vmem>>, vector<8x512xbf16>,
    return
  }
  func.func @transform_0(%arg0: i32) -> (i32, i32) {
    %c0_i32 = arith.constant 0 : i32
    %c0_i32_0 = arith.constant 0 : i32
    return %arg0, %c0_i32 : i32, i32
  }
  func.func @transform_1(%arg0: i32) -> (i32, i32) {
    %c0_i32 = arith.constant 0 : i32
    %c0_i32_0 = arith.constant 0 : i32
    %c0_i32_1 = arith.constant 0 : i32
    return %c0_i32, %c0_i32_0 : i32, i32
  }
  func.func @transform_2(%arg0: i32) -> (i32, i32) {
    %c0_i32 = arith.constant 0 : i32
    %c0_i32_0 = arith.constant 0 : i32
    %c0_i32_1 = arith.constant 0 : i32
    return %c0_i32, %c0_i32_0 : i32, i32
  }
  func.func @transform_3(%arg0: i32) -> (i32, i32) {
    %c0_i32 = arith.constant 0 : i32
    %c0_i32_0 = arith.constant 0 : i32
    return %arg0, %c0_i32 : i32, i32
  }
}

module attributes {stable_mosaic.version = 11 : i64} {
  func.func @_mm_bias_act_kernel(%arg0: i32, %arg1: memref<8x512xbf16, #tpu.memory_space<vmem>>, %arg2: memref<512x128xbf16, #tpu.memory_space<vmem>>, %arg3: memref<1x128xf32, #tpu.memory_space<vmem>>, %arg4: memref<8x128xf32, #tpu.memory_space<vmem>>) attributes {dimension_semantics = [#tpu.dimension_semantics<parallel>], iteration_bounds = array<i64: 1>, scalar_prefetch = 0 : i64, scratch_operands = 0 : i64, tpu.core_type = #tpu.core_type<tc>, window_params = [{transform_indices = @transform_0, window_bounds = array<i64: 8, 512>}, {pipeline_mode = #tpu.pipeline_mode<synchronous>, transform_indices = @transform_1, window_bounds = array<i64: 512, 128>}, {pipeline_mode = #tpu.pipeline_mode<synchronous>, transform_indices = @transform_2, window_bounds = array<i64: 1, 128>}, {transform_indices = @transform_3, window_bounds = array<i64: 8, 128>}]} {
    %c0 = arith.constant 0 : index
    %c0_0 = arith.constant 0 : index
    %0 = vector.load %arg1[%c0, %c0_0] : memref<8x512xbf16, #tpu.memory_space<vmem>>, vector<8x512xbf16>
    %c0_1 = arith.constant 0 : index
    %c0_2 = arith.constant 0 : index
    %1 = vector.load %arg2[%c0_1, %c0_2] : memref<512x128xbf16, #tpu.memory_space<vmem>>, vector<512x128xbf16>
    %cst = arith.constant dense<0.000000e+00> : vector<8x128xf32>
    %2 = tpu.matmul %0, %1, %cst {dimension_numbers = #tpu.dot_dimension_numbers<[1], [0], [0], [1], [0, 0, 1, 1], [], []>} : vector<8x512xbf16>, vector<512x128xbf16>, vector<8x128xf32> -> vector<8x128xf32>
    %c0_3 = arith.constant 0 : index
    %c0_4 = arith.constant 0 : index
    %3 = vector.load %arg3[%c0_3, %c0_4] : memref<1x128xf32, #tpu.memory_space<vmem>>, vector<1x128xf32>
    %4 = vector.broadcast %3 : vector<1x128xf32> to vector<8x128xf32>
    %5 = arith.addf %2, %4 : vector<8x128xf32>
    %cst_5 = arith.constant 0.000000e+00 : f32
    %6 = vector.broadcast %cst_5 : f32 to vector<8x128xf32>
    %7 = arith.maximumf %5, %6 : vector<8x128xf32>
    %c0_6 = arith.constant 0 : index
    %c0_7 = arith.constant 0 : index
    %8 = vector.load %arg4[%c0_6, %c0_7] : memref<8x128xf32, #tpu.memory_space<vmem>>, vector<8x128xf32>
    tpu.vector_store %arg4[%c0_6, %c0_7], %7 {strides = array<i32>} : memref<8x128xf32, #tpu.memory_space<vmem>>, vector<8x128xf32>,
    return
  }
  func.func @transform_0(%arg0: i32) -> (i32, i32) {
    %c0_i32 = arith.constant 0 : i32
    %c0_i32_0 = arith.constant 0 : i32
    return %arg0, %c0_i32 : i32, i32
  }
  func.func @transform_1(%arg0: i32) -> (i32, i32) {
    %c0_i32 = arith.constant 0 : i32
    %c0_i32_0 = arith.constant 0 : i32
    %c0_i32_1 = arith.constant 0 : i32
    return %c0_i32, %c0_i32_0 : i32, i32
  }
  func.func @transform_2(%arg0: i32) -> (i32, i32) {
    %c0_i32 = arith.constant 0 : i32
    %c0_i32_0 = arith.constant 0 : i32
    %c0_i32_1 = arith.constant 0 : i32
    return %c0_i32, %c0_i32_0 : i32, i32
  }
  func.func @transform_3(%arg0: i32) -> (i32, i32) {
    %c0_i32 = arith.constant 0 : i32
    %c0_i32_0 = arith.constant 0 : i32
    return %arg0, %c0_i32 : i32, i32
  }
}

module attributes {stable_mosaic.version = 11 : i64} {
  func.func @_global_avgpool_kernel(%arg0: i32, %arg1: memref<1x4x128xf32, #tpu.memory_space<vmem>>, %arg2: memref<1x1x128xf32, #tpu.memory_space<vmem>>) attributes {dimension_semantics = [#tpu.dimension_semantics<parallel>], iteration_bounds = array<i64: 2>, scalar_prefetch = 0 : i64, scratch_operands = 0 : i64, tpu.core_type = #tpu.core_type<tc>, window_params = [{transform_indices = @transform_0, window_bounds = array<i64: 1, 4, 128>}, {transform_indices = @transform_1, window_bounds = array<i64: 1, 1, 128>}]} {
    %c0 = arith.constant 0 : index
    %c0_0 = arith.constant 0 : index
    %c0_1 = arith.constant 0 : index
    %0 = vector.load %arg1[%c0, %c0_0, %c0_1] : memref<1x4x128xf32, #tpu.memory_space<vmem>>, vector<1x4x128xf32>
    %1 = vector.shape_cast %0 : vector<1x4x128xf32> to vector<4x128xf32>
    %cst = arith.constant dense<0.000000e+00> : vector<128xf32>
    %2 = vector.multi_reduction <add>, %1, %cst [0] : vector<4x128xf32> to vector<128xf32>
    %3 = vector.shape_cast %2 : vector<128xf32> to vector<1x128xf32>
    %cst_2 = arith.constant 2.500000e-01 : f32
    %4 = vector.broadcast %cst_2 : f32 to vector<1x128xf32>
    %5 = arith.mulf %3, %4 : vector<1x128xf32>
    %c0_3 = arith.constant 0 : index
    %c0_4 = arith.constant 0 : index
    %c0_5 = arith.constant 0 : index
    %6 = vector.load %arg2[%c0_3, %c0_4, %c0_5] : memref<1x1x128xf32, #tpu.memory_space<vmem>>, vector<1x1x128xf32>
    %7 = vector.shape_cast %6 : vector<1x1x128xf32> to vector<1x128xf32>
    %8 = vector.shape_cast %5 : vector<1x128xf32> to vector<1x1x128xf32>
    tpu.vector_store %arg2[%c0_3, %c0_4, %c0_5], %8 {strides = array<i32>} : memref<1x1x128xf32, #tpu.memory_space<vmem>>, vector<1x1x128xf32>,
    return
  }
  func.func @transform_0(%arg0: i32) -> (i32, i32, i32) {
    %c0_i32 = arith.constant 0 : i32
    %c0_i32_0 = arith.constant 0 : i32
    %c0_i32_1 = arith.constant 0 : i32
    return %arg0, %c0_i32, %c0_i32_0 : i32, i32, i32
  }
  func.func @transform_1(%arg0: i32) -> (i32, i32, i32) {
    %c0_i32 = arith.constant 0 : i32
    %c0_i32_0 = arith.constant 0 : i32
    %c0_i32_1 = arith.constant 0 : i32
    return %arg0, %c0_i32, %c0_i32_0 : i32, i32, i32
  }
}

</mosaic_0001>

<llo_original>
// kernel: squeezenet_forward.22
$region0: #{squeezenet_forward.22}
  #allocation0 [shape = 'u32[]', space=smem, size = 0x4, offset = 0x4, fixed_abs, tag = 'smem constant byte address 0x4 - core index']
  #allocation1 [shape = 'u32[144,128]{1,0:T(1,128)}', space=vmem, size = 0x12000, scoped, tag = 'internal scratch']
  %s0 = inlined_call_operand.vmem [shape: bf16[1280,27], index: 0, kind: input, shape index: {}]
  %s1 = inlined_call_operand.vmem [shape: bf16[27,64], index: 1, kind: input, shape index: {}]
  %s2 = inlined_call_operand.vmem [shape: f32[1,64], index: 2, kind: input, shape index: {}]
  %s3 = inlined_call_operand.vmem [shape: bf16[1280,64], index: 3, kind: output, shape index: {}]
  %s4 = sld [smem:[#allocation0]]
  $region45: #{squeezenet_forward.22} parent=0
    _
  %s6 = ssub.s32 1, %s4
  %s7 = scalar_select 0, %s6, %s4
  loop: start=0, step=1, limit=7
  $region2: #{squeezenet_forward.22} parent=0 // loop_pre_header
    _
  $region3: #{squeezenet_forward.22} parent=0 // loop_header
    %s9 = sphi 0, %s13
    %p10 = scmp.ge.s32.totalorder %s9, 7
    %s19 = sphi 0, %s21
    %s22 = sphi 0, %s19
    %s23 = sphi 0, %s22
    %s39 = sphi 0, %s23
    %s43 = sphi 0, %s43
    %s45 = sphi 0, %s43
    %s46 = sphi 0, %s45
    %s60 = sphi 0, %s46
    %s64 = sphi 0, %s64
    %s66 = sphi 0, %s64
    %s67 = sphi 0, %s66
    %s81 = sphi 0, %s67
    %s87 = sphi 0, %s89
    %s90 = sphi 0, %s87
    %s91 = sphi 0, %s90
    %s107 = sphi 0, %s91
  $region4: #{squeezenet_forward.22} parent=0 // loop_header_branch
    %12 = sbr.rel (%p10) target = $region8
  $region5: #{squeezenet_forward.22} parent=0 // loop_body
    %s14 = ssub.s32 %s9, 1
    %s15 = ssub.s32 %s9, 2
    %s16 = sadd.s32 %s9, 1
    %s17 = ssub.s32 %s9, %s16
    %p18 = scmp.eq.s32.totalorder %s17, 0
    %s20 = sadd.s32 %s19, 1
    %s21 = scalar_select %p18, %s19, %s20
    %p24 = pneg %p18
    %p25 = scmp.eq.s32.totalorder %s9, 4
    %p26 = por %p24, %p25
    %p27 = scmp.ne.s32.totalorder %s19, %s22
    %p28 = scmp.eq.s32.totalorder %s9, 0
    %p29 = por %p27, %p28
    %p30 = scmp.ne.s32.totalorder %s19, %s22
    %p31 = scmp.eq.s32.totalorder %s14, 4
    %p32 = por %p30, %p31
    %p33 = scmp.ne.s32.totalorder %s22, %s23
    %p34 = scmp.eq.s32.totalorder %s14, 0
    %p35 = por %p33, %p34
    %p36 = scmp.ne.s32.totalorder %s22, %s23
    %p37 = scmp.eq.s32.totalorder %s15, 4
    %p38 = por %p36, %p37
    %p40 = scmp.ne.s32.totalorder %s23, %s39
    %p41 = scmp.eq.s32.totalorder %s15, 0
    %p42 = por %p40, %p41
    %s44 = sadd.s32 %s43, 1
    %p47 = scmp.eq.s32.totalorder %s9, 4
    %p48 = scmp.ne.s32.totalorder %s43, %s45
    %p49 = scmp.eq.s32.totalorder %s9, 0
    %p50 = por %p48, %p49
    %p51 = scmp.ne.s32.totalorder %s43, %s45
    %p52 = scmp.eq.s32.totalorder %s14, 4
    %p53 = por %p51, %p52
    %p54 = scmp.ne.s32.totalorder %s45, %s46
    %p55 = scmp.eq.s32.totalorder %s14, 0
    %p56 = por %p54, %p55
    %p57 = scmp.ne.s32.totalorder %s45, %s46
    %p58 = scmp.eq.s32.totalorder %s15, 4
    %p59 = por %p57, %p58
    %p61 = scmp.ne.s32.totalorder %s46, %s60
    %p62 = scmp.eq.s32.totalorder %s15, 0
    %p63 = por %p61, %p62
    %s65 = sadd.s32 %s64, 1
    %p68 = scmp.eq.s32.totalorder %s9, 4
    %p69 = scmp.ne.s32.totalorder %s64, %s66
    %p70 = scmp.eq.s32.totalorder %s9, 0
    %p71 = por %p69, %p70
    %p72 = scmp.ne.s32.totalorder %s64, %s66
    %p73 = scmp.eq.s32.totalorder %s14, 4
    %p74 = por %p72, %p73
    %p75 = scmp.ne.s32.totalorder %s66, %s67
    %p76 = scmp.eq.s32.totalorder %s14, 0
    %p77 = por %p75, %p76
    %p78 = scmp.ne.s32.totalorder %s66, %s67
    %p79 = scmp.eq.s32.totalorder %s15, 4
    %p80 = por %p78, %p79
    %p82 = scmp.ne.s32.totalorder %s67, %s81
    %p83 = scmp.eq.s32.totalorder %s15, 0
    %p84 = por %p82, %p83
    %s85 = ssub.s32 %s9, %s16
    %p86 = scmp.eq.s32.totalorder %s85, 0
    %s88 = sadd.s32 %s87, 1
    %s89 = scalar_select %p86, %s87, %s88
    %p92 = pneg %p86
    %p93 = scmp.eq.s32.totalorder %s9, 4
    %p94 = por %p92, %p93
    %p95 = scmp.ne.s32.totalorder %s87, %s90
    %p96 = scmp.eq.s32.totalorder %s9, 0
    %p97 = por %p95, %p96
    %p98 = scmp.ne.s32.totalorder %s87, %s90
    %p99 = scmp.eq.s32.totalorder %s14, 4
    %p100 = por %p98, %p99
    %p101 = scmp.ne.s32.totalorder %s90, %s91
    %p102 = scmp.eq.s32.totalorder %s14, 0
    %p103 = por %p101, %p102
    %p104 = scmp.ne.s32.totalorder %s90, %s91
    %p105 = scmp.eq.s32.totalorder %s15, 4
    %p106 = por %p104, %p105
    %p108 = scmp.ne.s32.totalorder %s91, %s107
    %p109 = scmp.eq.s32.totalorder %s15, 0
    %p110 = por %p108, %p109
    %p111 = scmp.le.s32.totalorder 1, %s9
    %p112 = scmp.lt.s32.totalorder %s9, 6
    %p113 = pnand %p111, %p112
    %p114 = pneg %p113
    // Predicated region
    $region9: #{squeezenet_forward.22} parent=5 // pred_check
      _
    $region10: #{squeezenet_forward.22} parent=5 // pred_check_branch
      %116 = sbr.rel (%p113) target = $region12
    $region11: #{squeezenet_forward.22} parent=5 // pred_region
      %s117 = ssub.s32 %s9, 1
      // Predicated region
      $region13: #{squeezenet_forward.22} parent=11 // pred_check
        %p118 = pneg %p56
      $region14: #{squeezenet_forward.22} parent=11 // pred_check_branch
        %120 = sbr.rel (%p118) target = $region16
      $region15: #{squeezenet_forward.22} parent=11 // pred_region
        _
      $region16: #{squeezenet_forward.22} parent=11 // pred_fallthru
        _
      // Predicated region
      $region17: #{squeezenet_forward.22} parent=11 // pred_check
        %p121 = pneg %p77
      $region18: #{squeezenet_forward.22} parent=11 // pred_check_branch
        %123 = sbr.rel (%p121) target = $region20
      $region19: #{squeezenet_forward.22} parent=11 // pred_region
        _
      $region20: #{squeezenet_forward.22} parent=11 // pred_fallthru
        _
    $region12: #{squeezenet_forward.22} parent=5 // pred_fallthru
      _
    %p124 = scmp.lt.s32.totalorder %s9, 5
    // Predicated region
    $region21: #{squeezenet_forward.22} parent=5 // pred_check
      %p125 = pneg %p124
    $region22: #{squeezenet_forward.22} parent=5 // pred_check_branch
      %127 = sbr.rel (%p125) target = $region24
    $region23: #{squeezenet_forward.22} parent=5 // pred_region
      // Predicated region
      $region25: #{squeezenet_forward.22} parent=23 // pred_check
        %p128 = pneg %p29
      $region26: #{squeezenet_forward.22} parent=23 // pred_check_branch
        %130 = sbr.rel (%p128) target = $region28
      $region27: #{squeezenet_forward.22} parent=23 // pred_region
        %s131 = smul.u32 32, %s9
        %p132 = scmp.lt.s32.totalorder %s131, 159
        %s133 = scalar_select %p132, %s131, 159
        %s134 = smul.addr %s133, 4
        %s135 = scalar_lea.vmem %s0, %s134
        %s136 = smul.u32 32, %s9
      $region28: #{squeezenet_forward.22} parent=23 // pred_fallthru
        _
    $region24: #{squeezenet_forward.22} parent=5 // pred_fallthru
      _
    %p137 = scmp.le.s32.totalorder 1, %s9
    %p138 = scmp.lt.s32.totalorder %s9, 6
    %p139 = pnand %p137, %p138
    %p140 = pneg %p139
    // Predicated region
    $region29: #{squeezenet_forward.22} parent=5 // pred_check
      _
    $region30: #{squeezenet_forward.22} parent=5 // pred_check_branch
      %142 = sbr.rel (%p139) target = $region32
    $region31: #{squeezenet_forward.22} parent=5 // pred_region
      %s143 = ssub.s32 %s9, 1
      %s144 = smul.u32 32, %s14
      %p145 = scmp.lt.s32.totalorder %s144, 159
      %s146 = scalar_select %p145, %s144, 159
      %s147 = smul.addr %s146, 4
      %s148 = scalar_lea.vmem %s0, %s147
      %p149 = pneg %p35
      %p150 = pneg %p32
      %p151 = pneg %p56
      %p152 = pneg %p53
      %p153 = pneg %p77
      %p154 = pneg %p74
      %p155 = pneg %p103
      %p156 = pneg %p100
      %s157 = smul.u32 32, %s14
      %p158 = scmp.lt.s32.totalorder %s157, 159
      %s159 = scalar_select %p158, %s157, 159
      %s160 = smul.addr %s159, 4
      %s161 = scalar_lea.vmem %s3, %s160
      %s162 = smul.u32 32, %s14
      %p163 = scmp.lt.s32.totalorder %s162, 159
      %s164 = scalar_select %p163, %s162, 159
      %s165 = smul.addr %s164, 4
      %s166 = scalar_lea.vmem %s0, %s165
      %s167 = smul.u32 32, %s14
      %s168 = smul.u32 32, %s14
      %p169 = scmp.lt.s32.totalorder %s168, 159
      %s170 = scalar_select %p169, %s168, 159
      %s171 = smul.addr %s170, 4
      %s172 = scalar_lea.vmem %s3, %s171
      %s173 = smul.u32 32, %s14
      %v175 = vld [vmem:[%s166] sm:$0xf]
      %v176 = vld [vmem:[%s166 + $0x4] sm:$0xf]
      %v177 = vld [vmem:[%s166 + $0x8] sm:$0xf]
      %v178 = vld [vmem:[%s166 + $0xc] sm:$0xf]
      %v179 = vld [vmem:[%s166 + $0x10] sm:$0xf]
      %v180 = vld [vmem:[%s166 + $0x14] sm:$0xf]
      %v181 = vld [vmem:[%s166 + $0x18] sm:$0xf]
      %v182 = vld [vmem:[%s166 + $0x1c] sm:$0xf]
      %v183 = vld [vmem:[%s166 + $0x20] sm:$0xf]
      %v184 = vld [vmem:[%s166 + $0x24] sm:$0xf]
      %v185 = vld [vmem:[%s166 + $0x28] sm:$0xf]
      %v186 = vld [vmem:[%s166 + $0x2c] sm:$0xf]
      %v187 = vld [vmem:[%s166 + $0x30] sm:$0xf]
      %v188 = vld [vmem:[%s166 + $0x34] sm:$0xf]
      %v189 = vld [vmem:[%s166 + $0x38] sm:$0xf]
      %v190 = vld [vmem:[%s166 + $0x3c] sm:$0xf]
      %v191 = vld [vmem:[%s166 + $0x40] sm:$0xf]
      %v192 = vld [vmem:[%s166 + $0x44] sm:$0xf]
      %v193 = vld [vmem:[%s166 + $0x48] sm:$0xf]
      %v194 = vld [vmem:[%s166 + $0x4c] sm:$0xf]
      %v195 = vld [vmem:[%s166 + $0x50] sm:$0xf]
      %v196 = vld [vmem:[%s166 + $0x54] sm:$0xf]
      %v197 = vld [vmem:[%s166 + $0x58] sm:$0xf]
      %v198 = vld [vmem:[%s166 + $0x5c] sm:$0xf]
      %v199 = vld [vmem:[%s166 + $0x60] sm:$0xf]
      %v200 = vld [vmem:[%s166 + $0x64] sm:$0xf]
      %v201 = vld [vmem:[%s166 + $0x68] sm:$0xf]
      %v202 = vld [vmem:[%s166 + $0x6c] sm:$0xf]
      %v203 = vld [vmem:[%s166 + $0x70] sm:$0xf]
      %v204 = vld [vmem:[%s166 + $0x74] sm:$0xf]
      %v205 = vld [vmem:[%s166 + $0x78] sm:$0xf]
      %v206 = vld [vmem:[%s166 + $0x7c] sm:$0xf]
      %v207 = vld [vmem:[%s1] sm:$0xf]
      %v208 = vld [vmem:[%s1 + $0x4] sm:$0xf]
      %v209 = vld [vmem:[%s1 + $0x8] sm:$0xf]
      %v210 = vld [vmem:[%s1 + $0xc] sm:$0x3]
      %v211 = vld [vmem:[%s2] sm:$0x1]
      %v213 = vlaneseq
      %v214 = vshrl.u32 %v213, 7
      %v215 = vsub.s32 0, %v214
      %v216 = vrot.slane %v211, %v215
      %v250 = vunpack.c.l.b16 %v175
      %v251 = vunpack.c.l.b16 %v176
      %v252 = vunpack.c.l.b16 %v177
      %v253 = vunpack.c.l.b16 %v178
      %v254 = vunpack.c.l.b16 %v179
      %v255 = vunpack.c.l.b16 %v180
      %v256 = vunpack.c.l.b16 %v181
      %v257 = vunpack.c.l.b16 %v182
      %v258 = vunpack.c.l.b16 %v183
      %v259 = vunpack.c.l.b16 %v184
      %v260 = vunpack.c.l.b16 %v185
      %v261 = vunpack.c.l.b16 %v186
      %v262 = vunpack.c.l.b16 %v187
      %v263 = vunpack.c.l.b16 %v188
      %v264 = vunpack.c.l.b16 %v189
      %v265 = vunpack.c.l.b16 %v190
      %v266 = vunpack.c.l.b16 %v191
      %v267 = vunpack.c.l.b16 %v192
      %v268 = vunpack.c.l.b16 %v193
      %v269 = vunpack.c.l.b16 %v194
      %v270 = vunpack.c.l.b16 %v195
      %v271 = vunpack.c.l.b16 %v196
      %v272 = vunpack.c.l.b16 %v197
      %v273 = vunpack.c.l.b16 %v198
      %v274 = vunpack.c.l.b16 %v199
      %v275 = vunpack.c.l.b16 %v200
      %v276 = vunpack.c.l.b16 %v201
      %v277 = vunpack.c.l.b16 %v202
      %v278 = vunpack.c.l.b16 %v203
      %v279 = vunpack.c.l.b16 %v204
      %v280 = vunpack.c.l.b16 %v205
      %v281 = vunpack.c.l.b16 %v206
      %v282 = vpack.c.b16 %v251, %v250
      %v283 = vpack.c.b16 %v253, %v252
      %v284 = vpack.c.b16 %v255, %v254
      %v285 = vpack.c.b16 %v257, %v256
      %v286 = vpack.c.b16 %v259, %v258
      %v287 = vpack.c.b16 %v261, %v260
      %v288 = vpack.c.b16 %v263, %v262
      %v289 = vpack.c.b16 %v265, %v264
      %v290 = vpack.c.b16 %v267, %v266
      %v291 = vpack.c.b16 %v269, %v268
      %v292 = vpack.c.b16 %v271, %v270
      %v293 = vpack.c.b16 %v273, %v272
      %v294 = vpack.c.b16 %v275, %v274
      %v295 = vpack.c.b16 %v277, %v276
      %v296 = vpack.c.b16 %v279, %v278
      %v297 = vpack.c.b16 %v281, %v280
      %v302 = vunpack.c.l.b16 %v207
      %v303 = vunpack.c.l.b16 %v208
      %v304 = vunpack.c.l.b16 %v209
      %v305 = vunpack.c.l.b16 %v210
      %v306 = vpack.c.b16 %v303, %v302
      %v307 = vpack.c.b16 %v305, %v304
      %vm309 = vcmask 220160
      %v311 = vsel %vm309, %v282, 0
      %v314 = vsel %vm309, %v283, 0
      %v317 = vsel %vm309, %v284, 0
      %v320 = vsel %vm309, %v285, 0
      %v323 = vsel %vm309, %v286, 0
      %v326 = vsel %vm309, %v287, 0
      %v329 = vsel %vm309, %v288, 0
      %v332 = vsel %vm309, %v289, 0
      %v335 = vsel %vm309, %v290, 0
      %v338 = vsel %vm309, %v291, 0
      %v341 = vsel %vm309, %v292, 0
      %v344 = vsel %vm309, %v293, 0
      %v347 = vsel %vm309, %v294, 0
      %v350 = vsel %vm309, %v295, 0
      %v353 = vsel %vm309, %v296, 0
      %v356 = vsel %vm309, %v297, 0
      %vm358 = vcmask 1044480
      %vm359 = vcmask 1045504
      %v360 = vsel %vm358, 4294967295, 65535
      %v361 = vsel %vm359, %v360, 0
      %v363 = vand.u32 %v307, %v361
      %365 = vmatprep.subr.bf16.mxu0 0
      %366 = vmatpush1.bf16.msra.mxu0 %v306
      %367 = vmatprep.subr.bf16.mxu0 0
      %368 = vmatpush1.bf16.msra.mxu0 %v363
      %369 = vmatprep.subr.bf16.mxu0 0
      %370 = vmatpush1.bf16.msra.mxu0 0
      %371 = vmatprep.subr.bf16.mxu0 0
      %372 = vmatpush1.bf16.msra.mxu0 0
      %373 = vmatprep.subr.bf16.mxu0 0
      %374 = vmatpush1.bf16.msra.mxu0 0
      %375 = vmatprep.subr.bf16.mxu0 0
      %376 = vmatpush1.bf16.msra.mxu0 0
      %377 = vmatprep.subr.bf16.mxu0 0
      %378 = vmatpush1.bf16.msra.mxu0 0
      %379 = vmatprep.subr.bf16.mxu0 0
      %380 = vmatpush1.bf16.msra.mxu0 0
      %381 = vmatprep.subr.bf16.mxu0 0
      %382 = vmatpush1.bf16.msra.mxu0 0
      %383 = vmatprep.subr.bf16.mxu0 0
      %384 = vmatpush1.bf16.msra.mxu0 0
      %385 = vmatprep.subr.bf16.mxu0 0
      %386 = vmatpush1.bf16.msra.mxu0 0
      %387 = vmatprep.subr.bf16.mxu0 0
      %388 = vmatpush1.bf16.msra.mxu0 0
      %389 = vmatprep.subr.bf16.mxu0 0
      %390 = vmatpush1.bf16.msra.mxu0 0
      %391 = vmatprep.subr.bf16.mxu0 0
      %392 = vmatpush1.bf16.msra.mxu0 0
      %393 = vmatprep.subr.bf16.mxu0 0
      %394 = vmatpush1.bf16.msra.mxu0 0
      %395 = vmatprep.subr.bf16.mxu0 0
      %396 = vmatpush1.bf16.msra.mxu0 0
      %397 = vmatprep.mubr.bf16.mxu0 0
      %398 = vmatmul.mubr.bf16.gmra.mrb[0].mxu0 %v311
      %v399 = vpop.f32.mrb[0].mxu0
      %v400 = vadd.f32 %v216, %v399
      %v401 = vpop.f32.mrb[0].mxu0
      %v402 = vpop.f32.mrb[0].mxu0
      %v403 = vadd.f32 %v216, %v402
      %v404 = vpop.f32.mrb[0].mxu0
      %405 = vmatprep.mubr.bf16.mxu0 0
      %406 = vmatmul.mubr.bf16.gmra.mrb[0].mxu0 %v314
      %v407 = vpop.f32.mrb[0].mxu0
      %v408 = vadd.f32 %v216, %v407
      %v409 = vpop.f32.mrb[0].mxu0
      %v410 = vpop.f32.mrb[0].mxu0
      %v411 = vadd.f32 %v216, %v410
      %v412 = vpop.f32.mrb[0].mxu0
      %413 = vmatprep.mubr.bf16.mxu0 0
      %414 = vmatmul.mubr.bf16.gmra.mrb[0].mxu0 %v317
      %v415 = vpop.f32.mrb[0].mxu0
      %v416 = vadd.f32 %v216, %v415
      %v417 = vpop.f32.mrb[0].mxu0
      %v418 = vpop.f32.mrb[0].mxu0
      %v419 = vadd.f32 %v216, %v418
      %v420 = vpop.f32.mrb[0].mxu0
      %421 = vmatprep.mubr.bf16.mxu0 0
      %422 = vmatmul.mubr.bf16.gmra.mrb[0].mxu0 %v320
      %v423 = vpop.f32.mrb[0].mxu0
      %v424 = vadd.f32 %v216, %v423
      %v425 = vpop.f32.mrb[0].mxu0
      %v426 = vpop.f32.mrb[0].mxu0
      %v427 = vadd.f32 %v216, %v426
      %v428 = vpop.f32.mrb[0].mxu0
      %429 = vmatprep.mubr.bf16.mxu0 0
      %430 = vmatmul.mubr.bf16.gmra.mrb[0].mxu0 %v323
      %v431 = vpop.f32.mrb[0].mxu0
      %v432 = vadd.f32 %v216, %v431
      %v433 = vpop.f32.mrb[0].mxu0
      %v434 = vpop.f32.mrb[0].mxu0
      %v435 = vadd.f32 %v216, %v434
      %v436 = vpop.f32.mrb[0].mxu0
      %437 = vmatprep.mubr.bf16.mxu0 0
      %438 = vmatmul.mubr.bf16.gmra.mrb[0].mxu0 %v326
      %v439 = vpop.f32.mrb[0].mxu0
      %v440 = vadd.f32 %v216, %v439
      %v441 = vpop.f32.mrb[0].mxu0
      %v442 = vpop.f32.mrb[0].mxu0
      %v443 = vadd.f32 %v216, %v442
      %v444 = vpop.f32.mrb[0].mxu0
      %445 = vmatprep.mubr.bf16.mxu0 0
      %446 = vmatmul.mubr.bf16.gmra.mrb[0].mxu0 %v329
      %v447 = vpop.f32.mrb[0].mxu0
      %v448 = vadd.f32 %v216, %v447
      %v449 = vpop.f32.mrb[0].mxu0
      %v450 = vpop.f32.mrb[0].mxu0
      %v451 = vadd.f32 %v216, %v450
      %v452 = vpop.f32.mrb[0].mxu0
      %453 = vmatprep.mubr.bf16.mxu0 0
      %454 = vmatmul.mubr.bf16.gmra.mrb[0].mxu0 %v332
      %v455 = vpop.f32.mrb[0].mxu0
      %v456 = vadd.f32 %v216, %v455
      %v457 = vpop.f32.mrb[0].mxu0
      %v458 = vpop.f32.mrb[0].mxu0
      %v459 = vadd.f32 %v216, %v458
      %v460 = vpop.f32.mrb[0].mxu0
      %461 = vmatprep.mubr.bf16.mxu0 0
      %462 = vmatmul.mubr.bf16.gmra.mrb[0].mxu0 %v335
      %v463 = vpop.f32.mrb[0].mxu0
      %v464 = vadd.f32 %v216, %v463
      %v465 = vpop.f32.mrb[0].mxu0
      %v466 = vpop.f32.mrb[0].mxu0
      %v467 = vadd.f32 %v216, %v466
      %v468 = vpop.f32.mrb[0].mxu0
      %469 = vmatprep.mubr.bf16.mxu0 0
      %470 = vmatmul.mubr.bf16.gmra.mrb[0].mxu0 %v338
      %v471 = vpop.f32.mrb[0].mxu0
      %v472 = vadd.f32 %v216, %v471
      %v473 = vpop.f32.mrb[0].mxu0
      %v474 = vpop.f32.mrb[0].mxu0
      %v475 = vadd.f32 %v216, %v474
      %v476 = vpop.f32.mrb[0].mxu0
      %477 = vmatprep.mubr.bf16.mxu0 0
      %478 = vmatmul.mubr.bf16.gmra.mrb[0].mxu0 %v341
      %v479 = vpop.f32.mrb[0].mxu0
      %v480 = vadd.f32 %v216, %v479
      %v481 = vpop.f32.mrb[0].mxu0
      %v482 = vpop.f32.mrb[0].mxu0
      %v483 = vadd.f32 %v216, %v482
      %v484 = vpop.f32.mrb[0].mxu0
      %485 = vmatprep.mubr.bf16.mxu0 0
      %486 = vmatmul.mubr.bf16.gmra.mrb[0].mxu0 %v344
      %v487 = vpop.f32.mrb[0].mxu0
      %v488 = vadd.f32 %v216, %v487
      %v489 = vpop.f32.mrb[0].mxu0
      %v490 = vpop.f32.mrb[0].mxu0
      %v491 = vadd.f32 %v216, %v490
      %v492 = vpop.f32.mrb[0].mxu0
      %493 = vmatprep.mubr.bf16.mxu0 0
      %494 = vmatmul.mubr.bf16.gmra.mrb[0].mxu0 %v347
      %v495 = vpop.f32.mrb[0].mxu0
      %v496 = vadd.f32 %v216, %v495
      %v497 = vpop.f32.mrb[0].mxu0
      %v498 = vpop.f32.mrb[0].mxu0
      %v499 = vadd.f32 %v216, %v498
      %v500 = vpop.f32.mrb[0].mxu0
      %501 = vmatprep.mubr.bf16.mxu0 0
      %502 = vmatmul.mubr.bf16.gmra.mrb[0].mxu0 %v350
      %v503 = vpop.f32.mrb[0].mxu0
      %v504 = vadd.f32 %v216, %v503
      %v505 = vpop.f32.mrb[0].mxu0
      %v506 = vpop.f32.mrb[0].mxu0
      %v507 = vadd.f32 %v216, %v506
      %v508 = vpop.f32.mrb[0].mxu0
      %509 = vmatprep.mubr.bf16.mxu0 0
      %510 = vmatmul.mubr.bf16.gmra.mrb[0].mxu0 %v353
      %v511 = vpop.f32.mrb[0].mxu0
      %v512 = vadd.f32 %v216, %v511
      %v513 = vpop.f32.mrb[0].mxu0
      %v514 = vpop.f32.mrb[0].mxu0
      %v515 = vadd.f32 %v216, %v514
      %v516 = vpop.f32.mrb[0].mxu0
      %517 = vmatprep.mubr.bf16.mxu0 0
      %518 = vmatmul.mubr.bf16.gmra.mrb[0].mxu0 %v356
      %v519 = vpop.f32.mrb[0].mxu0
      %v520 = vadd.f32 %v216, %v519
      %v521 = vpop.f32.mrb[0].mxu0
      %v522 = vpop.f32.mrb[0].mxu0
      %v523 = vadd.f32 %v216, %v522
      %v524 = vpop.f32.mrb[0].mxu0
      %525 = vdwg.mxu0
      %v526 = vmax.f32 %v400, 0.0
      %v527 = vmax.f32 %v403, 0.0
      %v528 = vmax.f32 %v408, 0.0
      %v529 = vmax.f32 %v411, 0.0
      %v530 = vmax.f32 %v416, 0.0
      %v531 = vmax.f32 %v419, 0.0
      %v532 = vmax.f32 %v424, 0.0
      %v533 = vmax.f32 %v427, 0.0
      %v534 = vmax.f32 %v432, 0.0
      %v535 = vmax.f32 %v435, 0.0
      %v536 = vmax.f32 %v440, 0.0
      %v537 = vmax.f32 %v443, 0.0
      %v538 = vmax.f32 %v448, 0.0
      %v539 = vmax.f32 %v451, 0.0
      %v540 = vmax.f32 %v456, 0.0
      %v541 = vmax.f32 %v459, 0.0
      %v542 = vmax.f32 %v464, 0.0
      %v543 = vmax.f32 %v467, 0.0
      %v544 = vmax.f32 %v472, 0.0
      %v545 = vmax.f32 %v475, 0.0
      %v546 = vmax.f32 %v480, 0.0
      %v547 = vmax.f32 %v483, 0.0
      %v548 = vmax.f32 %v488, 0.0
      %v549 = vmax.f32 %v491, 0.0
      %v550 = vmax.f32 %v496, 0.0
      %v551 = vmax.f32 %v499, 0.0
      %v552 = vmax.f32 %v504, 0.0
      %v553 = vmax.f32 %v507, 0.0
      %v554 = vmax.f32 %v512, 0.0
      %v555 = vmax.f32 %v515, 0.0
      %v556 = vmax.f32 %v520, 0.0
      %v557 = vmax.f32 %v523, 0.0
      %v558 = vpack.c.bf16 %v527, %v526
      %v559 = vpack.c.bf16 %v529, %v528
      %v560 = vpack.c.bf16 %v531, %v530
      %v561 = vpack.c.bf16 %v533, %v532
      %v562 = vpack.c.bf16 %v535, %v534
      %v563 = vpack.c.bf16 %v537, %v536
      %v564 = vpack.c.bf16 %v539, %v538
      %v565 = vpack.c.bf16 %v541, %v540
      %v566 = vpack.c.bf16 %v543, %v542
      %v567 = vpack.c.bf16 %v545, %v544
      %v568 = vpack.c.bf16 %v547, %v546
      %v569 = vpack.c.bf16 %v549, %v548
      %v570 = vpack.c.bf16 %v551, %v550
      %v571 = vpack.c.bf16 %v553, %v552
      %v572 = vpack.c.bf16 %v555, %v554
      %v573 = vpack.c.bf16 %v557, %v556
      %v590 = vunpack.c.l.b16 %v558
      %v591 = vunpack.c.h.b16 %v558
      %v592 = vunpack.c.l.b16 %v559
      %v593 = vunpack.c.h.b16 %v559
      %v594 = vunpack.c.l.b16 %v560
      %v595 = vunpack.c.h.b16 %v560
      %v596 = vunpack.c.l.b16 %v561
      %v597 = vunpack.c.h.b16 %v561
      %v598 = vunpack.c.l.b16 %v562
      %v599 = vunpack.c.h.b16 %v562
      %v600 = vunpack.c.l.b16 %v563
      %v601 = vunpack.c.h.b16 %v563
      %v602 = vunpack.c.l.b16 %v564
      %v603 = vunpack.c.h.b16 %v564
      %v604 = vunpack.c.l.b16 %v565
      %v605 = vunpack.c.h.b16 %v565
      %v606 = vunpack.c.l.b16 %v566
      %v607 = vunpack.c.h.b16 %v566
      %v608 = vunpack.c.l.b16 %v567
      %v609 = vunpack.c.h.b16 %v567
      %v610 = vunpack.c.l.b16 %v568
      %v611 = vunpack.c.h.b16 %v568
      %v612 = vunpack.c.l.b16 %v569
      %v613 = vunpack.c.h.b16 %v569
      %v614 = vunpack.c.l.b16 %v570
      %v615 = vunpack.c.h.b16 %v570
      %v616 = vunpack.c.l.b16 %v571
      %v617 = vunpack.c.h.b16 %v571
      %v618 = vunpack.c.l.b16 %v572
      %v619 = vunpack.c.h.b16 %v572
      %v620 = vunpack.c.l.b16 %v573
      %v621 = vunpack.c.h.b16 %v573
      %v622 = vpack.c.b16 %v590, %v590
      %v623 = vpack.c.b16 %v591, %v591
      %v624 = vpack.c.b16 %v592, %v592
      %v625 = vpack.c.b16 %v593, %v593
      %v626 = vpack.c.b16 %v594, %v594
      %v627 = vpack.c.b16 %v595, %v595
      %v628 = vpack.c.b16 %v596, %v596
      %v629 = vpack.c.b16 %v597, %v597
      %v630 = vpack.c.b16 %v598, %v598
      %v631 = vpack.c.b16 %v599, %v599
      %v632 = vpack.c.b16 %v600, %v600
      %v633 = vpack.c.b16 %v601, %v601
      %v634 = vpack.c.b16 %v602, %v602
      %v635 = vpack.c.b16 %v603, %v603
      %v636 = vpack.c.b16 %v604, %v604
      %v637 = vpack.c.b16 %v605, %v605
      %v638 = vpack.c.b16 %v606, %v606
      %v639 = vpack.c.b16 %v607, %v607
      %v640 = vpack.c.b16 %v608, %v608
      %v641 = vpack.c.b16 %v609, %v609
      %v642 = vpack.c.b16 %v610, %v610
      %v643 = vpack.c.b16 %v611, %v611
      %v644 = vpack.c.b16 %v612, %v612
      %v645 = vpack.c.b16 %v613, %v613
      %v646 = vpack.c.b16 %v614, %v614
      %v647 = vpack.c.b16 %v615, %v615
      %v648 = vpack.c.b16 %v616, %v616
      %v649 = vpack.c.b16 %v617, %v617
      %v650 = vpack.c.b16 %v618, %v618
      %v651 = vpack.c.b16 %v619, %v619
      %v652 = vpack.c.b16 %v620, %v620
      %v653 = vpack.c.b16 %v621, %v621
      %vm686 = vcmask 519168
      %687 = vst.msk [vmem:[%s172] sm:$0xf] %vm686, %v622
      %688 = vst.msk [vmem:[%s172 + $0x4] sm:$0xf] %vm686, %v623
      %689 = vst.msk [vmem:[%s172 + $0x8] sm:$0xf] %vm686, %v624
      %690 = vst.msk [vmem:[%s172 + $0xc] sm:$0xf] %vm686, %v625
      %691 = vst.msk [vmem:[%s172 + $0x10] sm:$0xf] %vm686, %v626
      %692 = vst.msk [vmem:[%s172 + $0x14] sm:$0xf] %vm686, %v627
      %693 = vst.msk [vmem:[%s172 + $0x18] sm:$0xf] %vm686, %v628
      %694 = vst.msk [vmem:[%s172 + $0x1c] sm:$0xf] %vm686, %v629
      %695 = vst.msk [vmem:[%s172 + $0x20] sm:$0xf] %vm686, %v630
      %696 = vst.msk [vmem:[%s172 + $0x24] sm:$0xf] %vm686, %v631
      %697 = vst.msk [vmem:[%s172 + $0x28] sm:$0xf] %vm686, %v632
      %698 = vst.msk [vmem:[%s172 + $0x2c] sm:$0xf] %vm686, %v633
      %699 = vst.msk [vmem:[%s172 + $0x30] sm:$0xf] %vm686, %v634
      %700 = vst.msk [vmem:[%s172 + $0x34] sm:$0xf] %vm686, %v635
      %701 = vst.msk [vmem:[%s172 + $0x38] sm:$0xf] %vm686, %v636
      %702 = vst.msk [vmem:[%s172 + $0x3c] sm:$0xf] %vm686, %v637
      %703 = vst.msk [vmem:[%s172 + $0x40] sm:$0xf] %vm686, %v638
      %704 = vst.msk [vmem:[%s172 + $0x44] sm:$0xf] %vm686, %v639
      %705 = vst.msk [vmem:[%s172 + $0x48] sm:$0xf] %vm686, %v640
      %706 = vst.msk [vmem:[%s172 + $0x4c] sm:$0xf] %vm686, %v641
      %707 = vst.msk [vmem:[%s172 + $0x50] sm:$0xf] %vm686, %v642
      %708 = vst.msk [vmem:[%s172 + $0x54] sm:$0xf] %vm686, %v643
      %709 = vst.msk [vmem:[%s172 + $0x58] sm:$0xf] %vm686, %v644
      %710 = vst.msk [vmem:[%s172 + $0x5c] sm:$0xf] %vm686, %v645
      %711 = vst.msk [vmem:[%s172 + $0x60] sm:$0xf] %vm686, %v646
      %712 = vst.msk [vmem:[%s172 + $0x64] sm:$0xf] %vm686, %v647
      %713 = vst.msk [vmem:[%s172 + $0x68] sm:$0xf] %vm686, %v648
      %714 = vst.msk [vmem:[%s172 + $0x6c] sm:$0xf] %vm686, %v649
      %715 = vst.msk [vmem:[%s172 + $0x70] sm:$0xf] %vm686, %v650
      %716 = vst.msk [vmem:[%s172 + $0x74] sm:$0xf] %vm686, %v651
      %717 = vst.msk [vmem:[%s172 + $0x78] sm:$0xf] %vm686, %v652
      %718 = vst.msk [vmem:[%s172 + $0x7c] sm:$0xf] %vm686, %v653
      %s719 = smul.u32 32, %s14
      %p720 = scmp.lt.s32.totalorder %s719, 159
      %s721 = scalar_select %p720, %s719, 159
      %s722 = smul.addr %s721, 4
      %s723 = scalar_lea.vmem %s3, %s722
      // Predicated region
      $region33: #{squeezenet_forward.22} parent=31 // pred_check
        %p724 = pneg %p100
      $region34: #{squeezenet_forward.22} parent=31 // pred_check_branch
        %726 = sbr.rel (%p724) target = $region36
      $region35: #{squeezenet_forward.22} parent=31 // pred_region
        %s727 = smul.u32 32, %s14
      $region36: #{squeezenet_forward.22} parent=31 // pred_fallthru
        _
    $region32: #{squeezenet_forward.22} parent=5 // pred_fallthru
      _
    %p728 = scmp.le.s32.totalorder 2, %s9
    // Predicated region
    $region37: #{squeezenet_forward.22} parent=5 // pred_check
      %p729 = pneg %p728
    $region38: #{squeezenet_forward.22} parent=5 // pred_check_branch
      %731 = sbr.rel (%p729) target = $region40
    $region39: #{squeezenet_forward.22} parent=5 // pred_region
      %s732 = ssub.s32 %s9, 2
      // Predicated region
      $region41: #{squeezenet_forward.22} parent=39 // pred_check
        %p733 = pneg %p106
      $region42: #{squeezenet_forward.22} parent=39 // pred_check_branch
        %735 = sbr.rel (%p733) target = $region44
      $region43: #{squeezenet_forward.22} parent=39 // pred_region
        %s736 = smul.u32 32, %s15
        %p737 = scmp.lt.s32.totalorder %s736, 159
        %s738 = scalar_select %p737, %s736, 159
        %s739 = smul.addr %s738, 4
        %s740 = scalar_lea.vmem %s3, %s739
      $region44: #{squeezenet_forward.22} parent=39 // pred_fallthru
        _
    $region40: #{squeezenet_forward.22} parent=5 // pred_fallthru
      _
  $region6: #{squeezenet_forward.22} parent=0 // loop_footer
    %s13 = sadd.s32 1, %s9
  $region7: #{squeezenet_forward.22} parent=0 // loop_footer_branch
    %8 = sbr.rel target = $region3
  $region8: #{squeezenet_forward.22} parent=0 // loop_exit
    _

// kernel: squeezenet_forward.23
$region0: #{squeezenet_forward.23}
  #allocation0 [shape = 'u32[]', space=smem, size = 0x4, offset = 0x4, fixed_abs, tag = 'smem constant byte address 0x4 - core index']
  #allocation1 [shape = 'u32[144,128]{1,0:T(1,128)}', space=vmem, size = 0x12000, scoped, tag = 'internal scratch']
  %s0 = inlined_call_operand.vmem [shape: bf16[24,2,12,128], index: 0, kind: input, shape index: {}]
  %s1 = inlined_call_operand.vmem [shape: bf16[2,11,11,64], index: 1, kind: output, shape index: {}]
  %s2 = sld [smem:[#allocation0]]
  $region37: #{squeezenet_forward.23} parent=0
    _
  %s4 = ssub.s32 1, %s2
  %s5 = scalar_select 0, %s4, %s2
  loop: start=0, step=1, limit=4
  $region2: #{squeezenet_forward.23} parent=0 // loop_pre_header
    _
  $region3: #{squeezenet_forward.23} parent=0 // loop_header
    %s7 = sphi 0, %s11
    %p8 = scmp.ge.s32.totalorder %s7, 4
    %s17 = sphi 0, %s19
    %s20 = sphi 0, %s17
    %s21 = sphi 0, %s20
    %s37 = sphi 0, %s21
    %s43 = sphi 0, %s45
    %s46 = sphi 0, %s43
    %s47 = sphi 0, %s46
    %s63 = sphi 0, %s47
  $region4: #{squeezenet_forward.23} parent=0 // loop_header_branch
    %10 = sbr.rel (%p8) target = $region8
  $region5: #{squeezenet_forward.23} parent=0 // loop_body
    %s12 = ssub.s32 %s7, 1
    %s13 = ssub.s32 %s7, 2
    %s14 = sadd.s32 %s7, 1
    %s15 = ssub.s32 %s7, %s14
    %p16 = scmp.eq.s32.totalorder %s15, 0
    %s18 = sadd.s32 %s17, 1
    %s19 = scalar_select %p16, %s17, %s18
    %p22 = pneg %p16
    %p23 = scmp.eq.s32.totalorder %s7, 1
    %p24 = por %p22, %p23
    %p25 = scmp.ne.s32.totalorder %s17, %s20
    %p26 = scmp.eq.s32.totalorder %s7, 0
    %p27 = por %p25, %p26
    %p28 = scmp.ne.s32.totalorder %s17, %s20
    %p29 = scmp.eq.s32.totalorder %s12, 1
    %p30 = por %p28, %p29
    %p31 = scmp.ne.s32.totalorder %s20, %s21
    %p32 = scmp.eq.s32.totalorder %s12, 0
    %p33 = por %p31, %p32
    %p34 = scmp.ne.s32.totalorder %s20, %s21
    %p35 = scmp.eq.s32.totalorder %s13, 1
    %p36 = por %p34, %p35
    %p38 = scmp.ne.s32.totalorder %s21, %s37
    %p39 = scmp.eq.s32.totalorder %s13, 0
    %p40 = por %p38, %p39
    %s41 = ssub.s32 %s7, %s14
    %p42 = scmp.eq.s32.totalorder %s41, 0
    %s44 = sadd.s32 %s43, 1
    %s45 = scalar_select %p42, %s43, %s44
    %p48 = pneg %p42
    %p49 = scmp.eq.s32.totalorder %s7, 1
    %p50 = por %p48, %p49
    %p51 = scmp.ne.s32.totalorder %s43, %s46
    %p52 = scmp.eq.s32.totalorder %s7, 0
    %p53 = por %p51, %p52
    %p54 = scmp.ne.s32.totalorder %s43, %s46
    %p55 = scmp.eq.s32.totalorder %s12, 1
    %p56 = por %p54, %p55
    %p57 = scmp.ne.s32.totalorder %s46, %s47
    %p58 = scmp.eq.s32.totalorder %s12, 0
    %p59 = por %p57, %p58
    %p60 = scmp.ne.s32.totalorder %s46, %s47
    %p61 = scmp.eq.s32.totalorder %s13, 1
    %p62 = por %p60, %p61
    %p64 = scmp.ne.s32.totalorder %s47, %s63
    %p65 = scmp.eq.s32.totalorder %s13, 0
    %p66 = por %p64, %p65
    %p67 = scmp.le.s32.totalorder 1, %s7
    %p68 = scmp.lt.s32.totalorder %s7, 3
    %p69 = pnand %p67, %p68
    %p70 = pneg %p69
    // Predicated region
    $region9: #{squeezenet_forward.23} parent=5 // pred_check
      _
    $region10: #{squeezenet_forward.23} parent=5 // pred_check_branch
      %72 = sbr.rel (%p69) target = $region12
    $region11: #{squeezenet_forward.23} parent=5 // pred_region
      %s73 = ssub.s32 %s7, 1
    $region12: #{squeezenet_forward.23} parent=5 // pred_fallthru
      _
    %p74 = scmp.lt.s32.totalorder %s7, 2
    // Predicated region
    $region13: #{squeezenet_forward.23} parent=5 // pred_check
      %p75 = pneg %p74
    $region14: #{squeezenet_forward.23} parent=5 // pred_check_branch
      %77 = sbr.rel (%p75) target = $region16
    $region15: #{squeezenet_forward.23} parent=5 // pred_region
      // Predicated region
      $region17: #{squeezenet_forward.23} parent=15 // pred_check
        %p78 = pneg %p27
      $region18: #{squeezenet_forward.23} parent=15 // pred_check_branch
        %80 = sbr.rel (%p78) target = $region20
      $region19: #{squeezenet_forward.23} parent=15 // pred_region
        %s81 = smul.u32 12, %s7
        %p82 = scmp.lt.s32.totalorder %s81, 23
        %s83 = scalar_select %p82, %s81, 23
        %s84 = smul.addr %s83, 4
        %s85 = smul.addr %s84, 4
        %s86 = scalar_lea.vmem %s0, %s85
        %s87 = smul.u32 12, %s7
      $region20: #{squeezenet_forward.23} parent=15 // pred_fallthru
        _
    $region16: #{squeezenet_forward.23} parent=5 // pred_fallthru
      _
    %p88 = scmp.le.s32.totalorder 1, %s7
    %p89 = scmp.lt.s32.totalorder %s7, 3
    %p90 = pnand %p88, %p89
    %p91 = pneg %p90
    // Predicated region
    $region21: #{squeezenet_forward.23} parent=5 // pred_check
      _
    $region22: #{squeezenet_forward.23} parent=5 // pred_check_branch
      %93 = sbr.rel (%p90) target = $region24
    $region23: #{squeezenet_forward.23} parent=5 // pred_region
      %s94 = ssub.s32 %s7, 1
      %s95 = smul.u32 12, %s12
      %p96 = scmp.lt.s32.totalorder %s95, 23
      %s97 = scalar_select %p96, %s95, 23
      %s98 = smul.addr %s97, 4
      %s99 = smul.addr %s98, 4
      %s100 = scalar_lea.vmem %s0, %s99
      %p101 = pneg %p33
      %p102 = pneg %p30
      %p103 = pneg %p59
      %p104 = pneg %p56
      %p105 = scmp.lt.s32.totalorder %s12, 1
      %s106 = scalar_select %p105, %s12, 1
      %s107 = smul.addr %s106, 22
      %s108 = smul.addr %s107, 4
      %s109 = scalar_lea.vmem %s1, %s108
      %s110 = smul.u32 12, %s12
      %p111 = scmp.lt.s32.totalorder %s110, 23
      %s112 = scalar_select %p111, %s110, 23
      %s113 = smul.addr %s112, 4
      %s114 = smul.addr %s113, 4
      %s115 = scalar_lea.vmem %s0, %s114
      %s116 = smul.u32 12, %s12
      %p117 = scmp.lt.s32.totalorder %s12, 1
      %s118 = scalar_select %p117, %s12, 1
      %s119 = smul.addr %s118, 22
      %s120 = smul.addr %s119, 4
      %s121 = scalar_lea.vmem %s1, %s120
      %v122 = vld [vmem:[%s115] sm:$0xf]
      %v123 = vld [vmem:[%s115 + $0x4] sm:$0x3]
      %v124 = vld [vmem:[%s115 + $0x8] sm:$0xf]
      %v125 = vld [vmem:[%s115 + $0xc] sm:$0x3]
      %v126 = vld [vmem:[%s115 + $0x10] sm:$0xf]
      %v127 = vld [vmem:[%s115 + $0x14] sm:$0x3]
      %v128 = vld [vmem:[%s115 + $0x18] sm:$0xf]
      %v129 = vld [vmem:[%s115 + $0x1c] sm:$0x3]
      %v130 = vld [vmem:[%s115 + $0x20] sm:$0xf]
      %v131 = vld [vmem:[%s115 + $0x24] sm:$0x3]
      %v132 = vld [vmem:[%s115 + $0x28] sm:$0xf]
      %v133 = vld [vmem:[%s115 + $0x2c] sm:$0x3]
      %v134 = vld [vmem:[%s115 + $0x30] sm:$0xf]
      %v135 = vld [vmem:[%s115 + $0x34] sm:$0x3]
      %v136 = vld [vmem:[%s115 + $0x38] sm:$0xf]
      %v137 = vld [vmem:[%s115 + $0x3c] sm:$0x3]
      %v138 = vld [vmem:[%s115 + $0x40] sm:$0xf]
      %v139 = vld [vmem:[%s115 + $0x44] sm:$0x3]
      %v140 = vld [vmem:[%s115 + $0x48] sm:$0xf]
      %v141 = vld [vmem:[%s115 + $0x4c] sm:$0x3]
      %v142 = vld [vmem:[%s115 + $0x50] sm:$0xf]
      %v143 = vld [vmem:[%s115 + $0x54] sm:$0x3]
      %v144 = vld [vmem:[%s115 + $0x58] sm:$0xf]
      %v145 = vld [vmem:[%s115 + $0x5c] sm:$0x3]
      %v146 = vld [vmem:[%s115 + $0x60] sm:$0xf]
      %v147 = vld [vmem:[%s115 + $0x64] sm:$0x3]
      %v148 = vld [vmem:[%s115 + $0x68] sm:$0xf]
      %v149 = vld [vmem:[%s115 + $0x6c] sm:$0x3]
      %v150 = vld [vmem:[%s115 + $0x70] sm:$0xf]
      %v151 = vld [vmem:[%s115 + $0x74] sm:$0x3]
      %v152 = vld [vmem:[%s115 + $0x78] sm:$0xf]
      %v153 = vld [vmem:[%s115 + $0x7c] sm:$0x3]
      %v154 = vld [vmem:[%s115 + $0x80] sm:$0xf]
      %v155 = vld [vmem:[%s115 + $0x84] sm:$0x3]
      %v156 = vld [vmem:[%s115 + $0x88] sm:$0xf]
      %v157 = vld [vmem:[%s115 + $0x8c] sm:$0x3]
      %v158 = vld [vmem:[%s115 + $0x90] sm:$0xf]
      %v159 = vld [vmem:[%s115 + $0x94] sm:$0x3]
      %v160 = vld [vmem:[%s115 + $0x98] sm:$0xf]
      %v161 = vld [vmem:[%s115 + $0x9c] sm:$0x3]
      %v162 = vld [vmem:[%s115 + $0xa0] sm:$0xf]
      %v163 = vld [vmem:[%s115 + $0xa4] sm:$0x3]
      %v164 = vld [vmem:[%s115 + $0xa8] sm:$0xf]
      %v165 = vld [vmem:[%s115 + $0xac] sm:$0x3]
      %v166 = vld [vmem:[%s115 + $0xb0] sm:$0xf]
      %v167 = vld [vmem:[%s115 + $0xb4] sm:$0x3]
      %v168 = vmax.bf16 %v122, %v124
      %v169 = vmax.bf16 %v123, %v125
      %v170 = vmax.bf16 %v126, %v128
      %v171 = vmax.bf16 %v127, %v129
      %v172 = vmax.bf16 %v130, %v132
      %v173 = vmax.bf16 %v131, %v133
      %v174 = vmax.bf16 %v134, %v136
      %v175 = vmax.bf16 %v135, %v137
      %v176 = vmax.bf16 %v138, %v140
      %v177 = vmax.bf16 %v139, %v141
      %v178 = vmax.bf16 %v142, %v144
      %v179 = vmax.bf16 %v143, %v145
      %v180 = vmax.bf16 %v146, %v148
      %v181 = vmax.bf16 %v147, %v149
      %v182 = vmax.bf16 %v150, %v152
      %v183 = vmax.bf16 %v151, %v153
      %v184 = vmax.bf16 %v154, %v156
      %v185 = vmax.bf16 %v155, %v157
      %v186 = vmax.bf16 %v158, %v160
      %v187 = vmax.bf16 %v159, %v161
      %v188 = vmax.bf16 %v162, %v164
      %v189 = vmax.bf16 %v163, %v165
      %v190 = vmax.bf16 %v168, %v126
      %v191 = vmax.bf16 %v169, %v127
      %v192 = vmax.bf16 %v170, %v130
      %v193 = vmax.bf16 %v171, %v131
      %v194 = vmax.bf16 %v172, %v134
      %v195 = vmax.bf16 %v173, %v135
      %v196 = vmax.bf16 %v174, %v138
      %v197 = vmax.bf16 %v175, %v139
      %v198 = vmax.bf16 %v176, %v142
      %v199 = vmax.bf16 %v177, %v143
      %v200 = vmax.bf16 %v178, %v146
      %v201 = vmax.bf16 %v179, %v147
      %v202 = vmax.bf16 %v180, %v150
      %v203 = vmax.bf16 %v181, %v151
      %v204 = vmax.bf16 %v182, %v154
      %v205 = vmax.bf16 %v183, %v155
      %v206 = vmax.bf16 %v184, %v158
      %v207 = vmax.bf16 %v185, %v159
      %v208 = vmax.bf16 %v186, %v162
      %v209 = vmax.bf16 %v187, %v163
      %v210 = vmax.bf16 %v188, %v166
      %v211 = vmax.bf16 %v189, %v167
      %234 = vrot.lane.b32.xlu0 %v190, 64
      %v235 = vpop.permute.xlu0 %234
      %236 = vrot.lane.b32.xlu0 %v191, 64
      %v237 = vpop.permute.xlu0 %236
      %238 = vrot.lane.b32.xlu0 %v192, 64
      %v239 = vpop.permute.xlu0 %238
      %240 = vrot.lane.b32.xlu0 %v193, 64
      %v241 = vpop.permute.xlu0 %240
      %242 = vrot.lane.b32.xlu0 %v194, 64
      %v243 = vpop.permute.xlu0 %242
      %244 = vrot.lane.b32.xlu0 %v195, 64
      %v245 = vpop.permute.xlu0 %244
      %246 = vrot.lane.b32.xlu0 %v196, 64
      %v247 = vpop.permute.xlu0 %246
      %248 = vrot.lane.b32.xlu0 %v197, 64
      %v249 = vpop.permute.xlu0 %248
      %250 = vrot.lane.b32.xlu0 %v198, 64
      %v251 = vpop.permute.xlu0 %250
      %252 = vrot.lane.b32.xlu0 %v199, 64
      %v253 = vpop.permute.xlu0 %252
      %254 = vrot.lane.b32.xlu0 %v200, 64
      %v255 = vpop.permute.xlu0 %254
      %256 = vrot.lane.b32.xlu0 %v201, 64
      %v257 = vpop.permute.xlu0 %256
      %258 = vrot.lane.b32.xlu0 %v202, 64
      %v259 = vpop.permute.xlu0 %258
      %260 = vrot.lane.b32.xlu0 %v203, 64
      %v261 = vpop.permute.xlu0 %260
      %262 = vrot.lane.b32.xlu0 %v204, 64
      %v263 = vpop.permute.xlu0 %262
      %264 = vrot.lane.b32.xlu0 %v205, 64
      %v265 = vpop.permute.xlu0 %264
      %266 = vrot.lane.b32.xlu0 %v206, 64
      %v267 = vpop.permute.xlu0 %266
      %268 = vrot.lane.b32.xlu0 %v207, 64
      %v269 = vpop.permute.xlu0 %268
      %270 = vrot.lane.b32.xlu0 %v208, 64
      %v271 = vpop.permute.xlu0 %270
      %272 = vrot.lane.b32.xlu0 %v209, 64
      %v273 = vpop.permute.xlu0 %272
      %274 = vrot.lane.b32.xlu0 %v210, 64
      %v275 = vpop.permute.xlu0 %274
      %276 = vrot.lane.b32.xlu0 %v211, 64
      %v277 = vpop.permute.xlu0 %276
      %v300 = vmax.bf16 %v190, %v235
      %v301 = vmax.bf16 %v191, %v237
      %v302 = vmax.bf16 %v192, %v239
      %v303 = vmax.bf16 %v193, %v241
      %v304 = vmax.bf16 %v194, %v243
      %v305 = vmax.bf16 %v195, %v245
      %v306 = vmax.bf16 %v196, %v247
      %v307 = vmax.bf16 %v197, %v249
      %v308 = vmax.bf16 %v198, %v251
      %v309 = vmax.bf16 %v199, %v253
      %v310 = vmax.bf16 %v200, %v255
      %v311 = vmax.bf16 %v201, %v257
      %v312 = vmax.bf16 %v202, %v259
      %v313 = vmax.bf16 %v203, %v261
      %v314 = vmax.bf16 %v204, %v263
      %v315 = vmax.bf16 %v205, %v265
      %v316 = vmax.bf16 %v206, %v267
      %v317 = vmax.bf16 %v207, %v269
      %v318 = vmax.bf16 %v208, %v271
      %v319 = vmax.bf16 %v209, %v273
      %v320 = vmax.bf16 %v210, %v275
      %v321 = vmax.bf16 %v211, %v277
      %vm322 = vsmask.f32 3328
      %vm323 = vsmask.f32 7440
      %vm324 = vmor %vm322, %vm323
      %v326 = vshrl.u32 %v190, 16
      %v328 = vrot.slane %v326, 4
      %v329 = vshll.u32 %v190, 16
      %v331 = vrot.slane %v329, 5
      %v332 = vor.u32 %v328, %v331
      %v333 = vrot.slane %v332, 4
      %v335 = vshll.u32 %v191, 16
      %v337 = vrot.slane %v335, 5
      %v338 = vsel %vm324, %v333, %v337
      %v339 = vshrl.u32 %v191, 16
      %v341 = vrot.slane %v339, 4
      %v342 = vor.u32 %v341, %v337
      %v343 = vrot.slane %v342, 4
      %v345 = vshrl.u32 %v192, 16
      %v347 = vrot.slane %v345, 4
      %v348 = vshll.u32 %v192, 16
      %v350 = vrot.slane %v348, 5
      %v351 = vor.u32 %v347, %v350
      %v352 = vrot.slane %v351, 4
      %v354 = vshll.u32 %v193, 16
      %v356 = vrot.slane %v354, 5
      %v357 = vsel %vm324, %v352, %v356
      %v358 = vshrl.u32 %v193, 16
      %v360 = vrot.slane %v358, 4
      %v361 = vor.u32 %v360, %v356
      %v362 = vrot.slane %v361, 4
      %v364 = vshrl.u32 %v194, 16
      %v366 = vrot.slane %v364, 4
      %v367 = vshll.u32 %v194, 16
      %v369 = vrot.slane %v367, 5
      %v370 = vor.u32 %v366, %v369
      %v371 = vrot.slane %v370, 4
      %v373 = vshll.u32 %v195, 16
      %v375 = vrot.slane %v373, 5
      %v376 = vsel %vm324, %v371, %v375
      %v377 = vshrl.u32 %v195, 16
      %v379 = vrot.slane %v377, 4
      %v380 = vor.u32 %v379, %v375
      %v381 = vrot.slane %v380, 4
      %v383 = vshrl.u32 %v196, 16
      %v385 = vrot.slane %v383, 4
      %v386 = vshll.u32 %v196, 16
      %v388 = vrot.slane %v386, 5
      %v389 = vor.u32 %v385, %v388
      %v390 = vrot.slane %v389, 4
      %v392 = vshll.u32 %v197, 16
      %v394 = vrot.slane %v392, 5
      %v395 = vsel %vm324, %v390, %v394
      %v396 = vshrl.u32 %v197, 16
      %v398 = vrot.slane %v396, 4
      %v399 = vor.u32 %v398, %v394
      %v400 = vrot.slane %v399, 4
      %v402 = vshrl.u32 %v198, 16
      %v404 = vrot.slane %v402, 4
      %v405 = vshll.u32 %v198, 16
      %v407 = vrot.slane %v405, 5
      %v408 = vor.u32 %v404, %v407
      %v409 = vrot.slane %v408, 4
      %v411 = vshll.u32 %v199, 16
      %v413 = vrot.slane %v411, 5
      %v414 = vsel %vm324, %v409, %v413
      %v415 = vshrl.u32 %v199, 16
      %v417 = vrot.slane %v415, 4
      %v418 = vor.u32 %v417, %v413
      %v419 = vrot.slane %v418, 4
      %v421 = vshrl.u32 %v200, 16
      %v423 = vrot.slane %v421, 4
      %v424 = vshll.u32 %v200, 16
      %v426 = vrot.slane %v424, 5
      %v427 = vor.u32 %v423, %v426
      %v428 = vrot.slane %v427, 4
      %v430 = vshll.u32 %v201, 16
      %v432 = vrot.slane %v430, 5
      %v433 = vsel %vm324, %v428, %v432
      %v434 = vshrl.u32 %v201, 16
      %v436 = vrot.slane %v434, 4
      %v437 = vor.u32 %v436, %v432
      %v438 = vrot.slane %v437, 4
      %v440 = vshrl.u32 %v202, 16
      %v442 = vrot.slane %v440, 4
      %v443 = vshll.u32 %v202, 16
      %v445 = vrot.slane %v443, 5
      %v446 = vor.u32 %v442, %v445
      %v447 = vrot.slane %v446, 4
      %v449 = vshll.u32 %v203, 16
      %v451 = vrot.slane %v449, 5
      %v452 = vsel %vm324, %v447, %v451
      %v453 = vshrl.u32 %v203, 16
      %v455 = vrot.slane %v453, 4
      %v456 = vor.u32 %v455, %v451
      %v457 = vrot.slane %v456, 4
      %v459 = vshrl.u32 %v204, 16
      %v461 = vrot.slane %v459, 4
      %v462 = vshll.u32 %v204, 16
      %v464 = vrot.slane %v462, 5
      %v465 = vor.u32 %v461, %v464
      %v466 = vrot.slane %v465, 4
      %v468 = vshll.u32 %v205, 16
      %v470 = vrot.slane %v468, 5
      %v471 = vsel %vm324, %v466, %v470
      %v472 = vshrl.u32 %v205, 16
      %v474 = vrot.slane %v472, 4
      %v475 = vor.u32 %v474, %v470
      %v476 = vrot.slane %v475, 4
      %v478 = vshrl.u32 %v206, 16
      %v480 = vrot.slane %v478, 4
      %v481 = vshll.u32 %v206, 16
      %v483 = vrot.slane %v481, 5
      %v484 = vor.u32 %v480, %v483
      %v485 = vrot.slane %v484, 4
      %v487 = vshll.u32 %v207, 16
      %v489 = vrot.slane %v487, 5
      %v490 = vsel %vm324, %v485, %v489
      %v491 = vshrl.u32 %v207, 16
      %v493 = vrot.slane %v491, 4
      %v494 = vor.u32 %v493, %v489
      %v495 = vrot.slane %v494, 4
      %v497 = vshrl.u32 %v208, 16
      %v499 = vrot.slane %v497, 4
      %v500 = vshll.u32 %v208, 16
      %v502 = vrot.slane %v500, 5
      %v503 = vor.u32 %v499, %v502
      %v504 = vrot.slane %v503, 4
      %v506 = vshll.u32 %v209, 16
      %v508 = vrot.slane %v506, 5
      %v509 = vsel %vm324, %v504, %v508
      %v510 = vshrl.u32 %v209, 16
      %v512 = vrot.slane %v510, 4
      %v513 = vor.u32 %v512, %v508
      %v514 = vrot.slane %v513, 4
      %v516 = vshrl.u32 %v210, 16
      %v518 = vrot.slane %v516, 4
      %v519 = vshll.u32 %v210, 16
      %v521 = vrot.slane %v519, 5
      %v522 = vor.u32 %v518, %v521
      %v523 = vrot.slane %v522, 4
      %v525 = vshll.u32 %v211, 16
      %v527 = vrot.slane %v525, 5
      %v528 = vsel %vm324, %v523, %v527
      %v529 = vshrl.u32 %v211, 16
      %v531 = vrot.slane %v529, 4
      %v532 = vor.u32 %v531, %v527
      %v533 = vrot.slane %v532, 4
      %v556 = vmax.bf16 %v300, %v338
      %v557 = vmax.bf16 %v301, %v343
      %v558 = vmax.bf16 %v302, %v357
      %v559 = vmax.bf16 %v303, %v362
      %v560 = vmax.bf16 %v304, %v376
      %v561 = vmax.bf16 %v305, %v381
      %v562 = vmax.bf16 %v306, %v395
      %v563 = vmax.bf16 %v307, %v400
      %v564 = vmax.bf16 %v308, %v414
      %v565 = vmax.bf16 %v309, %v419
      %v566 = vmax.bf16 %v310, %v433
      %v567 = vmax.bf16 %v311, %v438
      %v568 = vmax.bf16 %v312, %v452
      %v569 = vmax.bf16 %v313, %v457
      %v570 = vmax.bf16 %v314, %v471
      %v571 = vmax.bf16 %v315, %v476
      %v572 = vmax.bf16 %v316, %v490
      %v573 = vmax.bf16 %v317, %v495
      %v574 = vmax.bf16 %v318, %v509
      %v575 = vmax.bf16 %v319, %v514
      %v576 = vmax.bf16 %v320, %v528
      %v577 = vmax.bf16 %v321, %v533
      %vm578 = vcmask 519168
      %579 = vst.msk [vmem:[%s121] sm:$0xf] %vm578, %v556
      %vm580 = vcmask 517120
      %vm581 = vsmask.f32 1280
      %vm582 = vmand %vm580, %vm581
      %v583 = vld [vmem:[%s121 + $0x4] sm:$0x3]
      %v584 = vsel %vm582, %v557, %v583
      %585 = vst [vmem:[%s121 + $0x4] sm:$0x3] %v584
      %586 = vst.msk [vmem:[%s121 + $0x8] sm:$0xf] %vm578, %v558
      %v587 = vld [vmem:[%s121 + $0xc] sm:$0x3]
      %v588 = vsel %vm582, %v559, %v587
      %589 = vst [vmem:[%s121 + $0xc] sm:$0x3] %v588
      %590 = vst.msk [vmem:[%s121 + $0x10] sm:$0xf] %vm578, %v560
      %v591 = vld [vmem:[%s121 + $0x14] sm:$0x3]
      %v592 = vsel %vm582, %v561, %v591
      %593 = vst [vmem:[%s121 + $0x14] sm:$0x3] %v592
      %594 = vst.msk [vmem:[%s121 + $0x18] sm:$0xf] %vm578, %v562
      %v595 = vld [vmem:[%s121 + $0x1c] sm:$0x3]
      %v596 = vsel %vm582, %v563, %v595
      %597 = vst [vmem:[%s121 + $0x1c] sm:$0x3] %v596
      %598 = vst.msk [vmem:[%s121 + $0x20] sm:$0xf] %vm578, %v564
      %v599 = vld [vmem:[%s121 + $0x24] sm:$0x3]
      %v600 = vsel %vm582, %v565, %v599
      %601 = vst [vmem:[%s121 + $0x24] sm:$0x3] %v600
      %602 = vst.msk [vmem:[%s121 + $0x28] sm:$0xf] %vm578, %v566
      %v603 = vld [vmem:[%s121 + $0x2c] sm:$0x3]
      %v604 = vsel %vm582, %v567, %v603
      %605 = vst [vmem:[%s121 + $0x2c] sm:$0x3] %v604
      %606 = vst.msk [vmem:[%s121 + $0x30] sm:$0xf] %vm578, %v568
      %v607 = vld [vmem:[%s121 + $0x34] sm:$0x3]
      %v608 = vsel %vm582, %v569, %v607
      %609 = vst [vmem:[%s121 + $0x34] sm:$0x3] %v608
      %610 = vst.msk [vmem:[%s121 + $0x38] sm:$0xf] %vm578, %v570
      %v611 = vld [vmem:[%s121 + $0x3c] sm:$0x3]
      %v612 = vsel %vm582, %v571, %v611
      %613 = vst [vmem:[%s121 + $0x3c] sm:$0x3] %v612
      %614 = vst.msk [vmem:[%s121 + $0x40] sm:$0xf] %vm578, %v572
      %v615 = vld [vmem:[%s121 + $0x44] sm:$0x3]
      %v616 = vsel %vm582, %v573, %v615
      %617 = vst [vmem:[%s121 + $0x44] sm:$0x3] %v616
      %618 = vst.msk [vmem:[%s121 + $0x48] sm:$0xf] %vm578, %v574
      %v619 = vld [vmem:[%s121 + $0x4c] sm:$0x3]
      %v620 = vsel %vm582, %v575, %v619
      %621 = vst [vmem:[%s121 + $0x4c] sm:$0x3] %v620
      %622 = vst.msk [vmem:[%s121 + $0x50] sm:$0xf] %vm578, %v576
      %v623 = vld [vmem:[%s121 + $0x54] sm:$0x3]
      %v624 = vsel %vm582, %v577, %v623
      %625 = vst [vmem:[%s121 + $0x54] sm:$0x3] %v624
      %p626 = scmp.lt.s32.totalorder %s12, 1
      %s627 = scalar_select %p626, %s12, 1
      %s628 = smul.addr %s627, 22
      %s629 = smul.addr %s628, 4
      %s630 = scalar_lea.vmem %s1, %s629
      // Predicated region
      $region25: #{squeezenet_forward.23} parent=23 // pred_check
        %p631 = pneg %p56
      $region26: #{squeezenet_forward.23} parent=23 // pred_check_branch
        %633 = sbr.rel (%p631) target = $region28
      $region27: #{squeezenet_forward.23} parent=23 // pred_region
        _
      $region28: #{squeezenet_forward.23} parent=23 // pred_fallthru
        _
    $region24: #{squeezenet_forward.23} parent=5 // pred_fallthru
      _
    %p634 = scmp.le.s32.totalorder 2, %s7
    // Predicated region
    $region29: #{squeezenet_forward.23} parent=5 // pred_check
      %p635 = pneg %p634
    $region30: #{squeezenet_forward.23} parent=5 // pred_check_branch
      %637 = sbr.rel (%p635) target = $region32
    $region31: #{squeezenet_forward.23} parent=5 // pred_region
      %s638 = ssub.s32 %s7, 2
      // Predicated region
      $region33: #{squeezenet_forward.23} parent=31 // pred_check
        %p639 = pneg %p62
      $region34: #{squeezenet_forward.23} parent=31 // pred_check_branch
        %641 = sbr.rel (%p639) target = $region36
      $region35: #{squeezenet_forward.23} parent=31 // pred_region
        %p642 = scmp.lt.s32.totalorder %s13, 1
        %s643 = scalar_select %p642, %s13, 1
        %s644 = smul.addr %s643, 22
        %s645 = smul.addr %s644, 4
        %s646 = scalar_lea.vmem %s1, %s645
      $region36: #{squeezenet_forward.23} parent=31 // pred_fallthru
        _
    $region32: #{squeezenet_forward.23} parent=5 // pred_fallthru
      _
  $region6: #{squeezenet_forward.23} parent=0 // loop_footer
    %s11 = sadd.s32 1, %s7
  $region7: #{squeezenet_forward.23} parent=0 // loop_footer_branch
    %6 = sbr.rel target = $region3
  $region8: #{squeezenet_forward.23} parent=0 // loop_exit
    _

// kernel: squeezenet_forward.24
$region0: #{squeezenet_forward.24}
  #allocation0 [shape = 'u32[]', space=smem, size = 0x4, offset = 0x4, fixed_abs, tag = 'smem constant byte address 0x4 - core index']
  #allocation1 [shape = 'u32[144,128]{1,0:T(1,128)}', space=vmem, size = 0x12000, scoped, tag = 'internal scratch']
  %s0 = inlined_call_operand.vmem [shape: bf16[248,64], index: 0, kind: input, shape index: {}]
  %s1 = inlined_call_operand.vmem [shape: bf16[64,16], index: 1, kind: input, shape index: {}]
  %s2 = inlined_call_operand.vmem [shape: f32[1,16], index: 2, kind: input, shape index: {}]
  %s3 = inlined_call_operand.vmem [shape: bf16[248,16], index: 3, kind: output, shape index: {}]
  %s4 = sld [smem:[#allocation0]]
  $region22: #{squeezenet_forward.24} parent=0
    _
  %s6 = ssub.s32 1, %s4
  %s7 = scalar_select 0, %s6, %s4
  // Predicated region
  $region2: #{squeezenet_forward.24} parent=0 // pred_check
    _
  $region3: #{squeezenet_forward.24} parent=0 // pred_check_branch
    %9 = sbr.rel (0) target = $region5
  $region4: #{squeezenet_forward.24} parent=0 // pred_region
    _
  $region5: #{squeezenet_forward.24} parent=0 // pred_fallthru
    _
  // Predicated region
  $region6: #{squeezenet_forward.24} parent=0 // pred_check
    _
  $region7: #{squeezenet_forward.24} parent=0 // pred_check_branch
    %11 = sbr.rel (0) target = $region9
  $region8: #{squeezenet_forward.24} parent=0 // pred_region
    _
  $region9: #{squeezenet_forward.24} parent=0 // pred_fallthru
    _
  // Predicated region
  $region10: #{squeezenet_forward.24} parent=0 // pred_check
    _
  $region11: #{squeezenet_forward.24} parent=0 // pred_check_branch
    %13 = sbr.rel (0) target = $region13
  $region12: #{squeezenet_forward.24} parent=0 // pred_region
    _
  $region13: #{squeezenet_forward.24} parent=0 // pred_fallthru
    _
  %v15 = vld [vmem:[%s0] sm:$0xf]
  %v16 = vld [vmem:[%s0 + $0x4] sm:$0xf]
  %v17 = vld [vmem:[%s0 + $0x8] sm:$0xf]
  %v18 = vld [vmem:[%s0 + $0xc] sm:$0xf]
  %v19 = vld [vmem:[%s0 + $0x10] sm:$0xf]
  %v20 = vld [vmem:[%s0 + $0x14] sm:$0xf]
  %v21 = vld [vmem:[%s0 + $0x18] sm:$0xf]
  %v22 = vld [vmem:[%s0 + $0x1c] sm:$0xf]
  %v23 = vld [vmem:[%s0 + $0x20] sm:$0xf]
  %v24 = vld [vmem:[%s0 + $0x24] sm:$0xf]
  %v25 = vld [vmem:[%s0 + $0x28] sm:$0xf]
  %v26 = vld [vmem:[%s0 + $0x2c] sm:$0xf]
  %v27 = vld [vmem:[%s0 + $0x30] sm:$0xf]
  %v28 = vld [vmem:[%s0 + $0x34] sm:$0xf]
  %v29 = vld [vmem:[%s0 + $0x38] sm:$0xf]
  %v30 = vld [vmem:[%s0 + $0x3c] sm:$0xf]
  %v31 = vld [vmem:[%s0 + $0x40] sm:$0xf]
  %v32 = vld [vmem:[%s0 + $0x44] sm:$0xf]
  %v33 = vld [vmem:[%s0 + $0x48] sm:$0xf]
  %v34 = vld [vmem:[%s0 + $0x4c] sm:$0xf]
  %v35 = vld [vmem:[%s0 + $0x50] sm:$0xf]
  %v36 = vld [vmem:[%s0 + $0x54] sm:$0xf]
  %v37 = vld [vmem:[%s0 + $0x58] sm:$0xf]
  %v38 = vld [vmem:[%s0 + $0x5c] sm:$0xf]
  %v39 = vld [vmem:[%s0 + $0x60] sm:$0xf]
  %v40 = vld [vmem:[%s0 + $0x64] sm:$0xf]
  %v41 = vld [vmem:[%s0 + $0x68] sm:$0xf]
  %v42 = vld [vmem:[%s0 + $0x6c] sm:$0xf]
  %v43 = vld [vmem:[%s0 + $0x70] sm:$0xf]
  %v44 = vld [vmem:[%s0 + $0x74] sm:$0xf]
  %v45 = vld [vmem:[%s0 + $0x78] sm:$0xf]
  %v46 = vld [vmem:[%s1] sm:$0xf]
  %v47 = vld [vmem:[%s1 + $0x4] sm:$0xf]
  %v48 = vld [vmem:[%s1 + $0x8] sm:$0xf]
  %v49 = vld [vmem:[%s1 + $0xc] sm:$0xf]
  %v50 = vld [vmem:[%s1 + $0x10] sm:$0xf]
  %v51 = vld [vmem:[%s1 + $0x14] sm:$0xf]
  %v52 = vld [vmem:[%s1 + $0x18] sm:$0xf]
  %v53 = vld [vmem:[%s1 + $0x1c] sm:$0xf]
  %v54 = vld [vmem:[%s2] sm:$0x1]
  %v56 = vlaneseq
  %v57 = vshrl.u32 %v56, 7
  %v58 = vsub.s32 0, %v57
  %v59 = vrot.slane %v54, %v58
  %v92 = vunpack.c.l.b16 %v15
  %v93 = vunpack.c.l.b16 %v16
  %v94 = vunpack.c.l.b16 %v17
  %v95 = vunpack.c.l.b16 %v18
  %v96 = vunpack.c.l.b16 %v19
  %v97 = vunpack.c.l.b16 %v20
  %v98 = vunpack.c.l.b16 %v21
  %v99 = vunpack.c.l.b16 %v22
  %v100 = vunpack.c.l.b16 %v23
  %v101 = vunpack.c.l.b16 %v24
  %v102 = vunpack.c.l.b16 %v25
  %v103 = vunpack.c.l.b16 %v26
  %v104 = vunpack.c.l.b16 %v27
  %v105 = vunpack.c.l.b16 %v28
  %v106 = vunpack.c.l.b16 %v29
  %v107 = vunpack.c.l.b16 %v30
  %v108 = vunpack.c.l.b16 %v31
  %v109 = vunpack.c.l.b16 %v32
  %v110 = vunpack.c.l.b16 %v33
  %v111 = vunpack.c.l.b16 %v34
  %v112 = vunpack.c.l.b16 %v35
  %v113 = vunpack.c.l.b16 %v36
  %v114 = vunpack.c.l.b16 %v37
  %v115 = vunpack.c.l.b16 %v38
  %v116 = vunpack.c.l.b16 %v39
  %v117 = vunpack.c.l.b16 %v40
  %v118 = vunpack.c.l.b16 %v41
  %v119 = vunpack.c.l.b16 %v42
  %v120 = vunpack.c.l.b16 %v43
  %v121 = vunpack.c.l.b16 %v44
  %v122 = vunpack.c.l.b16 %v45
  %v123 = vpack.c.b16 %v93, %v92
  %v124 = vpack.c.b16 %v95, %v94
  %v125 = vpack.c.b16 %v97, %v96
  %v126 = vpack.c.b16 %v99, %v98
  %v127 = vpack.c.b16 %v101, %v100
  %v128 = vpack.c.b16 %v103, %v102
  %v129 = vpack.c.b16 %v105, %v104
  %v130 = vpack.c.b16 %v107, %v106
  %v131 = vpack.c.b16 %v109, %v108
  %v132 = vpack.c.b16 %v111, %v110
  %v133 = vpack.c.b16 %v113, %v112
  %v134 = vpack.c.b16 %v115, %v114
  %v135 = vpack.c.b16 %v117, %v116
  %v136 = vpack.c.b16 %v119, %v118
  %v137 = vpack.c.b16 %v121, %v120
  %v138 = vpack.c.b16 %v122, %v122
  %v147 = vunpack.c.l.b16 %v46
  %v148 = vunpack.c.l.b16 %v47
  %v149 = vunpack.c.l.b16 %v48
  %v150 = vunpack.c.l.b16 %v49
  %v151 = vunpack.c.l.b16 %v50
  %v152 = vunpack.c.l.b16 %v51
  %v153 = vunpack.c.l.b16 %v52
  %v154 = vunpack.c.l.b16 %v53
  %v155 = vpack.c.b16 %v148, %v147
  %v156 = vpack.c.b16 %v150, %v149
  %v157 = vpack.c.b16 %v152, %v151
  %v158 = vpack.c.b16 %v154, %v153
  %vm163 = vcmask 523264
  %v165 = vsel %vm163, %v123, 0
  %v168 = vsel %vm163, %v124, 0
  %v171 = vsel %vm163, %v125, 0
  %v174 = vsel %vm163, %v126, 0
  %v177 = vsel %vm163, %v127, 0
  %v180 = vsel %vm163, %v128, 0
  %v183 = vsel %vm163, %v129, 0
  %v186 = vsel %vm163, %v130, 0
  %v189 = vsel %vm163, %v131, 0
  %v192 = vsel %vm163, %v132, 0
  %v195 = vsel %vm163, %v133, 0
  %v198 = vsel %vm163, %v134, 0
  %v201 = vsel %vm163, %v135, 0
  %v204 = vsel %vm163, %v136, 0
  %v207 = vsel %vm163, %v137, 0
  %v210 = vsel %vm163, %v138, 0
  %212 = vmatprep.subr.bf16.mxu0 0
  %213 = vmatpush1.bf16.msra.mxu0 %v155
  %214 = vmatprep.subr.bf16.mxu0 0
  %215 = vmatpush1.bf16.msra.mxu0 %v156
  %216 = vmatprep.subr.bf16.mxu0 0
  %217 = vmatpush1.bf16.msra.mxu0 %v157
  %218 = vmatprep.subr.bf16.mxu0 0
  %219 = vmatpush1.bf16.msra.mxu0 %v158
  %220 = vmatprep.subr.bf16.mxu0 0
  %221 = vmatpush1.bf16.msra.mxu0 0
  %222 = vmatprep.subr.bf16.mxu0 0
  %223 = vmatpush1.bf16.msra.mxu0 0
  %224 = vmatprep.subr.bf16.mxu0 0
  %225 = vmatpush1.bf16.msra.mxu0 0
  %226 = vmatprep.subr.bf16.mxu0 0
  %227 = vmatpush1.bf16.msra.mxu0 0
  %228 = vmatprep.subr.bf16.mxu0 0
  %229 = vmatpush1.bf16.msra.mxu0 0
  %230 = vmatprep.subr.bf16.mxu0 0
  %231 = vmatpush1.bf16.msra.mxu0 0
  %232 = vmatprep.subr.bf16.mxu0 0
  %233 = vmatpush1.bf16.msra.mxu0 0
  %234 = vmatprep.subr.bf16.mxu0 0
  %235 = vmatpush1.bf16.msra.mxu0 0
  %236 = vmatprep.subr.bf16.mxu0 0
  %237 = vmatpush1.bf16.msra.mxu0 0
  %238 = vmatprep.subr.bf16.mxu0 0
  %239 = vmatpush1.bf16.msra.mxu0 0
  %240 = vmatprep.subr.bf16.mxu0 0
  %241 = vmatpush1.bf16.msra.mxu0 0
  %242 = vmatprep.subr.bf16.mxu0 0
  %243 = vmatpush1.bf16.msra.mxu0 0
  %244 = vmatprep.mubr.bf16.mxu0 0
  %245 = vmatmul.mubr.bf16.gmra.mrb[0].mxu0 %v165
  %v246 = vpop.f32.mrb[0].mxu0
  %v247 = vadd.f32 %v59, %v246
  %v248 = vpop.f32.mrb[0].mxu0
  %v249 = vpop.f32.mrb[0].mxu0
  %v250 = vadd.f32 %v59, %v249
  %v251 = vpop.f32.mrb[0].mxu0
  %252 = vmatprep.mubr.bf16.mxu0 0
  %253 = vmatmul.mubr.bf16.gmra.mrb[0].mxu0 %v168
  %v254 = vpop.f32.mrb[0].mxu0
  %v255 = vadd.f32 %v59, %v254
  %v256 = vpop.f32.mrb[0].mxu0
  %v257 = vpop.f32.mrb[0].mxu0
  %v258 = vadd.f32 %v59, %v257
  %v259 = vpop.f32.mrb[0].mxu0
  %260 = vmatprep.mubr.bf16.mxu0 0
  %261 = vmatmul.mubr.bf16.gmra.mrb[0].mxu0 %v171
  %v262 = vpop.f32.mrb[0].mxu0
  %v263 = vadd.f32 %v59, %v262
  %v264 = vpop.f32.mrb[0].mxu0
  %v265 = vpop.f32.mrb[0].mxu0
  %v266 = vadd.f32 %v59, %v265
  %v267 = vpop.f32.mrb[0].mxu0
  %268 = vmatprep.mubr.bf16.mxu0 0
  %269 = vmatmul.mubr.bf16.gmra.mrb[0].mxu0 %v174
  %v270 = vpop.f32.mrb[0].mxu0
  %v271 = vadd.f32 %v59, %v270
  %v272 = vpop.f32.mrb[0].mxu0
  %v273 = vpop.f32.mrb[0].mxu0
  %v274 = vadd.f32 %v59, %v273
  %v275 = vpop.f32.mrb[0].mxu0
  %276 = vmatprep.mubr.bf16.mxu0 0
  %277 = vmatmul.mubr.bf16.gmra.mrb[0].mxu0 %v177
  %v278 = vpop.f32.mrb[0].mxu0
  %v279 = vadd.f32 %v59, %v278
  %v280 = vpop.f32.mrb[0].mxu0
  %v281 = vpop.f32.mrb[0].mxu0
  %v282 = vadd.f32 %v59, %v281
  %v283 = vpop.f32.mrb[0].mxu0
  %284 = vmatprep.mubr.bf16.mxu0 0
  %285 = vmatmul.mubr.bf16.gmra.mrb[0].mxu0 %v180
  %v286 = vpop.f32.mrb[0].mxu0
  %v287 = vadd.f32 %v59, %v286
  %v288 = vpop.f32.mrb[0].mxu0
  %v289 = vpop.f32.mrb[0].mxu0
  %v290 = vadd.f32 %v59, %v289
  %v291 = vpop.f32.mrb[0].mxu0
  %292 = vmatprep.mubr.bf16.mxu0 0
  %293 = vmatmul.mubr.bf16.gmra.mrb[0].mxu0 %v183
  %v294 = vpop.f32.mrb[0].mxu0
  %v295 = vadd.f32 %v59, %v294
  %v296 = vpop.f32.mrb[0].mxu0
  %v297 = vpop.f32.mrb[0].mxu0
  %v298 = vadd.f32 %v59, %v297
  %v299 = vpop.f32.mrb[0].mxu0
  %300 = vmatprep.mubr.bf16.mxu0 0
  %301 = vmatmul.mubr.bf16.gmra.mrb[0].mxu0 %v186
  %v302 = vpop.f32.mrb[0].mxu0
  %v303 = vadd.f32 %v59, %v302
  %v304 = vpop.f32.mrb[0].mxu0
  %v305 = vpop.f32.mrb[0].mxu0
  %v306 = vadd.f32 %v59, %v305
  %v307 = vpop.f32.mrb[0].mxu0
  %308 = vmatprep.mubr.bf16.mxu0 0
  %309 = vmatmul.mubr.bf16.gmra.mrb[0].mxu0 %v189
  %v310 = vpop.f32.mrb[0].mxu0
  %v311 = vadd.f32 %v59, %v310
  %v312 = vpop.f32.mrb[0].mxu0
  %v313 = vpop.f32.mrb[0].mxu0
  %v314 = vadd.f32 %v59, %v313
  %v315 = vpop.f32.mrb[0].mxu0
  %316 = vmatprep.mubr.bf16.mxu0 0
  %317 = vmatmul.mubr.bf16.gmra.mrb[0].mxu0 %v192
  %v318 = vpop.f32.mrb[0].mxu0
  %v319 = vadd.f32 %v59, %v318
  %v320 = vpop.f32.mrb[0].mxu0
  %v321 = vpop.f32.mrb[0].mxu0
  %v322 = vadd.f32 %v59, %v321
  %v323 = vpop.f32.mrb[0].mxu0
  %324 = vmatprep.mubr.bf16.mxu0 0
  %325 = vmatmul.mubr.bf16.gmra.mrb[0].mxu0 %v195
  %v326 = vpop.f32.mrb[0].mxu0
  %v327 = vadd.f32 %v59, %v326
  %v328 = vpop.f32.mrb[0].mxu0
  %v329 = vpop.f32.mrb[0].mxu0
  %v330 = vadd.f32 %v59, %v329
  %v331 = vpop.f32.mrb[0].mxu0
  %332 = vmatprep.mubr.bf16.mxu0 0
  %333 = vmatmul.mubr.bf16.gmra.mrb[0].mxu0 %v198
  %v334 = vpop.f32.mrb[0].mxu0
  %v335 = vadd.f32 %v59, %v334
  %v336 = vpop.f32.mrb[0].mxu0
  %v337 = vpop.f32.mrb[0].mxu0
  %v338 = vadd.f32 %v59, %v337
  %v339 = vpop.f32.mrb[0].mxu0
  %340 = vmatprep.mubr.bf16.mxu0 0
  %341 = vmatmul.mubr.bf16.gmra.mrb[0].mxu0 %v201
  %v342 = vpop.f32.mrb[0].mxu0
  %v343 = vadd.f32 %v59, %v342
  %v344 = vpop.f32.mrb[0].mxu0
  %v345 = vpop.f32.mrb[0].mxu0
  %v346 = vadd.f32 %v59, %v345
  %v347 = vpop.f32.mrb[0].mxu0
  %348 = vmatprep.mubr.bf16.mxu0 0
  %349 = vmatmul.mubr.bf16.gmra.mrb[0].mxu0 %v204
  %v350 = vpop.f32.mrb[0].mxu0
  %v351 = vadd.f32 %v59, %v350
  %v352 = vpop.f32.mrb[0].mxu0
  %v353 = vpop.f32.mrb[0].mxu0
  %v354 = vadd.f32 %v59, %v353
  %v355 = vpop.f32.mrb[0].mxu0
  %356 = vmatprep.mubr.bf16.mxu0 0
  %357 = vmatmul.mubr.bf16.gmra.mrb[0].mxu0 %v207
  %v358 = vpop.f32.mrb[0].mxu0
  %v359 = vadd.f32 %v59, %v358
  %v360 = vpop.f32.mrb[0].mxu0
  %v361 = vpop.f32.mrb[0].mxu0
  %v362 = vadd.f32 %v59, %v361
  %v363 = vpop.f32.mrb[0].mxu0
  %364 = vmatprep.mubr.bf16.mxu0 0
  %365 = vmatmul.mubr.bf16.gmra.mrb[0].mxu0 %v210
  %v366 = vpop.f32.mrb[0].mxu0
  %v367 = vadd.f32 %v59, %v366
  %v368 = vpop.f32.mrb[0].mxu0
  %v369 = vpop.f32.mrb[0].mxu0
  %v370 = vpop.f32.mrb[0].mxu0
  %371 = vdwg.mxu0
  %v372 = vmax.f32 %v247, 0.0
  %v373 = vmax.f32 %v250, 0.0
  %v374 = vmax.f32 %v255, 0.0
  %v375 = vmax.f32 %v258, 0.0
  %v376 = vmax.f32 %v263, 0.0
  %v377 = vmax.f32 %v266, 0.0
  %v378 = vmax.f32 %v271, 0.0
  %v379 = vmax.f32 %v274, 0.0
  %v380 = vmax.f32 %v279, 0.0
  %v381 = vmax.f32 %v282, 0.0
  %v382 = vmax.f32 %v287, 0.0
  %v383 = vmax.f32 %v290, 0.0
  %v384 = vmax.f32 %v295, 0.0
  %v385 = vmax.f32 %v298, 0.0
  %v386 = vmax.f32 %v303, 0.0
  %v387 = vmax.f32 %v306, 0.0
  %v388 = vmax.f32 %v311, 0.0
  %v389 = vmax.f32 %v314, 0.0
  %v390 = vmax.f32 %v319, 0.0
  %v391 = vmax.f32 %v322, 0.0
  %v392 = vmax.f32 %v327, 0.0
  %v393 = vmax.f32 %v330, 0.0
  %v394 = vmax.f32 %v335, 0.0
  %v395 = vmax.f32 %v338, 0.0
  %v396 = vmax.f32 %v343, 0.0
  %v397 = vmax.f32 %v346, 0.0
  %v398 = vmax.f32 %v351, 0.0
  %v399 = vmax.f32 %v354, 0.0
  %v400 = vmax.f32 %v359, 0.0
  %v401 = vmax.f32 %v362, 0.0
  %v402 = vmax.f32 %v367, 0.0
  %v403 = vpack.c.bf16 %v373, %v372
  %v404 = vpack.c.bf16 %v375, %v374
  %v405 = vpack.c.bf16 %v377, %v376
  %v406 = vpack.c.bf16 %v379, %v378
  %v407 = vpack.c.bf16 %v381, %v380
  %v408 = vpack.c.bf16 %v383, %v382
  %v409 = vpack.c.bf16 %v385, %v384
  %v410 = vpack.c.bf16 %v387, %v386
  %v411 = vpack.c.bf16 %v389, %v388
  %v412 = vpack.c.bf16 %v391, %v390
  %v413 = vpack.c.bf16 %v393, %v392
  %v414 = vpack.c.bf16 %v395, %v394
  %v415 = vpack.c.bf16 %v397, %v396
  %v416 = vpack.c.bf16 %v399, %v398
  %v417 = vpack.c.bf16 %v401, %v400
  %v418 = vpack.c.bf16 %v402, %v402
  %v435 = vunpack.c.l.b16 %v403
  %v436 = vunpack.c.h.b16 %v403
  %v437 = vunpack.c.l.b16 %v404
  %v438 = vunpack.c.h.b16 %v404
  %v439 = vunpack.c.l.b16 %v405
  %v440 = vunpack.c.h.b16 %v405
  %v441 = vunpack.c.l.b16 %v406
  %v442 = vunpack.c.h.b16 %v406
  %v443 = vunpack.c.l.b16 %v407
  %v444 = vunpack.c.h.b16 %v407
  %v445 = vunpack.c.l.b16 %v408
  %v446 = vunpack.c.h.b16 %v408
  %v447 = vunpack.c.l.b16 %v409
  %v448 = vunpack.c.h.b16 %v409
  %v449 = vunpack.c.l.b16 %v410
  %v450 = vunpack.c.h.b16 %v410
  %v451 = vunpack.c.l.b16 %v411
  %v452 = vunpack.c.h.b16 %v411
  %v453 = vunpack.c.l.b16 %v412
  %v454 = vunpack.c.h.b16 %v412
  %v455 = vunpack.c.l.b16 %v413
  %v456 = vunpack.c.h.b16 %v413
  %v457 = vunpack.c.l.b16 %v414
  %v458 = vunpack.c.h.b16 %v414
  %v459 = vunpack.c.l.b16 %v415
  %v460 = vunpack.c.h.b16 %v415
  %v461 = vunpack.c.l.b16 %v416
  %v462 = vunpack.c.h.b16 %v416
  %v463 = vunpack.c.l.b16 %v417
  %v464 = vunpack.c.h.b16 %v417
  %v465 = vunpack.c.l.b16 %v418
  %v466 = vpack.c.b16 %v435, %v435
  %v467 = vpack.c.b16 %v436, %v436
  %v468 = vpack.c.b16 %v437, %v437
  %v469 = vpack.c.b16 %v438, %v438
  %v470 = vpack.c.b16 %v439, %v439
  %v471 = vpack.c.b16 %v440, %v440
  %v472 = vpack.c.b16 %v441, %v441
  %v473 = vpack.c.b16 %v442, %v442
  %v474 = vpack.c.b16 %v443, %v443
  %v475 = vpack.c.b16 %v444, %v444
  %v476 = vpack.c.b16 %v445, %v445
  %v477 = vpack.c.b16 %v446, %v446
  %v478 = vpack.c.b16 %v447, %v447
  %v479 = vpack.c.b16 %v448, %v448
  %v480 = vpack.c.b16 %v449, %v449
  %v481 = vpack.c.b16 %v450, %v450
  %v482 = vpack.c.b16 %v451, %v451
  %v483 = vpack.c.b16 %v452, %v452
  %v484 = vpack.c.b16 %v453, %v453
  %v485 = vpack.c.b16 %v454, %v454
  %v486 = vpack.c.b16 %v455, %v455
  %v487 = vpack.c.b16 %v456, %v456
  %v488 = vpack.c.b16 %v457, %v457
  %v489 = vpack.c.b16 %v458, %v458
  %v490 = vpack.c.b16 %v459, %v459
  %v491 = vpack.c.b16 %v460, %v460
  %v492 = vpack.c.b16 %v461, %v461
  %v493 = vpack.c.b16 %v462, %v462
  %v494 = vpack.c.b16 %v463, %v463
  %v495 = vpack.c.b16 %v464, %v464
  %v496 = vpack.c.b16 %v465, %v465
  %vm528 = vcmask 125952
  %529 = vst.msk [vmem:[%s3] sm:$0xf] %vm528, %v466
  %530 = vst.msk [vmem:[%s3 + $0x4] sm:$0xf] %vm528, %v467
  %531 = vst.msk [vmem:[%s3 + $0x8] sm:$0xf] %vm528, %v468
  %532 = vst.msk [vmem:[%s3 + $0xc] sm:$0xf] %vm528, %v469
  %533 = vst.msk [vmem:[%s3 + $0x10] sm:$0xf] %vm528, %v470
  %534 = vst.msk [vmem:[%s3 + $0x14] sm:$0xf] %vm528, %v471
  %535 = vst.msk [vmem:[%s3 + $0x18] sm:$0xf] %vm528, %v472
  %536 = vst.msk [vmem:[%s3 + $0x1c] sm:$0xf] %vm528, %v473
  %537 = vst.msk [vmem:[%s3 + $0x20] sm:$0xf] %vm528, %v474
  %538 = vst.msk [vmem:[%s3 + $0x24] sm:$0xf] %vm528, %v475
  %539 = vst.msk [vmem:[%s3 + $0x28] sm:$0xf] %vm528, %v476
  %540 = vst.msk [vmem:[%s3 + $0x2c] sm:$0xf] %vm528, %v477
  %541 = vst.msk [vmem:[%s3 + $0x30] sm:$0xf] %vm528, %v478
  %542 = vst.msk [vmem:[%s3 + $0x34] sm:$0xf] %vm528, %v479
  %543 = vst.msk [vmem:[%s3 + $0x38] sm:$0xf] %vm528, %v480
  %544 = vst.msk [vmem:[%s3 + $0x3c] sm:$0xf] %vm528, %v481
  %545 = vst.msk [vmem:[%s3 + $0x40] sm:$0xf] %vm528, %v482
  %546 = vst.msk [vmem:[%s3 + $0x44] sm:$0xf] %vm528, %v483
  %547 = vst.msk [vmem:[%s3 + $0x48] sm:$0xf] %vm528, %v484
  %548 = vst.msk [vmem:[%s3 + $0x4c] sm:$0xf] %vm528, %v485
  %549 = vst.msk [vmem:[%s3 + $0x50] sm:$0xf] %vm528, %v486
  %550 = vst.msk [vmem:[%s3 + $0x54] sm:$0xf] %vm528, %v487
  %551 = vst.msk [vmem:[%s3 + $0x58] sm:$0xf] %vm528, %v488
  %552 = vst.msk [vmem:[%s3 + $0x5c] sm:$0xf] %vm528, %v489
  %553 = vst.msk [vmem:[%s3 + $0x60] sm:$0xf] %vm528, %v490
  %554 = vst.msk [vmem:[%s3 + $0x64] sm:$0xf] %vm528, %v491
  %555 = vst.msk [vmem:[%s3 + $0x68] sm:$0xf] %vm528, %v492
  %556 = vst.msk [vmem:[%s3 + $0x6c] sm:$0xf] %vm528, %v493
  %557 = vst.msk [vmem:[%s3 + $0x70] sm:$0xf] %vm528, %v494
  %558 = vst.msk [vmem:[%s3 + $0x74] sm:$0xf] %vm528, %v495
  %559 = vst.msk [vmem:[%s3 + $0x78] sm:$0xf] %vm528, %v496
  // Predicated region
  $region14: #{squeezenet_forward.24} parent=0 // pred_check
    _
  $region15: #{squeezenet_forward.24} parent=0 // pred_check_branch
    %561 = sbr.rel (0) target = $region17
  $region16: #{squeezenet_forward.24} parent=0 // pred_region
    _
  $region17: #{squeezenet_forward.24} parent=0 // pred_fallthru
    _
  // Predicated region
  $region18: #{squeezenet_forward.24} parent=0 // pred_check
    _
  $region19: #{squeezenet_forward.24} parent=0 // pred_check_branch
    %563 = sbr.rel (0) target = $region21
  $region20: #{squeezenet_forward.24} parent=0 // pred_region
    _
  $region21: #{squeezenet_forward.24} parent=0 // pred_fallthru
    _

// kernel: squeezenet_forward.25
$region0: #{squeezenet_forward.25}
  #allocation0 [shape = 'u32[]', space=smem, size = 0x4, offset = 0x4, fixed_abs, tag = 'smem constant byte address 0x4 - core index']
  #allocation1 [shape = 'u32[144,128]{1,0:T(1,128)}', space=vmem, size = 0x12000, scoped, tag = 'internal scratch']
  %s0 = inlined_call_operand.vmem [shape: bf16[248,144], index: 0, kind: input, shape index: {}]
  %s1 = inlined_call_operand.vmem [shape: bf16[144,128], index: 1, kind: input, shape index: {}]
  %s2 = inlined_call_operand.vmem [shape: f32[1,128], index: 2, kind: input, shape index: {}]
  %s3 = inlined_call_operand.vmem [shape: bf16[248,128], index: 3, kind: output, shape index: {}]
  %s4 = sld [smem:[#allocation0]]
  $region22: #{squeezenet_forward.25} parent=0
    _
  %s6 = ssub.s32 1, %s4
  %s7 = scalar_select 0, %s6, %s4
  // Predicated region
  $region2: #{squeezenet_forward.25} parent=0 // pred_check
    _
  $region3: #{squeezenet_forward.25} parent=0 // pred_check_branch
    %9 = sbr.rel (0) target = $region5
  $region4: #{squeezenet_forward.25} parent=0 // pred_region
    _
  $region5: #{squeezenet_forward.25} parent=0 // pred_fallthru
    _
  // Predicated region
  $region6: #{squeezenet_forward.25} parent=0 // pred_check
    _
  $region7: #{squeezenet_forward.25} parent=0 // pred_check_branch
    %11 = sbr.rel (0) target = $region9
  $region8: #{squeezenet_forward.25} parent=0 // pred_region
    _
  $region9: #{squeezenet_forward.25} parent=0 // pred_fallthru
    _
  // Predicated region
  $region10: #{squeezenet_forward.25} parent=0 // pred_check
    _
  $region11: #{squeezenet_forward.25} parent=0 // pred_check_branch
    %13 = sbr.rel (0) target = $region13
  $region12: #{squeezenet_forward.25} parent=0 // pred_region
    _
  $region13: #{squeezenet_forward.25} parent=0 // pred_fallthru
    _
  %v15 = vld [vmem:[%s0] sm:$0xff]
  %v16 = vld [vmem:[%s0 + $0x8] sm:$0xff]
  %v17 = vld [vmem:[%s0 + $0x10] sm:$0xff]
  %v18 = vld [vmem:[%s0 + $0x18] sm:$0xff]
  %v19 = vld [vmem:[%s0 + $0x20] sm:$0xff]
  %v20 = vld [vmem:[%s0 + $0x28] sm:$0xff]
  %v21 = vld [vmem:[%s0 + $0x30] sm:$0xff]
  %v22 = vld [vmem:[%s0 + $0x38] sm:$0xff]
  %v23 = vld [vmem:[%s0 + $0x40] sm:$0xff]
  %v24 = vld [vmem:[%s0 + $0x48] sm:$0xff]
  %v25 = vld [vmem:[%s0 + $0x50] sm:$0xff]
  %v26 = vld [vmem:[%s0 + $0x58] sm:$0xff]
  %v27 = vld [vmem:[%s0 + $0x60] sm:$0xff]
  %v28 = vld [vmem:[%s0 + $0x68] sm:$0xff]
  %v29 = vld [vmem:[%s0 + $0x70] sm:$0xff]
  %v30 = vld [vmem:[%s0 + $0x78] sm:$0xff]
  %v31 = vld [vmem:[%s0 + $0x80] sm:$0xff]
  %v32 = vld [vmem:[%s0 + $0x88] sm:$0xff]
  %v33 = vld [vmem:[%s0 + $0x90] sm:$0xff]
  %v34 = vld [vmem:[%s0 + $0x98] sm:$0xff]
  %v35 = vld [vmem:[%s0 + $0xa0] sm:$0xff]
  %v36 = vld [vmem:[%s0 + $0xa8] sm:$0xff]
  %v37 = vld [vmem:[%s0 + $0xb0] sm:$0xff]
  %v38 = vld [vmem:[%s0 + $0xb8] sm:$0xff]
  %v39 = vld [vmem:[%s0 + $0xc0] sm:$0xff]
  %v40 = vld [vmem:[%s0 + $0xc8] sm:$0xff]
  %v41 = vld [vmem:[%s0 + $0xd0] sm:$0xff]
  %v42 = vld [vmem:[%s0 + $0xd8] sm:$0xff]
  %v43 = vld [vmem:[%s0 + $0xe0] sm:$0xff]
  %v44 = vld [vmem:[%s0 + $0xe8] sm:$0xff]
  %v45 = vld [vmem:[%s0 + $0xf0] sm:$0xff]
  %v46 = vld [vmem:[%s1] sm:$0xf]
  %v47 = vld [vmem:[%s1 + $0x4] sm:$0xf]
  %v48 = vld [vmem:[%s1 + $0x8] sm:$0xf]
  %v49 = vld [vmem:[%s1 + $0xc] sm:$0xf]
  %v50 = vld [vmem:[%s1 + $0x10] sm:$0xf]
  %v51 = vld [vmem:[%s1 + $0x14] sm:$0xf]
  %v52 = vld [vmem:[%s1 + $0x18] sm:$0xf]
  %v53 = vld [vmem:[%s1 + $0x1c] sm:$0xf]
  %v54 = vld [vmem:[%s1 + $0x20] sm:$0xf]
  %v55 = vld [vmem:[%s1 + $0x24] sm:$0xf]
  %v56 = vld [vmem:[%s1 + $0x28] sm:$0xf]
  %v57 = vld [vmem:[%s1 + $0x2c] sm:$0xf]
  %v58 = vld [vmem:[%s1 + $0x30] sm:$0xf]
  %v59 = vld [vmem:[%s1 + $0x34] sm:$0xf]
  %v60 = vld [vmem:[%s1 + $0x38] sm:$0xf]
  %v61 = vld [vmem:[%s1 + $0x3c] sm:$0xf]
  %v62 = vld [vmem:[%s1 + $0x40] sm:$0xf]
  %v63 = vld [vmem:[%s1 + $0x44] sm:$0xf]
  %v64 = vld [vmem:[%s2] sm:$0x1]
  %v66 = vlaneseq
  %v67 = vshrl.u32 %v66, 7
  %v68 = vsub.s32 0, %v67
  %v69 = vrot.slane %v64, %v68
  %v102 = vunpack.c.l.b16 %v15
  %v103 = vunpack.c.h.b16 %v15
  %v104 = vunpack.c.l.b16 %v16
  %v105 = vunpack.c.h.b16 %v16
  %v106 = vunpack.c.l.b16 %v17
  %v107 = vunpack.c.h.b16 %v17
  %v108 = vunpack.c.l.b16 %v18
  %v109 = vunpack.c.h.b16 %v18
  %v110 = vunpack.c.l.b16 %v19
  %v111 = vunpack.c.h.b16 %v19
  %v112 = vunpack.c.l.b16 %v20
  %v113 = vunpack.c.h.b16 %v20
  %v114 = vunpack.c.l.b16 %v21
  %v115 = vunpack.c.h.b16 %v21
  %v116 = vunpack.c.l.b16 %v22
  %v117 = vunpack.c.h.b16 %v22
  %v118 = vunpack.c.l.b16 %v23
  %v119 = vunpack.c.h.b16 %v23
  %v120 = vunpack.c.l.b16 %v24
  %v121 = vunpack.c.h.b16 %v24
  %v122 = vunpack.c.l.b16 %v25
  %v123 = vunpack.c.h.b16 %v25
  %v124 = vunpack.c.l.b16 %v26
  %v125 = vunpack.c.h.b16 %v26
  %v126 = vunpack.c.l.b16 %v27
  %v127 = vunpack.c.h.b16 %v27
  %v128 = vunpack.c.l.b16 %v28
  %v129 = vunpack.c.h.b16 %v28
  %v130 = vunpack.c.l.b16 %v29
  %v131 = vunpack.c.h.b16 %v29
  %v132 = vunpack.c.l.b16 %v30
  %v133 = vunpack.c.h.b16 %v30
  %v134 = vunpack.c.l.b16 %v31
  %v135 = vunpack.c.h.b16 %v31
  %v136 = vunpack.c.l.b16 %v32
  %v137 = vunpack.c.h.b16 %v32
  %v138 = vunpack.c.l.b16 %v33
  %v139 = vunpack.c.h.b16 %v33
  %v140 = vunpack.c.l.b16 %v34
  %v141 = vunpack.c.h.b16 %v34
  %v142 = vunpack.c.l.b16 %v35
  %v143 = vunpack.c.h.b16 %v35
  %v144 = vunpack.c.l.b16 %v36
  %v145 = vunpack.c.h.b16 %v36
  %v146 = vunpack.c.l.b16 %v37
  %v147 = vunpack.c.h.b16 %v37
  %v148 = vunpack.c.l.b16 %v38
  %v149 = vunpack.c.h.b16 %v38
  %v150 = vunpack.c.l.b16 %v39
  %v151 = vunpack.c.h.b16 %v39
  %v152 = vunpack.c.l.b16 %v40
  %v153 = vunpack.c.h.b16 %v40
  %v154 = vunpack.c.l.b16 %v41
  %v155 = vunpack.c.h.b16 %v41
  %v156 = vunpack.c.l.b16 %v42
  %v157 = vunpack.c.h.b16 %v42
  %v158 = vunpack.c.l.b16 %v43
  %v159 = vunpack.c.h.b16 %v43
  %v160 = vunpack.c.l.b16 %v44
  %v161 = vunpack.c.h.b16 %v44
  %v162 = vunpack.c.l.b16 %v45
  %v163 = vunpack.c.h.b16 %v45
  %v164 = vpack.c.b16 %v104, %v102
  %v165 = vpack.c.b16 %v105, %v103
  %v166 = vpack.c.b16 %v108, %v106
  %v167 = vpack.c.b16 %v109, %v107
  %v168 = vpack.c.b16 %v112, %v110
  %v169 = vpack.c.b16 %v113, %v111
  %v170 = vpack.c.b16 %v116, %v114
  %v171 = vpack.c.b16 %v117, %v115
  %v172 = vpack.c.b16 %v120, %v118
  %v173 = vpack.c.b16 %v121, %v119
  %v174 = vpack.c.b16 %v124, %v122
  %v175 = vpack.c.b16 %v125, %v123
  %v176 = vpack.c.b16 %v128, %v126
  %v177 = vpack.c.b16 %v129, %v127
  %v178 = vpack.c.b16 %v132, %v130
  %v179 = vpack.c.b16 %v133, %v131
  %v180 = vpack.c.b16 %v136, %v134
  %v181 = vpack.c.b16 %v137, %v135
  %v182 = vpack.c.b16 %v140, %v138
  %v183 = vpack.c.b16 %v141, %v139
  %v184 = vpack.c.b16 %v144, %v142
  %v185 = vpack.c.b16 %v145, %v143
  %v186 = vpack.c.b16 %v148, %v146
  %v187 = vpack.c.b16 %v149, %v147
  %v188 = vpack.c.b16 %v152, %v150
  %v189 = vpack.c.b16 %v153, %v151
  %v190 = vpack.c.b16 %v156, %v154
  %v191 = vpack.c.b16 %v157, %v155
  %v192 = vpack.c.b16 %v160, %v158
  %v193 = vpack.c.b16 %v161, %v159
  %v194 = vpack.c.b16 %v162, %v162
  %v195 = vpack.c.b16 %v163, %v163
  %v230 = vunpack.c.l.b16 %v46
  %v231 = vunpack.c.l.b16 %v47
  %v232 = vunpack.c.l.b16 %v48
  %v233 = vunpack.c.l.b16 %v49
  %v234 = vunpack.c.l.b16 %v50
  %v235 = vunpack.c.l.b16 %v51
  %v236 = vunpack.c.l.b16 %v52
  %v237 = vunpack.c.l.b16 %v53
  %v238 = vunpack.c.l.b16 %v54
  %v239 = vunpack.c.l.b16 %v55
  %v240 = vunpack.c.l.b16 %v56
  %v241 = vunpack.c.l.b16 %v57
  %v242 = vunpack.c.l.b16 %v58
  %v243 = vunpack.c.l.b16 %v59
  %v244 = vunpack.c.l.b16 %v60
  %v245 = vunpack.c.l.b16 %v61
  %v246 = vunpack.c.l.b16 %v62
  %v247 = vunpack.c.l.b16 %v63
  %v248 = vpack.c.b16 %v231, %v230
  %v249 = vpack.c.b16 %v233, %v232
  %v250 = vpack.c.b16 %v235, %v234
  %v251 = vpack.c.b16 %v237, %v236
  %v252 = vpack.c.b16 %v239, %v238
  %v253 = vpack.c.b16 %v241, %v240
  %v254 = vpack.c.b16 %v243, %v242
  %v255 = vpack.c.b16 %v245, %v244
  %v256 = vpack.c.b16 %v247, %v246
  %vm266 = vcmask 130048
  %v268 = vsel %vm266, %v165, 0
  %v271 = vsel %vm266, %v167, 0
  %v274 = vsel %vm266, %v169, 0
  %v277 = vsel %vm266, %v171, 0
  %v280 = vsel %vm266, %v173, 0
  %v283 = vsel %vm266, %v175, 0
  %v286 = vsel %vm266, %v177, 0
  %v289 = vsel %vm266, %v179, 0
  %v292 = vsel %vm266, %v181, 0
  %v295 = vsel %vm266, %v183, 0
  %v298 = vsel %vm266, %v185, 0
  %v301 = vsel %vm266, %v187, 0
  %v304 = vsel %vm266, %v189, 0
  %v307 = vsel %vm266, %v191, 0
  %v310 = vsel %vm266, %v193, 0
  %v313 = vsel %vm266, %v195, 0
  %315 = vmatprep.subr.bf16.mxu0 0
  %316 = vmatpush1.bf16.msra.mxu0 %v248
  %317 = vmatprep.subr.bf16.mxu0 0
  %318 = vmatpush1.bf16.msra.mxu0 %v249
  %319 = vmatprep.subr.bf16.mxu0 0
  %320 = vmatpush1.bf16.msra.mxu0 %v250
  %321 = vmatprep.subr.bf16.mxu0 0
  %322 = vmatpush1.bf16.msra.mxu0 %v251
  %323 = vmatprep.subr.bf16.mxu0 0
  %324 = vmatpush1.bf16.msra.mxu0 %v252
  %325 = vmatprep.subr.bf16.mxu0 0
  %326 = vmatpush1.bf16.msra.mxu0 %v253
  %327 = vmatprep.subr.bf16.mxu0 0
  %328 = vmatpush1.bf16.msra.mxu0 %v254
  %329 = vmatprep.subr.bf16.mxu0 0
  %330 = vmatpush1.bf16.msra.mxu0 %v255
  %331 = vmatprep.subr.bf16.mxu0 0
  %332 = vmatpush1.bf16.msra.mxu0 %v256
  %333 = vmatprep.subr.bf16.mxu0 0
  %334 = vmatpush1.bf16.msra.mxu0 0
  %335 = vmatprep.subr.bf16.mxu0 0
  %336 = vmatpush1.bf16.msra.mxu0 0
  %337 = vmatprep.subr.bf16.mxu0 0
  %338 = vmatpush1.bf16.msra.mxu0 0
  %339 = vmatprep.subr.bf16.mxu0 0
  %340 = vmatpush1.bf16.msra.mxu0 0
  %341 = vmatprep.subr.bf16.mxu0 0
  %342 = vmatpush1.bf16.msra.mxu0 0
  %343 = vmatprep.subr.bf16.mxu0 0
  %344 = vmatpush1.bf16.msra.mxu0 0
  %345 = vmatprep.subr.bf16.mxu0 0
  %346 = vmatpush1.bf16.msra.mxu0 0
  %347 = vmatprep.mubr.bf16.mxu0 %v268
  %348 = vmatmul.mubr.bf16.gmra.mrb[0].mxu0 %v164
  %v349 = vpop.f32.mrb[0].mxu0
  %v350 = vadd.f32 %v69, %v349
  %v351 = vpop.f32.mrb[0].mxu0
  %v352 = vpop.f32.mrb[0].mxu0
  %v353 = vadd.f32 %v69, %v352
  %v354 = vpop.f32.mrb[0].mxu0
  %355 = vmatprep.mubr.bf16.mxu0 %v271
  %356 = vmatmul.mubr.bf16.gmra.mrb[0].mxu0 %v166
  %v357 = vpop.f32.mrb[0].mxu0
  %v358 = vadd.f32 %v69, %v357
  %v359 = vpop.f32.mrb[0].mxu0
  %v360 = vpop.f32.mrb[0].mxu0
  %v361 = vadd.f32 %v69, %v360
  %v362 = vpop.f32.mrb[0].mxu0
  %363 = vmatprep.mubr.bf16.mxu0 %v274
  %364 = vmatmul.mubr.bf16.gmra.mrb[0].mxu0 %v168
  %v365 = vpop.f32.mrb[0].mxu0
  %v366 = vadd.f32 %v69, %v365
  %v367 = vpop.f32.mrb[0].mxu0
  %v368 = vpop.f32.mrb[0].mxu0
  %v369 = vadd.f32 %v69, %v368
  %v370 = vpop.f32.mrb[0].mxu0
  %371 = vmatprep.mubr.bf16.mxu0 %v277
  %372 = vmatmul.mubr.bf16.gmra.mrb[0].mxu0 %v170
  %v373 = vpop.f32.mrb[0].mxu0
  %v374 = vadd.f32 %v69, %v373
  %v375 = vpop.f32.mrb[0].mxu0
  %v376 = vpop.f32.mrb[0].mxu0
  %v377 = vadd.f32 %v69, %v376
  %v378 = vpop.f32.mrb[0].mxu0
  %379 = vmatprep.mubr.bf16.mxu0 %v280
  %380 = vmatmul.mubr.bf16.gmra.mrb[0].mxu0 %v172
  %v381 = vpop.f32.mrb[0].mxu0
  %v382 = vadd.f32 %v69, %v381
  %v383 = vpop.f32.mrb[0].mxu0
  %v384 = vpop.f32.mrb[0].mxu0
  %v385 = vadd.f32 %v69, %v384
  %v386 = vpop.f32.mrb[0].mxu0
  %387 = vmatprep.mubr.bf16.mxu0 %v283
  %388 = vmatmul.mubr.bf16.gmra.mrb[0].mxu0 %v174
  %v389 = vpop.f32.mrb[0].mxu0
  %v390 = vadd.f32 %v69, %v389
  %v391 = vpop.f32.mrb[0].mxu0
  %v392 = vpop.f32.mrb[0].mxu0
  %v393 = vadd.f32 %v69, %v392
  %v394 = vpop.f32.mrb[0].mxu0
  %395 = vmatprep.mubr.bf16.mxu0 %v286
  %396 = vmatmul.mubr.bf16.gmra.mrb[0].mxu0 %v176
  %v397 = vpop.f32.mrb[0].mxu0
  %v398 = vadd.f32 %v69, %v397
  %v399 = vpop.f32.mrb[0].mxu0
  %v400 = vpop.f32.mrb[0].mxu0
  %v401 = vadd.f32 %v69, %v400
  %v402 = vpop.f32.mrb[0].mxu0
  %403 = vmatprep.mubr.bf16.mxu0 %v289
  %404 = vmatmul.mubr.bf16.gmra.mrb[0].mxu0 %v178
  %v405 = vpop.f32.mrb[0].mxu0
  %v406 = vadd.f32 %v69, %v405
  %v407 = vpop.f32.mrb[0].mxu0
  %v408 = vpop.f32.mrb[0].mxu0
  %v409 = vadd.f32 %v69, %v408
  %v410 = vpop.f32.mrb[0].mxu0
  %411 = vmatprep.mubr.bf16.mxu0 %v292
  %412 = vmatmul.mubr.bf16.gmra.mrb[0].mxu0 %v180
  %v413 = vpop.f32.mrb[0].mxu0
  %v414 = vadd.f32 %v69, %v413
  %v415 = vpop.f32.mrb[0].mxu0
  %v416 = vpop.f32.mrb[0].mxu0
  %v417 = vadd.f32 %v69, %v416
  %v418 = vpop.f32.mrb[0].mxu0
  %419 = vmatprep.mubr.bf16.mxu0 %v295
  %420 = vmatmul.mubr.bf16.gmra.mrb[0].mxu0 %v182
  %v421 = vpop.f32.mrb[0].mxu0
  %v422 = vadd.f32 %v69, %v421
  %v423 = vpop.f32.mrb[0].mxu0
  %v424 = vpop.f32.mrb[0].mxu0
  %v425 = vadd.f32 %v69, %v424
  %v426 = vpop.f32.mrb[0].mxu0
  %427 = vmatprep.mubr.bf16.mxu0 %v298
  %428 = vmatmul.mubr.bf16.gmra.mrb[0].mxu0 %v184
  %v429 = vpop.f32.mrb[0].mxu0
  %v430 = vadd.f32 %v69, %v429
  %v431 = vpop.f32.mrb[0].mxu0
  %v432 = vpop.f32.mrb[0].mxu0
  %v433 = vadd.f32 %v69, %v432
  %v434 = vpop.f32.mrb[0].mxu0
  %435 = vmatprep.mubr.bf16.mxu0 %v301
  %436 = vmatmul.mubr.bf16.gmra.mrb[0].mxu0 %v186
  %v437 = vpop.f32.mrb[0].mxu0
  %v438 = vadd.f32 %v69, %v437
  %v439 = vpop.f32.mrb[0].mxu0
  %v440 = vpop.f32.mrb[0].mxu0
  %v441 = vadd.f32 %v69, %v440
  %v442 = vpop.f32.mrb[0].mxu0
  %443 = vmatprep.mubr.bf16.mxu0 %v304
  %444 = vmatmul.mubr.bf16.gmra.mrb[0].mxu0 %v188
  %v445 = vpop.f32.mrb[0].mxu0
  %v446 = vadd.f32 %v69, %v445
  %v447 = vpop.f32.mrb[0].mxu0
  %v448 = vpop.f32.mrb[0].mxu0
  %v449 = vadd.f32 %v69, %v448
  %v450 = vpop.f32.mrb[0].mxu0
  %451 = vmatprep.mubr.bf16.mxu0 %v307
  %452 = vmatmul.mubr.bf16.gmra.mrb[0].mxu0 %v190
  %v453 = vpop.f32.mrb[0].mxu0
  %v454 = vadd.f32 %v69, %v453
  %v455 = vpop.f32.mrb[0].mxu0
  %v456 = vpop.f32.mrb[0].mxu0
  %v457 = vadd.f32 %v69, %v456
  %v458 = vpop.f32.mrb[0].mxu0
  %459 = vmatprep.mubr.bf16.mxu0 %v310
  %460 = vmatmul.mubr.bf16.gmra.mrb[0].mxu0 %v192
  %v461 = vpop.f32.mrb[0].mxu0
  %v462 = vadd.f32 %v69, %v461
  %v463 = vpop.f32.mrb[0].mxu0
  %v464 = vpop.f32.mrb[0].mxu0
  %v465 = vadd.f32 %v69, %v464
  %v466 = vpop.f32.mrb[0].mxu0
  %467 = vmatprep.mubr.bf16.mxu0 %v313
  %468 = vmatmul.mubr.bf16.gmra.mrb[0].mxu0 %v194
  %v469 = vpop.f32.mrb[0].mxu0
  %v470 = vadd.f32 %v69, %v469
  %v471 = vpop.f32.mrb[0].mxu0
  %v472 = vpop.f32.mrb[0].mxu0
  %v473 = vpop.f32.mrb[0].mxu0
  %474 = vdwg.mxu0
  %v475 = vmax.f32 %v350, 0.0
  %v476 = vmax.f32 %v353, 0.0
  %v477 = vmax.f32 %v358, 0.0
  %v478 = vmax.f32 %v361, 0.0
  %v479 = vmax.f32 %v366, 0.0
  %v480 = vmax.f32 %v369, 0.0
  %v481 = vmax.f32 %v374, 0.0
  %v482 = vmax.f32 %v377, 0.0
  %v483 = vmax.f32 %v382, 0.0
  %v484 = vmax.f32 %v385, 0.0
  %v485 = vmax.f32 %v390, 0.0
  %v486 = vmax.f32 %v393, 0.0
  %v487 = vmax.f32 %v398, 0.0
  %v488 = vmax.f32 %v401, 0.0
  %v489 = vmax.f32 %v406, 0.0
  %v490 = vmax.f32 %v409, 0.0
  %v491 = vmax.f32 %v414, 0.0
  %v492 = vmax.f32 %v417, 0.0
  %v493 = vmax.f32 %v422, 0.0
  %v494 = vmax.f32 %v425, 0.0
  %v495 = vmax.f32 %v430, 0.0
  %v496 = vmax.f32 %v433, 0.0
  %v497 = vmax.f32 %v438, 0.0
  %v498 = vmax.f32 %v441, 0.0
  %v499 = vmax.f32 %v446, 0.0
  %v500 = vmax.f32 %v449, 0.0
  %v501 = vmax.f32 %v454, 0.0
  %v502 = vmax.f32 %v457, 0.0
  %v503 = vmax.f32 %v462, 0.0
  %v504 = vmax.f32 %v465, 0.0
  %v505 = vmax.f32 %v470, 0.0
  %v506 = vpack.c.bf16 %v476, %v475
  %v507 = vpack.c.bf16 %v478, %v477
  %v508 = vpack.c.bf16 %v480, %v479
  %v509 = vpack.c.bf16 %v482, %v481
  %v510 = vpack.c.bf16 %v484, %v483
  %v511 = vpack.c.bf16 %v486, %v485
  %v512 = vpack.c.bf16 %v488, %v487
  %v513 = vpack.c.bf16 %v490, %v489
  %v514 = vpack.c.bf16 %v492, %v491
  %v515 = vpack.c.bf16 %v494, %v493
  %v516 = vpack.c.bf16 %v496, %v495
  %v517 = vpack.c.bf16 %v498, %v497
  %v518 = vpack.c.bf16 %v500, %v499
  %v519 = vpack.c.bf16 %v502, %v501
  %v520 = vpack.c.bf16 %v504, %v503
  %v521 = vpack.c.bf16 %v505, %v505
  %v538 = vunpack.c.l.b16 %v506
  %v539 = vunpack.c.h.b16 %v506
  %v540 = vunpack.c.l.b16 %v507
  %v541 = vunpack.c.h.b16 %v507
  %v542 = vunpack.c.l.b16 %v508
  %v543 = vunpack.c.h.b16 %v508
  %v544 = vunpack.c.l.b16 %v509
  %v545 = vunpack.c.h.b16 %v509
  %v546 = vunpack.c.l.b16 %v510
  %v547 = vunpack.c.h.b16 %v510
  %v548 = vunpack.c.l.b16 %v511
  %v549 = vunpack.c.h.b16 %v511
  %v550 = vunpack.c.l.b16 %v512
  %v551 = vunpack.c.h.b16 %v512
  %v552 = vunpack.c.l.b16 %v513
  %v553 = vunpack.c.h.b16 %v513
  %v554 = vunpack.c.l.b16 %v514
  %v555 = vunpack.c.h.b16 %v514
  %v556 = vunpack.c.l.b16 %v515
  %v557 = vunpack.c.h.b16 %v515
  %v558 = vunpack.c.l.b16 %v516
  %v559 = vunpack.c.h.b16 %v516
  %v560 = vunpack.c.l.b16 %v517
  %v561 = vunpack.c.h.b16 %v517
  %v562 = vunpack.c.l.b16 %v518
  %v563 = vunpack.c.h.b16 %v518
  %v564 = vunpack.c.l.b16 %v519
  %v565 = vunpack.c.h.b16 %v519
  %v566 = vunpack.c.l.b16 %v520
  %v567 = vunpack.c.h.b16 %v520
  %v568 = vunpack.c.l.b16 %v521
  %v569 = vpack.c.b16 %v538, %v538
  %v570 = vpack.c.b16 %v539, %v539
  %v571 = vpack.c.b16 %v540, %v540
  %v572 = vpack.c.b16 %v541, %v541
  %v573 = vpack.c.b16 %v542, %v542
  %v574 = vpack.c.b16 %v543, %v543
  %v575 = vpack.c.b16 %v544, %v544
  %v576 = vpack.c.b16 %v545, %v545
  %v577 = vpack.c.b16 %v546, %v546
  %v578 = vpack.c.b16 %v547, %v547
  %v579 = vpack.c.b16 %v548, %v548
  %v580 = vpack.c.b16 %v549, %v549
  %v581 = vpack.c.b16 %v550, %v550
  %v582 = vpack.c.b16 %v551, %v551
  %v583 = vpack.c.b16 %v552, %v552
  %v584 = vpack.c.b16 %v553, %v553
  %v585 = vpack.c.b16 %v554, %v554
  %v586 = vpack.c.b16 %v555, %v555
  %v587 = vpack.c.b16 %v556, %v556
  %v588 = vpack.c.b16 %v557, %v557
  %v589 = vpack.c.b16 %v558, %v558
  %v590 = vpack.c.b16 %v559, %v559
  %v591 = vpack.c.b16 %v560, %v560
  %v592 = vpack.c.b16 %v561, %v561
  %v593 = vpack.c.b16 %v562, %v562
  %v594 = vpack.c.b16 %v563, %v563
  %v595 = vpack.c.b16 %v564, %v564
  %v596 = vpack.c.b16 %v565, %v565
  %v597 = vpack.c.b16 %v566, %v566
  %v598 = vpack.c.b16 %v567, %v567
  %v599 = vpack.c.b16 %v568, %v568
  %631 = vst [vmem:[%s3] sm:$0xf] %v569
  %632 = vst [vmem:[%s3 + $0x4] sm:$0xf] %v570
  %633 = vst [vmem:[%s3 + $0x8] sm:$0xf] %v571
  %634 = vst [vmem:[%s3 + $0xc] sm:$0xf] %v572
  %635 = vst [vmem:[%s3 + $0x10] sm:$0xf] %v573
  %636 = vst [vmem:[%s3 + $0x14] sm:$0xf] %v574
  %637 = vst [vmem:[%s3 + $0x18] sm:$0xf] %v575
  %638 = vst [vmem:[%s3 + $0x1c] sm:$0xf] %v576
  %639 = vst [vmem:[%s3 + $0x20] sm:$0xf] %v577
  %640 = vst [vmem:[%s3 + $0x24] sm:$0xf] %v578
  %641 = vst [vmem:[%s3 + $0x28] sm:$0xf] %v579
  %642 = vst [vmem:[%s3 + $0x2c] sm:$0xf] %v580
  %643 = vst [vmem:[%s3 + $0x30] sm:$0xf] %v581
  %644 = vst [vmem:[%s3 + $0x34] sm:$0xf] %v582
  %645 = vst [vmem:[%s3 + $0x38] sm:$0xf] %v583
  %646 = vst [vmem:[%s3 + $0x3c] sm:$0xf] %v584
  %647 = vst [vmem:[%s3 + $0x40] sm:$0xf] %v585
  %648 = vst [vmem:[%s3 + $0x44] sm:$0xf] %v586
  %649 = vst [vmem:[%s3 + $0x48] sm:$0xf] %v587
  %650 = vst [vmem:[%s3 + $0x4c] sm:$0xf] %v588
  %651 = vst [vmem:[%s3 + $0x50] sm:$0xf] %v589
  %652 = vst [vmem:[%s3 + $0x54] sm:$0xf] %v590
  %653 = vst [vmem:[%s3 + $0x58] sm:$0xf] %v591
  %654 = vst [vmem:[%s3 + $0x5c] sm:$0xf] %v592
  %655 = vst [vmem:[%s3 + $0x60] sm:$0xf] %v593
  %656 = vst [vmem:[%s3 + $0x64] sm:$0xf] %v594
  %657 = vst [vmem:[%s3 + $0x68] sm:$0xf] %v595
  %658 = vst [vmem:[%s3 + $0x6c] sm:$0xf] %v596
  %659 = vst [vmem:[%s3 + $0x70] sm:$0xf] %v597
  %660 = vst [vmem:[%s3 + $0x74] sm:$0xf] %v598
  %661 = vst [vmem:[%s3 + $0x78] sm:$0xf] %v599
  // Predicated region
  $region14: #{squeezenet_forward.25} parent=0 // pred_check
    _
  $region15: #{squeezenet_forward.25} parent=0 // pred_check_branch
    %663 = sbr.rel (0) target = $region17
  $region16: #{squeezenet_forward.25} parent=0 // pred_region
    _
  $region17: #{squeezenet_forward.25} parent=0 // pred_fallthru
    _
  // Predicated region
  $region18: #{squeezenet_forward.25} parent=0 // pred_check
    _
  $region19: #{squeezenet_forward.25} parent=0 // pred_check_branch
    %665 = sbr.rel (0) target = $region21
  $region20: #{squeezenet_forward.25} parent=0 // pred_region
    _
  $region21: #{squeezenet_forward.25} parent=0 // pred_fallthru
    _

// kernel: squeezenet_forward.26
$region0: #{squeezenet_forward.26}
  #allocation0 [shape = 'u32[]', space=smem, size = 0x4, offset = 0x4, fixed_abs, tag = 'smem constant byte address 0x4 - core index']
  #allocation1 [shape = 'u32[144,128]{1,0:T(1,128)}', space=vmem, size = 0x12000, scoped, tag = 'internal scratch']
  %s0 = inlined_call_operand.vmem [shape: bf16[248,128], index: 0, kind: input, shape index: {}]
  %s1 = inlined_call_operand.vmem [shape: bf16[128,16], index: 1, kind: input, shape index: {}]
  %s2 = inlined_call_operand.vmem [shape: f32[1,16], index: 2, kind: input, shape index: {}]
  %s3 = inlined_call_operand.vmem [shape: bf16[248,16], index: 3, kind: output, shape index: {}]
  %s4 = sld [smem:[#allocation0]]
  $region22: #{squeezenet_forward.26} parent=0
    _
  %s6 = ssub.s32 1, %s4
  %s7 = scalar_select 0, %s6, %s4
  // Predicated region
  $region2: #{squeezenet_forward.26} parent=0 // pred_check
    _
  $region3: #{squeezenet_forward.26} parent=0 // pred_check_branch
    %9 = sbr.rel (0) target = $region5
  $region4: #{squeezenet_forward.26} parent=0 // pred_region
    _
  $region5: #{squeezenet_forward.26} parent=0 // pred_fallthru
    _
  // Predicated region
  $region6: #{squeezenet_forward.26} parent=0 // pred_check
    _
  $region7: #{squeezenet_forward.26} parent=0 // pred_check_branch
    %11 = sbr.rel (0) target = $region9
  $region8: #{squeezenet_forward.26} parent=0 // pred_region
    _
  $region9: #{squeezenet_forward.26} parent=0 // pred_fallthru
    _
  // Predicated region
  $region10: #{squeezenet_forward.26} parent=0 // pred_check
    _
  $region11: #{squeezenet_forward.26} parent=0 // pred_check_branch
    %13 = sbr.rel (0) target = $region13
  $region12: #{squeezenet_forward.26} parent=0 // pred_region
    _
  $region13: #{squeezenet_forward.26} parent=0 // pred_fallthru
    _
  %v15 = vld [vmem:[%s0] sm:$0xf]
  %v16 = vld [vmem:[%s0 + $0x4] sm:$0xf]
  %v17 = vld [vmem:[%s0 + $0x8] sm:$0xf]
  %v18 = vld [vmem:[%s0 + $0xc] sm:$0xf]
  %v19 = vld [vmem:[%s0 + $0x10] sm:$0xf]
  %v20 = vld [vmem:[%s0 + $0x14] sm:$0xf]
  %v21 = vld [vmem:[%s0 + $0x18] sm:$0xf]
  %v22 = vld [vmem:[%s0 + $0x1c] sm:$0xf]
  %v23 = vld [vmem:[%s0 + $0x20] sm:$0xf]
  %v24 = vld [vmem:[%s0 + $0x24] sm:$0xf]
  %v25 = vld [vmem:[%s0 + $0x28] sm:$0xf]
  %v26 = vld [vmem:[%s0 + $0x2c] sm:$0xf]
  %v27 = vld [vmem:[%s0 + $0x30] sm:$0xf]
  %v28 = vld [vmem:[%s0 + $0x34] sm:$0xf]
  %v29 = vld [vmem:[%s0 + $0x38] sm:$0xf]
  %v30 = vld [vmem:[%s0 + $0x3c] sm:$0xf]
  %v31 = vld [vmem:[%s0 + $0x40] sm:$0xf]
  %v32 = vld [vmem:[%s0 + $0x44] sm:$0xf]
  %v33 = vld [vmem:[%s0 + $0x48] sm:$0xf]
  %v34 = vld [vmem:[%s0 + $0x4c] sm:$0xf]
  %v35 = vld [vmem:[%s0 + $0x50] sm:$0xf]
  %v36 = vld [vmem:[%s0 + $0x54] sm:$0xf]
  %v37 = vld [vmem:[%s0 + $0x58] sm:$0xf]
  %v38 = vld [vmem:[%s0 + $0x5c] sm:$0xf]
  %v39 = vld [vmem:[%s0 + $0x60] sm:$0xf]
  %v40 = vld [vmem:[%s0 + $0x64] sm:$0xf]
  %v41 = vld [vmem:[%s0 + $0x68] sm:$0xf]
  %v42 = vld [vmem:[%s0 + $0x6c] sm:$0xf]
  %v43 = vld [vmem:[%s0 + $0x70] sm:$0xf]
  %v44 = vld [vmem:[%s0 + $0x74] sm:$0xf]
  %v45 = vld [vmem:[%s0 + $0x78] sm:$0xf]
  %v46 = vld [vmem:[%s1] sm:$0xf]
  %v47 = vld [vmem:[%s1 + $0x4] sm:$0xf]
  %v48 = vld [vmem:[%s1 + $0x8] sm:$0xf]
  %v49 = vld [vmem:[%s1 + $0xc] sm:$0xf]
  %v50 = vld [vmem:[%s1 + $0x10] sm:$0xf]
  %v51 = vld [vmem:[%s1 + $0x14] sm:$0xf]
  %v52 = vld [vmem:[%s1 + $0x18] sm:$0xf]
  %v53 = vld [vmem:[%s1 + $0x1c] sm:$0xf]
  %v54 = vld [vmem:[%s1 + $0x20] sm:$0xf]
  %v55 = vld [vmem:[%s1 + $0x24] sm:$0xf]
  %v56 = vld [vmem:[%s1 + $0x28] sm:$0xf]
  %v57 = vld [vmem:[%s1 + $0x2c] sm:$0xf]
  %v58 = vld [vmem:[%s1 + $0x30] sm:$0xf]
  %v59 = vld [vmem:[%s1 + $0x34] sm:$0xf]
  %v60 = vld [vmem:[%s1 + $0x38] sm:$0xf]
  %v61 = vld [vmem:[%s1 + $0x3c] sm:$0xf]
  %v62 = vld [vmem:[%s2] sm:$0x1]
  %v64 = vlaneseq
  %v65 = vshrl.u32 %v64, 7
  %v66 = vsub.s32 0, %v65
  %v67 = vrot.slane %v62, %v66
  %v100 = vunpack.c.l.b16 %v15
  %v101 = vunpack.c.l.b16 %v16
  %v102 = vunpack.c.l.b16 %v17
  %v103 = vunpack.c.l.b16 %v18
  %v104 = vunpack.c.l.b16 %v19
  %v105 = vunpack.c.l.b16 %v20
  %v106 = vunpack.c.l.b16 %v21
  %v107 = vunpack.c.l.b16 %v22
  %v108 = vunpack.c.l.b16 %v23
  %v109 = vunpack.c.l.b16 %v24
  %v110 = vunpack.c.l.b16 %v25
  %v111 = vunpack.c.l.b16 %v26
  %v112 = vunpack.c.l.b16 %v27
  %v113 = vunpack.c.l.b16 %v28
  %v114 = vunpack.c.l.b16 %v29
  %v115 = vunpack.c.l.b16 %v30
  %v116 = vunpack.c.l.b16 %v31
  %v117 = vunpack.c.l.b16 %v32
  %v118 = vunpack.c.l.b16 %v33
  %v119 = vunpack.c.l.b16 %v34
  %v120 = vunpack.c.l.b16 %v35
  %v121 = vunpack.c.l.b16 %v36
  %v122 = vunpack.c.l.b16 %v37
  %v123 = vunpack.c.l.b16 %v38
  %v124 = vunpack.c.l.b16 %v39
  %v125 = vunpack.c.l.b16 %v40
  %v126 = vunpack.c.l.b16 %v41
  %v127 = vunpack.c.l.b16 %v42
  %v128 = vunpack.c.l.b16 %v43
  %v129 = vunpack.c.l.b16 %v44
  %v130 = vunpack.c.l.b16 %v45
  %v131 = vpack.c.b16 %v101, %v100
  %v132 = vpack.c.b16 %v103, %v102
  %v133 = vpack.c.b16 %v105, %v104
  %v134 = vpack.c.b16 %v107, %v106
  %v135 = vpack.c.b16 %v109, %v108
  %v136 = vpack.c.b16 %v111, %v110
  %v137 = vpack.c.b16 %v113, %v112
  %v138 = vpack.c.b16 %v115, %v114
  %v139 = vpack.c.b16 %v117, %v116
  %v140 = vpack.c.b16 %v119, %v118
  %v141 = vpack.c.b16 %v121, %v120
  %v142 = vpack.c.b16 %v123, %v122
  %v143 = vpack.c.b16 %v125, %v124
  %v144 = vpack.c.b16 %v127, %v126
  %v145 = vpack.c.b16 %v129, %v128
  %v146 = vpack.c.b16 %v130, %v130
  %v179 = vunpack.c.l.b16 %v46
  %v180 = vunpack.c.l.b16 %v47
  %v181 = vunpack.c.l.b16 %v48
  %v182 = vunpack.c.l.b16 %v49
  %v183 = vunpack.c.l.b16 %v50
  %v184 = vunpack.c.l.b16 %v51
  %v185 = vunpack.c.l.b16 %v52
  %v186 = vunpack.c.l.b16 %v53
  %v187 = vunpack.c.l.b16 %v54
  %v188 = vunpack.c.l.b16 %v55
  %v189 = vunpack.c.l.b16 %v56
  %v190 = vunpack.c.l.b16 %v57
  %v191 = vunpack.c.l.b16 %v58
  %v192 = vunpack.c.l.b16 %v59
  %v193 = vunpack.c.l.b16 %v60
  %v194 = vunpack.c.l.b16 %v61
  %v195 = vpack.c.b16 %v180, %v179
  %v196 = vpack.c.b16 %v182, %v181
  %v197 = vpack.c.b16 %v184, %v183
  %v198 = vpack.c.b16 %v186, %v185
  %v199 = vpack.c.b16 %v188, %v187
  %v200 = vpack.c.b16 %v190, %v189
  %v201 = vpack.c.b16 %v192, %v191
  %v202 = vpack.c.b16 %v194, %v193
  %211 = vmatprep.subr.bf16.mxu0 0
  %212 = vmatpush1.bf16.msra.mxu0 %v195
  %213 = vmatprep.subr.bf16.mxu0 0
  %214 = vmatpush1.bf16.msra.mxu0 %v196
  %215 = vmatprep.subr.bf16.mxu0 0
  %216 = vmatpush1.bf16.msra.mxu0 %v197
  %217 = vmatprep.subr.bf16.mxu0 0
  %218 = vmatpush1.bf16.msra.mxu0 %v198
  %219 = vmatprep.subr.bf16.mxu0 0
  %220 = vmatpush1.bf16.msra.mxu0 %v199
  %221 = vmatprep.subr.bf16.mxu0 0
  %222 = vmatpush1.bf16.msra.mxu0 %v200
  %223 = vmatprep.subr.bf16.mxu0 0
  %224 = vmatpush1.bf16.msra.mxu0 %v201
  %225 = vmatprep.subr.bf16.mxu0 0
  %226 = vmatpush1.bf16.msra.mxu0 %v202
  %227 = vmatprep.subr.bf16.mxu0 0
  %228 = vmatpush1.bf16.msra.mxu0 0
  %229 = vmatprep.subr.bf16.mxu0 0
  %230 = vmatpush1.bf16.msra.mxu0 0
  %231 = vmatprep.subr.bf16.mxu0 0
  %232 = vmatpush1.bf16.msra.mxu0 0
  %233 = vmatprep.subr.bf16.mxu0 0
  %234 = vmatpush1.bf16.msra.mxu0 0
  %235 = vmatprep.subr.bf16.mxu0 0
  %236 = vmatpush1.bf16.msra.mxu0 0
  %237 = vmatprep.subr.bf16.mxu0 0
  %238 = vmatpush1.bf16.msra.mxu0 0
  %239 = vmatprep.subr.bf16.mxu0 0
  %240 = vmatpush1.bf16.msra.mxu0 0
  %241 = vmatprep.subr.bf16.mxu0 0
  %242 = vmatpush1.bf16.msra.mxu0 0
  %243 = vmatprep.mubr.bf16.mxu0 0
  %244 = vmatmul.mubr.bf16.gmra.mrb[0].mxu0 %v131
  %v245 = vpop.f32.mrb[0].mxu0
  %v246 = vadd.f32 %v67, %v245
  %v247 = vpop.f32.mrb[0].mxu0
  %v248 = vpop.f32.mrb[0].mxu0
  %v249 = vadd.f32 %v67, %v248
  %v250 = vpop.f32.mrb[0].mxu0
  %251 = vmatprep.mubr.bf16.mxu0 0
  %252 = vmatmul.mubr.bf16.gmra.mrb[0].mxu0 %v132
  %v253 = vpop.f32.mrb[0].mxu0
  %v254 = vadd.f32 %v67, %v253
  %v255 = vpop.f32.mrb[0].mxu0
  %v256 = vpop.f32.mrb[0].mxu0
  %v257 = vadd.f32 %v67, %v256
  %v258 = vpop.f32.mrb[0].mxu0
  %259 = vmatprep.mubr.bf16.mxu0 0
  %260 = vmatmul.mubr.bf16.gmra.mrb[0].mxu0 %v133
  %v261 = vpop.f32.mrb[0].mxu0
  %v262 = vadd.f32 %v67, %v261
  %v263 = vpop.f32.mrb[0].mxu0
  %v264 = vpop.f32.mrb[0].mxu0
  %v265 = vadd.f32 %v67, %v264
  %v266 = vpop.f32.mrb[0].mxu0
  %267 = vmatprep.mubr.bf16.mxu0 0
  %268 = vmatmul.mubr.bf16.gmra.mrb[0].mxu0 %v134
  %v269 = vpop.f32.mrb[0].mxu0
  %v270 = vadd.f32 %v67, %v269
  %v271 = vpop.f32.mrb[0].mxu0
  %v272 = vpop.f32.mrb[0].mxu0
  %v273 = vadd.f32 %v67, %v272
  %v274 = vpop.f32.mrb[0].mxu0
  %275 = vmatprep.mubr.bf16.mxu0 0
  %276 = vmatmul.mubr.bf16.gmra.mrb[0].mxu0 %v135
  %v277 = vpop.f32.mrb[0].mxu0
  %v278 = vadd.f32 %v67, %v277
  %v279 = vpop.f32.mrb[0].mxu0
  %v280 = vpop.f32.mrb[0].mxu0
  %v281 = vadd.f32 %v67, %v280
  %v282 = vpop.f32.mrb[0].mxu0
  %283 = vmatprep.mubr.bf16.mxu0 0
  %284 = vmatmul.mubr.bf16.gmra.mrb[0].mxu0 %v136
  %v285 = vpop.f32.mrb[0].mxu0
  %v286 = vadd.f32 %v67, %v285
  %v287 = vpop.f32.mrb[0].mxu0
  %v288 = vpop.f32.mrb[0].mxu0
  %v289 = vadd.f32 %v67, %v288
  %v290 = vpop.f32.mrb[0].mxu0
  %291 = vmatprep.mubr.bf16.mxu0 0
  %292 = vmatmul.mubr.bf16.gmra.mrb[0].mxu0 %v137
  %v293 = vpop.f32.mrb[0].mxu0
  %v294 = vadd.f32 %v67, %v293
  %v295 = vpop.f32.mrb[0].mxu0
  %v296 = vpop.f32.mrb[0].mxu0
  %v297 = vadd.f32 %v67, %v296
  %v298 = vpop.f32.mrb[0].mxu0
  %299 = vmatprep.mubr.bf16.mxu0 0
  %300 = vmatmul.mubr.bf16.gmra.mrb[0].mxu0 %v138
  %v301 = vpop.f32.mrb[0].mxu0
  %v302 = vadd.f32 %v67, %v301
  %v303 = vpop.f32.mrb[0].mxu0
  %v304 = vpop.f32.mrb[0].mxu0
  %v305 = vadd.f32 %v67, %v304
  %v306 = vpop.f32.mrb[0].mxu0
  %307 = vmatprep.mubr.bf16.mxu0 0
  %308 = vmatmul.mubr.bf16.gmra.mrb[0].mxu0 %v139
  %v309 = vpop.f32.mrb[0].mxu0
  %v310 = vadd.f32 %v67, %v309
  %v311 = vpop.f32.mrb[0].mxu0
  %v312 = vpop.f32.mrb[0].mxu0
  %v313 = vadd.f32 %v67, %v312
  %v314 = vpop.f32.mrb[0].mxu0
  %315 = vmatprep.mubr.bf16.mxu0 0
  %316 = vmatmul.mubr.bf16.gmra.mrb[0].mxu0 %v140
  %v317 = vpop.f32.mrb[0].mxu0
  %v318 = vadd.f32 %v67, %v317
  %v319 = vpop.f32.mrb[0].mxu0
  %v320 = vpop.f32.mrb[0].mxu0
  %v321 = vadd.f32 %v67, %v320
  %v322 = vpop.f32.mrb[0].mxu0
  %323 = vmatprep.mubr.bf16.mxu0 0
  %324 = vmatmul.mubr.bf16.gmra.mrb[0].mxu0 %v141
  %v325 = vpop.f32.mrb[0].mxu0
  %v326 = vadd.f32 %v67, %v325
  %v327 = vpop.f32.mrb[0].mxu0
  %v328 = vpop.f32.mrb[0].mxu0
  %v329 = vadd.f32 %v67, %v328
  %v330 = vpop.f32.mrb[0].mxu0
  %331 = vmatprep.mubr.bf16.mxu0 0
  %332 = vmatmul.mubr.bf16.gmra.mrb[0].mxu0 %v142
  %v333 = vpop.f32.mrb[0].mxu0
  %v334 = vadd.f32 %v67, %v333
  %v335 = vpop.f32.mrb[0].mxu0
  %v336 = vpop.f32.mrb[0].mxu0
  %v337 = vadd.f32 %v67, %v336
  %v338 = vpop.f32.mrb[0].mxu0
  %339 = vmatprep.mubr.bf16.mxu0 0
  %340 = vmatmul.mubr.bf16.gmra.mrb[0].mxu0 %v143
  %v341 = vpop.f32.mrb[0].mxu0
  %v342 = vadd.f32 %v67, %v341
  %v343 = vpop.f32.mrb[0].mxu0
  %v344 = vpop.f32.mrb[0].mxu0
  %v345 = vadd.f32 %v67, %v344
  %v346 = vpop.f32.mrb[0].mxu0
  %347 = vmatprep.mubr.bf16.mxu0 0
  %348 = vmatmul.mubr.bf16.gmra.mrb[0].mxu0 %v144
  %v349 = vpop.f32.mrb[0].mxu0
  %v350 = vadd.f32 %v67, %v349
  %v351 = vpop.f32.mrb[0].mxu0
  %v352 = vpop.f32.mrb[0].mxu0
  %v353 = vadd.f32 %v67, %v352
  %v354 = vpop.f32.mrb[0].mxu0
  %355 = vmatprep.mubr.bf16.mxu0 0
  %356 = vmatmul.mubr.bf16.gmra.mrb[0].mxu0 %v145
  %v357 = vpop.f32.mrb[0].mxu0
  %v358 = vadd.f32 %v67, %v357
  %v359 = vpop.f32.mrb[0].mxu0
  %v360 = vpop.f32.mrb[0].mxu0
  %v361 = vadd.f32 %v67, %v360
  %v362 = vpop.f32.mrb[0].mxu0
  %363 = vmatprep.mubr.bf16.mxu0 0
  %364 = vmatmul.mubr.bf16.gmra.mrb[0].mxu0 %v146
  %v365 = vpop.f32.mrb[0].mxu0
  %v366 = vadd.f32 %v67, %v365
  %v367 = vpop.f32.mrb[0].mxu0
  %v368 = vpop.f32.mrb[0].mxu0
  %v369 = vpop.f32.mrb[0].mxu0
  %370 = vdwg.mxu0
  %v371 = vmax.f32 %v246, 0.0
  %v372 = vmax.f32 %v249, 0.0
  %v373 = vmax.f32 %v254, 0.0
  %v374 = vmax.f32 %v257, 0.0
  %v375 = vmax.f32 %v262, 0.0
  %v376 = vmax.f32 %v265, 0.0
  %v377 = vmax.f32 %v270, 0.0
  %v378 = vmax.f32 %v273, 0.0
  %v379 = vmax.f32 %v278, 0.0
  %v380 = vmax.f32 %v281, 0.0
  %v381 = vmax.f32 %v286, 0.0
  %v382 = vmax.f32 %v289, 0.0
  %v383 = vmax.f32 %v294, 0.0
  %v384 = vmax.f32 %v297, 0.0
  %v385 = vmax.f32 %v302, 0.0
  %v386 = vmax.f32 %v305, 0.0
  %v387 = vmax.f32 %v310, 0.0
  %v388 = vmax.f32 %v313, 0.0
  %v389 = vmax.f32 %v318, 0.0
  %v390 = vmax.f32 %v321, 0.0
  %v391 = vmax.f32 %v326, 0.0
  %v392 = vmax.f32 %v329, 0.0
  %v393 = vmax.f32 %v334, 0.0
  %v394 = vmax.f32 %v337, 0.0
  %v395 = vmax.f32 %v342, 0.0
  %v396 = vmax.f32 %v345, 0.0
  %v397 = vmax.f32 %v350, 0.0
  %v398 = vmax.f32 %v353, 0.0
  %v399 = vmax.f32 %v358, 0.0
  %v400 = vmax.f32 %v361, 0.0
  %v401 = vmax.f32 %v366, 0.0
  %v402 = vpack.c.bf16 %v372, %v371
  %v403 = vpack.c.bf16 %v374, %v373
  %v404 = vpack.c.bf16 %v376, %v375
  %v405 = vpack.c.bf16 %v378, %v377
  %v406 = vpack.c.bf16 %v380, %v379
  %v407 = vpack.c.bf16 %v382, %v381
  %v408 = vpack.c.bf16 %v384, %v383
  %v409 = vpack.c.bf16 %v386, %v385
  %v410 = vpack.c.bf16 %v388, %v387
  %v411 = vpack.c.bf16 %v390, %v389
  %v412 = vpack.c.bf16 %v392, %v391
  %v413 = vpack.c.bf16 %v394, %v393
  %v414 = vpack.c.bf16 %v396, %v395
  %v415 = vpack.c.bf16 %v398, %v397
  %v416 = vpack.c.bf16 %v400, %v399
  %v417 = vpack.c.bf16 %v401, %v401
  %v434 = vunpack.c.l.b16 %v402
  %v435 = vunpack.c.h.b16 %v402
  %v436 = vunpack.c.l.b16 %v403
  %v437 = vunpack.c.h.b16 %v403
  %v438 = vunpack.c.l.b16 %v404
  %v439 = vunpack.c.h.b16 %v404
  %v440 = vunpack.c.l.b16 %v405
  %v441 = vunpack.c.h.b16 %v405
  %v442 = vunpack.c.l.b16 %v406
  %v443 = vunpack.c.h.b16 %v406
  %v444 = vunpack.c.l.b16 %v407
  %v445 = vunpack.c.h.b16 %v407
  %v446 = vunpack.c.l.b16 %v408
  %v447 = vunpack.c.h.b16 %v408
  %v448 = vunpack.c.l.b16 %v409
  %v449 = vunpack.c.h.b16 %v409
  %v450 = vunpack.c.l.b16 %v410
  %v451 = vunpack.c.h.b16 %v410
  %v452 = vunpack.c.l.b16 %v411
  %v453 = vunpack.c.h.b16 %v411
  %v454 = vunpack.c.l.b16 %v412
  %v455 = vunpack.c.h.b16 %v412
  %v456 = vunpack.c.l.b16 %v413
  %v457 = vunpack.c.h.b16 %v413
  %v458 = vunpack.c.l.b16 %v414
  %v459 = vunpack.c.h.b16 %v414
  %v460 = vunpack.c.l.b16 %v415
  %v461 = vunpack.c.h.b16 %v415
  %v462 = vunpack.c.l.b16 %v416
  %v463 = vunpack.c.h.b16 %v416
  %v464 = vunpack.c.l.b16 %v417
  %v465 = vpack.c.b16 %v434, %v434
  %v466 = vpack.c.b16 %v435, %v435
  %v467 = vpack.c.b16 %v436, %v436
  %v468 = vpack.c.b16 %v437, %v437
  %v469 = vpack.c.b16 %v438, %v438
  %v470 = vpack.c.b16 %v439, %v439
  %v471 = vpack.c.b16 %v440, %v440
  %v472 = vpack.c.b16 %v441, %v441
  %v473 = vpack.c.b16 %v442, %v442
  %v474 = vpack.c.b16 %v443, %v443
  %v475 = vpack.c.b16 %v444, %v444
  %v476 = vpack.c.b16 %v445, %v445
  %v477 = vpack.c.b16 %v446, %v446
  %v478 = vpack.c.b16 %v447, %v447
  %v479 = vpack.c.b16 %v448, %v448
  %v480 = vpack.c.b16 %v449, %v449
  %v481 = vpack.c.b16 %v450, %v450
  %v482 = vpack.c.b16 %v451, %v451
  %v483 = vpack.c.b16 %v452, %v452
  %v484 = vpack.c.b16 %v453, %v453
  %v485 = vpack.c.b16 %v454, %v454
  %v486 = vpack.c.b16 %v455, %v455
  %v487 = vpack.c.b16 %v456, %v456
  %v488 = vpack.c.b16 %v457, %v457
  %v489 = vpack.c.b16 %v458, %v458
  %v490 = vpack.c.b16 %v459, %v459
  %v491 = vpack.c.b16 %v460, %v460
  %v492 = vpack.c.b16 %v461, %v461
  %v493 = vpack.c.b16 %v462, %v462
  %v494 = vpack.c.b16 %v463, %v463
  %v495 = vpack.c.b16 %v464, %v464
  %vm527 = vcmask 125952
  %528 = vst.msk [vmem:[%s3] sm:$0xf] %vm527, %v465
  %529 = vst.msk [vmem:[%s3 + $0x4] sm:$0xf] %vm527, %v466
  %530 = vst.msk [vmem:[%s3 + $0x8] sm:$0xf] %vm527, %v467
  %531 = vst.msk [vmem:[%s3 + $0xc] sm:$0xf] %vm527, %v468
  %532 = vst.msk [vmem:[%s3 + $0x10] sm:$0xf] %vm527, %v469
  %533 = vst.msk [vmem:[%s3 + $0x14] sm:$0xf] %vm527, %v470
  %534 = vst.msk [vmem:[%s3 + $0x18] sm:$0xf] %vm527, %v471
  %535 = vst.msk [vmem:[%s3 + $0x1c] sm:$0xf] %vm527, %v472
  %536 = vst.msk [vmem:[%s3 + $0x20] sm:$0xf] %vm527, %v473
  %537 = vst.msk [vmem:[%s3 + $0x24] sm:$0xf] %vm527, %v474
  %538 = vst.msk [vmem:[%s3 + $0x28] sm:$0xf] %vm527, %v475
  %539 = vst.msk [vmem:[%s3 + $0x2c] sm:$0xf] %vm527, %v476
  %540 = vst.msk [vmem:[%s3 + $0x30] sm:$0xf] %vm527, %v477
  %541 = vst.msk [vmem:[%s3 + $0x34] sm:$0xf] %vm527, %v478
  %542 = vst.msk [vmem:[%s3 + $0x38] sm:$0xf] %vm527, %v479
  %543 = vst.msk [vmem:[%s3 + $0x3c] sm:$0xf] %vm527, %v480
  %544 = vst.msk [vmem:[%s3 + $0x40] sm:$0xf] %vm527, %v481
  %545 = vst.msk [vmem:[%s3 + $0x44] sm:$0xf] %vm527, %v482
  %546 = vst.msk [vmem:[%s3 + $0x48] sm:$0xf] %vm527, %v483
  %547 = vst.msk [vmem:[%s3 + $0x4c] sm:$0xf] %vm527, %v484
  %548 = vst.msk [vmem:[%s3 + $0x50] sm:$0xf] %vm527, %v485
  %549 = vst.msk [vmem:[%s3 + $0x54] sm:$0xf] %vm527, %v486
  %550 = vst.msk [vmem:[%s3 + $0x58] sm:$0xf] %vm527, %v487
  %551 = vst.msk [vmem:[%s3 + $0x5c] sm:$0xf] %vm527, %v488
  %552 = vst.msk [vmem:[%s3 + $0x60] sm:$0xf] %vm527, %v489
  %553 = vst.msk [vmem:[%s3 + $0x64] sm:$0xf] %vm527, %v490
  %554 = vst.msk [vmem:[%s3 + $0x68] sm:$0xf] %vm527, %v491
  %555 = vst.msk [vmem:[%s3 + $0x6c] sm:$0xf] %vm527, %v492
  %556 = vst.msk [vmem:[%s3 + $0x70] sm:$0xf] %vm527, %v493
  %557 = vst.msk [vmem:[%s3 + $0x74] sm:$0xf] %vm527, %v494
  %558 = vst.msk [vmem:[%s3 + $0x78] sm:$0xf] %vm527, %v495
  // Predicated region
  $region14: #{squeezenet_forward.26} parent=0 // pred_check
    _
  $region15: #{squeezenet_forward.26} parent=0 // pred_check_branch
    %560 = sbr.rel (0) target = $region17
  $region16: #{squeezenet_forward.26} parent=0 // pred_region
    _
  $region17: #{squeezenet_forward.26} parent=0 // pred_fallthru
    _
  // Predicated region
  $region18: #{squeezenet_forward.26} parent=0 // pred_check
    _
  $region19: #{squeezenet_forward.26} parent=0 // pred_check_branch
    %562 = sbr.rel (0) target = $region21
  $region20: #{squeezenet_forward.26} parent=0 // pred_region
    _
  $region21: #{squeezenet_forward.26} parent=0 // pred_fallthru
    _

// kernel: squeezenet_forward.28
$region0: #{squeezenet_forward.28}
  #allocation0 [shape = 'u32[]', space=smem, size = 0x4, offset = 0x4, fixed_abs, tag = 'smem constant byte address 0x4 - core index']
  #allocation1 [shape = 'u32[144,128]{1,0:T(1,128)}', space=vmem, size = 0x12000, scoped, tag = 'internal scratch']
  %s0 = inlined_call_operand.vmem [shape: bf16[12,2,6,256], index: 0, kind: input, shape index: {}]
  %s1 = inlined_call_operand.vmem [shape: bf16[2,5,5,128], index: 1, kind: output, shape index: {}]
  %s2 = sld [smem:[#allocation0]]
  $region37: #{squeezenet_forward.28} parent=0
    _
  %s4 = ssub.s32 1, %s2
  %s5 = scalar_select 0, %s4, %s2
  loop: start=0, step=1, limit=4
  $region2: #{squeezenet_forward.28} parent=0 // loop_pre_header
    _
  $region3: #{squeezenet_forward.28} parent=0 // loop_header
    %s7 = sphi 0, %s11
    %p8 = scmp.ge.s32.totalorder %s7, 4
    %s17 = sphi 0, %s19
    %s20 = sphi 0, %s17
    %s21 = sphi 0, %s20
    %s37 = sphi 0, %s21
    %s43 = sphi 0, %s45
    %s46 = sphi 0, %s43
    %s47 = sphi 0, %s46
    %s63 = sphi 0, %s47
  $region4: #{squeezenet_forward.28} parent=0 // loop_header_branch
    %10 = sbr.rel (%p8) target = $region8
  $region5: #{squeezenet_forward.28} parent=0 // loop_body
    %s12 = ssub.s32 %s7, 1
    %s13 = ssub.s32 %s7, 2
    %s14 = sadd.s32 %s7, 1
    %s15 = ssub.s32 %s7, %s14
    %p16 = scmp.eq.s32.totalorder %s15, 0
    %s18 = sadd.s32 %s17, 1
    %s19 = scalar_select %p16, %s17, %s18
    %p22 = pneg %p16
    %p23 = scmp.eq.s32.totalorder %s7, 1
    %p24 = por %p22, %p23
    %p25 = scmp.ne.s32.totalorder %s17, %s20
    %p26 = scmp.eq.s32.totalorder %s7, 0
    %p27 = por %p25, %p26
    %p28 = scmp.ne.s32.totalorder %s17, %s20
    %p29 = scmp.eq.s32.totalorder %s12, 1
    %p30 = por %p28, %p29
    %p31 = scmp.ne.s32.totalorder %s20, %s21
    %p32 = scmp.eq.s32.totalorder %s12, 0
    %p33 = por %p31, %p32
    %p34 = scmp.ne.s32.totalorder %s20, %s21
    %p35 = scmp.eq.s32.totalorder %s13, 1
    %p36 = por %p34, %p35
    %p38 = scmp.ne.s32.totalorder %s21, %s37
    %p39 = scmp.eq.s32.totalorder %s13, 0
    %p40 = por %p38, %p39
    %s41 = ssub.s32 %s7, %s14
    %p42 = scmp.eq.s32.totalorder %s41, 0
    %s44 = sadd.s32 %s43, 1
    %s45 = scalar_select %p42, %s43, %s44
    %p48 = pneg %p42
    %p49 = scmp.eq.s32.totalorder %s7, 1
    %p50 = por %p48, %p49
    %p51 = scmp.ne.s32.totalorder %s43, %s46
    %p52 = scmp.eq.s32.totalorder %s7, 0
    %p53 = por %p51, %p52
    %p54 = scmp.ne.s32.totalorder %s43, %s46
    %p55 = scmp.eq.s32.totalorder %s12, 1
    %p56 = por %p54, %p55
    %p57 = scmp.ne.s32.totalorder %s46, %s47
    %p58 = scmp.eq.s32.totalorder %s12, 0
    %p59 = por %p57, %p58
    %p60 = scmp.ne.s32.totalorder %s46, %s47
    %p61 = scmp.eq.s32.totalorder %s13, 1
    %p62 = por %p60, %p61
    %p64 = scmp.ne.s32.totalorder %s47, %s63
    %p65 = scmp.eq.s32.totalorder %s13, 0
    %p66 = por %p64, %p65
    %p67 = scmp.le.s32.totalorder 1, %s7
    %p68 = scmp.lt.s32.totalorder %s7, 3
    %p69 = pnand %p67, %p68
    %p70 = pneg %p69
    // Predicated region
    $region9: #{squeezenet_forward.28} parent=5 // pred_check
      _
    $region10: #{squeezenet_forward.28} parent=5 // pred_check_branch
      %72 = sbr.rel (%p69) target = $region12
    $region11: #{squeezenet_forward.28} parent=5 // pred_region
      %s73 = ssub.s32 %s7, 1
    $region12: #{squeezenet_forward.28} parent=5 // pred_fallthru
      _
    %p74 = scmp.lt.s32.totalorder %s7, 2
    // Predicated region
    $region13: #{squeezenet_forward.28} parent=5 // pred_check
      %p75 = pneg %p74
    $region14: #{squeezenet_forward.28} parent=5 // pred_check_branch
      %77 = sbr.rel (%p75) target = $region16
    $region15: #{squeezenet_forward.28} parent=5 // pred_region
      // Predicated region
      $region17: #{squeezenet_forward.28} parent=15 // pred_check
        %p78 = pneg %p27
      $region18: #{squeezenet_forward.28} parent=15 // pred_check_branch
        %80 = sbr.rel (%p78) target = $region20
      $region19: #{squeezenet_forward.28} parent=15 // pred_region
        %s81 = smul.u32 6, %s7
        %p82 = scmp.lt.s32.totalorder %s81, 11
        %s83 = scalar_select %p82, %s81, 11
        %s84 = smul.addr %s83, 4
        %s85 = smul.addr %s84, 4
        %s86 = scalar_lea.vmem %s0, %s85
        %s87 = smul.u32 6, %s7
      $region20: #{squeezenet_forward.28} parent=15 // pred_fallthru
        _
    $region16: #{squeezenet_forward.28} parent=5 // pred_fallthru
      _
    %p88 = scmp.le.s32.totalorder 1, %s7
    %p89 = scmp.lt.s32.totalorder %s7, 3
    %p90 = pnand %p88, %p89
    %p91 = pneg %p90
    // Predicated region
    $region21: #{squeezenet_forward.28} parent=5 // pred_check
      _
    $region22: #{squeezenet_forward.28} parent=5 // pred_check_branch
      %93 = sbr.rel (%p90) target = $region24
    $region23: #{squeezenet_forward.28} parent=5 // pred_region
      %s94 = ssub.s32 %s7, 1
      %s95 = smul.u32 6, %s12
      %p96 = scmp.lt.s32.totalorder %s95, 11
      %s97 = scalar_select %p96, %s95, 11
      %s98 = smul.addr %s97, 4
      %s99 = smul.addr %s98, 4
      %s100 = scalar_lea.vmem %s0, %s99
      %p101 = pneg %p33
      %p102 = pneg %p30
      %p103 = pneg %p59
      %p104 = pneg %p56
      %p105 = scmp.lt.s32.totalorder %s12, 1
      %s106 = scalar_select %p105, %s12, 1
      %s107 = smul.addr %s106, 5
      %s108 = smul.addr %s107, 4
      %s109 = scalar_lea.vmem %s1, %s108
      %s110 = smul.u32 6, %s12
      %p111 = scmp.lt.s32.totalorder %s110, 11
      %s112 = scalar_select %p111, %s110, 11
      %s113 = smul.addr %s112, 4
      %s114 = smul.addr %s113, 4
      %s115 = scalar_lea.vmem %s0, %s114
      %s116 = smul.u32 6, %s12
      %p117 = scmp.lt.s32.totalorder %s12, 1
      %s118 = scalar_select %p117, %s12, 1
      %s119 = smul.addr %s118, 5
      %s120 = smul.addr %s119, 4
      %s121 = scalar_lea.vmem %s1, %s120
      %v122 = vld [vmem:[%s115] sm:$0x77]
      %v123 = vld [vmem:[%s115 + $0x8] sm:$0x77]
      %v124 = vld [vmem:[%s115 + $0x10] sm:$0x77]
      %v125 = vld [vmem:[%s115 + $0x18] sm:$0x77]
      %v126 = vld [vmem:[%s115 + $0x20] sm:$0x77]
      %v127 = vld [vmem:[%s115 + $0x28] sm:$0x77]
      %v128 = vld [vmem:[%s115 + $0x30] sm:$0x77]
      %v129 = vld [vmem:[%s115 + $0x38] sm:$0x77]
      %v130 = vld [vmem:[%s115 + $0x40] sm:$0x77]
      %v131 = vld [vmem:[%s115 + $0x48] sm:$0x77]
      %v132 = vld [vmem:[%s115 + $0x50] sm:$0x77]
      %v133 = vmax.bf16 %v122, %v123
      %v134 = vmax.bf16 %v124, %v125
      %v135 = vmax.bf16 %v126, %v127
      %v136 = vmax.bf16 %v128, %v129
      %v137 = vmax.bf16 %v130, %v131
      %v138 = vmax.bf16 %v133, %v124
      %v139 = vmax.bf16 %v134, %v126
      %v140 = vmax.bf16 %v135, %v128
      %v141 = vmax.bf16 %v136, %v130
      %v142 = vmax.bf16 %v137, %v132
      %v148 = vrot.slane %v138, 4
      %v149 = vrot.slane %v139, 4
      %v150 = vrot.slane %v140, 4
      %v151 = vrot.slane %v141, 4
      %v152 = vrot.slane %v142, 4
      %v158 = vmax.bf16 %v138, %v148
      %v159 = vmax.bf16 %v139, %v149
      %v160 = vmax.bf16 %v140, %v150
      %v161 = vmax.bf16 %v141, %v151
      %v162 = vmax.bf16 %v142, %v152
      %v164 = vshrl.u32 %v138, 16
      %v166 = vrot.slane %v164, 4
      %v167 = vshll.u32 %v138, 16
      %v169 = vrot.slane %v167, 5
      %v170 = vor.u32 %v166, %v169
      %v171 = vrot.slane %v170, 4
      %v173 = vshrl.u32 %v139, 16
      %v175 = vrot.slane %v173, 4
      %v176 = vshll.u32 %v139, 16
      %v178 = vrot.slane %v176, 5
      %v179 = vor.u32 %v175, %v178
      %v180 = vrot.slane %v179, 4
      %v182 = vshrl.u32 %v140, 16
      %v184 = vrot.slane %v182, 4
      %v185 = vshll.u32 %v140, 16
      %v187 = vrot.slane %v185, 5
      %v188 = vor.u32 %v184, %v187
      %v189 = vrot.slane %v188, 4
      %v191 = vshrl.u32 %v141, 16
      %v193 = vrot.slane %v191, 4
      %v194 = vshll.u32 %v141, 16
      %v196 = vrot.slane %v194, 5
      %v197 = vor.u32 %v193, %v196
      %v198 = vrot.slane %v197, 4
      %v200 = vshrl.u32 %v142, 16
      %v202 = vrot.slane %v200, 4
      %v203 = vshll.u32 %v142, 16
      %v205 = vrot.slane %v203, 5
      %v206 = vor.u32 %v202, %v205
      %v207 = vrot.slane %v206, 4
      %v213 = vmax.bf16 %v158, %v171
      %v214 = vmax.bf16 %v159, %v180
      %v215 = vmax.bf16 %v160, %v189
      %v216 = vmax.bf16 %v161, %v198
      %v217 = vmax.bf16 %v162, %v207
      %vm218 = vcmask 1042432
      %vm219 = vsmask.f32 2304
      %vm220 = vmand %vm218, %vm219
      %v221 = vld [vmem:[%s121] sm:$0x7]
      %v222 = vsel %vm220, %v213, %v221
      %223 = vst [vmem:[%s121] sm:$0x7] %v222
      %v224 = vld [vmem:[%s121 + $0x4] sm:$0x7]
      %v225 = vsel %vm220, %v214, %v224
      %226 = vst [vmem:[%s121 + $0x4] sm:$0x7] %v225
      %v227 = vld [vmem:[%s121 + $0x8] sm:$0x7]
      %v228 = vsel %vm220, %v215, %v227
      %229 = vst [vmem:[%s121 + $0x8] sm:$0x7] %v228
      %v230 = vld [vmem:[%s121 + $0xc] sm:$0x7]
      %v231 = vsel %vm220, %v216, %v230
      %232 = vst [vmem:[%s121 + $0xc] sm:$0x7] %v231
      %v233 = vld [vmem:[%s121 + $0x10] sm:$0x7]
      %v234 = vsel %vm220, %v217, %v233
      %235 = vst [vmem:[%s121 + $0x10] sm:$0x7] %v234
      %p236 = scmp.lt.s32.totalorder %s12, 1
      %s237 = scalar_select %p236, %s12, 1
      %s238 = smul.addr %s237, 5
      %s239 = smul.addr %s238, 4
      %s240 = scalar_lea.vmem %s1, %s239
      // Predicated region
      $region25: #{squeezenet_forward.28} parent=23 // pred_check
        %p241 = pneg %p56
      $region26: #{squeezenet_forward.28} parent=23 // pred_check_branch
        %243 = sbr.rel (%p241) target = $region28
      $region27: #{squeezenet_forward.28} parent=23 // pred_region
        _
      $region28: #{squeezenet_forward.28} parent=23 // pred_fallthru
        _
    $region24: #{squeezenet_forward.28} parent=5 // pred_fallthru
      _
    %p244 = scmp.le.s32.totalorder 2, %s7
    // Predicated region
    $region29: #{squeezenet_forward.28} parent=5 // pred_check
      %p245 = pneg %p244
    $region30: #{squeezenet_forward.28} parent=5 // pred_check_branch
      %247 = sbr.rel (%p245) target = $region32
    $region31: #{squeezenet_forward.28} parent=5 // pred_region
      %s248 = ssub.s32 %s7, 2
      // Predicated region
      $region33: #{squeezenet_forward.28} parent=31 // pred_check
        %p249 = pneg %p62
      $region34: #{squeezenet_forward.28} parent=31 // pred_check_branch
        %251 = sbr.rel (%p249) target = $region36
      $region35: #{squeezenet_forward.28} parent=31 // pred_region
        %p252 = scmp.lt.s32.totalorder %s13, 1
        %s253 = scalar_select %p252, %s13, 1
        %s254 = smul.addr %s253, 5
        %s255 = smul.addr %s254, 4
        %s256 = scalar_lea.vmem %s1, %s255
      $region36: #{squeezenet_forward.28} parent=31 // pred_fallthru
        _
    $region32: #{squeezenet_forward.28} parent=5 // pred_fallthru
      _
  $region6: #{squeezenet_forward.28} parent=0 // loop_footer
    %s11 = sadd.s32 1, %s7
  $region7: #{squeezenet_forward.28} parent=0 // loop_footer_branch
    %6 = sbr.rel target = $region3
  $region8: #{squeezenet_forward.28} parent=0 // loop_exit
    _

// kernel: squeezenet_forward.29
$region0: #{squeezenet_forward.29}
  #allocation0 [shape = 'u32[]', space=smem, size = 0x4, offset = 0x4, fixed_abs, tag = 'smem constant byte address 0x4 - core index']
  #allocation1 [shape = 'u32[144,128]{1,0:T(1,128)}', space=vmem, size = 0x12000, scoped, tag = 'internal scratch']
  %s0 = inlined_call_operand.vmem [shape: bf16[56,128], index: 0, kind: input, shape index: {}]
  %s1 = inlined_call_operand.vmem [shape: bf16[128,32], index: 1, kind: input, shape index: {}]
  %s2 = inlined_call_operand.vmem [shape: f32[1,32], index: 2, kind: input, shape index: {}]
  %s3 = inlined_call_operand.vmem [shape: bf16[56,32], index: 3, kind: output, shape index: {}]
  %s4 = sld [smem:[#allocation0]]
  $region22: #{squeezenet_forward.29} parent=0
    _
  %s6 = ssub.s32 1, %s4
  %s7 = scalar_select 0, %s6, %s4
  // Predicated region
  $region2: #{squeezenet_forward.29} parent=0 // pred_check
    _
  $region3: #{squeezenet_forward.29} parent=0 // pred_check_branch
    %9 = sbr.rel (0) target = $region5
  $region4: #{squeezenet_forward.29} parent=0 // pred_region
    _
  $region5: #{squeezenet_forward.29} parent=0 // pred_fallthru
    _
  // Predicated region
  $region6: #{squeezenet_forward.29} parent=0 // pred_check
    _
  $region7: #{squeezenet_forward.29} parent=0 // pred_check_branch
    %11 = sbr.rel (0) target = $region9
  $region8: #{squeezenet_forward.29} parent=0 // pred_region
    _
  $region9: #{squeezenet_forward.29} parent=0 // pred_fallthru
    _
  // Predicated region
  $region10: #{squeezenet_forward.29} parent=0 // pred_check
    _
  $region11: #{squeezenet_forward.29} parent=0 // pred_check_branch
    %13 = sbr.rel (0) target = $region13
  $region12: #{squeezenet_forward.29} parent=0 // pred_region
    _
  $region13: #{squeezenet_forward.29} parent=0 // pred_fallthru
    _
  %v15 = vld [vmem:[%s0] sm:$0xf]
  %v16 = vld [vmem:[%s0 + $0x4] sm:$0xf]
  %v17 = vld [vmem:[%s0 + $0x8] sm:$0xf]
  %v18 = vld [vmem:[%s0 + $0xc] sm:$0xf]
  %v19 = vld [vmem:[%s0 + $0x10] sm:$0xf]
  %v20 = vld [vmem:[%s0 + $0x14] sm:$0xf]
  %v21 = vld [vmem:[%s0 + $0x18] sm:$0xf]
  %v22 = vld [vmem:[%s1] sm:$0xf]
  %v23 = vld [vmem:[%s1 + $0x4] sm:$0xf]
  %v24 = vld [vmem:[%s1 + $0x8] sm:$0xf]
  %v25 = vld [vmem:[%s1 + $0xc] sm:$0xf]
  %v26 = vld [vmem:[%s1 + $0x10] sm:$0xf]
  %v27 = vld [vmem:[%s1 + $0x14] sm:$0xf]
  %v28 = vld [vmem:[%s1 + $0x18] sm:$0xf]
  %v29 = vld [vmem:[%s1 + $0x1c] sm:$0xf]
  %v30 = vld [vmem:[%s1 + $0x20] sm:$0xf]
  %v31 = vld [vmem:[%s1 + $0x24] sm:$0xf]
  %v32 = vld [vmem:[%s1 + $0x28] sm:$0xf]
  %v33 = vld [vmem:[%s1 + $0x2c] sm:$0xf]
  %v34 = vld [vmem:[%s1 + $0x30] sm:$0xf]
  %v35 = vld [vmem:[%s1 + $0x34] sm:$0xf]
  %v36 = vld [vmem:[%s1 + $0x38] sm:$0xf]
  %v37 = vld [vmem:[%s1 + $0x3c] sm:$0xf]
  %v38 = vld [vmem:[%s2] sm:$0x1]
  %v40 = vlaneseq
  %v41 = vshrl.u32 %v40, 7
  %v42 = vsub.s32 0, %v41
  %v43 = vrot.slane %v38, %v42
  %v52 = vunpack.c.l.b16 %v15
  %v53 = vunpack.c.l.b16 %v16
  %v54 = vunpack.c.l.b16 %v17
  %v55 = vunpack.c.l.b16 %v18
  %v56 = vunpack.c.l.b16 %v19
  %v57 = vunpack.c.l.b16 %v20
  %v58 = vunpack.c.l.b16 %v21
  %v59 = vpack.c.b16 %v53, %v52
  %v60 = vpack.c.b16 %v55, %v54
  %v61 = vpack.c.b16 %v57, %v56
  %v62 = vpack.c.b16 %v58, %v58
  %v83 = vunpack.c.l.b16 %v22
  %v84 = vunpack.c.l.b16 %v23
  %v85 = vunpack.c.l.b16 %v24
  %v86 = vunpack.c.l.b16 %v25
  %v87 = vunpack.c.l.b16 %v26
  %v88 = vunpack.c.l.b16 %v27
  %v89 = vunpack.c.l.b16 %v28
  %v90 = vunpack.c.l.b16 %v29
  %v91 = vunpack.c.l.b16 %v30
  %v92 = vunpack.c.l.b16 %v31
  %v93 = vunpack.c.l.b16 %v32
  %v94 = vunpack.c.l.b16 %v33
  %v95 = vunpack.c.l.b16 %v34
  %v96 = vunpack.c.l.b16 %v35
  %v97 = vunpack.c.l.b16 %v36
  %v98 = vunpack.c.l.b16 %v37
  %v99 = vpack.c.b16 %v84, %v83
  %v100 = vpack.c.b16 %v86, %v85
  %v101 = vpack.c.b16 %v88, %v87
  %v102 = vpack.c.b16 %v90, %v89
  %v103 = vpack.c.b16 %v92, %v91
  %v104 = vpack.c.b16 %v94, %v93
  %v105 = vpack.c.b16 %v96, %v95
  %v106 = vpack.c.b16 %v98, %v97
  %115 = vmatprep.subr.bf16.mxu0 0
  %116 = vmatpush1.bf16.msra.mxu0 %v99
  %117 = vmatprep.subr.bf16.mxu0 0
  %118 = vmatpush1.bf16.msra.mxu0 %v100
  %119 = vmatprep.subr.bf16.mxu0 0
  %120 = vmatpush1.bf16.msra.mxu0 %v101
  %121 = vmatprep.subr.bf16.mxu0 0
  %122 = vmatpush1.bf16.msra.mxu0 %v102
  %123 = vmatprep.subr.bf16.mxu0 0
  %124 = vmatpush1.bf16.msra.mxu0 %v103
  %125 = vmatprep.subr.bf16.mxu0 0
  %126 = vmatpush1.bf16.msra.mxu0 %v104
  %127 = vmatprep.subr.bf16.mxu0 0
  %128 = vmatpush1.bf16.msra.mxu0 %v105
  %129 = vmatprep.subr.bf16.mxu0 0
  %130 = vmatpush1.bf16.msra.mxu0 %v106
  %131 = vmatprep.subr.bf16.mxu0 0
  %132 = vmatpush1.bf16.msra.mxu0 0
  %133 = vmatprep.subr.bf16.mxu0 0
  %134 = vmatpush1.bf16.msra.mxu0 0
  %135 = vmatprep.subr.bf16.mxu0 0
  %136 = vmatpush1.bf16.msra.mxu0 0
  %137 = vmatprep.subr.bf16.mxu0 0
  %138 = vmatpush1.bf16.msra.mxu0 0
  %139 = vmatprep.subr.bf16.mxu0 0
  %140 = vmatpush1.bf16.msra.mxu0 0
  %141 = vmatprep.subr.bf16.mxu0 0
  %142 = vmatpush1.bf16.msra.mxu0 0
  %143 = vmatprep.subr.bf16.mxu0 0
  %144 = vmatpush1.bf16.msra.mxu0 0
  %145 = vmatprep.subr.bf16.mxu0 0
  %146 = vmatpush1.bf16.msra.mxu0 0
  %147 = vmatprep.mubr.bf16.mxu0 0
  %148 = vmatmul.mubr.bf16.gmra.mrb[0].mxu0 %v59
  %v149 = vpop.f32.mrb[0].mxu0
  %v150 = vadd.f32 %v43, %v149
  %v151 = vpop.f32.mrb[0].mxu0
  %v152 = vpop.f32.mrb[0].mxu0
  %v153 = vadd.f32 %v43, %v152
  %v154 = vpop.f32.mrb[0].mxu0
  %155 = vmatprep.mubr.bf16.mxu0 0
  %156 = vmatmul.mubr.bf16.gmra.mrb[0].mxu0 %v60
  %v157 = vpop.f32.mrb[0].mxu0
  %v158 = vadd.f32 %v43, %v157
  %v159 = vpop.f32.mrb[0].mxu0
  %v160 = vpop.f32.mrb[0].mxu0
  %v161 = vadd.f32 %v43, %v160
  %v162 = vpop.f32.mrb[0].mxu0
  %163 = vmatprep.mubr.bf16.mxu0 0
  %164 = vmatmul.mubr.bf16.gmra.mrb[0].mxu0 %v61
  %v165 = vpop.f32.mrb[0].mxu0
  %v166 = vadd.f32 %v43, %v165
  %v167 = vpop.f32.mrb[0].mxu0
  %v168 = vpop.f32.mrb[0].mxu0
  %v169 = vadd.f32 %v43, %v168
  %v170 = vpop.f32.mrb[0].mxu0
  %171 = vmatprep.mubr.bf16.mxu0 0
  %172 = vmatmul.mubr.bf16.gmra.mrb[0].mxu0 %v62
  %v173 = vpop.f32.mrb[0].mxu0
  %v174 = vadd.f32 %v43, %v173
  %v175 = vpop.f32.mrb[0].mxu0
  %v176 = vpop.f32.mrb[0].mxu0
  %v177 = vpop.f32.mrb[0].mxu0
  %178 = vdwg.mxu0
  %v179 = vmax.f32 %v150, 0.0
  %v180 = vmax.f32 %v153, 0.0
  %v181 = vmax.f32 %v158, 0.0
  %v182 = vmax.f32 %v161, 0.0
  %v183 = vmax.f32 %v166, 0.0
  %v184 = vmax.f32 %v169, 0.0
  %v185 = vmax.f32 %v174, 0.0
  %v186 = vpack.c.bf16 %v180, %v179
  %v187 = vpack.c.bf16 %v182, %v181
  %v188 = vpack.c.bf16 %v184, %v183
  %v189 = vpack.c.bf16 %v185, %v185
  %v194 = vunpack.c.l.b16 %v186
  %v195 = vunpack.c.h.b16 %v186
  %v196 = vunpack.c.l.b16 %v187
  %v197 = vunpack.c.h.b16 %v187
  %v198 = vunpack.c.l.b16 %v188
  %v199 = vunpack.c.h.b16 %v188
  %v200 = vunpack.c.l.b16 %v189
  %v201 = vpack.c.b16 %v194, %v194
  %v202 = vpack.c.b16 %v195, %v195
  %v203 = vpack.c.b16 %v196, %v196
  %v204 = vpack.c.b16 %v197, %v197
  %v205 = vpack.c.b16 %v198, %v198
  %v206 = vpack.c.b16 %v199, %v199
  %v207 = vpack.c.b16 %v200, %v200
  %vm215 = vcmask 257024
  %216 = vst.msk [vmem:[%s3] sm:$0xf] %vm215, %v201
  %217 = vst.msk [vmem:[%s3 + $0x4] sm:$0xf] %vm215, %v202
  %218 = vst.msk [vmem:[%s3 + $0x8] sm:$0xf] %vm215, %v203
  %219 = vst.msk [vmem:[%s3 + $0xc] sm:$0xf] %vm215, %v204
  %220 = vst.msk [vmem:[%s3 + $0x10] sm:$0xf] %vm215, %v205
  %221 = vst.msk [vmem:[%s3 + $0x14] sm:$0xf] %vm215, %v206
  %222 = vst.msk [vmem:[%s3 + $0x18] sm:$0xf] %vm215, %v207
  // Predicated region
  $region14: #{squeezenet_forward.29} parent=0 // pred_check
    _
  $region15: #{squeezenet_forward.29} parent=0 // pred_check_branch
    %224 = sbr.rel (0) target = $region17
  $region16: #{squeezenet_forward.29} parent=0 // pred_region
    _
  $region17: #{squeezenet_forward.29} parent=0 // pred_fallthru
    _
  // Predicated region
  $region18: #{squeezenet_forward.29} parent=0 // pred_check
    _
  $region19: #{squeezenet_forward.29} parent=0 // pred_check_branch
    %226 = sbr.rel (0) target = $region21
  $region20: #{squeezenet_forward.29} parent=0 // pred_region
    _
  $region21: #{squeezenet_forward.29} parent=0 // pred_fallthru
    _

// kernel: squeezenet_forward.30
$region0: #{squeezenet_forward.30}
  #allocation0 [shape = 'u32[]', space=smem, size = 0x4, offset = 0x4, fixed_abs, tag = 'smem constant byte address 0x4 - core index']
  #allocation1 [shape = 'u32[144,128]{1,0:T(1,128)}', space=vmem, size = 0x12000, scoped, tag = 'internal scratch']
  %s0 = inlined_call_operand.vmem [shape: bf16[56,288], index: 0, kind: input, shape index: {}]
  %s1 = inlined_call_operand.vmem [shape: bf16[288,256], index: 1, kind: input, shape index: {}]
  %s2 = inlined_call_operand.vmem [shape: f32[1,256], index: 2, kind: input, shape index: {}]
  %s3 = inlined_call_operand.vmem [shape: bf16[56,256], index: 3, kind: output, shape index: {}]
  %s4 = sld [smem:[#allocation0]]
  $region22: #{squeezenet_forward.30} parent=0
    _
  %s6 = ssub.s32 1, %s4
  %s7 = scalar_select 0, %s6, %s4
  // Predicated region
  $region2: #{squeezenet_forward.30} parent=0 // pred_check
    _
  $region3: #{squeezenet_forward.30} parent=0 // pred_check_branch
    %9 = sbr.rel (0) target = $region5
  $region4: #{squeezenet_forward.30} parent=0 // pred_region
    _
  $region5: #{squeezenet_forward.30} parent=0 // pred_fallthru
    _
  // Predicated region
  $region6: #{squeezenet_forward.30} parent=0 // pred_check
    _
  $region7: #{squeezenet_forward.30} parent=0 // pred_check_branch
    %11 = sbr.rel (0) target = $region9
  $region8: #{squeezenet_forward.30} parent=0 // pred_region
    _
  $region9: #{squeezenet_forward.30} parent=0 // pred_fallthru
    _
  // Predicated region
  $region10: #{squeezenet_forward.30} parent=0 // pred_check
    _
  $region11: #{squeezenet_forward.30} parent=0 // pred_check_branch
    %13 = sbr.rel (0) target = $region13
  $region12: #{squeezenet_forward.30} parent=0 // pred_region
    _
  $region13: #{squeezenet_forward.30} parent=0 // pred_fallthru
    _
  %v15 = vld [vmem:[%s0] sm:$0xff]
  %v16 = vld [vmem:[%s0 + $0x8] sm:$0xf]
  %v17 = vld [vmem:[%s0 + $0xc] sm:$0xff]
  %v18 = vld [vmem:[%s0 + $0x14] sm:$0xf]
  %v19 = vld [vmem:[%s0 + $0x18] sm:$0xff]
  %v20 = vld [vmem:[%s0 + $0x20] sm:$0xf]
  %v21 = vld [vmem:[%s0 + $0x24] sm:$0xff]
  %v22 = vld [vmem:[%s0 + $0x2c] sm:$0xf]
  %v23 = vld [vmem:[%s0 + $0x30] sm:$0xff]
  %v24 = vld [vmem:[%s0 + $0x38] sm:$0xf]
  %v25 = vld [vmem:[%s0 + $0x3c] sm:$0xff]
  %v26 = vld [vmem:[%s0 + $0x44] sm:$0xf]
  %v27 = vld [vmem:[%s0 + $0x48] sm:$0xff]
  %v28 = vld [vmem:[%s0 + $0x50] sm:$0xf]
  %v29 = vld [vmem:[%s1] sm:$0xff]
  %v30 = vld [vmem:[%s1 + $0x8] sm:$0xff]
  %v31 = vld [vmem:[%s1 + $0x10] sm:$0xff]
  %v32 = vld [vmem:[%s1 + $0x18] sm:$0xff]
  %v33 = vld [vmem:[%s1 + $0x20] sm:$0xff]
  %v34 = vld [vmem:[%s1 + $0x28] sm:$0xff]
  %v35 = vld [vmem:[%s1 + $0x30] sm:$0xff]
  %v36 = vld [vmem:[%s1 + $0x38] sm:$0xff]
  %v37 = vld [vmem:[%s1 + $0x40] sm:$0xff]
  %v38 = vld [vmem:[%s1 + $0x48] sm:$0xff]
  %v39 = vld [vmem:[%s1 + $0x50] sm:$0xff]
  %v40 = vld [vmem:[%s1 + $0x58] sm:$0xff]
  %v41 = vld [vmem:[%s1 + $0x60] sm:$0xff]
  %v42 = vld [vmem:[%s1 + $0x68] sm:$0xff]
  %v43 = vld [vmem:[%s1 + $0x70] sm:$0xff]
  %v44 = vld [vmem:[%s1 + $0x78] sm:$0xff]
  %v45 = vld [vmem:[%s1 + $0x80] sm:$0xff]
  %v46 = vld [vmem:[%s1 + $0x88] sm:$0xff]
  %v47 = vld [vmem:[%s1 + $0x90] sm:$0xff]
  %v48 = vld [vmem:[%s1 + $0x98] sm:$0xff]
  %v49 = vld [vmem:[%s1 + $0xa0] sm:$0xff]
  %v50 = vld [vmem:[%s1 + $0xa8] sm:$0xff]
  %v51 = vld [vmem:[%s1 + $0xb0] sm:$0xff]
  %v52 = vld [vmem:[%s1 + $0xb8] sm:$0xff]
  %v53 = vld [vmem:[%s1 + $0xc0] sm:$0xff]
  %v54 = vld [vmem:[%s1 + $0xc8] sm:$0xff]
  %v55 = vld [vmem:[%s1 + $0xd0] sm:$0xff]
  %v56 = vld [vmem:[%s1 + $0xd8] sm:$0xff]
  %v57 = vld [vmem:[%s1 + $0xe0] sm:$0xff]
  %v58 = vld [vmem:[%s1 + $0xe8] sm:$0xff]
  %v59 = vld [vmem:[%s1 + $0xf0] sm:$0xff]
  %v60 = vld [vmem:[%s1 + $0xf8] sm:$0xff]
  %v61 = vld [vmem:[%s1 + $0x100] sm:$0xff]
  %v62 = vld [vmem:[%s1 + $0x108] sm:$0xff]
  %v63 = vld [vmem:[%s1 + $0x110] sm:$0xff]
  %v64 = vld [vmem:[%s1 + $0x118] sm:$0xff]
  %v65 = vld [vmem:[%s2] sm:$0x3]
  %v67 = vlaneseq
  %v68 = vshrl.u32 %v67, 7
  %v69 = vsub.s32 0, %v68
  %v70 = vrot.slane %v65, %v69
  %v71 = vlaneseq
  %v72 = vshrl.u32 %v71, 7
  %v73 = vsub.s32 1, %v72
  %v74 = vrot.slane %v65, %v73
  %v91 = vunpack.c.l.b16 %v15
  %v92 = vunpack.c.h.b16 %v15
  %v93 = vunpack.c.l.b16 %v16
  %v94 = vunpack.c.l.b16 %v17
  %v95 = vunpack.c.h.b16 %v17
  %v96 = vunpack.c.l.b16 %v18
  %v97 = vunpack.c.l.b16 %v19
  %v98 = vunpack.c.h.b16 %v19
  %v99 = vunpack.c.l.b16 %v20
  %v100 = vunpack.c.l.b16 %v21
  %v101 = vunpack.c.h.b16 %v21
  %v102 = vunpack.c.l.b16 %v22
  %v103 = vunpack.c.l.b16 %v23
  %v104 = vunpack.c.h.b16 %v23
  %v105 = vunpack.c.l.b16 %v24
  %v106 = vunpack.c.l.b16 %v25
  %v107 = vunpack.c.h.b16 %v25
  %v108 = vunpack.c.l.b16 %v26
  %v109 = vunpack.c.l.b16 %v27
  %v110 = vunpack.c.h.b16 %v27
  %v111 = vunpack.c.l.b16 %v28
  %v112 = vpack.c.b16 %v94, %v91
  %v113 = vpack.c.b16 %v95, %v92
  %v114 = vpack.c.b16 %v96, %v93
  %v115 = vpack.c.b16 %v100, %v97
  %v116 = vpack.c.b16 %v101, %v98
  %v117 = vpack.c.b16 %v102, %v99
  %v118 = vpack.c.b16 %v106, %v103
  %v119 = vpack.c.b16 %v107, %v104
  %v120 = vpack.c.b16 %v108, %v105
  %v121 = vpack.c.b16 %v109, %v109
  %v122 = vpack.c.b16 %v110, %v110
  %v123 = vpack.c.b16 %v111, %v111
  %v168 = vunpack.c.l.b16 %v29
  %v169 = vunpack.c.h.b16 %v29
  %v170 = vunpack.c.l.b16 %v30
  %v171 = vunpack.c.h.b16 %v30
  %v172 = vunpack.c.l.b16 %v31
  %v173 = vunpack.c.h.b16 %v31
  %v174 = vunpack.c.l.b16 %v32
  %v175 = vunpack.c.h.b16 %v32
  %v176 = vunpack.c.l.b16 %v33
  %v177 = vunpack.c.h.b16 %v33
  %v178 = vunpack.c.l.b16 %v34
  %v179 = vunpack.c.h.b16 %v34
  %v180 = vunpack.c.l.b16 %v35
  %v181 = vunpack.c.h.b16 %v35
  %v182 = vunpack.c.l.b16 %v36
  %v183 = vunpack.c.h.b16 %v36
  %v184 = vunpack.c.l.b16 %v37
  %v185 = vunpack.c.h.b16 %v37
  %v186 = vunpack.c.l.b16 %v38
  %v187 = vunpack.c.h.b16 %v38
  %v188 = vunpack.c.l.b16 %v39
  %v189 = vunpack.c.h.b16 %v39
  %v190 = vunpack.c.l.b16 %v40
  %v191 = vunpack.c.h.b16 %v40
  %v192 = vunpack.c.l.b16 %v41
  %v193 = vunpack.c.h.b16 %v41
  %v194 = vunpack.c.l.b16 %v42
  %v195 = vunpack.c.h.b16 %v42
  %v196 = vunpack.c.l.b16 %v43
  %v197 = vunpack.c.h.b16 %v43
  %v198 = vunpack.c.l.b16 %v44
  %v199 = vunpack.c.h.b16 %v44
  %v200 = vunpack.c.l.b16 %v45
  %v201 = vunpack.c.h.b16 %v45
  %v202 = vunpack.c.l.b16 %v46
  %v203 = vunpack.c.h.b16 %v46
  %v204 = vunpack.c.l.b16 %v47
  %v205 = vunpack.c.h.b16 %v47
  %v206 = vunpack.c.l.b16 %v48
  %v207 = vunpack.c.h.b16 %v48
  %v208 = vunpack.c.l.b16 %v49
  %v209 = vunpack.c.h.b16 %v49
  %v210 = vunpack.c.l.b16 %v50
  %v211 = vunpack.c.h.b16 %v50
  %v212 = vunpack.c.l.b16 %v51
  %v213 = vunpack.c.h.b16 %v51
  %v214 = vunpack.c.l.b16 %v52
  %v215 = vunpack.c.h.b16 %v52
  %v216 = vunpack.c.l.b16 %v53
  %v217 = vunpack.c.h.b16 %v53
  %v218 = vunpack.c.l.b16 %v54
  %v219 = vunpack.c.h.b16 %v54
  %v220 = vunpack.c.l.b16 %v55
  %v221 = vunpack.c.h.b16 %v55
  %v222 = vunpack.c.l.b16 %v56
  %v223 = vunpack.c.h.b16 %v56
  %v224 = vunpack.c.l.b16 %v57
  %v225 = vunpack.c.h.b16 %v57
  %v226 = vunpack.c.l.b16 %v58
  %v227 = vunpack.c.h.b16 %v58
  %v228 = vunpack.c.l.b16 %v59
  %v229 = vunpack.c.h.b16 %v59
  %v230 = vunpack.c.l.b16 %v60
  %v231 = vunpack.c.h.b16 %v60
  %v232 = vunpack.c.l.b16 %v61
  %v233 = vunpack.c.h.b16 %v61
  %v234 = vunpack.c.l.b16 %v62
  %v235 = vunpack.c.h.b16 %v62
  %v236 = vunpack.c.l.b16 %v63
  %v237 = vunpack.c.h.b16 %v63
  %v238 = vunpack.c.l.b16 %v64
  %v239 = vunpack.c.h.b16 %v64
  %v240 = vpack.c.b16 %v170, %v168
  %v241 = vpack.c.b16 %v171, %v169
  %v242 = vpack.c.b16 %v174, %v172
  %v243 = vpack.c.b16 %v175, %v173
  %v244 = vpack.c.b16 %v178, %v176
  %v245 = vpack.c.b16 %v179, %v177
  %v246 = vpack.c.b16 %v182, %v180
  %v247 = vpack.c.b16 %v183, %v181
  %v248 = vpack.c.b16 %v186, %v184
  %v249 = vpack.c.b16 %v187, %v185
  %v250 = vpack.c.b16 %v190, %v188
  %v251 = vpack.c.b16 %v191, %v189
  %v252 = vpack.c.b16 %v194, %v192
  %v253 = vpack.c.b16 %v195, %v193
  %v254 = vpack.c.b16 %v198, %v196
  %v255 = vpack.c.b16 %v199, %v197
  %v256 = vpack.c.b16 %v202, %v200
  %v257 = vpack.c.b16 %v203, %v201
  %v258 = vpack.c.b16 %v206, %v204
  %v259 = vpack.c.b16 %v207, %v205
  %v260 = vpack.c.b16 %v210, %v208
  %v261 = vpack.c.b16 %v211, %v209
  %v262 = vpack.c.b16 %v214, %v212
  %v263 = vpack.c.b16 %v215, %v213
  %v264 = vpack.c.b16 %v218, %v216
  %v265 = vpack.c.b16 %v219, %v217
  %v266 = vpack.c.b16 %v222, %v220
  %v267 = vpack.c.b16 %v223, %v221
  %v268 = vpack.c.b16 %v226, %v224
  %v269 = vpack.c.b16 %v227, %v225
  %v270 = vpack.c.b16 %v230, %v228
  %v271 = vpack.c.b16 %v231, %v229
  %v272 = vpack.c.b16 %v234, %v232
  %v273 = vpack.c.b16 %v235, %v233
  %v274 = vpack.c.b16 %v238, %v236
  %v275 = vpack.c.b16 %v239, %v237
  %vm312 = vcmask 261120
  %v314 = vsel %vm312, %v114, 0
  %v317 = vsel %vm312, %v117, 0
  %v320 = vsel %vm312, %v120, 0
  %v323 = vsel %vm312, %v123, 0
  %325 = vmatprep.subr.bf16.mxu0 %v241
  %326 = vmatpush1.bf16.msra.mxu0 %v240
  %327 = vmatprep.subr.bf16.mxu0 %v243
  %328 = vmatpush1.bf16.msra.mxu0 %v242
  %329 = vmatprep.subr.bf16.mxu0 %v245
  %330 = vmatpush1.bf16.msra.mxu0 %v244
  %331 = vmatprep.subr.bf16.mxu0 %v247
  %332 = vmatpush1.bf16.msra.mxu0 %v246
  %333 = vmatprep.subr.bf16.mxu0 %v249
  %334 = vmatpush1.bf16.msra.mxu0 %v248
  %335 = vmatprep.subr.bf16.mxu0 %v251
  %336 = vmatpush1.bf16.msra.mxu0 %v250
  %337 = vmatprep.subr.bf16.mxu0 %v253
  %338 = vmatpush1.bf16.msra.mxu0 %v252
  %339 = vmatprep.subr.bf16.mxu0 %v255
  %340 = vmatpush1.bf16.msra.mxu0 %v254
  %341 = vmatprep.subr.bf16.mxu0 %v257
  %342 = vmatpush1.bf16.msra.mxu0 %v256
  %343 = vmatprep.subr.bf16.mxu0 %v259
  %344 = vmatpush1.bf16.msra.mxu0 %v258
  %345 = vmatprep.subr.bf16.mxu0 %v261
  %346 = vmatpush1.bf16.msra.mxu0 %v260
  %347 = vmatprep.subr.bf16.mxu0 %v263
  %348 = vmatpush1.bf16.msra.mxu0 %v262
  %349 = vmatprep.subr.bf16.mxu0 %v265
  %350 = vmatpush1.bf16.msra.mxu0 %v264
  %351 = vmatprep.subr.bf16.mxu0 %v267
  %352 = vmatpush1.bf16.msra.mxu0 %v266
  %353 = vmatprep.subr.bf16.mxu0 %v269
  %354 = vmatpush1.bf16.msra.mxu0 %v268
  %355 = vmatprep.subr.bf16.mxu0 %v271
  %356 = vmatpush1.bf16.msra.mxu0 %v270
  %357 = vmatprep.mubr.bf16.mxu0 %v113
  %358 = vmatmul.mubr.bf16.gmra.mrb[0].mxu0 %v112
  %v359 = vpop.f32.mrb[0].mxu0
  %v360 = vadd.f32 %v70, %v359
  %v361 = vpop.f32.mrb[0].mxu0
  %v362 = vadd.f32 %v74, %v361
  %v363 = vpop.f32.mrb[0].mxu0
  %v364 = vadd.f32 %v70, %v363
  %v365 = vpop.f32.mrb[0].mxu0
  %v366 = vadd.f32 %v74, %v365
  %367 = vmatprep.mubr.bf16.mxu0 %v116
  %368 = vmatmul.mubr.bf16.gmra.mrb[0].mxu0 %v115
  %v369 = vpop.f32.mrb[0].mxu0
  %v370 = vadd.f32 %v70, %v369
  %v371 = vpop.f32.mrb[0].mxu0
  %v372 = vadd.f32 %v74, %v371
  %v373 = vpop.f32.mrb[0].mxu0
  %v374 = vadd.f32 %v70, %v373
  %v375 = vpop.f32.mrb[0].mxu0
  %v376 = vadd.f32 %v74, %v375
  %377 = vmatprep.mubr.bf16.mxu0 %v119
  %378 = vmatmul.mubr.bf16.gmra.mrb[0].mxu0 %v118
  %v379 = vpop.f32.mrb[0].mxu0
  %v380 = vadd.f32 %v70, %v379
  %v381 = vpop.f32.mrb[0].mxu0
  %v382 = vadd.f32 %v74, %v381
  %v383 = vpop.f32.mrb[0].mxu0
  %v384 = vadd.f32 %v70, %v383
  %v385 = vpop.f32.mrb[0].mxu0
  %v386 = vadd.f32 %v74, %v385
  %387 = vmatprep.mubr.bf16.mxu0 %v122
  %388 = vmatmul.mubr.bf16.gmra.mrb[0].mxu0 %v121
  %v389 = vpop.f32.mrb[0].mxu0
  %v390 = vadd.f32 %v70, %v389
  %v391 = vpop.f32.mrb[0].mxu0
  %v392 = vadd.f32 %v74, %v391
  %v393 = vpop.f32.mrb[0].mxu0
  %v394 = vpop.f32.mrb[0].mxu0
  %395 = vdwg.mxu0
  %396 = vmatprep.subr.bf16.mxu0 %v273
  %397 = vmatpush1.bf16.msra.mxu0 %v272
  %398 = vmatprep.subr.bf16.mxu0 %v275
  %399 = vmatpush1.bf16.msra.mxu0 %v274
  %400 = vmatprep.subr.bf16.mxu0 0
  %401 = vmatpush1.bf16.msra.mxu0 0
  %402 = vmatprep.subr.bf16.mxu0 0
  %403 = vmatpush1.bf16.msra.mxu0 0
  %404 = vmatprep.subr.bf16.mxu0 0
  %405 = vmatpush1.bf16.msra.mxu0 0
  %406 = vmatprep.subr.bf16.mxu0 0
  %407 = vmatpush1.bf16.msra.mxu0 0
  %408 = vmatprep.subr.bf16.mxu0 0
  %409 = vmatpush1.bf16.msra.mxu0 0
  %410 = vmatprep.subr.bf16.mxu0 0
  %411 = vmatpush1.bf16.msra.mxu0 0
  %412 = vmatprep.subr.bf16.mxu0 0
  %413 = vmatpush1.bf16.msra.mxu0 0
  %414 = vmatprep.subr.bf16.mxu0 0
  %415 = vmatpush1.bf16.msra.mxu0 0
  %416 = vmatprep.subr.bf16.mxu0 0
  %417 = vmatpush1.bf16.msra.mxu0 0
  %418 = vmatprep.subr.bf16.mxu0 0
  %419 = vmatpush1.bf16.msra.mxu0 0
  %420 = vmatprep.subr.bf16.mxu0 0
  %421 = vmatpush1.bf16.msra.mxu0 0
  %422 = vmatprep.subr.bf16.mxu0 0
  %423 = vmatpush1.bf16.msra.mxu0 0
  %424 = vmatprep.subr.bf16.mxu0 0
  %425 = vmatpush1.bf16.msra.mxu0 0
  %426 = vmatprep.subr.bf16.mxu0 0
  %427 = vmatpush1.bf16.msra.mxu0 0
  %428 = vmatprep.mubr.bf16.mxu0 0
  %429 = vmatmul.mubr.bf16.gmra.mrb[0].mxu0 %v314
  %v430 = vpop.f32.mrb[0].mxu0
  %v431 = vadd.f32 %v360, %v430
  %v432 = vpop.f32.mrb[0].mxu0
  %v433 = vadd.f32 %v362, %v432
  %v434 = vpop.f32.mrb[0].mxu0
  %v435 = vadd.f32 %v364, %v434
  %v436 = vpop.f32.mrb[0].mxu0
  %v437 = vadd.f32 %v366, %v436
  %438 = vmatprep.mubr.bf16.mxu0 0
  %439 = vmatmul.mubr.bf16.gmra.mrb[0].mxu0 %v317
  %v440 = vpop.f32.mrb[0].mxu0
  %v441 = vadd.f32 %v370, %v440
  %v442 = vpop.f32.mrb[0].mxu0
  %v443 = vadd.f32 %v372, %v442
  %v444 = vpop.f32.mrb[0].mxu0
  %v445 = vadd.f32 %v374, %v444
  %v446 = vpop.f32.mrb[0].mxu0
  %v447 = vadd.f32 %v376, %v446
  %448 = vmatprep.mubr.bf16.mxu0 0
  %449 = vmatmul.mubr.bf16.gmra.mrb[0].mxu0 %v320
  %v450 = vpop.f32.mrb[0].mxu0
  %v451 = vadd.f32 %v380, %v450
  %v452 = vpop.f32.mrb[0].mxu0
  %v453 = vadd.f32 %v382, %v452
  %v454 = vpop.f32.mrb[0].mxu0
  %v455 = vadd.f32 %v384, %v454
  %v456 = vpop.f32.mrb[0].mxu0
  %v457 = vadd.f32 %v386, %v456
  %458 = vmatprep.mubr.bf16.mxu0 0
  %459 = vmatmul.mubr.bf16.gmra.mrb[0].mxu0 %v323
  %v460 = vpop.f32.mrb[0].mxu0
  %v461 = vadd.f32 %v390, %v460
  %v462 = vpop.f32.mrb[0].mxu0
  %v463 = vadd.f32 %v392, %v462
  %v464 = vpop.f32.mrb[0].mxu0
  %v465 = vpop.f32.mrb[0].mxu0
  %466 = vdwg.mxu0
  %v467 = vmax.f32 %v431, 0.0
  %v468 = vmax.f32 %v433, 0.0
  %v469 = vmax.f32 %v435, 0.0
  %v470 = vmax.f32 %v437, 0.0
  %v471 = vmax.f32 %v441, 0.0
  %v472 = vmax.f32 %v443, 0.0
  %v473 = vmax.f32 %v445, 0.0
  %v474 = vmax.f32 %v447, 0.0
  %v475 = vmax.f32 %v451, 0.0
  %v476 = vmax.f32 %v453, 0.0
  %v477 = vmax.f32 %v455, 0.0
  %v478 = vmax.f32 %v457, 0.0
  %v479 = vmax.f32 %v461, 0.0
  %v480 = vmax.f32 %v463, 0.0
  %v481 = vpack.c.bf16 %v469, %v467
  %v482 = vpack.c.bf16 %v470, %v468
  %v483 = vpack.c.bf16 %v473, %v471
  %v484 = vpack.c.bf16 %v474, %v472
  %v485 = vpack.c.bf16 %v477, %v475
  %v486 = vpack.c.bf16 %v478, %v476
  %v487 = vpack.c.bf16 %v479, %v479
  %v488 = vpack.c.bf16 %v480, %v480
  %v497 = vunpack.c.l.b16 %v481
  %v498 = vunpack.c.l.b16 %v482
  %v499 = vunpack.c.h.b16 %v481
  %v500 = vunpack.c.h.b16 %v482
  %v501 = vunpack.c.l.b16 %v483
  %v502 = vunpack.c.l.b16 %v484
  %v503 = vunpack.c.h.b16 %v483
  %v504 = vunpack.c.h.b16 %v484
  %v505 = vunpack.c.l.b16 %v485
  %v506 = vunpack.c.l.b16 %v486
  %v507 = vunpack.c.h.b16 %v485
  %v508 = vunpack.c.h.b16 %v486
  %v509 = vunpack.c.l.b16 %v487
  %v510 = vunpack.c.l.b16 %v488
  %v511 = vpack.c.b16 %v498, %v497
  %v512 = vpack.c.b16 %v500, %v499
  %v513 = vpack.c.b16 %v502, %v501
  %v514 = vpack.c.b16 %v504, %v503
  %v515 = vpack.c.b16 %v506, %v505
  %v516 = vpack.c.b16 %v508, %v507
  %v517 = vpack.c.b16 %v510, %v509
  %525 = vst [vmem:[%s3] sm:$0xff] %v511
  %526 = vst [vmem:[%s3 + $0x8] sm:$0xff] %v512
  %527 = vst [vmem:[%s3 + $0x10] sm:$0xff] %v513
  %528 = vst [vmem:[%s3 + $0x18] sm:$0xff] %v514
  %529 = vst [vmem:[%s3 + $0x20] sm:$0xff] %v515
  %530 = vst [vmem:[%s3 + $0x28] sm:$0xff] %v516
  %531 = vst [vmem:[%s3 + $0x30] sm:$0xff] %v517
  // Predicated region
  $region14: #{squeezenet_forward.30} parent=0 // pred_check
    _
  $region15: #{squeezenet_forward.30} parent=0 // pred_check_branch
    %533 = sbr.rel (0) target = $region17
  $region16: #{squeezenet_forward.30} parent=0 // pred_region
    _
  $region17: #{squeezenet_forward.30} parent=0 // pred_fallthru
    _
  // Predicated region
  $region18: #{squeezenet_forward.30} parent=0 // pred_check
    _
  $region19: #{squeezenet_forward.30} parent=0 // pred_check_branch
    %535 = sbr.rel (0) target = $region21
  $region20: #{squeezenet_forward.30} parent=0 // pred_region
    _
  $region21: #{squeezenet_forward.30} parent=0 // pred_fallthru
    _

// kernel: squeezenet_forward.31
$region0: #{squeezenet_forward.31}
  #allocation0 [shape = 'u32[]', space=smem, size = 0x4, offset = 0x4, fixed_abs, tag = 'smem constant byte address 0x4 - core index']
  #allocation1 [shape = 'u32[144,128]{1,0:T(1,128)}', space=vmem, size = 0x12000, scoped, tag = 'internal scratch']
  %s0 = inlined_call_operand.vmem [shape: bf16[56,256], index: 0, kind: input, shape index: {}]
  %s1 = inlined_call_operand.vmem [shape: bf16[256,32], index: 1, kind: input, shape index: {}]
  %s2 = inlined_call_operand.vmem [shape: f32[1,32], index: 2, kind: input, shape index: {}]
  %s3 = inlined_call_operand.vmem [shape: bf16[56,32], index: 3, kind: output, shape index: {}]
  %s4 = sld [smem:[#allocation0]]
  $region22: #{squeezenet_forward.31} parent=0
    _
  %s6 = ssub.s32 1, %s4
  %s7 = scalar_select 0, %s6, %s4
  // Predicated region
  $region2: #{squeezenet_forward.31} parent=0 // pred_check
    _
  $region3: #{squeezenet_forward.31} parent=0 // pred_check_branch
    %9 = sbr.rel (0) target = $region5
  $region4: #{squeezenet_forward.31} parent=0 // pred_region
    _
  $region5: #{squeezenet_forward.31} parent=0 // pred_fallthru
    _
  // Predicated region
  $region6: #{squeezenet_forward.31} parent=0 // pred_check
    _
  $region7: #{squeezenet_forward.31} parent=0 // pred_check_branch
    %11 = sbr.rel (0) target = $region9
  $region8: #{squeezenet_forward.31} parent=0 // pred_region
    _
  $region9: #{squeezenet_forward.31} parent=0 // pred_fallthru
    _
  // Predicated region
  $region10: #{squeezenet_forward.31} parent=0 // pred_check
    _
  $region11: #{squeezenet_forward.31} parent=0 // pred_check_branch
    %13 = sbr.rel (0) target = $region13
  $region12: #{squeezenet_forward.31} parent=0 // pred_region
    _
  $region13: #{squeezenet_forward.31} parent=0 // pred_fallthru
    _
  %v15 = vld [vmem:[%s0] sm:$0xff]
  %v16 = vld [vmem:[%s0 + $0x8] sm:$0xff]
  %v17 = vld [vmem:[%s0 + $0x10] sm:$0xff]
  %v18 = vld [vmem:[%s0 + $0x18] sm:$0xff]
  %v19 = vld [vmem:[%s0 + $0x20] sm:$0xff]
  %v20 = vld [vmem:[%s0 + $0x28] sm:$0xff]
  %v21 = vld [vmem:[%s0 + $0x30] sm:$0xff]
  %v22 = vld [vmem:[%s1] sm:$0xf]
  %v23 = vld [vmem:[%s1 + $0x4] sm:$0xf]
  %v24 = vld [vmem:[%s1 + $0x8] sm:$0xf]
  %v25 = vld [vmem:[%s1 + $0xc] sm:$0xf]
  %v26 = vld [vmem:[%s1 + $0x10] sm:$0xf]
  %v27 = vld [vmem:[%s1 + $0x14] sm:$0xf]
  %v28 = vld [vmem:[%s1 + $0x18] sm:$0xf]
  %v29 = vld [vmem:[%s1 + $0x1c] sm:$0xf]
  %v30 = vld [vmem:[%s1 + $0x20] sm:$0xf]
  %v31 = vld [vmem:[%s1 + $0x24] sm:$0xf]
  %v32 = vld [vmem:[%s1 + $0x28] sm:$0xf]
  %v33 = vld [vmem:[%s1 + $0x2c] sm:$0xf]
  %v34 = vld [vmem:[%s1 + $0x30] sm:$0xf]
  %v35 = vld [vmem:[%s1 + $0x34] sm:$0xf]
  %v36 = vld [vmem:[%s1 + $0x38] sm:$0xf]
  %v37 = vld [vmem:[%s1 + $0x3c] sm:$0xf]
  %v38 = vld [vmem:[%s1 + $0x40] sm:$0xf]
  %v39 = vld [vmem:[%s1 + $0x44] sm:$0xf]
  %v40 = vld [vmem:[%s1 + $0x48] sm:$0xf]
  %v41 = vld [vmem:[%s1 + $0x4c] sm:$0xf]
  %v42 = vld [vmem:[%s1 + $0x50] sm:$0xf]
  %v43 = vld [vmem:[%s1 + $0x54] sm:$0xf]
  %v44 = vld [vmem:[%s1 + $0x58] sm:$0xf]
  %v45 = vld [vmem:[%s1 + $0x5c] sm:$0xf]
  %v46 = vld [vmem:[%s1 + $0x60] sm:$0xf]
  %v47 = vld [vmem:[%s1 + $0x64] sm:$0xf]
  %v48 = vld [vmem:[%s1 + $0x68] sm:$0xf]
  %v49 = vld [vmem:[%s1 + $0x6c] sm:$0xf]
  %v50 = vld [vmem:[%s1 + $0x70] sm:$0xf]
  %v51 = vld [vmem:[%s1 + $0x74] sm:$0xf]
  %v52 = vld [vmem:[%s1 + $0x78] sm:$0xf]
  %v53 = vld [vmem:[%s1 + $0x7c] sm:$0xf]
  %v54 = vld [vmem:[%s2] sm:$0x1]
  %v56 = vlaneseq
  %v57 = vshrl.u32 %v56, 7
  %v58 = vsub.s32 0, %v57
  %v59 = vrot.slane %v54, %v58
  %v68 = vunpack.c.l.b16 %v15
  %v69 = vunpack.c.h.b16 %v15
  %v70 = vunpack.c.l.b16 %v16
  %v71 = vunpack.c.h.b16 %v16
  %v72 = vunpack.c.l.b16 %v17
  %v73 = vunpack.c.h.b16 %v17
  %v74 = vunpack.c.l.b16 %v18
  %v75 = vunpack.c.h.b16 %v18
  %v76 = vunpack.c.l.b16 %v19
  %v77 = vunpack.c.h.b16 %v19
  %v78 = vunpack.c.l.b16 %v20
  %v79 = vunpack.c.h.b16 %v20
  %v80 = vunpack.c.l.b16 %v21
  %v81 = vunpack.c.h.b16 %v21
  %v82 = vpack.c.b16 %v70, %v68
  %v83 = vpack.c.b16 %v71, %v69
  %v84 = vpack.c.b16 %v74, %v72
  %v85 = vpack.c.b16 %v75, %v73
  %v86 = vpack.c.b16 %v78, %v76
  %v87 = vpack.c.b16 %v79, %v77
  %v88 = vpack.c.b16 %v80, %v80
  %v89 = vpack.c.b16 %v81, %v81
  %v130 = vunpack.c.l.b16 %v22
  %v131 = vunpack.c.l.b16 %v23
  %v132 = vunpack.c.l.b16 %v24
  %v133 = vunpack.c.l.b16 %v25
  %v134 = vunpack.c.l.b16 %v26
  %v135 = vunpack.c.l.b16 %v27
  %v136 = vunpack.c.l.b16 %v28
  %v137 = vunpack.c.l.b16 %v29
  %v138 = vunpack.c.l.b16 %v30
  %v139 = vunpack.c.l.b16 %v31
  %v140 = vunpack.c.l.b16 %v32
  %v141 = vunpack.c.l.b16 %v33
  %v142 = vunpack.c.l.b16 %v34
  %v143 = vunpack.c.l.b16 %v35
  %v144 = vunpack.c.l.b16 %v36
  %v145 = vunpack.c.l.b16 %v37
  %v146 = vunpack.c.l.b16 %v38
  %v147 = vunpack.c.l.b16 %v39
  %v148 = vunpack.c.l.b16 %v40
  %v149 = vunpack.c.l.b16 %v41
  %v150 = vunpack.c.l.b16 %v42
  %v151 = vunpack.c.l.b16 %v43
  %v152 = vunpack.c.l.b16 %v44
  %v153 = vunpack.c.l.b16 %v45
  %v154 = vunpack.c.l.b16 %v46
  %v155 = vunpack.c.l.b16 %v47
  %v156 = vunpack.c.l.b16 %v48
  %v157 = vunpack.c.l.b16 %v49
  %v158 = vunpack.c.l.b16 %v50
  %v159 = vunpack.c.l.b16 %v51
  %v160 = vunpack.c.l.b16 %v52
  %v161 = vunpack.c.l.b16 %v53
  %v162 = vpack.c.b16 %v131, %v130
  %v163 = vpack.c.b16 %v133, %v132
  %v164 = vpack.c.b16 %v135, %v134
  %v165 = vpack.c.b16 %v137, %v136
  %v166 = vpack.c.b16 %v139, %v138
  %v167 = vpack.c.b16 %v141, %v140
  %v168 = vpack.c.b16 %v143, %v142
  %v169 = vpack.c.b16 %v145, %v144
  %v170 = vpack.c.b16 %v147, %v146
  %v171 = vpack.c.b16 %v149, %v148
  %v172 = vpack.c.b16 %v151, %v150
  %v173 = vpack.c.b16 %v153, %v152
  %v174 = vpack.c.b16 %v155, %v154
  %v175 = vpack.c.b16 %v157, %v156
  %v176 = vpack.c.b16 %v159, %v158
  %v177 = vpack.c.b16 %v161, %v160
  %194 = vmatprep.subr.bf16.mxu0 0
  %195 = vmatpush1.bf16.msra.mxu0 %v162
  %196 = vmatprep.subr.bf16.mxu0 0
  %197 = vmatpush1.bf16.msra.mxu0 %v163
  %198 = vmatprep.subr.bf16.mxu0 0
  %199 = vmatpush1.bf16.msra.mxu0 %v164
  %200 = vmatprep.subr.bf16.mxu0 0
  %201 = vmatpush1.bf16.msra.mxu0 %v165
  %202 = vmatprep.subr.bf16.mxu0 0
  %203 = vmatpush1.bf16.msra.mxu0 %v166
  %204 = vmatprep.subr.bf16.mxu0 0
  %205 = vmatpush1.bf16.msra.mxu0 %v167
  %206 = vmatprep.subr.bf16.mxu0 0
  %207 = vmatpush1.bf16.msra.mxu0 %v168
  %208 = vmatprep.subr.bf16.mxu0 0
  %209 = vmatpush1.bf16.msra.mxu0 %v169
  %210 = vmatprep.subr.bf16.mxu0 0
  %211 = vmatpush1.bf16.msra.mxu0 %v170
  %212 = vmatprep.subr.bf16.mxu0 0
  %213 = vmatpush1.bf16.msra.mxu0 %v171
  %214 = vmatprep.subr.bf16.mxu0 0
  %215 = vmatpush1.bf16.msra.mxu0 %v172
  %216 = vmatprep.subr.bf16.mxu0 0
  %217 = vmatpush1.bf16.msra.mxu0 %v173
  %218 = vmatprep.subr.bf16.mxu0 0
  %219 = vmatpush1.bf16.msra.mxu0 %v174
  %220 = vmatprep.subr.bf16.mxu0 0
  %221 = vmatpush1.bf16.msra.mxu0 %v175
  %222 = vmatprep.subr.bf16.mxu0 0
  %223 = vmatpush1.bf16.msra.mxu0 %v176
  %224 = vmatprep.subr.bf16.mxu0 0
  %225 = vmatpush1.bf16.msra.mxu0 %v177
  %226 = vmatprep.mubr.bf16.mxu0 %v83
  %227 = vmatmul.mubr.bf16.gmra.mrb[0].mxu0 %v82
  %v228 = vpop.f32.mrb[0].mxu0
  %v229 = vadd.f32 %v59, %v228
  %v230 = vpop.f32.mrb[0].mxu0
  %v231 = vpop.f32.mrb[0].mxu0
  %v232 = vadd.f32 %v59, %v231
  %v233 = vpop.f32.mrb[0].mxu0
  %234 = vmatprep.mubr.bf16.mxu0 %v85
  %235 = vmatmul.mubr.bf16.gmra.mrb[0].mxu0 %v84
  %v236 = vpop.f32.mrb[0].mxu0
  %v237 = vadd.f32 %v59, %v236
  %v238 = vpop.f32.mrb[0].mxu0
  %v239 = vpop.f32.mrb[0].mxu0
  %v240 = vadd.f32 %v59, %v239
  %v241 = vpop.f32.mrb[0].mxu0
  %242 = vmatprep.mubr.bf16.mxu0 %v87
  %243 = vmatmul.mubr.bf16.gmra.mrb[0].mxu0 %v86
  %v244 = vpop.f32.mrb[0].mxu0
  %v245 = vadd.f32 %v59, %v244
  %v246 = vpop.f32.mrb[0].mxu0
  %v247 = vpop.f32.mrb[0].mxu0
  %v248 = vadd.f32 %v59, %v247
  %v249 = vpop.f32.mrb[0].mxu0
  %250 = vmatprep.mubr.bf16.mxu0 %v89
  %251 = vmatmul.mubr.bf16.gmra.mrb[0].mxu0 %v88
  %v252 = vpop.f32.mrb[0].mxu0
  %v253 = vadd.f32 %v59, %v252
  %v254 = vpop.f32.mrb[0].mxu0
  %v255 = vpop.f32.mrb[0].mxu0
  %v256 = vpop.f32.mrb[0].mxu0
  %257 = vdwg.mxu0
  %v258 = vmax.f32 %v229, 0.0
  %v259 = vmax.f32 %v232, 0.0
  %v260 = vmax.f32 %v237, 0.0
  %v261 = vmax.f32 %v240, 0.0
  %v262 = vmax.f32 %v245, 0.0
  %v263 = vmax.f32 %v248, 0.0
  %v264 = vmax.f32 %v253, 0.0
  %v265 = vpack.c.bf16 %v259, %v258
  %v266 = vpack.c.bf16 %v261, %v260
  %v267 = vpack.c.bf16 %v263, %v262
  %v268 = vpack.c.bf16 %v264, %v264
  %v273 = vunpack.c.l.b16 %v265
  %v274 = vunpack.c.h.b16 %v265
  %v275 = vunpack.c.l.b16 %v266
  %v276 = vunpack.c.h.b16 %v266
  %v277 = vunpack.c.l.b16 %v267
  %v278 = vunpack.c.h.b16 %v267
  %v279 = vunpack.c.l.b16 %v268
  %v280 = vpack.c.b16 %v273, %v273
  %v281 = vpack.c.b16 %v274, %v274
  %v282 = vpack.c.b16 %v275, %v275
  %v283 = vpack.c.b16 %v276, %v276
  %v284 = vpack.c.b16 %v277, %v277
  %v285 = vpack.c.b16 %v278, %v278
  %v286 = vpack.c.b16 %v279, %v279
  %vm294 = vcmask 257024
  %295 = vst.msk [vmem:[%s3] sm:$0xf] %vm294, %v280
  %296 = vst.msk [vmem:[%s3 + $0x4] sm:$0xf] %vm294, %v281
  %297 = vst.msk [vmem:[%s3 + $0x8] sm:$0xf] %vm294, %v282
  %298 = vst.msk [vmem:[%s3 + $0xc] sm:$0xf] %vm294, %v283
  %299 = vst.msk [vmem:[%s3 + $0x10] sm:$0xf] %vm294, %v284
  %300 = vst.msk [vmem:[%s3 + $0x14] sm:$0xf] %vm294, %v285
  %301 = vst.msk [vmem:[%s3 + $0x18] sm:$0xf] %vm294, %v286
  // Predicated region
  $region14: #{squeezenet_forward.31} parent=0 // pred_check
    _
  $region15: #{squeezenet_forward.31} parent=0 // pred_check_branch
    %303 = sbr.rel (0) target = $region17
  $region16: #{squeezenet_forward.31} parent=0 // pred_region
    _
  $region17: #{squeezenet_forward.31} parent=0 // pred_fallthru
    _
  // Predicated region
  $region18: #{squeezenet_forward.31} parent=0 // pred_check
    _
  $region19: #{squeezenet_forward.31} parent=0 // pred_check_branch
    %305 = sbr.rel (0) target = $region21
  $region20: #{squeezenet_forward.31} parent=0 // pred_region
    _
  $region21: #{squeezenet_forward.31} parent=0 // pred_fallthru
    _

// kernel: squeezenet_forward.33
$region0: #{squeezenet_forward.33}
  #allocation0 [shape = 'u32[]', space=smem, size = 0x4, offset = 0x4, fixed_abs, tag = 'smem constant byte address 0x4 - core index']
  #allocation1 [shape = 'u32[144,128]{1,0:T(1,128)}', space=vmem, size = 0x12000, scoped, tag = 'internal scratch']
  %s0 = inlined_call_operand.vmem [shape: bf16[6,2,3,512], index: 0, kind: input, shape index: {}]
  %s1 = inlined_call_operand.vmem [shape: bf16[2,2,2,256], index: 1, kind: output, shape index: {}]
  %s2 = sld [smem:[#allocation0]]
  $region37: #{squeezenet_forward.33} parent=0
    _
  %s4 = ssub.s32 1, %s2
  %s5 = scalar_select 0, %s4, %s2
  loop: start=0, step=1, limit=4
  $region2: #{squeezenet_forward.33} parent=0 // loop_pre_header
    _
  $region3: #{squeezenet_forward.33} parent=0 // loop_header
    %s7 = sphi 0, %s11
    %p8 = scmp.ge.s32.totalorder %s7, 4
    %s17 = sphi 0, %s19
    %s20 = sphi 0, %s17
    %s21 = sphi 0, %s20
    %s37 = sphi 0, %s21
    %s43 = sphi 0, %s45
    %s46 = sphi 0, %s43
    %s47 = sphi 0, %s46
    %s63 = sphi 0, %s47
  $region4: #{squeezenet_forward.33} parent=0 // loop_header_branch
    %10 = sbr.rel (%p8) target = $region8
  $region5: #{squeezenet_forward.33} parent=0 // loop_body
    %s12 = ssub.s32 %s7, 1
    %s13 = ssub.s32 %s7, 2
    %s14 = sadd.s32 %s7, 1
    %s15 = ssub.s32 %s7, %s14
    %p16 = scmp.eq.s32.totalorder %s15, 0
    %s18 = sadd.s32 %s17, 1
    %s19 = scalar_select %p16, %s17, %s18
    %p22 = pneg %p16
    %p23 = scmp.eq.s32.totalorder %s7, 1
    %p24 = por %p22, %p23
    %p25 = scmp.ne.s32.totalorder %s17, %s20
    %p26 = scmp.eq.s32.totalorder %s7, 0
    %p27 = por %p25, %p26
    %p28 = scmp.ne.s32.totalorder %s17, %s20
    %p29 = scmp.eq.s32.totalorder %s12, 1
    %p30 = por %p28, %p29
    %p31 = scmp.ne.s32.totalorder %s20, %s21
    %p32 = scmp.eq.s32.totalorder %s12, 0
    %p33 = por %p31, %p32
    %p34 = scmp.ne.s32.totalorder %s20, %s21
    %p35 = scmp.eq.s32.totalorder %s13, 1
    %p36 = por %p34, %p35
    %p38 = scmp.ne.s32.totalorder %s21, %s37
    %p39 = scmp.eq.s32.totalorder %s13, 0
    %p40 = por %p38, %p39
    %s41 = ssub.s32 %s7, %s14
    %p42 = scmp.eq.s32.totalorder %s41, 0
    %s44 = sadd.s32 %s43, 1
    %s45 = scalar_select %p42, %s43, %s44
    %p48 = pneg %p42
    %p49 = scmp.eq.s32.totalorder %s7, 1
    %p50 = por %p48, %p49
    %p51 = scmp.ne.s32.totalorder %s43, %s46
    %p52 = scmp.eq.s32.totalorder %s7, 0
    %p53 = por %p51, %p52
    %p54 = scmp.ne.s32.totalorder %s43, %s46
    %p55 = scmp.eq.s32.totalorder %s12, 1
    %p56 = por %p54, %p55
    %p57 = scmp.ne.s32.totalorder %s46, %s47
    %p58 = scmp.eq.s32.totalorder %s12, 0
    %p59 = por %p57, %p58
    %p60 = scmp.ne.s32.totalorder %s46, %s47
    %p61 = scmp.eq.s32.totalorder %s13, 1
    %p62 = por %p60, %p61
    %p64 = scmp.ne.s32.totalorder %s47, %s63
    %p65 = scmp.eq.s32.totalorder %s13, 0
    %p66 = por %p64, %p65
    %p67 = scmp.le.s32.totalorder 1, %s7
    %p68 = scmp.lt.s32.totalorder %s7, 3
    %p69 = pnand %p67, %p68
    %p70 = pneg %p69
    // Predicated region
    $region9: #{squeezenet_forward.33} parent=5 // pred_check
      _
    $region10: #{squeezenet_forward.33} parent=5 // pred_check_branch
      %72 = sbr.rel (%p69) target = $region12
    $region11: #{squeezenet_forward.33} parent=5 // pred_region
      %s73 = ssub.s32 %s7, 1
    $region12: #{squeezenet_forward.33} parent=5 // pred_fallthru
      _
    %p74 = scmp.lt.s32.totalorder %s7, 2
    // Predicated region
    $region13: #{squeezenet_forward.33} parent=5 // pred_check
      %p75 = pneg %p74
    $region14: #{squeezenet_forward.33} parent=5 // pred_check_branch
      %77 = sbr.rel (%p75) target = $region16
    $region15: #{squeezenet_forward.33} parent=5 // pred_region
      // Predicated region
      $region17: #{squeezenet_forward.33} parent=15 // pred_check
        %p78 = pneg %p27
      $region18: #{squeezenet_forward.33} parent=15 // pred_check_branch
        %80 = sbr.rel (%p78) target = $region20
      $region19: #{squeezenet_forward.33} parent=15 // pred_region
        %s81 = smul.u32 3, %s7
        %p82 = scmp.lt.s32.totalorder %s81, 5
        %s83 = scalar_select %p82, %s81, 5
        %s84 = smul.addr %s83, 8
        %s85 = smul.addr %s84, 2
        %s86 = scalar_lea.vmem %s0, %s85
        %s87 = smul.u32 3, %s7
      $region20: #{squeezenet_forward.33} parent=15 // pred_fallthru
        _
    $region16: #{squeezenet_forward.33} parent=5 // pred_fallthru
      _
    %p88 = scmp.le.s32.totalorder 1, %s7
    %p89 = scmp.lt.s32.totalorder %s7, 3
    %p90 = pnand %p88, %p89
    %p91 = pneg %p90
    // Predicated region
    $region21: #{squeezenet_forward.33} parent=5 // pred_check
      _
    $region22: #{squeezenet_forward.33} parent=5 // pred_check_branch
      %93 = sbr.rel (%p90) target = $region24
    $region23: #{squeezenet_forward.33} parent=5 // pred_region
      %s94 = ssub.s32 %s7, 1
      %s95 = smul.u32 3, %s12
      %p96 = scmp.lt.s32.totalorder %s95, 5
      %s97 = scalar_select %p96, %s95, 5
      %s98 = smul.addr %s97, 8
      %s99 = smul.addr %s98, 2
      %s100 = scalar_lea.vmem %s0, %s99
      %p101 = pneg %p33
      %p102 = pneg %p30
      %p103 = pneg %p59
      %p104 = pneg %p56
      %p105 = scmp.lt.s32.totalorder %s12, 1
      %s106 = scalar_select %p105, %s12, 1
      %s107 = smul.addr %s106, 4
      %s108 = scalar_lea.vmem %s1, %s107
      %s109 = smul.u32 3, %s12
      %p110 = scmp.lt.s32.totalorder %s109, 5
      %s111 = scalar_select %p110, %s109, 5
      %s112 = smul.addr %s111, 8
      %s113 = smul.addr %s112, 2
      %s114 = scalar_lea.vmem %s0, %s113
      %s115 = smul.u32 3, %s12
      %p116 = scmp.lt.s32.totalorder %s12, 1
      %s117 = scalar_select %p116, %s12, 1
      %s118 = smul.addr %s117, 4
      %s119 = scalar_lea.vmem %s1, %s118
      %v120 = vld [vmem:[%s114] sm:$0xff]
      %v121 = vld [vmem:[%s114 + $0x8] sm:$0xff]
      %v122 = vld [vmem:[%s114 + $0x10] sm:$0xff]
      %v123 = vld [vmem:[%s114 + $0x18] sm:$0xff]
      %v124 = vld [vmem:[%s114 + $0x20] sm:$0xff]
      %v125 = vmax.bf16 %v120, %v121
      %v126 = vmax.bf16 %v122, %v123
      %v127 = vmax.bf16 %v125, %v122
      %v128 = vmax.bf16 %v126, %v124
      %v131 = vrot.slane %v127, 4
      %v132 = vrot.slane %v128, 4
      %v135 = vmax.bf16 %v127, %v131
      %v136 = vmax.bf16 %v128, %v132
      %v138 = vshrl.u32 %v127, 16
      %v140 = vrot.slane %v138, 6
      %v141 = vshll.u32 %v127, 16
      %v143 = vrot.slane %v141, 7
      %v144 = vor.u32 %v140, %v143
      %v145 = vrot.slane %v144, 2
      %v147 = vshrl.u32 %v128, 16
      %v149 = vrot.slane %v147, 6
      %v150 = vshll.u32 %v128, 16
      %v152 = vrot.slane %v150, 7
      %v153 = vor.u32 %v149, %v152
      %v154 = vrot.slane %v153, 2
      %v157 = vmax.bf16 %v135, %v145
      %v158 = vmax.bf16 %v136, %v154
      %v162 = vunpack.c.l.s4 1966171168
      %v163 = vunpack.c.0.s8 %v162
      %v164 = vlaneseq
      %v165 = vshrl.u32 %v164, 7
      %v166 = vsub.s32 %v163, %v165
      %v167 = vrot.slane %v157, %v166
      %v169 = vunpack.c.l.s4 1966171168
      %v170 = vunpack.c.0.s8 %v169
      %v171 = vlaneseq
      %v172 = vshrl.u32 %v171, 7
      %v173 = vsub.s32 %v170, %v172
      %v174 = vrot.slane %v158, %v173
      %177 = vst [vmem:[%s119] sm:$0x3] %v167
      %178 = vst [vmem:[%s119 + $0x2] sm:$0x3] %v174
      %p179 = scmp.lt.s32.totalorder %s12, 1
      %s180 = scalar_select %p179, %s12, 1
      %s181 = smul.addr %s180, 4
      %s182 = scalar_lea.vmem %s1, %s181
      // Predicated region
      $region25: #{squeezenet_forward.33} parent=23 // pred_check
        %p183 = pneg %p56
      $region26: #{squeezenet_forward.33} parent=23 // pred_check_branch
        %185 = sbr.rel (%p183) target = $region28
      $region27: #{squeezenet_forward.33} parent=23 // pred_region
        _
      $region28: #{squeezenet_forward.33} parent=23 // pred_fallthru
        _
    $region24: #{squeezenet_forward.33} parent=5 // pred_fallthru
      _
    %p186 = scmp.le.s32.totalorder 2, %s7
    // Predicated region
    $region29: #{squeezenet_forward.33} parent=5 // pred_check
      %p187 = pneg %p186
    $region30: #{squeezenet_forward.33} parent=5 // pred_check_branch
      %189 = sbr.rel (%p187) target = $region32
    $region31: #{squeezenet_forward.33} parent=5 // pred_region
      %s190 = ssub.s32 %s7, 2
      // Predicated region
      $region33: #{squeezenet_forward.33} parent=31 // pred_check
        %p191 = pneg %p62
      $region34: #{squeezenet_forward.33} parent=31 // pred_check_branch
        %193 = sbr.rel (%p191) target = $region36
      $region35: #{squeezenet_forward.33} parent=31 // pred_region
        %p194 = scmp.lt.s32.totalorder %s13, 1
        %s195 = scalar_select %p194, %s13, 1
        %s196 = smul.addr %s195, 4
        %s197 = scalar_lea.vmem %s1, %s196
      $region36: #{squeezenet_forward.33} parent=31 // pred_fallthru
        _
    $region32: #{squeezenet_forward.33} parent=5 // pred_fallthru
      _
  $region6: #{squeezenet_forward.33} parent=0 // loop_footer
    %s11 = sadd.s32 1, %s7
  $region7: #{squeezenet_forward.33} parent=0 // loop_footer_branch
    %6 = sbr.rel target = $region3
  $region8: #{squeezenet_forward.33} parent=0 // loop_exit
    _

// kernel: squeezenet_forward.34
$region0: #{squeezenet_forward.34}
  #allocation0 [shape = 'u32[]', space=smem, size = 0x4, offset = 0x4, fixed_abs, tag = 'smem constant byte address 0x4 - core index']
  #allocation1 [shape = 'u32[144,128]{1,0:T(1,128)}', space=vmem, size = 0x12000, scoped, tag = 'internal scratch']
  %s0 = inlined_call_operand.vmem [shape: bf16[8,256], index: 0, kind: input, shape index: {}]
  %s1 = inlined_call_operand.vmem [shape: bf16[256,48], index: 1, kind: input, shape index: {}]
  %s2 = inlined_call_operand.vmem [shape: f32[1,48], index: 2, kind: input, shape index: {}]
  %s3 = inlined_call_operand.vmem [shape: bf16[8,48], index: 3, kind: output, shape index: {}]
  %s4 = sld [smem:[#allocation0]]
  $region22: #{squeezenet_forward.34} parent=0
    _
  %s6 = ssub.s32 1, %s4
  %s7 = scalar_select 0, %s6, %s4
  // Predicated region
  $region2: #{squeezenet_forward.34} parent=0 // pred_check
    _
  $region3: #{squeezenet_forward.34} parent=0 // pred_check_branch
    %9 = sbr.rel (0) target = $region5
  $region4: #{squeezenet_forward.34} parent=0 // pred_region
    _
  $region5: #{squeezenet_forward.34} parent=0 // pred_fallthru
    _
  // Predicated region
  $region6: #{squeezenet_forward.34} parent=0 // pred_check
    _
  $region7: #{squeezenet_forward.34} parent=0 // pred_check_branch
    %11 = sbr.rel (0) target = $region9
  $region8: #{squeezenet_forward.34} parent=0 // pred_region
    _
  $region9: #{squeezenet_forward.34} parent=0 // pred_fallthru
    _
  // Predicated region
  $region10: #{squeezenet_forward.34} parent=0 // pred_check
    _
  $region11: #{squeezenet_forward.34} parent=0 // pred_check_branch
    %13 = sbr.rel (0) target = $region13
  $region12: #{squeezenet_forward.34} parent=0 // pred_region
    _
  $region13: #{squeezenet_forward.34} parent=0 // pred_fallthru
    _
  %v15 = vld [vmem:[%s0] sm:$0xff]
  %v16 = vld [vmem:[%s1] sm:$0xf]
  %v17 = vld [vmem:[%s1 + $0x4] sm:$0xf]
  %v18 = vld [vmem:[%s1 + $0x8] sm:$0xf]
  %v19 = vld [vmem:[%s1 + $0xc] sm:$0xf]
  %v20 = vld [vmem:[%s1 + $0x10] sm:$0xf]
  %v21 = vld [vmem:[%s1 + $0x14] sm:$0xf]
  %v22 = vld [vmem:[%s1 + $0x18] sm:$0xf]
  %v23 = vld [vmem:[%s1 + $0x1c] sm:$0xf]
  %v24 = vld [vmem:[%s1 + $0x20] sm:$0xf]
  %v25 = vld [vmem:[%s1 + $0x24] sm:$0xf]
  %v26 = vld [vmem:[%s1 + $0x28] sm:$0xf]
  %v27 = vld [vmem:[%s1 + $0x2c] sm:$0xf]
  %v28 = vld [vmem:[%s1 + $0x30] sm:$0xf]
  %v29 = vld [vmem:[%s1 + $0x34] sm:$0xf]
  %v30 = vld [vmem:[%s1 + $0x38] sm:$0xf]
  %v31 = vld [vmem:[%s1 + $0x3c] sm:$0xf]
  %v32 = vld [vmem:[%s1 + $0x40] sm:$0xf]
  %v33 = vld [vmem:[%s1 + $0x44] sm:$0xf]
  %v34 = vld [vmem:[%s1 + $0x48] sm:$0xf]
  %v35 = vld [vmem:[%s1 + $0x4c] sm:$0xf]
  %v36 = vld [vmem:[%s1 + $0x50] sm:$0xf]
  %v37 = vld [vmem:[%s1 + $0x54] sm:$0xf]
  %v38 = vld [vmem:[%s1 + $0x58] sm:$0xf]
  %v39 = vld [vmem:[%s1 + $0x5c] sm:$0xf]
  %v40 = vld [vmem:[%s1 + $0x60] sm:$0xf]
  %v41 = vld [vmem:[%s1 + $0x64] sm:$0xf]
  %v42 = vld [vmem:[%s1 + $0x68] sm:$0xf]
  %v43 = vld [vmem:[%s1 + $0x6c] sm:$0xf]
  %v44 = vld [vmem:[%s1 + $0x70] sm:$0xf]
  %v45 = vld [vmem:[%s1 + $0x74] sm:$0xf]
  %v46 = vld [vmem:[%s1 + $0x78] sm:$0xf]
  %v47 = vld [vmem:[%s1 + $0x7c] sm:$0xf]
  %v48 = vld [vmem:[%s2] sm:$0x1]
  %v50 = vlaneseq
  %v51 = vshrl.u32 %v50, 7
  %v52 = vsub.s32 0, %v51
  %v53 = vrot.slane %v48, %v52
  %v56 = vunpack.c.l.b16 %v15
  %v57 = vunpack.c.h.b16 %v15
  %v58 = vpack.c.b16 %v56, %v56
  %v59 = vpack.c.b16 %v57, %v57
  %v94 = vunpack.c.l.b16 %v16
  %v95 = vunpack.c.l.b16 %v17
  %v96 = vunpack.c.l.b16 %v18
  %v97 = vunpack.c.l.b16 %v19
  %v98 = vunpack.c.l.b16 %v20
  %v99 = vunpack.c.l.b16 %v21
  %v100 = vunpack.c.l.b16 %v22
  %v101 = vunpack.c.l.b16 %v23
  %v102 = vunpack.c.l.b16 %v24
  %v103 = vunpack.c.l.b16 %v25
  %v104 = vunpack.c.l.b16 %v26
  %v105 = vunpack.c.l.b16 %v27
  %v106 = vunpack.c.l.b16 %v28
  %v107 = vunpack.c.l.b16 %v29
  %v108 = vunpack.c.l.b16 %v30
  %v109 = vunpack.c.l.b16 %v31
  %v110 = vunpack.c.l.b16 %v32
  %v111 = vunpack.c.l.b16 %v33
  %v112 = vunpack.c.l.b16 %v34
  %v113 = vunpack.c.l.b16 %v35
  %v114 = vunpack.c.l.b16 %v36
  %v115 = vunpack.c.l.b16 %v37
  %v116 = vunpack.c.l.b16 %v38
  %v117 = vunpack.c.l.b16 %v39
  %v118 = vunpack.c.l.b16 %v40
  %v119 = vunpack.c.l.b16 %v41
  %v120 = vunpack.c.l.b16 %v42
  %v121 = vunpack.c.l.b16 %v43
  %v122 = vunpack.c.l.b16 %v44
  %v123 = vunpack.c.l.b16 %v45
  %v124 = vunpack.c.l.b16 %v46
  %v125 = vunpack.c.l.b16 %v47
  %v126 = vpack.c.b16 %v95, %v94
  %v127 = vpack.c.b16 %v97, %v96
  %v128 = vpack.c.b16 %v99, %v98
  %v129 = vpack.c.b16 %v101, %v100
  %v130 = vpack.c.b16 %v103, %v102
  %v131 = vpack.c.b16 %v105, %v104
  %v132 = vpack.c.b16 %v107, %v106
  %v133 = vpack.c.b16 %v109, %v108
  %v134 = vpack.c.b16 %v111, %v110
  %v135 = vpack.c.b16 %v113, %v112
  %v136 = vpack.c.b16 %v115, %v114
  %v137 = vpack.c.b16 %v117, %v116
  %v138 = vpack.c.b16 %v119, %v118
  %v139 = vpack.c.b16 %v121, %v120
  %v140 = vpack.c.b16 %v123, %v122
  %v141 = vpack.c.b16 %v125, %v124
  %158 = vmatprep.subr.bf16.mxu0 0
  %159 = vmatpush1.bf16.msra.mxu0 %v126
  %160 = vmatprep.subr.bf16.mxu0 0
  %161 = vmatpush1.bf16.msra.mxu0 %v127
  %162 = vmatprep.subr.bf16.mxu0 0
  %163 = vmatpush1.bf16.msra.mxu0 %v128
  %164 = vmatprep.subr.bf16.mxu0 0
  %165 = vmatpush1.bf16.msra.mxu0 %v129
  %166 = vmatprep.subr.bf16.mxu0 0
  %167 = vmatpush1.bf16.msra.mxu0 %v130
  %168 = vmatprep.subr.bf16.mxu0 0
  %169 = vmatpush1.bf16.msra.mxu0 %v131
  %170 = vmatprep.subr.bf16.mxu0 0
  %171 = vmatpush1.bf16.msra.mxu0 %v132
  %172 = vmatprep.subr.bf16.mxu0 0
  %173 = vmatpush1.bf16.msra.mxu0 %v133
  %174 = vmatprep.subr.bf16.mxu0 0
  %175 = vmatpush1.bf16.msra.mxu0 %v134
  %176 = vmatprep.subr.bf16.mxu0 0
  %177 = vmatpush1.bf16.msra.mxu0 %v135
  %178 = vmatprep.subr.bf16.mxu0 0
  %179 = vmatpush1.bf16.msra.mxu0 %v136
  %180 = vmatprep.subr.bf16.mxu0 0
  %181 = vmatpush1.bf16.msra.mxu0 %v137
  %182 = vmatprep.subr.bf16.mxu0 0
  %183 = vmatpush1.bf16.msra.mxu0 %v138
  %184 = vmatprep.subr.bf16.mxu0 0
  %185 = vmatpush1.bf16.msra.mxu0 %v139
  %186 = vmatprep.subr.bf16.mxu0 0
  %187 = vmatpush1.bf16.msra.mxu0 %v140
  %188 = vmatprep.subr.bf16.mxu0 0
  %189 = vmatpush1.bf16.msra.mxu0 %v141
  %190 = vmatprep.mubr.bf16.mxu0 %v59
  %191 = vmatmul.mubr.bf16.gmra.mrb[0].mxu0 %v58
  %v192 = vpop.f32.mrb[0].mxu0
  %v193 = vadd.f32 %v53, %v192
  %v194 = vpop.f32.mrb[0].mxu0
  %v195 = vpop.f32.mrb[0].mxu0
  %v196 = vpop.f32.mrb[0].mxu0
  %197 = vdwg.mxu0
  %v198 = vmax.f32 %v193, 0.0
  %v199 = vpack.c.bf16 %v198, %v198
  %vm200 = vcmask 388096
  %201 = vst.msk [vmem:[%s3] sm:$0xf] %vm200, %v199
  // Predicated region
  $region14: #{squeezenet_forward.34} parent=0 // pred_check
    _
  $region15: #{squeezenet_forward.34} parent=0 // pred_check_branch
    %203 = sbr.rel (0) target = $region17
  $region16: #{squeezenet_forward.34} parent=0 // pred_region
    _
  $region17: #{squeezenet_forward.34} parent=0 // pred_fallthru
    _
  // Predicated region
  $region18: #{squeezenet_forward.34} parent=0 // pred_check
    _
  $region19: #{squeezenet_forward.34} parent=0 // pred_check_branch
    %205 = sbr.rel (0) target = $region21
  $region20: #{squeezenet_forward.34} parent=0 // pred_region
    _
  $region21: #{squeezenet_forward.34} parent=0 // pred_fallthru
    _

// kernel: squeezenet_forward.36
$region0: #{squeezenet_forward.36}
  #allocation0 [shape = 'u32[]', space=smem, size = 0x4, offset = 0x4, fixed_abs, tag = 'smem constant byte address 0x4 - core index']
  #allocation1 [shape = 'u32[144,128]{1,0:T(1,128)}', space=vmem, size = 0x12000, scoped, tag = 'internal scratch']
  %s0 = inlined_call_operand.vmem [shape: bf16[8,384], index: 0, kind: input, shape index: {}]
  %s1 = inlined_call_operand.vmem [shape: bf16[384,48], index: 1, kind: input, shape index: {}]
  %s2 = inlined_call_operand.vmem [shape: f32[1,48], index: 2, kind: input, shape index: {}]
  %s3 = inlined_call_operand.vmem [shape: bf16[8,48], index: 3, kind: output, shape index: {}]
  %s4 = sld [smem:[#allocation0]]
  $region22: #{squeezenet_forward.36} parent=0
    _
  %s6 = ssub.s32 1, %s4
  %s7 = scalar_select 0, %s6, %s4
  // Predicated region
  $region2: #{squeezenet_forward.36} parent=0 // pred_check
    _
  $region3: #{squeezenet_forward.36} parent=0 // pred_check_branch
    %9 = sbr.rel (0) target = $region5
  $region4: #{squeezenet_forward.36} parent=0 // pred_region
    _
  $region5: #{squeezenet_forward.36} parent=0 // pred_fallthru
    _
  // Predicated region
  $region6: #{squeezenet_forward.36} parent=0 // pred_check
    _
  $region7: #{squeezenet_forward.36} parent=0 // pred_check_branch
    %11 = sbr.rel (0) target = $region9
  $region8: #{squeezenet_forward.36} parent=0 // pred_region
    _
  $region9: #{squeezenet_forward.36} parent=0 // pred_fallthru
    _
  // Predicated region
  $region10: #{squeezenet_forward.36} parent=0 // pred_check
    _
  $region11: #{squeezenet_forward.36} parent=0 // pred_check_branch
    %13 = sbr.rel (0) target = $region13
  $region12: #{squeezenet_forward.36} parent=0 // pred_region
    _
  $region13: #{squeezenet_forward.36} parent=0 // pred_fallthru
    _
  %v15 = vld [vmem:[%s0] sm:$0xff]
  %v16 = vld [vmem:[%s0 + $0x8] sm:$0xf]
  %v17 = vld [vmem:[%s1] sm:$0xf]
  %v18 = vld [vmem:[%s1 + $0x4] sm:$0xf]
  %v19 = vld [vmem:[%s1 + $0x8] sm:$0xf]
  %v20 = vld [vmem:[%s1 + $0xc] sm:$0xf]
  %v21 = vld [vmem:[%s1 + $0x10] sm:$0xf]
  %v22 = vld [vmem:[%s1 + $0x14] sm:$0xf]
  %v23 = vld [vmem:[%s1 + $0x18] sm:$0xf]
  %v24 = vld [vmem:[%s1 + $0x1c] sm:$0xf]
  %v25 = vld [vmem:[%s1 + $0x20] sm:$0xf]
  %v26 = vld [vmem:[%s1 + $0x24] sm:$0xf]
  %v27 = vld [vmem:[%s1 + $0x28] sm:$0xf]
  %v28 = vld [vmem:[%s1 + $0x2c] sm:$0xf]
  %v29 = vld [vmem:[%s1 + $0x30] sm:$0xf]
  %v30 = vld [vmem:[%s1 + $0x34] sm:$0xf]
  %v31 = vld [vmem:[%s1 + $0x38] sm:$0xf]
  %v32 = vld [vmem:[%s1 + $0x3c] sm:$0xf]
  %v33 = vld [vmem:[%s1 + $0x40] sm:$0xf]
  %v34 = vld [vmem:[%s1 + $0x44] sm:$0xf]
  %v35 = vld [vmem:[%s1 + $0x48] sm:$0xf]
  %v36 = vld [vmem:[%s1 + $0x4c] sm:$0xf]
  %v37 = vld [vmem:[%s1 + $0x50] sm:$0xf]
  %v38 = vld [vmem:[%s1 + $0x54] sm:$0xf]
  %v39 = vld [vmem:[%s1 + $0x58] sm:$0xf]
  %v40 = vld [vmem:[%s1 + $0x5c] sm:$0xf]
  %v41 = vld [vmem:[%s1 + $0x60] sm:$0xf]
  %v42 = vld [vmem:[%s1 + $0x64] sm:$0xf]
  %v43 = vld [vmem:[%s1 + $0x68] sm:$0xf]
  %v44 = vld [vmem:[%s1 + $0x6c] sm:$0xf]
  %v45 = vld [vmem:[%s1 + $0x70] sm:$0xf]
  %v46 = vld [vmem:[%s1 + $0x74] sm:$0xf]
  %v47 = vld [vmem:[%s1 + $0x78] sm:$0xf]
  %v48 = vld [vmem:[%s1 + $0x7c] sm:$0xf]
  %v49 = vld [vmem:[%s1 + $0x80] sm:$0xf]
  %v50 = vld [vmem:[%s1 + $0x84] sm:$0xf]
  %v51 = vld [vmem:[%s1 + $0x88] sm:$0xf]
  %v52 = vld [vmem:[%s1 + $0x8c] sm:$0xf]
  %v53 = vld [vmem:[%s1 + $0x90] sm:$0xf]
  %v54 = vld [vmem:[%s1 + $0x94] sm:$0xf]
  %v55 = vld [vmem:[%s1 + $0x98] sm:$0xf]
  %v56 = vld [vmem:[%s1 + $0x9c] sm:$0xf]
  %v57 = vld [vmem:[%s1 + $0xa0] sm:$0xf]
  %v58 = vld [vmem:[%s1 + $0xa4] sm:$0xf]
  %v59 = vld [vmem:[%s1 + $0xa8] sm:$0xf]
  %v60 = vld [vmem:[%s1 + $0xac] sm:$0xf]
  %v61 = vld [vmem:[%s1 + $0xb0] sm:$0xf]
  %v62 = vld [vmem:[%s1 + $0xb4] sm:$0xf]
  %v63 = vld [vmem:[%s1 + $0xb8] sm:$0xf]
  %v64 = vld [vmem:[%s1 + $0xbc] sm:$0xf]
  %v65 = vld [vmem:[%s2] sm:$0x1]
  %v67 = vlaneseq
  %v68 = vshrl.u32 %v67, 7
  %v69 = vsub.s32 0, %v68
  %v70 = vrot.slane %v65, %v69
  %v74 = vunpack.c.l.b16 %v15
  %v75 = vunpack.c.h.b16 %v15
  %v76 = vunpack.c.l.b16 %v16
  %v77 = vpack.c.b16 %v74, %v74
  %v78 = vpack.c.b16 %v75, %v75
  %v79 = vpack.c.b16 %v76, %v76
  %v131 = vunpack.c.l.b16 %v17
  %v132 = vunpack.c.l.b16 %v18
  %v133 = vunpack.c.l.b16 %v19
  %v134 = vunpack.c.l.b16 %v20
  %v135 = vunpack.c.l.b16 %v21
  %v136 = vunpack.c.l.b16 %v22
  %v137 = vunpack.c.l.b16 %v23
  %v138 = vunpack.c.l.b16 %v24
  %v139 = vunpack.c.l.b16 %v25
  %v140 = vunpack.c.l.b16 %v26
  %v141 = vunpack.c.l.b16 %v27
  %v142 = vunpack.c.l.b16 %v28
  %v143 = vunpack.c.l.b16 %v29
  %v144 = vunpack.c.l.b16 %v30
  %v145 = vunpack.c.l.b16 %v31
  %v146 = vunpack.c.l.b16 %v32
  %v147 = vunpack.c.l.b16 %v33
  %v148 = vunpack.c.l.b16 %v34
  %v149 = vunpack.c.l.b16 %v35
  %v150 = vunpack.c.l.b16 %v36
  %v151 = vunpack.c.l.b16 %v37
  %v152 = vunpack.c.l.b16 %v38
  %v153 = vunpack.c.l.b16 %v39
  %v154 = vunpack.c.l.b16 %v40
  %v155 = vunpack.c.l.b16 %v41
  %v156 = vunpack.c.l.b16 %v42
  %v157 = vunpack.c.l.b16 %v43
  %v158 = vunpack.c.l.b16 %v44
  %v159 = vunpack.c.l.b16 %v45
  %v160 = vunpack.c.l.b16 %v46
  %v161 = vunpack.c.l.b16 %v47
  %v162 = vunpack.c.l.b16 %v48
  %v163 = vunpack.c.l.b16 %v49
  %v164 = vunpack.c.l.b16 %v50
  %v165 = vunpack.c.l.b16 %v51
  %v166 = vunpack.c.l.b16 %v52
  %v167 = vunpack.c.l.b16 %v53
  %v168 = vunpack.c.l.b16 %v54
  %v169 = vunpack.c.l.b16 %v55
  %v170 = vunpack.c.l.b16 %v56
  %v171 = vunpack.c.l.b16 %v57
  %v172 = vunpack.c.l.b16 %v58
  %v173 = vunpack.c.l.b16 %v59
  %v174 = vunpack.c.l.b16 %v60
  %v175 = vunpack.c.l.b16 %v61
  %v176 = vunpack.c.l.b16 %v62
  %v177 = vunpack.c.l.b16 %v63
  %v178 = vunpack.c.l.b16 %v64
  %v179 = vpack.c.b16 %v132, %v131
  %v180 = vpack.c.b16 %v134, %v133
  %v181 = vpack.c.b16 %v136, %v135
  %v182 = vpack.c.b16 %v138, %v137
  %v183 = vpack.c.b16 %v140, %v139
  %v184 = vpack.c.b16 %v142, %v141
  %v185 = vpack.c.b16 %v144, %v143
  %v186 = vpack.c.b16 %v146, %v145
  %v187 = vpack.c.b16 %v148, %v147
  %v188 = vpack.c.b16 %v150, %v149
  %v189 = vpack.c.b16 %v152, %v151
  %v190 = vpack.c.b16 %v154, %v153
  %v191 = vpack.c.b16 %v156, %v155
  %v192 = vpack.c.b16 %v158, %v157
  %v193 = vpack.c.b16 %v160, %v159
  %v194 = vpack.c.b16 %v162, %v161
  %v195 = vpack.c.b16 %v164, %v163
  %v196 = vpack.c.b16 %v166, %v165
  %v197 = vpack.c.b16 %v168, %v167
  %v198 = vpack.c.b16 %v170, %v169
  %v199 = vpack.c.b16 %v172, %v171
  %v200 = vpack.c.b16 %v174, %v173
  %v201 = vpack.c.b16 %v176, %v175
  %v202 = vpack.c.b16 %v178, %v177
  %227 = vmatprep.subr.bf16.mxu0 0
  %228 = vmatpush1.bf16.msra.mxu0 %v179
  %229 = vmatprep.subr.bf16.mxu0 0
  %230 = vmatpush1.bf16.msra.mxu0 %v180
  %231 = vmatprep.subr.bf16.mxu0 0
  %232 = vmatpush1.bf16.msra.mxu0 %v181
  %233 = vmatprep.subr.bf16.mxu0 0
  %234 = vmatpush1.bf16.msra.mxu0 %v182
  %235 = vmatprep.subr.bf16.mxu0 0
  %236 = vmatpush1.bf16.msra.mxu0 %v183
  %237 = vmatprep.subr.bf16.mxu0 0
  %238 = vmatpush1.bf16.msra.mxu0 %v184
  %239 = vmatprep.subr.bf16.mxu0 0
  %240 = vmatpush1.bf16.msra.mxu0 %v185
  %241 = vmatprep.subr.bf16.mxu0 0
  %242 = vmatpush1.bf16.msra.mxu0 %v186
  %243 = vmatprep.subr.bf16.mxu0 0
  %244 = vmatpush1.bf16.msra.mxu0 %v187
  %245 = vmatprep.subr.bf16.mxu0 0
  %246 = vmatpush1.bf16.msra.mxu0 %v188
  %247 = vmatprep.subr.bf16.mxu0 0
  %248 = vmatpush1.bf16.msra.mxu0 %v189
  %249 = vmatprep.subr.bf16.mxu0 0
  %250 = vmatpush1.bf16.msra.mxu0 %v190
  %251 = vmatprep.subr.bf16.mxu0 0
  %252 = vmatpush1.bf16.msra.mxu0 %v191
  %253 = vmatprep.subr.bf16.mxu0 0
  %254 = vmatpush1.bf16.msra.mxu0 %v192
  %255 = vmatprep.subr.bf16.mxu0 0
  %256 = vmatpush1.bf16.msra.mxu0 %v193
  %257 = vmatprep.subr.bf16.mxu0 0
  %258 = vmatpush1.bf16.msra.mxu0 %v194
  %259 = vmatprep.mubr.bf16.mxu0 %v78
  %260 = vmatmul.mubr.bf16.gmra.mrb[0].mxu0 %v77
  %v261 = vpop.f32.mrb[0].mxu0
  %v262 = vadd.f32 %v70, %v261
  %v263 = vpop.f32.mrb[0].mxu0
  %v264 = vpop.f32.mrb[0].mxu0
  %v265 = vpop.f32.mrb[0].mxu0
  %266 = vdwg.mxu0
  %267 = vmatprep.subr.bf16.mxu0 0
  %268 = vmatpush1.bf16.msra.mxu0 %v195
  %269 = vmatprep.subr.bf16.mxu0 0
  %270 = vmatpush1.bf16.msra.mxu0 %v196
  %271 = vmatprep.subr.bf16.mxu0 0
  %272 = vmatpush1.bf16.msra.mxu0 %v197
  %273 = vmatprep.subr.bf16.mxu0 0
  %274 = vmatpush1.bf16.msra.mxu0 %v198
  %275 = vmatprep.subr.bf16.mxu0 0
  %276 = vmatpush1.bf16.msra.mxu0 %v199
  %277 = vmatprep.subr.bf16.mxu0 0
  %278 = vmatpush1.bf16.msra.mxu0 %v200
  %279 = vmatprep.subr.bf16.mxu0 0
  %280 = vmatpush1.bf16.msra.mxu0 %v201
  %281 = vmatprep.subr.bf16.mxu0 0
  %282 = vmatpush1.bf16.msra.mxu0 %v202
  %283 = vmatprep.subr.bf16.mxu0 0
  %284 = vmatpush1.bf16.msra.mxu0 0
  %285 = vmatprep.subr.bf16.mxu0 0
  %286 = vmatpush1.bf16.msra.mxu0 0
  %287 = vmatprep.subr.bf16.mxu0 0
  %288 = vmatpush1.bf16.msra.mxu0 0
  %289 = vmatprep.subr.bf16.mxu0 0
  %290 = vmatpush1.bf16.msra.mxu0 0
  %291 = vmatprep.subr.bf16.mxu0 0
  %292 = vmatpush1.bf16.msra.mxu0 0
  %293 = vmatprep.subr.bf16.mxu0 0
  %294 = vmatpush1.bf16.msra.mxu0 0
  %295 = vmatprep.subr.bf16.mxu0 0
  %296 = vmatpush1.bf16.msra.mxu0 0
  %297 = vmatprep.subr.bf16.mxu0 0
  %298 = vmatpush1.bf16.msra.mxu0 0
  %299 = vmatprep.mubr.bf16.mxu0 0
  %300 = vmatmul.mubr.bf16.gmra.mrb[0].mxu0 %v79
  %v301 = vpop.f32.mrb[0].mxu0
  %v302 = vadd.f32 %v262, %v301
  %v303 = vpop.f32.mrb[0].mxu0
  %v304 = vpop.f32.mrb[0].mxu0
  %v305 = vpop.f32.mrb[0].mxu0
  %306 = vdwg.mxu0
  %v307 = vmax.f32 %v302, 0.0
  %v308 = vpack.c.bf16 %v307, %v307
  %vm309 = vcmask 388096
  %310 = vst.msk [vmem:[%s3] sm:$0xf] %vm309, %v308
  // Predicated region
  $region14: #{squeezenet_forward.36} parent=0 // pred_check
    _
  $region15: #{squeezenet_forward.36} parent=0 // pred_check_branch
    %312 = sbr.rel (0) target = $region17
  $region16: #{squeezenet_forward.36} parent=0 // pred_region
    _
  $region17: #{squeezenet_forward.36} parent=0 // pred_fallthru
    _
  // Predicated region
  $region18: #{squeezenet_forward.36} parent=0 // pred_check
    _
  $region19: #{squeezenet_forward.36} parent=0 // pred_check_branch
    %314 = sbr.rel (0) target = $region21
  $region20: #{squeezenet_forward.36} parent=0 // pred_region
    _
  $region21: #{squeezenet_forward.36} parent=0 // pred_fallthru
    _

// kernel: squeezenet_forward.35
$region0: #{squeezenet_forward.35}
  #allocation0 [shape = 'u32[]', space=smem, size = 0x4, offset = 0x4, fixed_abs, tag = 'smem constant byte address 0x4 - core index']
  #allocation1 [shape = 'u32[144,128]{1,0:T(1,128)}', space=vmem, size = 0x12000, scoped, tag = 'internal scratch']
  %s0 = inlined_call_operand.vmem [shape: bf16[8,432], index: 0, kind: input, shape index: {}]
  %s1 = inlined_call_operand.vmem [shape: bf16[432,384], index: 1, kind: input, shape index: {}]
  %s2 = inlined_call_operand.vmem [shape: f32[1,384], index: 2, kind: input, shape index: {}]
  %s3 = inlined_call_operand.vmem [shape: bf16[8,384], index: 3, kind: output, shape index: {}]
  %s4 = sld [smem:[#allocation0]]
  $region22: #{squeezenet_forward.35} parent=0
    _
  %s6 = ssub.s32 1, %s4
  %s7 = scalar_select 0, %s6, %s4
  // Predicated region
  $region2: #{squeezenet_forward.35} parent=0 // pred_check
    _
  $region3: #{squeezenet_forward.35} parent=0 // pred_check_branch
    %9 = sbr.rel (0) target = $region5
  $region4: #{squeezenet_forward.35} parent=0 // pred_region
    _
  $region5: #{squeezenet_forward.35} parent=0 // pred_fallthru
    _
  // Predicated region
  $region6: #{squeezenet_forward.35} parent=0 // pred_check
    _
  $region7: #{squeezenet_forward.35} parent=0 // pred_check_branch
    %11 = sbr.rel (0) target = $region9
  $region8: #{squeezenet_forward.35} parent=0 // pred_region
    _
  $region9: #{squeezenet_forward.35} parent=0 // pred_fallthru
    _
  // Predicated region
  $region10: #{squeezenet_forward.35} parent=0 // pred_check
    _
  $region11: #{squeezenet_forward.35} parent=0 // pred_check_branch
    %13 = sbr.rel (0) target = $region13
  $region12: #{squeezenet_forward.35} parent=0 // pred_region
    _
  $region13: #{squeezenet_forward.35} parent=0 // pred_fallthru
    _
  %v15 = vld [vmem:[%s0] sm:$0xff]
  %v16 = vld [vmem:[%s0 + $0x8] sm:$0xff]
  %v17 = vld [vmem:[%s1] sm:$0xff]
  %v18 = vld [vmem:[%s1 + $0x8] sm:$0xf]
  %v19 = vld [vmem:[%s1 + $0xc] sm:$0xff]
  %v20 = vld [vmem:[%s1 + $0x14] sm:$0xf]
  %v21 = vld [vmem:[%s1 + $0x18] sm:$0xff]
  %v22 = vld [vmem:[%s1 + $0x20] sm:$0xf]
  %v23 = vld [vmem:[%s1 + $0x24] sm:$0xff]
  %v24 = vld [vmem:[%s1 + $0x2c] sm:$0xf]
  %v25 = vld [vmem:[%s1 + $0x30] sm:$0xff]
  %v26 = vld [vmem:[%s1 + $0x38] sm:$0xf]
  %v27 = vld [vmem:[%s1 + $0x3c] sm:$0xff]
  %v28 = vld [vmem:[%s1 + $0x44] sm:$0xf]
  %v29 = vld [vmem:[%s1 + $0x48] sm:$0xff]
  %v30 = vld [vmem:[%s1 + $0x50] sm:$0xf]
  %v31 = vld [vmem:[%s1 + $0x54] sm:$0xff]
  %v32 = vld [vmem:[%s1 + $0x5c] sm:$0xf]
  %v33 = vld [vmem:[%s1 + $0x60] sm:$0xff]
  %v34 = vld [vmem:[%s1 + $0x68] sm:$0xf]
  %v35 = vld [vmem:[%s1 + $0x6c] sm:$0xff]
  %v36 = vld [vmem:[%s1 + $0x74] sm:$0xf]
  %v37 = vld [vmem:[%s1 + $0x78] sm:$0xff]
  %v38 = vld [vmem:[%s1 + $0x80] sm:$0xf]
  %v39 = vld [vmem:[%s1 + $0x84] sm:$0xff]
  %v40 = vld [vmem:[%s1 + $0x8c] sm:$0xf]
  %v41 = vld [vmem:[%s1 + $0x90] sm:$0xff]
  %v42 = vld [vmem:[%s1 + $0x98] sm:$0xf]
  %v43 = vld [vmem:[%s1 + $0x9c] sm:$0xff]
  %v44 = vld [vmem:[%s1 + $0xa4] sm:$0xf]
  %v45 = vld [vmem:[%s1 + $0xa8] sm:$0xff]
  %v46 = vld [vmem:[%s1 + $0xb0] sm:$0xf]
  %v47 = vld [vmem:[%s1 + $0xb4] sm:$0xff]
  %v48 = vld [vmem:[%s1 + $0xbc] sm:$0xf]
  %v49 = vld [vmem:[%s1 + $0xc0] sm:$0xff]
  %v50 = vld [vmem:[%s1 + $0xc8] sm:$0xf]
  %v51 = vld [vmem:[%s1 + $0xcc] sm:$0xff]
  %v52 = vld [vmem:[%s1 + $0xd4] sm:$0xf]
  %v53 = vld [vmem:[%s1 + $0xd8] sm:$0xff]
  %v54 = vld [vmem:[%s1 + $0xe0] sm:$0xf]
  %v55 = vld [vmem:[%s1 + $0xe4] sm:$0xff]
  %v56 = vld [vmem:[%s1 + $0xec] sm:$0xf]
  %v57 = vld [vmem:[%s1 + $0xf0] sm:$0xff]
  %v58 = vld [vmem:[%s1 + $0xf8] sm:$0xf]
  %v59 = vld [vmem:[%s1 + $0xfc] sm:$0xff]
  %v60 = vld [vmem:[%s1 + $0x104] sm:$0xf]
  %v61 = vld [vmem:[%s1 + $0x108] sm:$0xff]
  %v62 = vld [vmem:[%s1 + $0x110] sm:$0xf]
  %v63 = vld [vmem:[%s1 + $0x114] sm:$0xff]
  %v64 = vld [vmem:[%s1 + $0x11c] sm:$0xf]
  %v65 = vld [vmem:[%s1 + $0x120] sm:$0xff]
  %v66 = vld [vmem:[%s1 + $0x128] sm:$0xf]
  %v67 = vld [vmem:[%s1 + $0x12c] sm:$0xff]
  %v68 = vld [vmem:[%s1 + $0x134] sm:$0xf]
  %v69 = vld [vmem:[%s1 + $0x138] sm:$0xff]
  %v70 = vld [vmem:[%s1 + $0x140] sm:$0xf]
  %v71 = vld [vmem:[%s1 + $0x144] sm:$0xff]
  %v72 = vld [vmem:[%s1 + $0x14c] sm:$0xf]
  %v73 = vld [vmem:[%s1 + $0x150] sm:$0xff]
  %v74 = vld [vmem:[%s1 + $0x158] sm:$0xf]
  %v75 = vld [vmem:[%s1 + $0x15c] sm:$0xff]
  %v76 = vld [vmem:[%s1 + $0x164] sm:$0xf]
  %v77 = vld [vmem:[%s1 + $0x168] sm:$0xff]
  %v78 = vld [vmem:[%s1 + $0x170] sm:$0xf]
  %v79 = vld [vmem:[%s1 + $0x174] sm:$0xff]
  %v80 = vld [vmem:[%s1 + $0x17c] sm:$0xf]
  %v81 = vld [vmem:[%s1 + $0x180] sm:$0xff]
  %v82 = vld [vmem:[%s1 + $0x188] sm:$0xf]
  %v83 = vld [vmem:[%s1 + $0x18c] sm:$0xff]
  %v84 = vld [vmem:[%s1 + $0x194] sm:$0xf]
  %v85 = vld [vmem:[%s1 + $0x198] sm:$0xff]
  %v86 = vld [vmem:[%s1 + $0x1a0] sm:$0xf]
  %v87 = vld [vmem:[%s1 + $0x1a4] sm:$0xff]
  %v88 = vld [vmem:[%s1 + $0x1ac] sm:$0xf]
  %v89 = vld [vmem:[%s1 + $0x1b0] sm:$0xff]
  %v90 = vld [vmem:[%s1 + $0x1b8] sm:$0xf]
  %v91 = vld [vmem:[%s1 + $0x1bc] sm:$0xff]
  %v92 = vld [vmem:[%s1 + $0x1c4] sm:$0xf]
  %v93 = vld [vmem:[%s1 + $0x1c8] sm:$0xff]
  %v94 = vld [vmem:[%s1 + $0x1d0] sm:$0xf]
  %v95 = vld [vmem:[%s1 + $0x1d4] sm:$0xff]
  %v96 = vld [vmem:[%s1 + $0x1dc] sm:$0xf]
  %v97 = vld [vmem:[%s1 + $0x1e0] sm:$0xff]
  %v98 = vld [vmem:[%s1 + $0x1e8] sm:$0xf]
  %v99 = vld [vmem:[%s1 + $0x1ec] sm:$0xff]
  %v100 = vld [vmem:[%s1 + $0x1f4] sm:$0xf]
  %v101 = vld [vmem:[%s1 + $0x1f8] sm:$0xff]
  %v102 = vld [vmem:[%s1 + $0x200] sm:$0xf]
  %v103 = vld [vmem:[%s1 + $0x204] sm:$0xff]
  %v104 = vld [vmem:[%s1 + $0x20c] sm:$0xf]
  %v105 = vld [vmem:[%s1 + $0x210] sm:$0xff]
  %v106 = vld [vmem:[%s1 + $0x218] sm:$0xf]
  %v107 = vld [vmem:[%s1 + $0x21c] sm:$0xff]
  %v108 = vld [vmem:[%s1 + $0x224] sm:$0xf]
  %v109 = vld [vmem:[%s1 + $0x228] sm:$0xff]
  %v110 = vld [vmem:[%s1 + $0x230] sm:$0xf]
  %v111 = vld [vmem:[%s1 + $0x234] sm:$0xff]
  %v112 = vld [vmem:[%s1 + $0x23c] sm:$0xf]
  %v113 = vld [vmem:[%s1 + $0x240] sm:$0xff]
  %v114 = vld [vmem:[%s1 + $0x248] sm:$0xf]
  %v115 = vld [vmem:[%s1 + $0x24c] sm:$0xff]
  %v116 = vld [vmem:[%s1 + $0x254] sm:$0xf]
  %v117 = vld [vmem:[%s1 + $0x258] sm:$0xff]
  %v118 = vld [vmem:[%s1 + $0x260] sm:$0xf]
  %v119 = vld [vmem:[%s1 + $0x264] sm:$0xff]
  %v120 = vld [vmem:[%s1 + $0x26c] sm:$0xf]
  %v121 = vld [vmem:[%s1 + $0x270] sm:$0xff]
  %v122 = vld [vmem:[%s1 + $0x278] sm:$0xf]
  %v123 = vld [vmem:[%s1 + $0x27c] sm:$0xff]
  %v124 = vld [vmem:[%s1 + $0x284] sm:$0xf]
  %v125 = vld [vmem:[%s2] sm:$0x7]
  %v127 = vlaneseq
  %v128 = vshrl.u32 %v127, 7
  %v129 = vsub.s32 0, %v128
  %v130 = vrot.slane %v125, %v129
  %v131 = vlaneseq
  %v132 = vshrl.u32 %v131, 7
  %v133 = vsub.s32 1, %v132
  %v134 = vrot.slane %v125, %v133
  %v135 = vlaneseq
  %v136 = vshrl.u32 %v135, 7
  %v137 = vsub.s32 2, %v136
  %v138 = vrot.slane %v125, %v137
  %v144 = vunpack.c.l.b16 %v15
  %v145 = vunpack.c.h.b16 %v15
  %v146 = vunpack.c.l.b16 %v16
  %v147 = vunpack.c.h.b16 %v16
  %v148 = vpack.c.b16 %v144, %v144
  %v149 = vpack.c.b16 %v145, %v145
  %v150 = vpack.c.b16 %v146, %v146
  %v151 = vpack.c.b16 %v147, %v147
  %v263 = vunpack.c.l.b16 %v17
  %v264 = vunpack.c.h.b16 %v17
  %v265 = vunpack.c.l.b16 %v18
  %v266 = vunpack.c.l.b16 %v19
  %v267 = vunpack.c.h.b16 %v19
  %v268 = vunpack.c.l.b16 %v20
  %v269 = vunpack.c.l.b16 %v21
  %v270 = vunpack.c.h.b16 %v21
  %v271 = vunpack.c.l.b16 %v22
  %v272 = vunpack.c.l.b16 %v23
  %v273 = vunpack.c.h.b16 %v23
  %v274 = vunpack.c.l.b16 %v24
  %v275 = vunpack.c.l.b16 %v25
  %v276 = vunpack.c.h.b16 %v25
  %v277 = vunpack.c.l.b16 %v26
  %v278 = vunpack.c.l.b16 %v27
  %v279 = vunpack.c.h.b16 %v27
  %v280 = vunpack.c.l.b16 %v28
  %v281 = vunpack.c.l.b16 %v29
  %v282 = vunpack.c.h.b16 %v29
  %v283 = vunpack.c.l.b16 %v30
  %v284 = vunpack.c.l.b16 %v31
  %v285 = vunpack.c.h.b16 %v31
  %v286 = vunpack.c.l.b16 %v32
  %v287 = vunpack.c.l.b16 %v33
  %v288 = vunpack.c.h.b16 %v33
  %v289 = vunpack.c.l.b16 %v34
  %v290 = vunpack.c.l.b16 %v35
  %v291 = vunpack.c.h.b16 %v35
  %v292 = vunpack.c.l.b16 %v36
  %v293 = vunpack.c.l.b16 %v37
  %v294 = vunpack.c.h.b16 %v37
  %v295 = vunpack.c.l.b16 %v38
  %v296 = vunpack.c.l.b16 %v39
  %v297 = vunpack.c.h.b16 %v39
  %v298 = vunpack.c.l.b16 %v40
  %v299 = vunpack.c.l.b16 %v41
  %v300 = vunpack.c.h.b16 %v41
  %v301 = vunpack.c.l.b16 %v42
  %v302 = vunpack.c.l.b16 %v43
  %v303 = vunpack.c.h.b16 %v43
  %v304 = vunpack.c.l.b16 %v44
  %v305 = vunpack.c.l.b16 %v45
  %v306 = vunpack.c.h.b16 %v45
  %v307 = vunpack.c.l.b16 %v46
  %v308 = vunpack.c.l.b16 %v47
  %v309 = vunpack.c.h.b16 %v47
  %v310 = vunpack.c.l.b16 %v48
  %v311 = vunpack.c.l.b16 %v49
  %v312 = vunpack.c.h.b16 %v49
  %v313 = vunpack.c.l.b16 %v50
  %v314 = vunpack.c.l.b16 %v51
  %v315 = vunpack.c.h.b16 %v51
  %v316 = vunpack.c.l.b16 %v52
  %v317 = vunpack.c.l.b16 %v53
  %v318 = vunpack.c.h.b16 %v53
  %v319 = vunpack.c.l.b16 %v54
  %v320 = vunpack.c.l.b16 %v55
  %v321 = vunpack.c.h.b16 %v55
  %v322 = vunpack.c.l.b16 %v56
  %v323 = vunpack.c.l.b16 %v57
  %v324 = vunpack.c.h.b16 %v57
  %v325 = vunpack.c.l.b16 %v58
  %v326 = vunpack.c.l.b16 %v59
  %v327 = vunpack.c.h.b16 %v59
  %v328 = vunpack.c.l.b16 %v60
  %v329 = vunpack.c.l.b16 %v61
  %v330 = vunpack.c.h.b16 %v61
  %v331 = vunpack.c.l.b16 %v62
  %v332 = vunpack.c.l.b16 %v63
  %v333 = vunpack.c.h.b16 %v63
  %v334 = vunpack.c.l.b16 %v64
  %v335 = vunpack.c.l.b16 %v65
  %v336 = vunpack.c.h.b16 %v65
  %v337 = vunpack.c.l.b16 %v66
  %v338 = vunpack.c.l.b16 %v67
  %v339 = vunpack.c.h.b16 %v67
  %v340 = vunpack.c.l.b16 %v68
  %v341 = vunpack.c.l.b16 %v69
  %v342 = vunpack.c.h.b16 %v69
  %v343 = vunpack.c.l.b16 %v70
  %v344 = vunpack.c.l.b16 %v71
  %v345 = vunpack.c.h.b16 %v71
  %v346 = vunpack.c.l.b16 %v72
  %v347 = vunpack.c.l.b16 %v73
  %v348 = vunpack.c.h.b16 %v73
  %v349 = vunpack.c.l.b16 %v74
  %v350 = vunpack.c.l.b16 %v75
  %v351 = vunpack.c.h.b16 %v75
  %v352 = vunpack.c.l.b16 %v76
  %v353 = vunpack.c.l.b16 %v77
  %v354 = vunpack.c.h.b16 %v77
  %v355 = vunpack.c.l.b16 %v78
  %v356 = vunpack.c.l.b16 %v79
  %v357 = vunpack.c.h.b16 %v79
  %v358 = vunpack.c.l.b16 %v80
  %v359 = vunpack.c.l.b16 %v81
  %v360 = vunpack.c.h.b16 %v81
  %v361 = vunpack.c.l.b16 %v82
  %v362 = vunpack.c.l.b16 %v83
  %v363 = vunpack.c.h.b16 %v83
  %v364 = vunpack.c.l.b16 %v84
  %v365 = vunpack.c.l.b16 %v85
  %v366 = vunpack.c.h.b16 %v85
  %v367 = vunpack.c.l.b16 %v86
  %v368 = vunpack.c.l.b16 %v87
  %v369 = vunpack.c.h.b16 %v87
  %v370 = vunpack.c.l.b16 %v88
  %v371 = vunpack.c.l.b16 %v89
  %v372 = vunpack.c.h.b16 %v89
  %v373 = vunpack.c.l.b16 %v90
  %v374 = vunpack.c.l.b16 %v91
  %v375 = vunpack.c.h.b16 %v91
  %v376 = vunpack.c.l.b16 %v92
  %v377 = vunpack.c.l.b16 %v93
  %v378 = vunpack.c.h.b16 %v93
  %v379 = vunpack.c.l.b16 %v94
  %v380 = vunpack.c.l.b16 %v95
  %v381 = vunpack.c.h.b16 %v95
  %v382 = vunpack.c.l.b16 %v96
  %v383 = vunpack.c.l.b16 %v97
  %v384 = vunpack.c.h.b16 %v97
  %v385 = vunpack.c.l.b16 %v98
  %v386 = vunpack.c.l.b16 %v99
  %v387 = vunpack.c.h.b16 %v99
  %v388 = vunpack.c.l.b16 %v100
  %v389 = vunpack.c.l.b16 %v101
  %v390 = vunpack.c.h.b16 %v101
  %v391 = vunpack.c.l.b16 %v102
  %v392 = vunpack.c.l.b16 %v103
  %v393 = vunpack.c.h.b16 %v103
  %v394 = vunpack.c.l.b16 %v104
  %v395 = vunpack.c.l.b16 %v105
  %v396 = vunpack.c.h.b16 %v105
  %v397 = vunpack.c.l.b16 %v106
  %v398 = vunpack.c.l.b16 %v107
  %v399 = vunpack.c.h.b16 %v107
  %v400 = vunpack.c.l.b16 %v108
  %v401 = vunpack.c.l.b16 %v109
  %v402 = vunpack.c.h.b16 %v109
  %v403 = vunpack.c.l.b16 %v110
  %v404 = vunpack.c.l.b16 %v111
  %v405 = vunpack.c.h.b16 %v111
  %v406 = vunpack.c.l.b16 %v112
  %v407 = vunpack.c.l.b16 %v113
  %v408 = vunpack.c.h.b16 %v113
  %v409 = vunpack.c.l.b16 %v114
  %v410 = vunpack.c.l.b16 %v115
  %v411 = vunpack.c.h.b16 %v115
  %v412 = vunpack.c.l.b16 %v116
  %v413 = vunpack.c.l.b16 %v117
  %v414 = vunpack.c.h.b16 %v117
  %v415 = vunpack.c.l.b16 %v118
  %v416 = vunpack.c.l.b16 %v119
  %v417 = vunpack.c.h.b16 %v119
  %v418 = vunpack.c.l.b16 %v120
  %v419 = vunpack.c.l.b16 %v121
  %v420 = vunpack.c.h.b16 %v121
  %v421 = vunpack.c.l.b16 %v122
  %v422 = vunpack.c.l.b16 %v123
  %v423 = vunpack.c.h.b16 %v123
  %v424 = vunpack.c.l.b16 %v124
  %v425 = vpack.c.b16 %v266, %v263
  %v426 = vpack.c.b16 %v267, %v264
  %v427 = vpack.c.b16 %v268, %v265
  %v428 = vpack.c.b16 %v272, %v269
  %v429 = vpack.c.b16 %v273, %v270
  %v430 = vpack.c.b16 %v274, %v271
  %v431 = vpack.c.b16 %v278, %v275
  %v432 = vpack.c.b16 %v279, %v276
  %v433 = vpack.c.b16 %v280, %v277
  %v434 = vpack.c.b16 %v284, %v281
  %v435 = vpack.c.b16 %v285, %v282
  %v436 = vpack.c.b16 %v286, %v283
  %v437 = vpack.c.b16 %v290, %v287
  %v438 = vpack.c.b16 %v291, %v288
  %v439 = vpack.c.b16 %v292, %v289
  %v440 = vpack.c.b16 %v296, %v293
  %v441 = vpack.c.b16 %v297, %v294
  %v442 = vpack.c.b16 %v298, %v295
  %v443 = vpack.c.b16 %v302, %v299
  %v444 = vpack.c.b16 %v303, %v300
  %v445 = vpack.c.b16 %v304, %v301
  %v446 = vpack.c.b16 %v308, %v305
  %v447 = vpack.c.b16 %v309, %v306
  %v448 = vpack.c.b16 %v310, %v307
  %v449 = vpack.c.b16 %v314, %v311
  %v450 = vpack.c.b16 %v315, %v312
  %v451 = vpack.c.b16 %v316, %v313
  %v452 = vpack.c.b16 %v320, %v317
  %v453 = vpack.c.b16 %v321, %v318
  %v454 = vpack.c.b16 %v322, %v319
  %v455 = vpack.c.b16 %v326, %v323
  %v456 = vpack.c.b16 %v327, %v324
  %v457 = vpack.c.b16 %v328, %v325
  %v458 = vpack.c.b16 %v332, %v329
  %v459 = vpack.c.b16 %v333, %v330
  %v460 = vpack.c.b16 %v334, %v331
  %v461 = vpack.c.b16 %v338, %v335
  %v462 = vpack.c.b16 %v339, %v336
  %v463 = vpack.c.b16 %v340, %v337
  %v464 = vpack.c.b16 %v344, %v341
  %v465 = vpack.c.b16 %v345, %v342
  %v466 = vpack.c.b16 %v346, %v343
  %v467 = vpack.c.b16 %v350, %v347
  %v468 = vpack.c.b16 %v351, %v348
  %v469 = vpack.c.b16 %v352, %v349
  %v470 = vpack.c.b16 %v356, %v353
  %v471 = vpack.c.b16 %v357, %v354
  %v472 = vpack.c.b16 %v358, %v355
  %v473 = vpack.c.b16 %v362, %v359
  %v474 = vpack.c.b16 %v363, %v360
  %v475 = vpack.c.b16 %v364, %v361
  %v476 = vpack.c.b16 %v368, %v365
  %v477 = vpack.c.b16 %v369, %v366
  %v478 = vpack.c.b16 %v370, %v367
  %v479 = vpack.c.b16 %v374, %v371
  %v480 = vpack.c.b16 %v375, %v372
  %v481 = vpack.c.b16 %v376, %v373
  %v482 = vpack.c.b16 %v380, %v377
  %v483 = vpack.c.b16 %v381, %v378
  %v484 = vpack.c.b16 %v382, %v379
  %v485 = vpack.c.b16 %v386, %v383
  %v486 = vpack.c.b16 %v387, %v384
  %v487 = vpack.c.b16 %v388, %v385
  %v488 = vpack.c.b16 %v392, %v389
  %v489 = vpack.c.b16 %v393, %v390
  %v490 = vpack.c.b16 %v394, %v391
  %v491 = vpack.c.b16 %v398, %v395
  %v492 = vpack.c.b16 %v399, %v396
  %v493 = vpack.c.b16 %v400, %v397
  %v494 = vpack.c.b16 %v404, %v401
  %v495 = vpack.c.b16 %v405, %v402
  %v496 = vpack.c.b16 %v406, %v403
  %v497 = vpack.c.b16 %v410, %v407
  %v498 = vpack.c.b16 %v411, %v408
  %v499 = vpack.c.b16 %v412, %v409
  %v500 = vpack.c.b16 %v416, %v413
  %v501 = vpack.c.b16 %v417, %v414
  %v502 = vpack.c.b16 %v418, %v415
  %v503 = vpack.c.b16 %v422, %v419
  %v504 = vpack.c.b16 %v423, %v420
  %v505 = vpack.c.b16 %v424, %v421
  %vm587 = vcmask 392192
  %v589 = vsel %vm587, %v151, 0
  %591 = vmatprep.subr.bf16.mxu0 %v426
  %592 = vmatpush1.bf16.msra.mxu0 %v425
  %593 = vmatprep.subr.bf16.mxu0 %v429
  %594 = vmatpush1.bf16.msra.mxu0 %v428
  %595 = vmatprep.subr.bf16.mxu0 %v432
  %596 = vmatpush1.bf16.msra.mxu0 %v431
  %597 = vmatprep.subr.bf16.mxu0 %v435
  %598 = vmatpush1.bf16.msra.mxu0 %v434
  %599 = vmatprep.subr.bf16.mxu0 %v438
  %600 = vmatpush1.bf16.msra.mxu0 %v437
  %601 = vmatprep.subr.bf16.mxu0 %v441
  %602 = vmatpush1.bf16.msra.mxu0 %v440
  %603 = vmatprep.subr.bf16.mxu0 %v444
  %604 = vmatpush1.bf16.msra.mxu0 %v443
  %605 = vmatprep.subr.bf16.mxu0 %v447
  %606 = vmatpush1.bf16.msra.mxu0 %v446
  %607 = vmatprep.subr.bf16.mxu0 %v450
  %608 = vmatpush1.bf16.msra.mxu0 %v449
  %609 = vmatprep.subr.bf16.mxu0 %v453
  %610 = vmatpush1.bf16.msra.mxu0 %v452
  %611 = vmatprep.subr.bf16.mxu0 %v456
  %612 = vmatpush1.bf16.msra.mxu0 %v455
  %613 = vmatprep.subr.bf16.mxu0 %v459
  %614 = vmatpush1.bf16.msra.mxu0 %v458
  %615 = vmatprep.subr.bf16.mxu0 %v462
  %616 = vmatpush1.bf16.msra.mxu0 %v461
  %617 = vmatprep.subr.bf16.mxu0 %v465
  %618 = vmatpush1.bf16.msra.mxu0 %v464
  %619 = vmatprep.subr.bf16.mxu0 %v468
  %620 = vmatpush1.bf16.msra.mxu0 %v467
  %621 = vmatprep.subr.bf16.mxu0 %v471
  %622 = vmatpush1.bf16.msra.mxu0 %v470
  %623 = vmatprep.mubr.bf16.mxu0 %v149
  %624 = vmatmul.mubr.bf16.gmra.mrb[0].mxu0 %v148
  %v625 = vpop.f32.mrb[0].mxu0
  %v626 = vadd.f32 %v130, %v625
  %v627 = vpop.f32.mrb[0].mxu0
  %v628 = vadd.f32 %v134, %v627
  %v629 = vpop.f32.mrb[0].mxu0
  %v630 = vpop.f32.mrb[0].mxu0
  %631 = vdwg.mxu0
  %632 = vmatprep.subr.bf16.mxu0 %v474
  %633 = vmatpush1.bf16.msra.mxu0 %v473
  %634 = vmatprep.subr.bf16.mxu0 %v477
  %635 = vmatpush1.bf16.msra.mxu0 %v476
  %636 = vmatprep.subr.bf16.mxu0 %v480
  %637 = vmatpush1.bf16.msra.mxu0 %v479
  %638 = vmatprep.subr.bf16.mxu0 %v483
  %639 = vmatpush1.bf16.msra.mxu0 %v482
  %640 = vmatprep.subr.bf16.mxu0 %v486
  %641 = vmatpush1.bf16.msra.mxu0 %v485
  %642 = vmatprep.subr.bf16.mxu0 %v489
  %643 = vmatpush1.bf16.msra.mxu0 %v488
  %644 = vmatprep.subr.bf16.mxu0 %v492
  %645 = vmatpush1.bf16.msra.mxu0 %v491
  %646 = vmatprep.subr.bf16.mxu0 %v495
  %647 = vmatpush1.bf16.msra.mxu0 %v494
  %648 = vmatprep.subr.bf16.mxu0 %v498
  %649 = vmatpush1.bf16.msra.mxu0 %v497
  %650 = vmatprep.subr.bf16.mxu0 %v501
  %651 = vmatpush1.bf16.msra.mxu0 %v500
  %652 = vmatprep.subr.bf16.mxu0 %v504
  %653 = vmatpush1.bf16.msra.mxu0 %v503
  %654 = vmatprep.subr.bf16.mxu0 0
  %655 = vmatpush1.bf16.msra.mxu0 0
  %656 = vmatprep.subr.bf16.mxu0 0
  %657 = vmatpush1.bf16.msra.mxu0 0
  %658 = vmatprep.subr.bf16.mxu0 0
  %659 = vmatpush1.bf16.msra.mxu0 0
  %660 = vmatprep.subr.bf16.mxu0 0
  %661 = vmatpush1.bf16.msra.mxu0 0
  %662 = vmatprep.subr.bf16.mxu0 0
  %663 = vmatpush1.bf16.msra.mxu0 0
  %664 = vmatprep.mubr.bf16.mxu0 %v589
  %665 = vmatmul.mubr.bf16.gmra.mrb[0].mxu0 %v150
  %v666 = vpop.f32.mrb[0].mxu0
  %v667 = vadd.f32 %v626, %v666
  %v668 = vpop.f32.mrb[0].mxu0
  %v669 = vadd.f32 %v628, %v668
  %v670 = vpop.f32.mrb[0].mxu0
  %v671 = vpop.f32.mrb[0].mxu0
  %672 = vdwg.mxu0
  %673 = vmatprep.subr.bf16.mxu0 0
  %674 = vmatpush1.bf16.msra.mxu0 %v427
  %675 = vmatprep.subr.bf16.mxu0 0
  %676 = vmatpush1.bf16.msra.mxu0 %v430
  %677 = vmatprep.subr.bf16.mxu0 0
  %678 = vmatpush1.bf16.msra.mxu0 %v433
  %679 = vmatprep.subr.bf16.mxu0 0
  %680 = vmatpush1.bf16.msra.mxu0 %v436
  %681 = vmatprep.subr.bf16.mxu0 0
  %682 = vmatpush1.bf16.msra.mxu0 %v439
  %683 = vmatprep.subr.bf16.mxu0 0
  %684 = vmatpush1.bf16.msra.mxu0 %v442
  %685 = vmatprep.subr.bf16.mxu0 0
  %686 = vmatpush1.bf16.msra.mxu0 %v445
  %687 = vmatprep.subr.bf16.mxu0 0
  %688 = vmatpush1.bf16.msra.mxu0 %v448
  %689 = vmatprep.subr.bf16.mxu0 0
  %690 = vmatpush1.bf16.msra.mxu0 %v451
  %691 = vmatprep.subr.bf16.mxu0 0
  %692 = vmatpush1.bf16.msra.mxu0 %v454
  %693 = vmatprep.subr.bf16.mxu0 0
  %694 = vmatpush1.bf16.msra.mxu0 %v457
  %695 = vmatprep.subr.bf16.mxu0 0
  %696 = vmatpush1.bf16.msra.mxu0 %v460
  %697 = vmatprep.subr.bf16.mxu0 0
  %698 = vmatpush1.bf16.msra.mxu0 %v463
  %699 = vmatprep.subr.bf16.mxu0 0
  %700 = vmatpush1.bf16.msra.mxu0 %v466
  %701 = vmatprep.subr.bf16.mxu0 0
  %702 = vmatpush1.bf16.msra.mxu0 %v469
  %703 = vmatprep.subr.bf16.mxu0 0
  %704 = vmatpush1.bf16.msra.mxu0 %v472
  %705 = vmatprep.mubr.bf16.mxu0 %v149
  %706 = vmatmul.mubr.bf16.gmra.mrb[0].mxu0 %v148
  %v707 = vpop.f32.mrb[0].mxu0
  %v708 = vadd.f32 %v138, %v707
  %v709 = vpop.f32.mrb[0].mxu0
  %v710 = vpop.f32.mrb[0].mxu0
  %v711 = vpop.f32.mrb[0].mxu0
  %712 = vdwg.mxu0
  %713 = vmatprep.subr.bf16.mxu0 0
  %714 = vmatpush1.bf16.msra.mxu0 %v475
  %715 = vmatprep.subr.bf16.mxu0 0
  %716 = vmatpush1.bf16.msra.mxu0 %v478
  %717 = vmatprep.subr.bf16.mxu0 0
  %718 = vmatpush1.bf16.msra.mxu0 %v481
  %719 = vmatprep.subr.bf16.mxu0 0
  %720 = vmatpush1.bf16.msra.mxu0 %v484
  %721 = vmatprep.subr.bf16.mxu0 0
  %722 = vmatpush1.bf16.msra.mxu0 %v487
  %723 = vmatprep.subr.bf16.mxu0 0
  %724 = vmatpush1.bf16.msra.mxu0 %v490
  %725 = vmatprep.subr.bf16.mxu0 0
  %726 = vmatpush1.bf16.msra.mxu0 %v493
  %727 = vmatprep.subr.bf16.mxu0 0
  %728 = vmatpush1.bf16.msra.mxu0 %v496
  %729 = vmatprep.subr.bf16.mxu0 0
  %730 = vmatpush1.bf16.msra.mxu0 %v499
  %731 = vmatprep.subr.bf16.mxu0 0
  %732 = vmatpush1.bf16.msra.mxu0 %v502
  %733 = vmatprep.subr.bf16.mxu0 0
  %734 = vmatpush1.bf16.msra.mxu0 %v505
  %735 = vmatprep.subr.bf16.mxu0 0
  %736 = vmatpush1.bf16.msra.mxu0 0
  %737 = vmatprep.subr.bf16.mxu0 0
  %738 = vmatpush1.bf16.msra.mxu0 0
  %739 = vmatprep.subr.bf16.mxu0 0
  %740 = vmatpush1.bf16.msra.mxu0 0
  %741 = vmatprep.subr.bf16.mxu0 0
  %742 = vmatpush1.bf16.msra.mxu0 0
  %743 = vmatprep.subr.bf16.mxu0 0
  %744 = vmatpush1.bf16.msra.mxu0 0
  %745 = vmatprep.mubr.bf16.mxu0 %v589
  %746 = vmatmul.mubr.bf16.gmra.mrb[0].mxu0 %v150
  %v747 = vpop.f32.mrb[0].mxu0
  %v748 = vadd.f32 %v708, %v747
  %v749 = vpop.f32.mrb[0].mxu0
  %v750 = vpop.f32.mrb[0].mxu0
  %v751 = vpop.f32.mrb[0].mxu0
  %752 = vdwg.mxu0
  %v753 = vmax.f32 %v667, 0.0
  %v754 = vmax.f32 %v669, 0.0
  %v755 = vmax.f32 %v748, 0.0
  %v756 = vpack.c.bf16 %v753, %v753
  %v757 = vpack.c.bf16 %v754, %v754
  %v758 = vpack.c.bf16 %v755, %v755
  %v762 = vunpack.c.l.b16 %v756
  %v763 = vunpack.c.l.b16 %v757
  %v764 = vunpack.c.l.b16 %v758
  %v765 = vpack.c.b16 %v763, %v762
  %v766 = vpack.c.b16 %v764, %v764
  %769 = vst [vmem:[%s3] sm:$0xff] %v765
  %770 = vst [vmem:[%s3 + $0x8] sm:$0xf] %v766
  // Predicated region
  $region14: #{squeezenet_forward.35} parent=0 // pred_check
    _
  $region15: #{squeezenet_forward.35} parent=0 // pred_check_branch
    %772 = sbr.rel (0) target = $region17
  $region16: #{squeezenet_forward.35} parent=0 // pred_region
    _
  $region17: #{squeezenet_forward.35} parent=0 // pred_fallthru
    _
  // Predicated region
  $region18: #{squeezenet_forward.35} parent=0 // pred_check
    _
  $region19: #{squeezenet_forward.35} parent=0 // pred_check_branch
    %774 = sbr.rel (0) target = $region21
  $region20: #{squeezenet_forward.35} parent=0 // pred_region
    _
  $region21: #{squeezenet_forward.35} parent=0 // pred_fallthru
    _

// kernel: squeezenet_forward.38
$region0: #{squeezenet_forward.38}
  #allocation0 [shape = 'u32[]', space=smem, size = 0x4, offset = 0x4, fixed_abs, tag = 'smem constant byte address 0x4 - core index']
  #allocation1 [shape = 'u32[144,128]{1,0:T(1,128)}', space=vmem, size = 0x12000, scoped, tag = 'internal scratch']
  %s0 = inlined_call_operand.vmem [shape: bf16[8,384], index: 0, kind: input, shape index: {}]
  %s1 = inlined_call_operand.vmem [shape: bf16[384,64], index: 1, kind: input, shape index: {}]
  %s2 = inlined_call_operand.vmem [shape: f32[1,64], index: 2, kind: input, shape index: {}]
  %s3 = inlined_call_operand.vmem [shape: bf16[8,64], index: 3, kind: output, shape index: {}]
  %s4 = sld [smem:[#allocation0]]
  $region22: #{squeezenet_forward.38} parent=0
    _
  %s6 = ssub.s32 1, %s4
  %s7 = scalar_select 0, %s6, %s4
  // Predicated region
  $region2: #{squeezenet_forward.38} parent=0 // pred_check
    _
  $region3: #{squeezenet_forward.38} parent=0 // pred_check_branch
    %9 = sbr.rel (0) target = $region5
  $region4: #{squeezenet_forward.38} parent=0 // pred_region
    _
  $region5: #{squeezenet_forward.38} parent=0 // pred_fallthru
    _
  // Predicated region
  $region6: #{squeezenet_forward.38} parent=0 // pred_check
    _
  $region7: #{squeezenet_forward.38} parent=0 // pred_check_branch
    %11 = sbr.rel (0) target = $region9
  $region8: #{squeezenet_forward.38} parent=0 // pred_region
    _
  $region9: #{squeezenet_forward.38} parent=0 // pred_fallthru
    _
  // Predicated region
  $region10: #{squeezenet_forward.38} parent=0 // pred_check
    _
  $region11: #{squeezenet_forward.38} parent=0 // pred_check_branch
    %13 = sbr.rel (0) target = $region13
  $region12: #{squeezenet_forward.38} parent=0 // pred_region
    _
  $region13: #{squeezenet_forward.38} parent=0 // pred_fallthru
    _
  %v15 = vld [vmem:[%s0] sm:$0xff]
  %v16 = vld [vmem:[%s0 + $0x8] sm:$0xf]
  %v17 = vld [vmem:[%s1] sm:$0xf]
  %v18 = vld [vmem:[%s1 + $0x4] sm:$0xf]
  %v19 = vld [vmem:[%s1 + $0x8] sm:$0xf]
  %v20 = vld [vmem:[%s1 + $0xc] sm:$0xf]
  %v21 = vld [vmem:[%s1 + $0x10] sm:$0xf]
  %v22 = vld [vmem:[%s1 + $0x14] sm:$0xf]
  %v23 = vld [vmem:[%s1 + $0x18] sm:$0xf]
  %v24 = vld [vmem:[%s1 + $0x1c] sm:$0xf]
  %v25 = vld [vmem:[%s1 + $0x20] sm:$0xf]
  %v26 = vld [vmem:[%s1 + $0x24] sm:$0xf]
  %v27 = vld [vmem:[%s1 + $0x28] sm:$0xf]
  %v28 = vld [vmem:[%s1 + $0x2c] sm:$0xf]
  %v29 = vld [vmem:[%s1 + $0x30] sm:$0xf]
  %v30 = vld [vmem:[%s1 + $0x34] sm:$0xf]
  %v31 = vld [vmem:[%s1 + $0x38] sm:$0xf]
  %v32 = vld [vmem:[%s1 + $0x3c] sm:$0xf]
  %v33 = vld [vmem:[%s1 + $0x40] sm:$0xf]
  %v34 = vld [vmem:[%s1 + $0x44] sm:$0xf]
  %v35 = vld [vmem:[%s1 + $0x48] sm:$0xf]
  %v36 = vld [vmem:[%s1 + $0x4c] sm:$0xf]
  %v37 = vld [vmem:[%s1 + $0x50] sm:$0xf]
  %v38 = vld [vmem:[%s1 + $0x54] sm:$0xf]
  %v39 = vld [vmem:[%s1 + $0x58] sm:$0xf]
  %v40 = vld [vmem:[%s1 + $0x5c] sm:$0xf]
  %v41 = vld [vmem:[%s1 + $0x60] sm:$0xf]
  %v42 = vld [vmem:[%s1 + $0x64] sm:$0xf]
  %v43 = vld [vmem:[%s1 + $0x68] sm:$0xf]
  %v44 = vld [vmem:[%s1 + $0x6c] sm:$0xf]
  %v45 = vld [vmem:[%s1 + $0x70] sm:$0xf]
  %v46 = vld [vmem:[%s1 + $0x74] sm:$0xf]
  %v47 = vld [vmem:[%s1 + $0x78] sm:$0xf]
  %v48 = vld [vmem:[%s1 + $0x7c] sm:$0xf]
  %v49 = vld [vmem:[%s1 + $0x80] sm:$0xf]
  %v50 = vld [vmem:[%s1 + $0x84] sm:$0xf]
  %v51 = vld [vmem:[%s1 + $0x88] sm:$0xf]
  %v52 = vld [vmem:[%s1 + $0x8c] sm:$0xf]
  %v53 = vld [vmem:[%s1 + $0x90] sm:$0xf]
  %v54 = vld [vmem:[%s1 + $0x94] sm:$0xf]
  %v55 = vld [vmem:[%s1 + $0x98] sm:$0xf]
  %v56 = vld [vmem:[%s1 + $0x9c] sm:$0xf]
  %v57 = vld [vmem:[%s1 + $0xa0] sm:$0xf]
  %v58 = vld [vmem:[%s1 + $0xa4] sm:$0xf]
  %v59 = vld [vmem:[%s1 + $0xa8] sm:$0xf]
  %v60 = vld [vmem:[%s1 + $0xac] sm:$0xf]
  %v61 = vld [vmem:[%s1 + $0xb0] sm:$0xf]
  %v62 = vld [vmem:[%s1 + $0xb4] sm:$0xf]
  %v63 = vld [vmem:[%s1 + $0xb8] sm:$0xf]
  %v64 = vld [vmem:[%s1 + $0xbc] sm:$0xf]
  %v65 = vld [vmem:[%s2] sm:$0x1]
  %v67 = vlaneseq
  %v68 = vshrl.u32 %v67, 7
  %v69 = vsub.s32 0, %v68
  %v70 = vrot.slane %v65, %v69
  %v74 = vunpack.c.l.b16 %v15
  %v75 = vunpack.c.h.b16 %v15
  %v76 = vunpack.c.l.b16 %v16
  %v77 = vpack.c.b16 %v74, %v74
  %v78 = vpack.c.b16 %v75, %v75
  %v79 = vpack.c.b16 %v76, %v76
  %v131 = vunpack.c.l.b16 %v17
  %v132 = vunpack.c.l.b16 %v18
  %v133 = vunpack.c.l.b16 %v19
  %v134 = vunpack.c.l.b16 %v20
  %v135 = vunpack.c.l.b16 %v21
  %v136 = vunpack.c.l.b16 %v22
  %v137 = vunpack.c.l.b16 %v23
  %v138 = vunpack.c.l.b16 %v24
  %v139 = vunpack.c.l.b16 %v25
  %v140 = vunpack.c.l.b16 %v26
  %v141 = vunpack.c.l.b16 %v27
  %v142 = vunpack.c.l.b16 %v28
  %v143 = vunpack.c.l.b16 %v29
  %v144 = vunpack.c.l.b16 %v30
  %v145 = vunpack.c.l.b16 %v31
  %v146 = vunpack.c.l.b16 %v32
  %v147 = vunpack.c.l.b16 %v33
  %v148 = vunpack.c.l.b16 %v34
  %v149 = vunpack.c.l.b16 %v35
  %v150 = vunpack.c.l.b16 %v36
  %v151 = vunpack.c.l.b16 %v37
  %v152 = vunpack.c.l.b16 %v38
  %v153 = vunpack.c.l.b16 %v39
  %v154 = vunpack.c.l.b16 %v40
  %v155 = vunpack.c.l.b16 %v41
  %v156 = vunpack.c.l.b16 %v42
  %v157 = vunpack.c.l.b16 %v43
  %v158 = vunpack.c.l.b16 %v44
  %v159 = vunpack.c.l.b16 %v45
  %v160 = vunpack.c.l.b16 %v46
  %v161 = vunpack.c.l.b16 %v47
  %v162 = vunpack.c.l.b16 %v48
  %v163 = vunpack.c.l.b16 %v49
  %v164 = vunpack.c.l.b16 %v50
  %v165 = vunpack.c.l.b16 %v51
  %v166 = vunpack.c.l.b16 %v52
  %v167 = vunpack.c.l.b16 %v53
  %v168 = vunpack.c.l.b16 %v54
  %v169 = vunpack.c.l.b16 %v55
  %v170 = vunpack.c.l.b16 %v56
  %v171 = vunpack.c.l.b16 %v57
  %v172 = vunpack.c.l.b16 %v58
  %v173 = vunpack.c.l.b16 %v59
  %v174 = vunpack.c.l.b16 %v60
  %v175 = vunpack.c.l.b16 %v61
  %v176 = vunpack.c.l.b16 %v62
  %v177 = vunpack.c.l.b16 %v63
  %v178 = vunpack.c.l.b16 %v64
  %v179 = vpack.c.b16 %v132, %v131
  %v180 = vpack.c.b16 %v134, %v133
  %v181 = vpack.c.b16 %v136, %v135
  %v182 = vpack.c.b16 %v138, %v137
  %v183 = vpack.c.b16 %v140, %v139
  %v184 = vpack.c.b16 %v142, %v141
  %v185 = vpack.c.b16 %v144, %v143
  %v186 = vpack.c.b16 %v146, %v145
  %v187 = vpack.c.b16 %v148, %v147
  %v188 = vpack.c.b16 %v150, %v149
  %v189 = vpack.c.b16 %v152, %v151
  %v190 = vpack.c.b16 %v154, %v153
  %v191 = vpack.c.b16 %v156, %v155
  %v192 = vpack.c.b16 %v158, %v157
  %v193 = vpack.c.b16 %v160, %v159
  %v194 = vpack.c.b16 %v162, %v161
  %v195 = vpack.c.b16 %v164, %v163
  %v196 = vpack.c.b16 %v166, %v165
  %v197 = vpack.c.b16 %v168, %v167
  %v198 = vpack.c.b16 %v170, %v169
  %v199 = vpack.c.b16 %v172, %v171
  %v200 = vpack.c.b16 %v174, %v173
  %v201 = vpack.c.b16 %v176, %v175
  %v202 = vpack.c.b16 %v178, %v177
  %227 = vmatprep.subr.bf16.mxu0 0
  %228 = vmatpush1.bf16.msra.mxu0 %v179
  %229 = vmatprep.subr.bf16.mxu0 0
  %230 = vmatpush1.bf16.msra.mxu0 %v180
  %231 = vmatprep.subr.bf16.mxu0 0
  %232 = vmatpush1.bf16.msra.mxu0 %v181
  %233 = vmatprep.subr.bf16.mxu0 0
  %234 = vmatpush1.bf16.msra.mxu0 %v182
  %235 = vmatprep.subr.bf16.mxu0 0
  %236 = vmatpush1.bf16.msra.mxu0 %v183
  %237 = vmatprep.subr.bf16.mxu0 0
  %238 = vmatpush1.bf16.msra.mxu0 %v184
  %239 = vmatprep.subr.bf16.mxu0 0
  %240 = vmatpush1.bf16.msra.mxu0 %v185
  %241 = vmatprep.subr.bf16.mxu0 0
  %242 = vmatpush1.bf16.msra.mxu0 %v186
  %243 = vmatprep.subr.bf16.mxu0 0
  %244 = vmatpush1.bf16.msra.mxu0 %v187
  %245 = vmatprep.subr.bf16.mxu0 0
  %246 = vmatpush1.bf16.msra.mxu0 %v188
  %247 = vmatprep.subr.bf16.mxu0 0
  %248 = vmatpush1.bf16.msra.mxu0 %v189
  %249 = vmatprep.subr.bf16.mxu0 0
  %250 = vmatpush1.bf16.msra.mxu0 %v190
  %251 = vmatprep.subr.bf16.mxu0 0
  %252 = vmatpush1.bf16.msra.mxu0 %v191
  %253 = vmatprep.subr.bf16.mxu0 0
  %254 = vmatpush1.bf16.msra.mxu0 %v192
  %255 = vmatprep.subr.bf16.mxu0 0
  %256 = vmatpush1.bf16.msra.mxu0 %v193
  %257 = vmatprep.subr.bf16.mxu0 0
  %258 = vmatpush1.bf16.msra.mxu0 %v194
  %259 = vmatprep.mubr.bf16.mxu0 %v78
  %260 = vmatmul.mubr.bf16.gmra.mrb[0].mxu0 %v77
  %v261 = vpop.f32.mrb[0].mxu0
  %v262 = vadd.f32 %v70, %v261
  %v263 = vpop.f32.mrb[0].mxu0
  %v264 = vpop.f32.mrb[0].mxu0
  %v265 = vpop.f32.mrb[0].mxu0
  %266 = vdwg.mxu0
  %267 = vmatprep.subr.bf16.mxu0 0
  %268 = vmatpush1.bf16.msra.mxu0 %v195
  %269 = vmatprep.subr.bf16.mxu0 0
  %270 = vmatpush1.bf16.msra.mxu0 %v196
  %271 = vmatprep.subr.bf16.mxu0 0
  %272 = vmatpush1.bf16.msra.mxu0 %v197
  %273 = vmatprep.subr.bf16.mxu0 0
  %274 = vmatpush1.bf16.msra.mxu0 %v198
  %275 = vmatprep.subr.bf16.mxu0 0
  %276 = vmatpush1.bf16.msra.mxu0 %v199
  %277 = vmatprep.subr.bf16.mxu0 0
  %278 = vmatpush1.bf16.msra.mxu0 %v200
  %279 = vmatprep.subr.bf16.mxu0 0
  %280 = vmatpush1.bf16.msra.mxu0 %v201
  %281 = vmatprep.subr.bf16.mxu0 0
  %282 = vmatpush1.bf16.msra.mxu0 %v202
  %283 = vmatprep.subr.bf16.mxu0 0
  %284 = vmatpush1.bf16.msra.mxu0 0
  %285 = vmatprep.subr.bf16.mxu0 0
  %286 = vmatpush1.bf16.msra.mxu0 0
  %287 = vmatprep.subr.bf16.mxu0 0
  %288 = vmatpush1.bf16.msra.mxu0 0
  %289 = vmatprep.subr.bf16.mxu0 0
  %290 = vmatpush1.bf16.msra.mxu0 0
  %291 = vmatprep.subr.bf16.mxu0 0
  %292 = vmatpush1.bf16.msra.mxu0 0
  %293 = vmatprep.subr.bf16.mxu0 0
  %294 = vmatpush1.bf16.msra.mxu0 0
  %295 = vmatprep.subr.bf16.mxu0 0
  %296 = vmatpush1.bf16.msra.mxu0 0
  %297 = vmatprep.subr.bf16.mxu0 0
  %298 = vmatpush1.bf16.msra.mxu0 0
  %299 = vmatprep.mubr.bf16.mxu0 0
  %300 = vmatmul.mubr.bf16.gmra.mrb[0].mxu0 %v79
  %v301 = vpop.f32.mrb[0].mxu0
  %v302 = vadd.f32 %v262, %v301
  %v303 = vpop.f32.mrb[0].mxu0
  %v304 = vpop.f32.mrb[0].mxu0
  %v305 = vpop.f32.mrb[0].mxu0
  %306 = vdwg.mxu0
  %v307 = vmax.f32 %v302, 0.0
  %v308 = vpack.c.bf16 %v307, %v307
  %vm309 = vcmask 519168
  %310 = vst.msk [vmem:[%s3] sm:$0xf] %vm309, %v308
  // Predicated region
  $region14: #{squeezenet_forward.38} parent=0 // pred_check
    _
  $region15: #{squeezenet_forward.38} parent=0 // pred_check_branch
    %312 = sbr.rel (0) target = $region17
  $region16: #{squeezenet_forward.38} parent=0 // pred_region
    _
  $region17: #{squeezenet_forward.38} parent=0 // pred_fallthru
    _
  // Predicated region
  $region18: #{squeezenet_forward.38} parent=0 // pred_check
    _
  $region19: #{squeezenet_forward.38} parent=0 // pred_check_branch
    %314 = sbr.rel (0) target = $region21
  $region20: #{squeezenet_forward.38} parent=0 // pred_region
    _
  $region21: #{squeezenet_forward.38} parent=0 // pred_fallthru
    _

// kernel: squeezenet_forward.40
$region0: #{squeezenet_forward.40}
  #allocation0 [shape = 'u32[]', space=smem, size = 0x4, offset = 0x4, fixed_abs, tag = 'smem constant byte address 0x4 - core index']
  #allocation1 [shape = 'u32[144,128]{1,0:T(1,128)}', space=vmem, size = 0x12000, scoped, tag = 'internal scratch']
  %s0 = inlined_call_operand.vmem [shape: bf16[8,512], index: 0, kind: input, shape index: {}]
  %s1 = inlined_call_operand.vmem [shape: bf16[512,64], index: 1, kind: input, shape index: {}]
  %s2 = inlined_call_operand.vmem [shape: f32[1,64], index: 2, kind: input, shape index: {}]
  %s3 = inlined_call_operand.vmem [shape: bf16[8,64], index: 3, kind: output, shape index: {}]
  %s4 = sld [smem:[#allocation0]]
  $region22: #{squeezenet_forward.40} parent=0
    _
  %s6 = ssub.s32 1, %s4
  %s7 = scalar_select 0, %s6, %s4
  // Predicated region
  $region2: #{squeezenet_forward.40} parent=0 // pred_check
    _
  $region3: #{squeezenet_forward.40} parent=0 // pred_check_branch
    %9 = sbr.rel (0) target = $region5
  $region4: #{squeezenet_forward.40} parent=0 // pred_region
    _
  $region5: #{squeezenet_forward.40} parent=0 // pred_fallthru
    _
  // Predicated region
  $region6: #{squeezenet_forward.40} parent=0 // pred_check
    _
  $region7: #{squeezenet_forward.40} parent=0 // pred_check_branch
    %11 = sbr.rel (0) target = $region9
  $region8: #{squeezenet_forward.40} parent=0 // pred_region
    _
  $region9: #{squeezenet_forward.40} parent=0 // pred_fallthru
    _
  // Predicated region
  $region10: #{squeezenet_forward.40} parent=0 // pred_check
    _
  $region11: #{squeezenet_forward.40} parent=0 // pred_check_branch
    %13 = sbr.rel (0) target = $region13
  $region12: #{squeezenet_forward.40} parent=0 // pred_region
    _
  $region13: #{squeezenet_forward.40} parent=0 // pred_fallthru
    _
  %v15 = vld [vmem:[%s0] sm:$0xff]
  %v16 = vld [vmem:[%s0 + $0x8] sm:$0xff]
  %v17 = vld [vmem:[%s1] sm:$0xf]
  %v18 = vld [vmem:[%s1 + $0x4] sm:$0xf]
  %v19 = vld [vmem:[%s1 + $0x8] sm:$0xf]
  %v20 = vld [vmem:[%s1 + $0xc] sm:$0xf]
  %v21 = vld [vmem:[%s1 + $0x10] sm:$0xf]
  %v22 = vld [vmem:[%s1 + $0x14] sm:$0xf]
  %v23 = vld [vmem:[%s1 + $0x18] sm:$0xf]
  %v24 = vld [vmem:[%s1 + $0x1c] sm:$0xf]
  %v25 = vld [vmem:[%s1 + $0x20] sm:$0xf]
  %v26 = vld [vmem:[%s1 + $0x24] sm:$0xf]
  %v27 = vld [vmem:[%s1 + $0x28] sm:$0xf]
  %v28 = vld [vmem:[%s1 + $0x2c] sm:$0xf]
  %v29 = vld [vmem:[%s1 + $0x30] sm:$0xf]
  %v30 = vld [vmem:[%s1 + $0x34] sm:$0xf]
  %v31 = vld [vmem:[%s1 + $0x38] sm:$0xf]
  %v32 = vld [vmem:[%s1 + $0x3c] sm:$0xf]
  %v33 = vld [vmem:[%s1 + $0x40] sm:$0xf]
  %v34 = vld [vmem:[%s1 + $0x44] sm:$0xf]
  %v35 = vld [vmem:[%s1 + $0x48] sm:$0xf]
  %v36 = vld [vmem:[%s1 + $0x4c] sm:$0xf]
  %v37 = vld [vmem:[%s1 + $0x50] sm:$0xf]
  %v38 = vld [vmem:[%s1 + $0x54] sm:$0xf]
  %v39 = vld [vmem:[%s1 + $0x58] sm:$0xf]
  %v40 = vld [vmem:[%s1 + $0x5c] sm:$0xf]
  %v41 = vld [vmem:[%s1 + $0x60] sm:$0xf]
  %v42 = vld [vmem:[%s1 + $0x64] sm:$0xf]
  %v43 = vld [vmem:[%s1 + $0x68] sm:$0xf]
  %v44 = vld [vmem:[%s1 + $0x6c] sm:$0xf]
  %v45 = vld [vmem:[%s1 + $0x70] sm:$0xf]
  %v46 = vld [vmem:[%s1 + $0x74] sm:$0xf]
  %v47 = vld [vmem:[%s1 + $0x78] sm:$0xf]
  %v48 = vld [vmem:[%s1 + $0x7c] sm:$0xf]
  %v49 = vld [vmem:[%s1 + $0x80] sm:$0xf]
  %v50 = vld [vmem:[%s1 + $0x84] sm:$0xf]
  %v51 = vld [vmem:[%s1 + $0x88] sm:$0xf]
  %v52 = vld [vmem:[%s1 + $0x8c] sm:$0xf]
  %v53 = vld [vmem:[%s1 + $0x90] sm:$0xf]
  %v54 = vld [vmem:[%s1 + $0x94] sm:$0xf]
  %v55 = vld [vmem:[%s1 + $0x98] sm:$0xf]
  %v56 = vld [vmem:[%s1 + $0x9c] sm:$0xf]
  %v57 = vld [vmem:[%s1 + $0xa0] sm:$0xf]
  %v58 = vld [vmem:[%s1 + $0xa4] sm:$0xf]
  %v59 = vld [vmem:[%s1 + $0xa8] sm:$0xf]
  %v60 = vld [vmem:[%s1 + $0xac] sm:$0xf]
  %v61 = vld [vmem:[%s1 + $0xb0] sm:$0xf]
  %v62 = vld [vmem:[%s1 + $0xb4] sm:$0xf]
  %v63 = vld [vmem:[%s1 + $0xb8] sm:$0xf]
  %v64 = vld [vmem:[%s1 + $0xbc] sm:$0xf]
  %v65 = vld [vmem:[%s1 + $0xc0] sm:$0xf]
  %v66 = vld [vmem:[%s1 + $0xc4] sm:$0xf]
  %v67 = vld [vmem:[%s1 + $0xc8] sm:$0xf]
  %v68 = vld [vmem:[%s1 + $0xcc] sm:$0xf]
  %v69 = vld [vmem:[%s1 + $0xd0] sm:$0xf]
  %v70 = vld [vmem:[%s1 + $0xd4] sm:$0xf]
  %v71 = vld [vmem:[%s1 + $0xd8] sm:$0xf]
  %v72 = vld [vmem:[%s1 + $0xdc] sm:$0xf]
  %v73 = vld [vmem:[%s1 + $0xe0] sm:$0xf]
  %v74 = vld [vmem:[%s1 + $0xe4] sm:$0xf]
  %v75 = vld [vmem:[%s1 + $0xe8] sm:$0xf]
  %v76 = vld [vmem:[%s1 + $0xec] sm:$0xf]
  %v77 = vld [vmem:[%s1 + $0xf0] sm:$0xf]
  %v78 = vld [vmem:[%s1 + $0xf4] sm:$0xf]
  %v79 = vld [vmem:[%s1 + $0xf8] sm:$0xf]
  %v80 = vld [vmem:[%s1 + $0xfc] sm:$0xf]
  %v81 = vld [vmem:[%s2] sm:$0x1]
  %v83 = vlaneseq
  %v84 = vshrl.u32 %v83, 7
  %v85 = vsub.s32 0, %v84
  %v86 = vrot.slane %v81, %v85
  %v90 = vunpack.c.l.b16 %v15
  %v91 = vunpack.c.h.b16 %v15
  %v92 = vunpack.c.l.b16 %v16
  %v93 = vunpack.c.h.b16 %v16
  %v94 = vpack.c.b16 %v90, %v90
  %v95 = vpack.c.b16 %v91, %v91
  %v96 = vpack.c.b16 %v92, %v92
  %v97 = vpack.c.b16 %v93, %v93
  %v166 = vunpack.c.l.b16 %v17
  %v167 = vunpack.c.l.b16 %v18
  %v168 = vunpack.c.l.b16 %v19
  %v169 = vunpack.c.l.b16 %v20
  %v170 = vunpack.c.l.b16 %v21
  %v171 = vunpack.c.l.b16 %v22
  %v172 = vunpack.c.l.b16 %v23
  %v173 = vunpack.c.l.b16 %v24
  %v174 = vunpack.c.l.b16 %v25
  %v175 = vunpack.c.l.b16 %v26
  %v176 = vunpack.c.l.b16 %v27
  %v177 = vunpack.c.l.b16 %v28
  %v178 = vunpack.c.l.b16 %v29
  %v179 = vunpack.c.l.b16 %v30
  %v180 = vunpack.c.l.b16 %v31
  %v181 = vunpack.c.l.b16 %v32
  %v182 = vunpack.c.l.b16 %v33
  %v183 = vunpack.c.l.b16 %v34
  %v184 = vunpack.c.l.b16 %v35
  %v185 = vunpack.c.l.b16 %v36
  %v186 = vunpack.c.l.b16 %v37
  %v187 = vunpack.c.l.b16 %v38
  %v188 = vunpack.c.l.b16 %v39
  %v189 = vunpack.c.l.b16 %v40
  %v190 = vunpack.c.l.b16 %v41
  %v191 = vunpack.c.l.b16 %v42
  %v192 = vunpack.c.l.b16 %v43
  %v193 = vunpack.c.l.b16 %v44
  %v194 = vunpack.c.l.b16 %v45
  %v195 = vunpack.c.l.b16 %v46
  %v196 = vunpack.c.l.b16 %v47
  %v197 = vunpack.c.l.b16 %v48
  %v198 = vunpack.c.l.b16 %v49
  %v199 = vunpack.c.l.b16 %v50
  %v200 = vunpack.c.l.b16 %v51
  %v201 = vunpack.c.l.b16 %v52
  %v202 = vunpack.c.l.b16 %v53
  %v203 = vunpack.c.l.b16 %v54
  %v204 = vunpack.c.l.b16 %v55
  %v205 = vunpack.c.l.b16 %v56
  %v206 = vunpack.c.l.b16 %v57
  %v207 = vunpack.c.l.b16 %v58
  %v208 = vunpack.c.l.b16 %v59
  %v209 = vunpack.c.l.b16 %v60
  %v210 = vunpack.c.l.b16 %v61
  %v211 = vunpack.c.l.b16 %v62
  %v212 = vunpack.c.l.b16 %v63
  %v213 = vunpack.c.l.b16 %v64
  %v214 = vunpack.c.l.b16 %v65
  %v215 = vunpack.c.l.b16 %v66
  %v216 = vunpack.c.l.b16 %v67
  %v217 = vunpack.c.l.b16 %v68
  %v218 = vunpack.c.l.b16 %v69
  %v219 = vunpack.c.l.b16 %v70
  %v220 = vunpack.c.l.b16 %v71
  %v221 = vunpack.c.l.b16 %v72
  %v222 = vunpack.c.l.b16 %v73
  %v223 = vunpack.c.l.b16 %v74
  %v224 = vunpack.c.l.b16 %v75
  %v225 = vunpack.c.l.b16 %v76
  %v226 = vunpack.c.l.b16 %v77
  %v227 = vunpack.c.l.b16 %v78
  %v228 = vunpack.c.l.b16 %v79
  %v229 = vunpack.c.l.b16 %v80
  %v230 = vpack.c.b16 %v167, %v166
  %v231 = vpack.c.b16 %v169, %v168
  %v232 = vpack.c.b16 %v171, %v170
  %v233 = vpack.c.b16 %v173, %v172
  %v234 = vpack.c.b16 %v175, %v174
  %v235 = vpack.c.b16 %v177, %v176
  %v236 = vpack.c.b16 %v179, %v178
  %v237 = vpack.c.b16 %v181, %v180
  %v238 = vpack.c.b16 %v183, %v182
  %v239 = vpack.c.b16 %v185, %v184
  %v240 = vpack.c.b16 %v187, %v186
  %v241 = vpack.c.b16 %v189, %v188
  %v242 = vpack.c.b16 %v191, %v190
  %v243 = vpack.c.b16 %v193, %v192
  %v244 = vpack.c.b16 %v195, %v194
  %v245 = vpack.c.b16 %v197, %v196
  %v246 = vpack.c.b16 %v199, %v198
  %v247 = vpack.c.b16 %v201, %v200
  %v248 = vpack.c.b16 %v203, %v202
  %v249 = vpack.c.b16 %v205, %v204
  %v250 = vpack.c.b16 %v207, %v206
  %v251 = vpack.c.b16 %v209, %v208
  %v252 = vpack.c.b16 %v211, %v210
  %v253 = vpack.c.b16 %v213, %v212
  %v254 = vpack.c.b16 %v215, %v214
  %v255 = vpack.c.b16 %v217, %v216
  %v256 = vpack.c.b16 %v219, %v218
  %v257 = vpack.c.b16 %v221, %v220
  %v258 = vpack.c.b16 %v223, %v222
  %v259 = vpack.c.b16 %v225, %v224
  %v260 = vpack.c.b16 %v227, %v226
  %v261 = vpack.c.b16 %v229, %v228
  %294 = vmatprep.subr.bf16.mxu0 0
  %295 = vmatpush1.bf16.msra.mxu0 %v230
  %296 = vmatprep.subr.bf16.mxu0 0
  %297 = vmatpush1.bf16.msra.mxu0 %v231
  %298 = vmatprep.subr.bf16.mxu0 0
  %299 = vmatpush1.bf16.msra.mxu0 %v232
  %300 = vmatprep.subr.bf16.mxu0 0
  %301 = vmatpush1.bf16.msra.mxu0 %v233
  %302 = vmatprep.subr.bf16.mxu0 0
  %303 = vmatpush1.bf16.msra.mxu0 %v234
  %304 = vmatprep.subr.bf16.mxu0 0
  %305 = vmatpush1.bf16.msra.mxu0 %v235
  %306 = vmatprep.subr.bf16.mxu0 0
  %307 = vmatpush1.bf16.msra.mxu0 %v236
  %308 = vmatprep.subr.bf16.mxu0 0
  %309 = vmatpush1.bf16.msra.mxu0 %v237
  %310 = vmatprep.subr.bf16.mxu0 0
  %311 = vmatpush1.bf16.msra.mxu0 %v238
  %312 = vmatprep.subr.bf16.mxu0 0
  %313 = vmatpush1.bf16.msra.mxu0 %v239
  %314 = vmatprep.subr.bf16.mxu0 0
  %315 = vmatpush1.bf16.msra.mxu0 %v240
  %316 = vmatprep.subr.bf16.mxu0 0
  %317 = vmatpush1.bf16.msra.mxu0 %v241
  %318 = vmatprep.subr.bf16.mxu0 0
  %319 = vmatpush1.bf16.msra.mxu0 %v242
  %320 = vmatprep.subr.bf16.mxu0 0
  %321 = vmatpush1.bf16.msra.mxu0 %v243
  %322 = vmatprep.subr.bf16.mxu0 0
  %323 = vmatpush1.bf16.msra.mxu0 %v244
  %324 = vmatprep.subr.bf16.mxu0 0
  %325 = vmatpush1.bf16.msra.mxu0 %v245
  %326 = vmatprep.mubr.bf16.mxu0 %v95
  %327 = vmatmul.mubr.bf16.gmra.mrb[0].mxu0 %v94
  %v328 = vpop.f32.mrb[0].mxu0
  %v329 = vadd.f32 %v86, %v328
  %v330 = vpop.f32.mrb[0].mxu0
  %v331 = vpop.f32.mrb[0].mxu0
  %v332 = vpop.f32.mrb[0].mxu0
  %333 = vdwg.mxu0
  %334 = vmatprep.subr.bf16.mxu0 0
  %335 = vmatpush1.bf16.msra.mxu0 %v246
  %336 = vmatprep.subr.bf16.mxu0 0
  %337 = vmatpush1.bf16.msra.mxu0 %v247
  %338 = vmatprep.subr.bf16.mxu0 0
  %339 = vmatpush1.bf16.msra.mxu0 %v248
  %340 = vmatprep.subr.bf16.mxu0 0
  %341 = vmatpush1.bf16.msra.mxu0 %v249
  %342 = vmatprep.subr.bf16.mxu0 0
  %343 = vmatpush1.bf16.msra.mxu0 %v250
  %344 = vmatprep.subr.bf16.mxu0 0
  %345 = vmatpush1.bf16.msra.mxu0 %v251
  %346 = vmatprep.subr.bf16.mxu0 0
  %347 = vmatpush1.bf16.msra.mxu0 %v252
  %348 = vmatprep.subr.bf16.mxu0 0
  %349 = vmatpush1.bf16.msra.mxu0 %v253
  %350 = vmatprep.subr.bf16.mxu0 0
  %351 = vmatpush1.bf16.msra.mxu0 %v254
  %352 = vmatprep.subr.bf16.mxu0 0
  %353 = vmatpush1.bf16.msra.mxu0 %v255
  %354 = vmatprep.subr.bf16.mxu0 0
  %355 = vmatpush1.bf16.msra.mxu0 %v256
  %356 = vmatprep.subr.bf16.mxu0 0
  %357 = vmatpush1.bf16.msra.mxu0 %v257
  %358 = vmatprep.subr.bf16.mxu0 0
  %359 = vmatpush1.bf16.msra.mxu0 %v258
  %360 = vmatprep.subr.bf16.mxu0 0
  %361 = vmatpush1.bf16.msra.mxu0 %v259
  %362 = vmatprep.subr.bf16.mxu0 0
  %363 = vmatpush1.bf16.msra.mxu0 %v260
  %364 = vmatprep.subr.bf16.mxu0 0
  %365 = vmatpush1.bf16.msra.mxu0 %v261
  %366 = vmatprep.mubr.bf16.mxu0 %v97
  %367 = vmatmul.mubr.bf16.gmra.mrb[0].mxu0 %v96
  %v368 = vpop.f32.mrb[0].mxu0
  %v369 = vadd.f32 %v329, %v368
  %v370 = vpop.f32.mrb[0].mxu0
  %v371 = vpop.f32.mrb[0].mxu0
  %v372 = vpop.f32.mrb[0].mxu0
  %373 = vdwg.mxu0
  %v374 = vmax.f32 %v369, 0.0
  %v375 = vpack.c.bf16 %v374, %v374
  %vm376 = vcmask 519168
  %377 = vst.msk [vmem:[%s3] sm:$0xf] %vm376, %v375
  // Predicated region
  $region14: #{squeezenet_forward.40} parent=0 // pred_check
    _
  $region15: #{squeezenet_forward.40} parent=0 // pred_check_branch
    %379 = sbr.rel (0) target = $region17
  $region16: #{squeezenet_forward.40} parent=0 // pred_region
    _
  $region17: #{squeezenet_forward.40} parent=0 // pred_fallthru
    _
  // Predicated region
  $region18: #{squeezenet_forward.40} parent=0 // pred_check
    _
  $region19: #{squeezenet_forward.40} parent=0 // pred_check_branch
    %381 = sbr.rel (0) target = $region21
  $region20: #{squeezenet_forward.40} parent=0 // pred_region
    _
  $region21: #{squeezenet_forward.40} parent=0 // pred_fallthru
    _

// kernel: squeezenet_forward.42
$region0: #{squeezenet_forward.42}
  #allocation0 [shape = 'u32[]', space=smem, size = 0x4, offset = 0x4, fixed_abs, tag = 'smem constant byte address 0x4 - core index']
  #allocation1 [shape = 'u32[144,128]{1,0:T(1,128)}', space=vmem, size = 0x12000, scoped, tag = 'internal scratch']
  %s0 = inlined_call_operand.vmem [shape: bf16[8,512], index: 0, kind: input, shape index: {}]
  %s1 = inlined_call_operand.vmem [shape: bf16[512,128], index: 1, kind: input, shape index: {}]
  %s2 = inlined_call_operand.vmem [shape: f32[1,128], index: 2, kind: input, shape index: {}]
  %s3 = inlined_call_operand.vmem [shape: f32[8,128], index: 3, kind: output, shape index: {}]
  %s4 = sld [smem:[#allocation0]]
  $region22: #{squeezenet_forward.42} parent=0
    _
  %s6 = ssub.s32 1, %s4
  %s7 = scalar_select 0, %s6, %s4
  // Predicated region
  $region2: #{squeezenet_forward.42} parent=0 // pred_check
    _
  $region3: #{squeezenet_forward.42} parent=0 // pred_check_branch
    %9 = sbr.rel (0) target = $region5
  $region4: #{squeezenet_forward.42} parent=0 // pred_region
    _
  $region5: #{squeezenet_forward.42} parent=0 // pred_fallthru
    _
  // Predicated region
  $region6: #{squeezenet_forward.42} parent=0 // pred_check
    _
  $region7: #{squeezenet_forward.42} parent=0 // pred_check_branch
    %11 = sbr.rel (0) target = $region9
  $region8: #{squeezenet_forward.42} parent=0 // pred_region
    _
  $region9: #{squeezenet_forward.42} parent=0 // pred_fallthru
    _
  // Predicated region
  $region10: #{squeezenet_forward.42} parent=0 // pred_check
    _
  $region11: #{squeezenet_forward.42} parent=0 // pred_check_branch
    %13 = sbr.rel (0) target = $region13
  $region12: #{squeezenet_forward.42} parent=0 // pred_region
    _
  $region13: #{squeezenet_forward.42} parent=0 // pred_fallthru
    _
  %v15 = vld [vmem:[%s0] sm:$0xff]
  %v16 = vld [vmem:[%s0 + $0x8] sm:$0xff]
  %v17 = vld [vmem:[%s1] sm:$0xf]
  %v18 = vld [vmem:[%s1 + $0x4] sm:$0xf]
  %v19 = vld [vmem:[%s1 + $0x8] sm:$0xf]
  %v20 = vld [vmem:[%s1 + $0xc] sm:$0xf]
  %v21 = vld [vmem:[%s1 + $0x10] sm:$0xf]
  %v22 = vld [vmem:[%s1 + $0x14] sm:$0xf]
  %v23 = vld [vmem:[%s1 + $0x18] sm:$0xf]
  %v24 = vld [vmem:[%s1 + $0x1c] sm:$0xf]
  %v25 = vld [vmem:[%s1 + $0x20] sm:$0xf]
  %v26 = vld [vmem:[%s1 + $0x24] sm:$0xf]
  %v27 = vld [vmem:[%s1 + $0x28] sm:$0xf]
  %v28 = vld [vmem:[%s1 + $0x2c] sm:$0xf]
  %v29 = vld [vmem:[%s1 + $0x30] sm:$0xf]
  %v30 = vld [vmem:[%s1 + $0x34] sm:$0xf]
  %v31 = vld [vmem:[%s1 + $0x38] sm:$0xf]
  %v32 = vld [vmem:[%s1 + $0x3c] sm:$0xf]
  %v33 = vld [vmem:[%s1 + $0x40] sm:$0xf]
  %v34 = vld [vmem:[%s1 + $0x44] sm:$0xf]
  %v35 = vld [vmem:[%s1 + $0x48] sm:$0xf]
  %v36 = vld [vmem:[%s1 + $0x4c] sm:$0xf]
  %v37 = vld [vmem:[%s1 + $0x50] sm:$0xf]
  %v38 = vld [vmem:[%s1 + $0x54] sm:$0xf]
  %v39 = vld [vmem:[%s1 + $0x58] sm:$0xf]
  %v40 = vld [vmem:[%s1 + $0x5c] sm:$0xf]
  %v41 = vld [vmem:[%s1 + $0x60] sm:$0xf]
  %v42 = vld [vmem:[%s1 + $0x64] sm:$0xf]
  %v43 = vld [vmem:[%s1 + $0x68] sm:$0xf]
  %v44 = vld [vmem:[%s1 + $0x6c] sm:$0xf]
  %v45 = vld [vmem:[%s1 + $0x70] sm:$0xf]
  %v46 = vld [vmem:[%s1 + $0x74] sm:$0xf]
  %v47 = vld [vmem:[%s1 + $0x78] sm:$0xf]
  %v48 = vld [vmem:[%s1 + $0x7c] sm:$0xf]
  %v49 = vld [vmem:[%s1 + $0x80] sm:$0xf]
  %v50 = vld [vmem:[%s1 + $0x84] sm:$0xf]
  %v51 = vld [vmem:[%s1 + $0x88] sm:$0xf]
  %v52 = vld [vmem:[%s1 + $0x8c] sm:$0xf]
  %v53 = vld [vmem:[%s1 + $0x90] sm:$0xf]
  %v54 = vld [vmem:[%s1 + $0x94] sm:$0xf]
  %v55 = vld [vmem:[%s1 + $0x98] sm:$0xf]
  %v56 = vld [vmem:[%s1 + $0x9c] sm:$0xf]
  %v57 = vld [vmem:[%s1 + $0xa0] sm:$0xf]
  %v58 = vld [vmem:[%s1 + $0xa4] sm:$0xf]
  %v59 = vld [vmem:[%s1 + $0xa8] sm:$0xf]
  %v60 = vld [vmem:[%s1 + $0xac] sm:$0xf]
  %v61 = vld [vmem:[%s1 + $0xb0] sm:$0xf]
  %v62 = vld [vmem:[%s1 + $0xb4] sm:$0xf]
  %v63 = vld [vmem:[%s1 + $0xb8] sm:$0xf]
  %v64 = vld [vmem:[%s1 + $0xbc] sm:$0xf]
  %v65 = vld [vmem:[%s1 + $0xc0] sm:$0xf]
  %v66 = vld [vmem:[%s1 + $0xc4] sm:$0xf]
  %v67 = vld [vmem:[%s1 + $0xc8] sm:$0xf]
  %v68 = vld [vmem:[%s1 + $0xcc] sm:$0xf]
  %v69 = vld [vmem:[%s1 + $0xd0] sm:$0xf]
  %v70 = vld [vmem:[%s1 + $0xd4] sm:$0xf]
  %v71 = vld [vmem:[%s1 + $0xd8] sm:$0xf]
  %v72 = vld [vmem:[%s1 + $0xdc] sm:$0xf]
  %v73 = vld [vmem:[%s1 + $0xe0] sm:$0xf]
  %v74 = vld [vmem:[%s1 + $0xe4] sm:$0xf]
  %v75 = vld [vmem:[%s1 + $0xe8] sm:$0xf]
  %v76 = vld [vmem:[%s1 + $0xec] sm:$0xf]
  %v77 = vld [vmem:[%s1 + $0xf0] sm:$0xf]
  %v78 = vld [vmem:[%s1 + $0xf4] sm:$0xf]
  %v79 = vld [vmem:[%s1 + $0xf8] sm:$0xf]
  %v80 = vld [vmem:[%s1 + $0xfc] sm:$0xf]
  %v81 = vld [vmem:[%s2] sm:$0x1]
  %v83 = vlaneseq
  %v84 = vshrl.u32 %v83, 7
  %v85 = vsub.s32 0, %v84
  %v86 = vrot.slane %v81, %v85
  %v90 = vunpack.c.l.b16 %v15
  %v91 = vunpack.c.h.b16 %v15
  %v92 = vunpack.c.l.b16 %v16
  %v93 = vunpack.c.h.b16 %v16
  %v94 = vpack.c.b16 %v90, %v90
  %v95 = vpack.c.b16 %v91, %v91
  %v96 = vpack.c.b16 %v92, %v92
  %v97 = vpack.c.b16 %v93, %v93
  %v166 = vunpack.c.l.b16 %v17
  %v167 = vunpack.c.l.b16 %v18
  %v168 = vunpack.c.l.b16 %v19
  %v169 = vunpack.c.l.b16 %v20
  %v170 = vunpack.c.l.b16 %v21
  %v171 = vunpack.c.l.b16 %v22
  %v172 = vunpack.c.l.b16 %v23
  %v173 = vunpack.c.l.b16 %v24
  %v174 = vunpack.c.l.b16 %v25
  %v175 = vunpack.c.l.b16 %v26
  %v176 = vunpack.c.l.b16 %v27
  %v177 = vunpack.c.l.b16 %v28
  %v178 = vunpack.c.l.b16 %v29
  %v179 = vunpack.c.l.b16 %v30
  %v180 = vunpack.c.l.b16 %v31
  %v181 = vunpack.c.l.b16 %v32
  %v182 = vunpack.c.l.b16 %v33
  %v183 = vunpack.c.l.b16 %v34
  %v184 = vunpack.c.l.b16 %v35
  %v185 = vunpack.c.l.b16 %v36
  %v186 = vunpack.c.l.b16 %v37
  %v187 = vunpack.c.l.b16 %v38
  %v188 = vunpack.c.l.b16 %v39
  %v189 = vunpack.c.l.b16 %v40
  %v190 = vunpack.c.l.b16 %v41
  %v191 = vunpack.c.l.b16 %v42
  %v192 = vunpack.c.l.b16 %v43
  %v193 = vunpack.c.l.b16 %v44
  %v194 = vunpack.c.l.b16 %v45
  %v195 = vunpack.c.l.b16 %v46
  %v196 = vunpack.c.l.b16 %v47
  %v197 = vunpack.c.l.b16 %v48
  %v198 = vunpack.c.l.b16 %v49
  %v199 = vunpack.c.l.b16 %v50
  %v200 = vunpack.c.l.b16 %v51
  %v201 = vunpack.c.l.b16 %v52
  %v202 = vunpack.c.l.b16 %v53
  %v203 = vunpack.c.l.b16 %v54
  %v204 = vunpack.c.l.b16 %v55
  %v205 = vunpack.c.l.b16 %v56
  %v206 = vunpack.c.l.b16 %v57
  %v207 = vunpack.c.l.b16 %v58
  %v208 = vunpack.c.l.b16 %v59
  %v209 = vunpack.c.l.b16 %v60
  %v210 = vunpack.c.l.b16 %v61
  %v211 = vunpack.c.l.b16 %v62
  %v212 = vunpack.c.l.b16 %v63
  %v213 = vunpack.c.l.b16 %v64
  %v214 = vunpack.c.l.b16 %v65
  %v215 = vunpack.c.l.b16 %v66
  %v216 = vunpack.c.l.b16 %v67
  %v217 = vunpack.c.l.b16 %v68
  %v218 = vunpack.c.l.b16 %v69
  %v219 = vunpack.c.l.b16 %v70
  %v220 = vunpack.c.l.b16 %v71
  %v221 = vunpack.c.l.b16 %v72
  %v222 = vunpack.c.l.b16 %v73
  %v223 = vunpack.c.l.b16 %v74
  %v224 = vunpack.c.l.b16 %v75
  %v225 = vunpack.c.l.b16 %v76
  %v226 = vunpack.c.l.b16 %v77
  %v227 = vunpack.c.l.b16 %v78
  %v228 = vunpack.c.l.b16 %v79
  %v229 = vunpack.c.l.b16 %v80
  %v230 = vpack.c.b16 %v167, %v166
  %v231 = vpack.c.b16 %v169, %v168
  %v232 = vpack.c.b16 %v171, %v170
  %v233 = vpack.c.b16 %v173, %v172
  %v234 = vpack.c.b16 %v175, %v174
  %v235 = vpack.c.b16 %v177, %v176
  %v236 = vpack.c.b16 %v179, %v178
  %v237 = vpack.c.b16 %v181, %v180
  %v238 = vpack.c.b16 %v183, %v182
  %v239 = vpack.c.b16 %v185, %v184
  %v240 = vpack.c.b16 %v187, %v186
  %v241 = vpack.c.b16 %v189, %v188
  %v242 = vpack.c.b16 %v191, %v190
  %v243 = vpack.c.b16 %v193, %v192
  %v244 = vpack.c.b16 %v195, %v194
  %v245 = vpack.c.b16 %v197, %v196
  %v246 = vpack.c.b16 %v199, %v198
  %v247 = vpack.c.b16 %v201, %v200
  %v248 = vpack.c.b16 %v203, %v202
  %v249 = vpack.c.b16 %v205, %v204
  %v250 = vpack.c.b16 %v207, %v206
  %v251 = vpack.c.b16 %v209, %v208
  %v252 = vpack.c.b16 %v211, %v210
  %v253 = vpack.c.b16 %v213, %v212
  %v254 = vpack.c.b16 %v215, %v214
  %v255 = vpack.c.b16 %v217, %v216
  %v256 = vpack.c.b16 %v219, %v218
  %v257 = vpack.c.b16 %v221, %v220
  %v258 = vpack.c.b16 %v223, %v222
  %v259 = vpack.c.b16 %v225, %v224
  %v260 = vpack.c.b16 %v227, %v226
  %v261 = vpack.c.b16 %v229, %v228
  %294 = vmatprep.subr.bf16.mxu0 0
  %295 = vmatpush1.bf16.msra.mxu0 %v230
  %296 = vmatprep.subr.bf16.mxu0 0
  %297 = vmatpush1.bf16.msra.mxu0 %v231
  %298 = vmatprep.subr.bf16.mxu0 0
  %299 = vmatpush1.bf16.msra.mxu0 %v232
  %300 = vmatprep.subr.bf16.mxu0 0
  %301 = vmatpush1.bf16.msra.mxu0 %v233
  %302 = vmatprep.subr.bf16.mxu0 0
  %303 = vmatpush1.bf16.msra.mxu0 %v234
  %304 = vmatprep.subr.bf16.mxu0 0
  %305 = vmatpush1.bf16.msra.mxu0 %v235
  %306 = vmatprep.subr.bf16.mxu0 0
  %307 = vmatpush1.bf16.msra.mxu0 %v236
  %308 = vmatprep.subr.bf16.mxu0 0
  %309 = vmatpush1.bf16.msra.mxu0 %v237
  %310 = vmatprep.subr.bf16.mxu0 0
  %311 = vmatpush1.bf16.msra.mxu0 %v238
  %312 = vmatprep.subr.bf16.mxu0 0
  %313 = vmatpush1.bf16.msra.mxu0 %v239
  %314 = vmatprep.subr.bf16.mxu0 0
  %315 = vmatpush1.bf16.msra.mxu0 %v240
  %316 = vmatprep.subr.bf16.mxu0 0
  %317 = vmatpush1.bf16.msra.mxu0 %v241
  %318 = vmatprep.subr.bf16.mxu0 0
  %319 = vmatpush1.bf16.msra.mxu0 %v242
  %320 = vmatprep.subr.bf16.mxu0 0
  %321 = vmatpush1.bf16.msra.mxu0 %v243
  %322 = vmatprep.subr.bf16.mxu0 0
  %323 = vmatpush1.bf16.msra.mxu0 %v244
  %324 = vmatprep.subr.bf16.mxu0 0
  %325 = vmatpush1.bf16.msra.mxu0 %v245
  %326 = vmatprep.mubr.bf16.mxu0 %v95
  %327 = vmatmul.mubr.bf16.gmra.mrb[0].mxu0 %v94
  %v328 = vpop.f32.mrb[0].mxu0
  %v329 = vadd.f32 %v86, %v328
  %v330 = vpop.f32.mrb[0].mxu0
  %v331 = vpop.f32.mrb[0].mxu0
  %v332 = vpop.f32.mrb[0].mxu0
  %333 = vdwg.mxu0
  %334 = vmatprep.subr.bf16.mxu0 0
  %335 = vmatpush1.bf16.msra.mxu0 %v246
  %336 = vmatprep.subr.bf16.mxu0 0
  %337 = vmatpush1.bf16.msra.mxu0 %v247
  %338 = vmatprep.subr.bf16.mxu0 0
  %339 = vmatpush1.bf16.msra.mxu0 %v248
  %340 = vmatprep.subr.bf16.mxu0 0
  %341 = vmatpush1.bf16.msra.mxu0 %v249
  %342 = vmatprep.subr.bf16.mxu0 0
  %343 = vmatpush1.bf16.msra.mxu0 %v250
  %344 = vmatprep.subr.bf16.mxu0 0
  %345 = vmatpush1.bf16.msra.mxu0 %v251
  %346 = vmatprep.subr.bf16.mxu0 0
  %347 = vmatpush1.bf16.msra.mxu0 %v252
  %348 = vmatprep.subr.bf16.mxu0 0
  %349 = vmatpush1.bf16.msra.mxu0 %v253
  %350 = vmatprep.subr.bf16.mxu0 0
  %351 = vmatpush1.bf16.msra.mxu0 %v254
  %352 = vmatprep.subr.bf16.mxu0 0
  %353 = vmatpush1.bf16.msra.mxu0 %v255
  %354 = vmatprep.subr.bf16.mxu0 0
  %355 = vmatpush1.bf16.msra.mxu0 %v256
  %356 = vmatprep.subr.bf16.mxu0 0
  %357 = vmatpush1.bf16.msra.mxu0 %v257
  %358 = vmatprep.subr.bf16.mxu0 0
  %359 = vmatpush1.bf16.msra.mxu0 %v258
  %360 = vmatprep.subr.bf16.mxu0 0
  %361 = vmatpush1.bf16.msra.mxu0 %v259
  %362 = vmatprep.subr.bf16.mxu0 0
  %363 = vmatpush1.bf16.msra.mxu0 %v260
  %364 = vmatprep.subr.bf16.mxu0 0
  %365 = vmatpush1.bf16.msra.mxu0 %v261
  %366 = vmatprep.mubr.bf16.mxu0 %v97
  %367 = vmatmul.mubr.bf16.gmra.mrb[0].mxu0 %v96
  %v368 = vpop.f32.mrb[0].mxu0
  %v369 = vadd.f32 %v329, %v368
  %v370 = vpop.f32.mrb[0].mxu0
  %v371 = vpop.f32.mrb[0].mxu0
  %v372 = vpop.f32.mrb[0].mxu0
  %373 = vdwg.mxu0
  %v374 = vmax.f32 %v369, 0.0
  %375 = vst [vmem:[%s3] sm:$0xff] %v374
  // Predicated region
  $region14: #{squeezenet_forward.42} parent=0 // pred_check
    _
  $region15: #{squeezenet_forward.42} parent=0 // pred_check_branch
    %377 = sbr.rel (0) target = $region17
  $region16: #{squeezenet_forward.42} parent=0 // pred_region
    _
  $region17: #{squeezenet_forward.42} parent=0 // pred_fallthru
    _
  // Predicated region
  $region18: #{squeezenet_forward.42} parent=0 // pred_check
    _
  $region19: #{squeezenet_forward.42} parent=0 // pred_check_branch
    %379 = sbr.rel (0) target = $region21
  $region20: #{squeezenet_forward.42} parent=0 // pred_region
    _
  $region21: #{squeezenet_forward.42} parent=0 // pred_fallthru
    _

// kernel: squeezenet_forward.39
$region0: #{squeezenet_forward.39}
  #allocation0 [shape = 'u32[]', space=smem, size = 0x4, offset = 0x4, fixed_abs, tag = 'smem constant byte address 0x4 - core index']
  #allocation1 [shape = 'u32[144,128]{1,0:T(1,128)}', space=vmem, size = 0x12000, scoped, tag = 'internal scratch']
  %s0 = inlined_call_operand.vmem [shape: bf16[8,576], index: 0, kind: input, shape index: {}]
  %s1 = inlined_call_operand.vmem [shape: bf16[576,512], index: 1, kind: input, shape index: {}]
  %s2 = inlined_call_operand.vmem [shape: f32[1,512], index: 2, kind: input, shape index: {}]
  %s3 = inlined_call_operand.vmem [shape: bf16[8,512], index: 3, kind: output, shape index: {}]
  %s4 = sld [smem:[#allocation0]]
  $region22: #{squeezenet_forward.39} parent=0
    _
  %s6 = ssub.s32 1, %s4
  %s7 = scalar_select 0, %s6, %s4
  // Predicated region
  $region2: #{squeezenet_forward.39} parent=0 // pred_check
    _
  $region3: #{squeezenet_forward.39} parent=0 // pred_check_branch
    %9 = sbr.rel (0) target = $region5
  $region4: #{squeezenet_forward.39} parent=0 // pred_region
    _
  $region5: #{squeezenet_forward.39} parent=0 // pred_fallthru
    _
  // Predicated region
  $region6: #{squeezenet_forward.39} parent=0 // pred_check
    _
  $region7: #{squeezenet_forward.39} parent=0 // pred_check_branch
    %11 = sbr.rel (0) target = $region9
  $region8: #{squeezenet_forward.39} parent=0 // pred_region
    _
  $region9: #{squeezenet_forward.39} parent=0 // pred_fallthru
    _
  // Predicated region
  $region10: #{squeezenet_forward.39} parent=0 // pred_check
    _
  $region11: #{squeezenet_forward.39} parent=0 // pred_check_branch
    %13 = sbr.rel (0) target = $region13
  $region12: #{squeezenet_forward.39} parent=0 // pred_region
    _
  $region13: #{squeezenet_forward.39} parent=0 // pred_fallthru
    _
  %v15 = vld [vmem:[%s0] sm:$0xff]
  %v16 = vld [vmem:[%s0 + $0x8] sm:$0xff]
  %v17 = vld [vmem:[%s0 + $0x10] sm:$0xf]
  %v18 = vld [vmem:[%s1] sm:$0xff]
  %v19 = vld [vmem:[%s1 + $0x8] sm:$0xff]
  %v20 = vld [vmem:[%s1 + $0x10] sm:$0xff]
  %v21 = vld [vmem:[%s1 + $0x18] sm:$0xff]
  %v22 = vld [vmem:[%s1 + $0x20] sm:$0xff]
  %v23 = vld [vmem:[%s1 + $0x28] sm:$0xff]
  %v24 = vld [vmem:[%s1 + $0x30] sm:$0xff]
  %v25 = vld [vmem:[%s1 + $0x38] sm:$0xff]
  %v26 = vld [vmem:[%s1 + $0x40] sm:$0xff]
  %v27 = vld [vmem:[%s1 + $0x48] sm:$0xff]
  %v28 = vld [vmem:[%s1 + $0x50] sm:$0xff]
  %v29 = vld [vmem:[%s1 + $0x58] sm:$0xff]
  %v30 = vld [vmem:[%s1 + $0x60] sm:$0xff]
  %v31 = vld [vmem:[%s1 + $0x68] sm:$0xff]
  %v32 = vld [vmem:[%s1 + $0x70] sm:$0xff]
  %v33 = vld [vmem:[%s1 + $0x78] sm:$0xff]
  %v34 = vld [vmem:[%s1 + $0x80] sm:$0xff]
  %v35 = vld [vmem:[%s1 + $0x88] sm:$0xff]
  %v36 = vld [vmem:[%s1 + $0x90] sm:$0xff]
  %v37 = vld [vmem:[%s1 + $0x98] sm:$0xff]
  %v38 = vld [vmem:[%s1 + $0xa0] sm:$0xff]
  %v39 = vld [vmem:[%s1 + $0xa8] sm:$0xff]
  %v40 = vld [vmem:[%s1 + $0xb0] sm:$0xff]
  %v41 = vld [vmem:[%s1 + $0xb8] sm:$0xff]
  %v42 = vld [vmem:[%s1 + $0xc0] sm:$0xff]
  %v43 = vld [vmem:[%s1 + $0xc8] sm:$0xff]
  %v44 = vld [vmem:[%s1 + $0xd0] sm:$0xff]
  %v45 = vld [vmem:[%s1 + $0xd8] sm:$0xff]
  %v46 = vld [vmem:[%s1 + $0xe0] sm:$0xff]
  %v47 = vld [vmem:[%s1 + $0xe8] sm:$0xff]
  %v48 = vld [vmem:[%s1 + $0xf0] sm:$0xff]
  %v49 = vld [vmem:[%s1 + $0xf8] sm:$0xff]
  %v50 = vld [vmem:[%s1 + $0x100] sm:$0xff]
  %v51 = vld [vmem:[%s1 + $0x108] sm:$0xff]
  %v52 = vld [vmem:[%s1 + $0x110] sm:$0xff]
  %v53 = vld [vmem:[%s1 + $0x118] sm:$0xff]
  %v54 = vld [vmem:[%s1 + $0x120] sm:$0xff]
  %v55 = vld [vmem:[%s1 + $0x128] sm:$0xff]
  %v56 = vld [vmem:[%s1 + $0x130] sm:$0xff]
  %v57 = vld [vmem:[%s1 + $0x138] sm:$0xff]
  %v58 = vld [vmem:[%s1 + $0x140] sm:$0xff]
  %v59 = vld [vmem:[%s1 + $0x148] sm:$0xff]
  %v60 = vld [vmem:[%s1 + $0x150] sm:$0xff]
  %v61 = vld [vmem:[%s1 + $0x158] sm:$0xff]
  %v62 = vld [vmem:[%s1 + $0x160] sm:$0xff]
  %v63 = vld [vmem:[%s1 + $0x168] sm:$0xff]
  %v64 = vld [vmem:[%s1 + $0x170] sm:$0xff]
  %v65 = vld [vmem:[%s1 + $0x178] sm:$0xff]
  %v66 = vld [vmem:[%s1 + $0x180] sm:$0xff]
  %v67 = vld [vmem:[%s1 + $0x188] sm:$0xff]
  %v68 = vld [vmem:[%s1 + $0x190] sm:$0xff]
  %v69 = vld [vmem:[%s1 + $0x198] sm:$0xff]
  %v70 = vld [vmem:[%s1 + $0x1a0] sm:$0xff]
  %v71 = vld [vmem:[%s1 + $0x1a8] sm:$0xff]
  %v72 = vld [vmem:[%s1 + $0x1b0] sm:$0xff]
  %v73 = vld [vmem:[%s1 + $0x1b8] sm:$0xff]
  %v74 = vld [vmem:[%s1 + $0x1c0] sm:$0xff]
  %v75 = vld [vmem:[%s1 + $0x1c8] sm:$0xff]
  %v76 = vld [vmem:[%s1 + $0x1d0] sm:$0xff]
  %v77 = vld [vmem:[%s1 + $0x1d8] sm:$0xff]
  %v78 = vld [vmem:[%s1 + $0x1e0] sm:$0xff]
  %v79 = vld [vmem:[%s1 + $0x1e8] sm:$0xff]
  %v80 = vld [vmem:[%s1 + $0x1f0] sm:$0xff]
  %v81 = vld [vmem:[%s1 + $0x1f8] sm:$0xff]
  %v82 = vld [vmem:[%s1 + $0x200] sm:$0xff]
  %v83 = vld [vmem:[%s1 + $0x208] sm:$0xff]
  %v84 = vld [vmem:[%s1 + $0x210] sm:$0xff]
  %v85 = vld [vmem:[%s1 + $0x218] sm:$0xff]
  %v86 = vld [vmem:[%s1 + $0x220] sm:$0xff]
  %v87 = vld [vmem:[%s1 + $0x228] sm:$0xff]
  %v88 = vld [vmem:[%s1 + $0x230] sm:$0xff]
  %v89 = vld [vmem:[%s1 + $0x238] sm:$0xff]
  %v90 = vld [vmem:[%s1 + $0x240] sm:$0xff]
  %v91 = vld [vmem:[%s1 + $0x248] sm:$0xff]
  %v92 = vld [vmem:[%s1 + $0x250] sm:$0xff]
  %v93 = vld [vmem:[%s1 + $0x258] sm:$0xff]
  %v94 = vld [vmem:[%s1 + $0x260] sm:$0xff]
  %v95 = vld [vmem:[%s1 + $0x268] sm:$0xff]
  %v96 = vld [vmem:[%s1 + $0x270] sm:$0xff]
  %v97 = vld [vmem:[%s1 + $0x278] sm:$0xff]
  %v98 = vld [vmem:[%s1 + $0x280] sm:$0xff]
  %v99 = vld [vmem:[%s1 + $0x288] sm:$0xff]
  %v100 = vld [vmem:[%s1 + $0x290] sm:$0xff]
  %v101 = vld [vmem:[%s1 + $0x298] sm:$0xff]
  %v102 = vld [vmem:[%s1 + $0x2a0] sm:$0xff]
  %v103 = vld [vmem:[%s1 + $0x2a8] sm:$0xff]
  %v104 = vld [vmem:[%s1 + $0x2b0] sm:$0xff]
  %v105 = vld [vmem:[%s1 + $0x2b8] sm:$0xff]
  %v106 = vld [vmem:[%s1 + $0x2c0] sm:$0xff]
  %v107 = vld [vmem:[%s1 + $0x2c8] sm:$0xff]
  %v108 = vld [vmem:[%s1 + $0x2d0] sm:$0xff]
  %v109 = vld [vmem:[%s1 + $0x2d8] sm:$0xff]
  %v110 = vld [vmem:[%s1 + $0x2e0] sm:$0xff]
  %v111 = vld [vmem:[%s1 + $0x2e8] sm:$0xff]
  %v112 = vld [vmem:[%s1 + $0x2f0] sm:$0xff]
  %v113 = vld [vmem:[%s1 + $0x2f8] sm:$0xff]
  %v114 = vld [vmem:[%s1 + $0x300] sm:$0xff]
  %v115 = vld [vmem:[%s1 + $0x308] sm:$0xff]
  %v116 = vld [vmem:[%s1 + $0x310] sm:$0xff]
  %v117 = vld [vmem:[%s1 + $0x318] sm:$0xff]
  %v118 = vld [vmem:[%s1 + $0x320] sm:$0xff]
  %v119 = vld [vmem:[%s1 + $0x328] sm:$0xff]
  %v120 = vld [vmem:[%s1 + $0x330] sm:$0xff]
  %v121 = vld [vmem:[%s1 + $0x338] sm:$0xff]
  %v122 = vld [vmem:[%s1 + $0x340] sm:$0xff]
  %v123 = vld [vmem:[%s1 + $0x348] sm:$0xff]
  %v124 = vld [vmem:[%s1 + $0x350] sm:$0xff]
  %v125 = vld [vmem:[%s1 + $0x358] sm:$0xff]
  %v126 = vld [vmem:[%s1 + $0x360] sm:$0xff]
  %v127 = vld [vmem:[%s1 + $0x368] sm:$0xff]
  %v128 = vld [vmem:[%s1 + $0x370] sm:$0xff]
  %v129 = vld [vmem:[%s1 + $0x378] sm:$0xff]
  %v130 = vld [vmem:[%s1 + $0x380] sm:$0xff]
  %v131 = vld [vmem:[%s1 + $0x388] sm:$0xff]
  %v132 = vld [vmem:[%s1 + $0x390] sm:$0xff]
  %v133 = vld [vmem:[%s1 + $0x398] sm:$0xff]
  %v134 = vld [vmem:[%s1 + $0x3a0] sm:$0xff]
  %v135 = vld [vmem:[%s1 + $0x3a8] sm:$0xff]
  %v136 = vld [vmem:[%s1 + $0x3b0] sm:$0xff]
  %v137 = vld [vmem:[%s1 + $0x3b8] sm:$0xff]
  %v138 = vld [vmem:[%s1 + $0x3c0] sm:$0xff]
  %v139 = vld [vmem:[%s1 + $0x3c8] sm:$0xff]
  %v140 = vld [vmem:[%s1 + $0x3d0] sm:$0xff]
  %v141 = vld [vmem:[%s1 + $0x3d8] sm:$0xff]
  %v142 = vld [vmem:[%s1 + $0x3e0] sm:$0xff]
  %v143 = vld [vmem:[%s1 + $0x3e8] sm:$0xff]
  %v144 = vld [vmem:[%s1 + $0x3f0] sm:$0xff]
  %v145 = vld [vmem:[%s1 + $0x3f8] sm:$0xff]
  %v146 = vld [vmem:[%s1 + $0x400] sm:$0xff]
  %v147 = vld [vmem:[%s1 + $0x408] sm:$0xff]
  %v148 = vld [vmem:[%s1 + $0x410] sm:$0xff]
  %v149 = vld [vmem:[%s1 + $0x418] sm:$0xff]
  %v150 = vld [vmem:[%s1 + $0x420] sm:$0xff]
  %v151 = vld [vmem:[%s1 + $0x428] sm:$0xff]
  %v152 = vld [vmem:[%s1 + $0x430] sm:$0xff]
  %v153 = vld [vmem:[%s1 + $0x438] sm:$0xff]
  %v154 = vld [vmem:[%s1 + $0x440] sm:$0xff]
  %v155 = vld [vmem:[%s1 + $0x448] sm:$0xff]
  %v156 = vld [vmem:[%s1 + $0x450] sm:$0xff]
  %v157 = vld [vmem:[%s1 + $0x458] sm:$0xff]
  %v158 = vld [vmem:[%s1 + $0x460] sm:$0xff]
  %v159 = vld [vmem:[%s1 + $0x468] sm:$0xff]
  %v160 = vld [vmem:[%s1 + $0x470] sm:$0xff]
  %v161 = vld [vmem:[%s1 + $0x478] sm:$0xff]
  %v162 = vld [vmem:[%s2] sm:$0xf]
  %v164 = vlaneseq
  %v165 = vshrl.u32 %v164, 7
  %v166 = vsub.s32 0, %v165
  %v167 = vrot.slane %v162, %v166
  %v168 = vlaneseq
  %v169 = vshrl.u32 %v168, 7
  %v170 = vsub.s32 1, %v169
  %v171 = vrot.slane %v162, %v170
  %v172 = vlaneseq
  %v173 = vshrl.u32 %v172, 7
  %v174 = vsub.s32 2, %v173
  %v175 = vrot.slane %v162, %v174
  %v176 = vlaneseq
  %v177 = vshrl.u32 %v176, 7
  %v178 = vsub.s32 3, %v177
  %v179 = vrot.slane %v162, %v178
  %v187 = vunpack.c.l.b16 %v15
  %v188 = vunpack.c.h.b16 %v15
  %v189 = vunpack.c.l.b16 %v16
  %v190 = vunpack.c.h.b16 %v16
  %v191 = vunpack.c.l.b16 %v17
  %v192 = vpack.c.b16 %v187, %v187
  %v193 = vpack.c.b16 %v188, %v188
  %v194 = vpack.c.b16 %v189, %v189
  %v195 = vpack.c.b16 %v190, %v190
  %v196 = vpack.c.b16 %v191, %v191
  %v345 = vunpack.c.l.b16 %v18
  %v346 = vunpack.c.h.b16 %v18
  %v347 = vunpack.c.l.b16 %v19
  %v348 = vunpack.c.h.b16 %v19
  %v349 = vunpack.c.l.b16 %v20
  %v350 = vunpack.c.h.b16 %v20
  %v351 = vunpack.c.l.b16 %v21
  %v352 = vunpack.c.h.b16 %v21
  %v353 = vunpack.c.l.b16 %v22
  %v354 = vunpack.c.h.b16 %v22
  %v355 = vunpack.c.l.b16 %v23
  %v356 = vunpack.c.h.b16 %v23
  %v357 = vunpack.c.l.b16 %v24
  %v358 = vunpack.c.h.b16 %v24
  %v359 = vunpack.c.l.b16 %v25
  %v360 = vunpack.c.h.b16 %v25
  %v361 = vunpack.c.l.b16 %v26
  %v362 = vunpack.c.h.b16 %v26
  %v363 = vunpack.c.l.b16 %v27
  %v364 = vunpack.c.h.b16 %v27
  %v365 = vunpack.c.l.b16 %v28
  %v366 = vunpack.c.h.b16 %v28
  %v367 = vunpack.c.l.b16 %v29
  %v368 = vunpack.c.h.b16 %v29
  %v369 = vunpack.c.l.b16 %v30
  %v370 = vunpack.c.h.b16 %v30
  %v371 = vunpack.c.l.b16 %v31
  %v372 = vunpack.c.h.b16 %v31
  %v373 = vunpack.c.l.b16 %v32
  %v374 = vunpack.c.h.b16 %v32
  %v375 = vunpack.c.l.b16 %v33
  %v376 = vunpack.c.h.b16 %v33
  %v377 = vunpack.c.l.b16 %v34
  %v378 = vunpack.c.h.b16 %v34
  %v379 = vunpack.c.l.b16 %v35
  %v380 = vunpack.c.h.b16 %v35
  %v381 = vunpack.c.l.b16 %v36
  %v382 = vunpack.c.h.b16 %v36
  %v383 = vunpack.c.l.b16 %v37
  %v384 = vunpack.c.h.b16 %v37
  %v385 = vunpack.c.l.b16 %v38
  %v386 = vunpack.c.h.b16 %v38
  %v387 = vunpack.c.l.b16 %v39
  %v388 = vunpack.c.h.b16 %v39
  %v389 = vunpack.c.l.b16 %v40
  %v390 = vunpack.c.h.b16 %v40
  %v391 = vunpack.c.l.b16 %v41
  %v392 = vunpack.c.h.b16 %v41
  %v393 = vunpack.c.l.b16 %v42
  %v394 = vunpack.c.h.b16 %v42
  %v395 = vunpack.c.l.b16 %v43
  %v396 = vunpack.c.h.b16 %v43
  %v397 = vunpack.c.l.b16 %v44
  %v398 = vunpack.c.h.b16 %v44
  %v399 = vunpack.c.l.b16 %v45
  %v400 = vunpack.c.h.b16 %v45
  %v401 = vunpack.c.l.b16 %v46
  %v402 = vunpack.c.h.b16 %v46
  %v403 = vunpack.c.l.b16 %v47
  %v404 = vunpack.c.h.b16 %v47
  %v405 = vunpack.c.l.b16 %v48
  %v406 = vunpack.c.h.b16 %v48
  %v407 = vunpack.c.l.b16 %v49
  %v408 = vunpack.c.h.b16 %v49
  %v409 = vunpack.c.l.b16 %v50
  %v410 = vunpack.c.h.b16 %v50
  %v411 = vunpack.c.l.b16 %v51
  %v412 = vunpack.c.h.b16 %v51
  %v413 = vunpack.c.l.b16 %v52
  %v414 = vunpack.c.h.b16 %v52
  %v415 = vunpack.c.l.b16 %v53
  %v416 = vunpack.c.h.b16 %v53
  %v417 = vunpack.c.l.b16 %v54
  %v418 = vunpack.c.h.b16 %v54
  %v419 = vunpack.c.l.b16 %v55
  %v420 = vunpack.c.h.b16 %v55
  %v421 = vunpack.c.l.b16 %v56
  %v422 = vunpack.c.h.b16 %v56
  %v423 = vunpack.c.l.b16 %v57
  %v424 = vunpack.c.h.b16 %v57
  %v425 = vunpack.c.l.b16 %v58
  %v426 = vunpack.c.h.b16 %v58
  %v427 = vunpack.c.l.b16 %v59
  %v428 = vunpack.c.h.b16 %v59
  %v429 = vunpack.c.l.b16 %v60
  %v430 = vunpack.c.h.b16 %v60
  %v431 = vunpack.c.l.b16 %v61
  %v432 = vunpack.c.h.b16 %v61
  %v433 = vunpack.c.l.b16 %v62
  %v434 = vunpack.c.h.b16 %v62
  %v435 = vunpack.c.l.b16 %v63
  %v436 = vunpack.c.h.b16 %v63
  %v437 = vunpack.c.l.b16 %v64
  %v438 = vunpack.c.h.b16 %v64
  %v439 = vunpack.c.l.b16 %v65
  %v440 = vunpack.c.h.b16 %v65
  %v441 = vunpack.c.l.b16 %v66
  %v442 = vunpack.c.h.b16 %v66
  %v443 = vunpack.c.l.b16 %v67
  %v444 = vunpack.c.h.b16 %v67
  %v445 = vunpack.c.l.b16 %v68
  %v446 = vunpack.c.h.b16 %v68
  %v447 = vunpack.c.l.b16 %v69
  %v448 = vunpack.c.h.b16 %v69
  %v449 = vunpack.c.l.b16 %v70
  %v450 = vunpack.c.h.b16 %v70
  %v451 = vunpack.c.l.b16 %v71
  %v452 = vunpack.c.h.b16 %v71
  %v453 = vunpack.c.l.b16 %v72
  %v454 = vunpack.c.h.b16 %v72
  %v455 = vunpack.c.l.b16 %v73
  %v456 = vunpack.c.h.b16 %v73
  %v457 = vunpack.c.l.b16 %v74
  %v458 = vunpack.c.h.b16 %v74
  %v459 = vunpack.c.l.b16 %v75
  %v460 = vunpack.c.h.b16 %v75
  %v461 = vunpack.c.l.b16 %v76
  %v462 = vunpack.c.h.b16 %v76
  %v463 = vunpack.c.l.b16 %v77
  %v464 = vunpack.c.h.b16 %v77
  %v465 = vunpack.c.l.b16 %v78
  %v466 = vunpack.c.h.b16 %v78
  %v467 = vunpack.c.l.b16 %v79
  %v468 = vunpack.c.h.b16 %v79
  %v469 = vunpack.c.l.b16 %v80
  %v470 = vunpack.c.h.b16 %v80
  %v471 = vunpack.c.l.b16 %v81
  %v472 = vunpack.c.h.b16 %v81
  %v473 = vunpack.c.l.b16 %v82
  %v474 = vunpack.c.h.b16 %v82
  %v475 = vunpack.c.l.b16 %v83
  %v476 = vunpack.c.h.b16 %v83
  %v477 = vunpack.c.l.b16 %v84
  %v478 = vunpack.c.h.b16 %v84
  %v479 = vunpack.c.l.b16 %v85
  %v480 = vunpack.c.h.b16 %v85
  %v481 = vunpack.c.l.b16 %v86
  %v482 = vunpack.c.h.b16 %v86
  %v483 = vunpack.c.l.b16 %v87
  %v484 = vunpack.c.h.b16 %v87
  %v485 = vunpack.c.l.b16 %v88
  %v486 = vunpack.c.h.b16 %v88
  %v487 = vunpack.c.l.b16 %v89
  %v488 = vunpack.c.h.b16 %v89
  %v489 = vunpack.c.l.b16 %v90
  %v490 = vunpack.c.h.b16 %v90
  %v491 = vunpack.c.l.b16 %v91
  %v492 = vunpack.c.h.b16 %v91
  %v493 = vunpack.c.l.b16 %v92
  %v494 = vunpack.c.h.b16 %v92
  %v495 = vunpack.c.l.b16 %v93
  %v496 = vunpack.c.h.b16 %v93
  %v497 = vunpack.c.l.b16 %v94
  %v498 = vunpack.c.h.b16 %v94
  %v499 = vunpack.c.l.b16 %v95
  %v500 = vunpack.c.h.b16 %v95
  %v501 = vunpack.c.l.b16 %v96
  %v502 = vunpack.c.h.b16 %v96
  %v503 = vunpack.c.l.b16 %v97
  %v504 = vunpack.c.h.b16 %v97
  %v505 = vunpack.c.l.b16 %v98
  %v506 = vunpack.c.h.b16 %v98
  %v507 = vunpack.c.l.b16 %v99
  %v508 = vunpack.c.h.b16 %v99
  %v509 = vunpack.c.l.b16 %v100
  %v510 = vunpack.c.h.b16 %v100
  %v511 = vunpack.c.l.b16 %v101
  %v512 = vunpack.c.h.b16 %v101
  %v513 = vunpack.c.l.b16 %v102
  %v514 = vunpack.c.h.b16 %v102
  %v515 = vunpack.c.l.b16 %v103
  %v516 = vunpack.c.h.b16 %v103
  %v517 = vunpack.c.l.b16 %v104
  %v518 = vunpack.c.h.b16 %v104
  %v519 = vunpack.c.l.b16 %v105
  %v520 = vunpack.c.h.b16 %v105
  %v521 = vunpack.c.l.b16 %v106
  %v522 = vunpack.c.h.b16 %v106
  %v523 = vunpack.c.l.b16 %v107
  %v524 = vunpack.c.h.b16 %v107
  %v525 = vunpack.c.l.b16 %v108
  %v526 = vunpack.c.h.b16 %v108
  %v527 = vunpack.c.l.b16 %v109
  %v528 = vunpack.c.h.b16 %v109
  %v529 = vunpack.c.l.b16 %v110
  %v530 = vunpack.c.h.b16 %v110
  %v531 = vunpack.c.l.b16 %v111
  %v532 = vunpack.c.h.b16 %v111
  %v533 = vunpack.c.l.b16 %v112
  %v534 = vunpack.c.h.b16 %v112
  %v535 = vunpack.c.l.b16 %v113
  %v536 = vunpack.c.h.b16 %v113
  %v537 = vunpack.c.l.b16 %v114
  %v538 = vunpack.c.h.b16 %v114
  %v539 = vunpack.c.l.b16 %v115
  %v540 = vunpack.c.h.b16 %v115
  %v541 = vunpack.c.l.b16 %v116
  %v542 = vunpack.c.h.b16 %v116
  %v543 = vunpack.c.l.b16 %v117
  %v544 = vunpack.c.h.b16 %v117
  %v545 = vunpack.c.l.b16 %v118
  %v546 = vunpack.c.h.b16 %v118
  %v547 = vunpack.c.l.b16 %v119
  %v548 = vunpack.c.h.b16 %v119
  %v549 = vunpack.c.l.b16 %v120
  %v550 = vunpack.c.h.b16 %v120
  %v551 = vunpack.c.l.b16 %v121
  %v552 = vunpack.c.h.b16 %v121
  %v553 = vunpack.c.l.b16 %v122
  %v554 = vunpack.c.h.b16 %v122
  %v555 = vunpack.c.l.b16 %v123
  %v556 = vunpack.c.h.b16 %v123
  %v557 = vunpack.c.l.b16 %v124
  %v558 = vunpack.c.h.b16 %v124
  %v559 = vunpack.c.l.b16 %v125
  %v560 = vunpack.c.h.b16 %v125
  %v561 = vunpack.c.l.b16 %v126
  %v562 = vunpack.c.h.b16 %v126
  %v563 = vunpack.c.l.b16 %v127
  %v564 = vunpack.c.h.b16 %v127
  %v565 = vunpack.c.l.b16 %v128
  %v566 = vunpack.c.h.b16 %v128
  %v567 = vunpack.c.l.b16 %v129
  %v568 = vunpack.c.h.b16 %v129
  %v569 = vunpack.c.l.b16 %v130
  %v570 = vunpack.c.h.b16 %v130
  %v571 = vunpack.c.l.b16 %v131
  %v572 = vunpack.c.h.b16 %v131
  %v573 = vunpack.c.l.b16 %v132
  %v574 = vunpack.c.h.b16 %v132
  %v575 = vunpack.c.l.b16 %v133
  %v576 = vunpack.c.h.b16 %v133
  %v577 = vunpack.c.l.b16 %v134
  %v578 = vunpack.c.h.b16 %v134
  %v579 = vunpack.c.l.b16 %v135
  %v580 = vunpack.c.h.b16 %v135
  %v581 = vunpack.c.l.b16 %v136
  %v582 = vunpack.c.h.b16 %v136
  %v583 = vunpack.c.l.b16 %v137
  %v584 = vunpack.c.h.b16 %v137
  %v585 = vunpack.c.l.b16 %v138
  %v586 = vunpack.c.h.b16 %v138
  %v587 = vunpack.c.l.b16 %v139
  %v588 = vunpack.c.h.b16 %v139
  %v589 = vunpack.c.l.b16 %v140
  %v590 = vunpack.c.h.b16 %v140
  %v591 = vunpack.c.l.b16 %v141
  %v592 = vunpack.c.h.b16 %v141
  %v593 = vunpack.c.l.b16 %v142
  %v594 = vunpack.c.h.b16 %v142
  %v595 = vunpack.c.l.b16 %v143
  %v596 = vunpack.c.h.b16 %v143
  %v597 = vunpack.c.l.b16 %v144
  %v598 = vunpack.c.h.b16 %v144
  %v599 = vunpack.c.l.b16 %v145
  %v600 = vunpack.c.h.b16 %v145
  %v601 = vunpack.c.l.b16 %v146
  %v602 = vunpack.c.h.b16 %v146
  %v603 = vunpack.c.l.b16 %v147
  %v604 = vunpack.c.h.b16 %v147
  %v605 = vunpack.c.l.b16 %v148
  %v606 = vunpack.c.h.b16 %v148
  %v607 = vunpack.c.l.b16 %v149
  %v608 = vunpack.c.h.b16 %v149
  %v609 = vunpack.c.l.b16 %v150
  %v610 = vunpack.c.h.b16 %v150
  %v611 = vunpack.c.l.b16 %v151
  %v612 = vunpack.c.h.b16 %v151
  %v613 = vunpack.c.l.b16 %v152
  %v614 = vunpack.c.h.b16 %v152
  %v615 = vunpack.c.l.b16 %v153
  %v616 = vunpack.c.h.b16 %v153
  %v617 = vunpack.c.l.b16 %v154
  %v618 = vunpack.c.h.b16 %v154
  %v619 = vunpack.c.l.b16 %v155
  %v620 = vunpack.c.h.b16 %v155
  %v621 = vunpack.c.l.b16 %v156
  %v622 = vunpack.c.h.b16 %v156
  %v623 = vunpack.c.l.b16 %v157
  %v624 = vunpack.c.h.b16 %v157
  %v625 = vunpack.c.l.b16 %v158
  %v626 = vunpack.c.h.b16 %v158
  %v627 = vunpack.c.l.b16 %v159
  %v628 = vunpack.c.h.b16 %v159
  %v629 = vunpack.c.l.b16 %v160
  %v630 = vunpack.c.h.b16 %v160
  %v631 = vunpack.c.l.b16 %v161
  %v632 = vunpack.c.h.b16 %v161
  %v633 = vpack.c.b16 %v349, %v345
  %v634 = vpack.c.b16 %v350, %v346
  %v635 = vpack.c.b16 %v351, %v347
  %v636 = vpack.c.b16 %v352, %v348
  %v637 = vpack.c.b16 %v357, %v353
  %v638 = vpack.c.b16 %v358, %v354
  %v639 = vpack.c.b16 %v359, %v355
  %v640 = vpack.c.b16 %v360, %v356
  %v641 = vpack.c.b16 %v365, %v361
  %v642 = vpack.c.b16 %v366, %v362
  %v643 = vpack.c.b16 %v367, %v363
  %v644 = vpack.c.b16 %v368, %v364
  %v645 = vpack.c.b16 %v373, %v369
  %v646 = vpack.c.b16 %v374, %v370
  %v647 = vpack.c.b16 %v375, %v371
  %v648 = vpack.c.b16 %v376, %v372
  %v649 = vpack.c.b16 %v381, %v377
  %v650 = vpack.c.b16 %v382, %v378
  %v651 = vpack.c.b16 %v383, %v379
  %v652 = vpack.c.b16 %v384, %v380
  %v653 = vpack.c.b16 %v389, %v385
  %v654 = vpack.c.b16 %v390, %v386
  %v655 = vpack.c.b16 %v391, %v387
  %v656 = vpack.c.b16 %v392, %v388
  %v657 = vpack.c.b16 %v397, %v393
  %v658 = vpack.c.b16 %v398, %v394
  %v659 = vpack.c.b16 %v399, %v395
  %v660 = vpack.c.b16 %v400, %v396
  %v661 = vpack.c.b16 %v405, %v401
  %v662 = vpack.c.b16 %v406, %v402
  %v663 = vpack.c.b16 %v407, %v403
  %v664 = vpack.c.b16 %v408, %v404
  %v665 = vpack.c.b16 %v413, %v409
  %v666 = vpack.c.b16 %v414, %v410
  %v667 = vpack.c.b16 %v415, %v411
  %v668 = vpack.c.b16 %v416, %v412
  %v669 = vpack.c.b16 %v421, %v417
  %v670 = vpack.c.b16 %v422, %v418
  %v671 = vpack.c.b16 %v423, %v419
  %v672 = vpack.c.b16 %v424, %v420
  %v673 = vpack.c.b16 %v429, %v425
  %v674 = vpack.c.b16 %v430, %v426
  %v675 = vpack.c.b16 %v431, %v427
  %v676 = vpack.c.b16 %v432, %v428
  %v677 = vpack.c.b16 %v437, %v433
  %v678 = vpack.c.b16 %v438, %v434
  %v679 = vpack.c.b16 %v439, %v435
  %v680 = vpack.c.b16 %v440, %v436
  %v681 = vpack.c.b16 %v445, %v441
  %v682 = vpack.c.b16 %v446, %v442
  %v683 = vpack.c.b16 %v447, %v443
  %v684 = vpack.c.b16 %v448, %v444
  %v685 = vpack.c.b16 %v453, %v449
  %v686 = vpack.c.b16 %v454, %v450
  %v687 = vpack.c.b16 %v455, %v451
  %v688 = vpack.c.b16 %v456, %v452
  %v689 = vpack.c.b16 %v461, %v457
  %v690 = vpack.c.b16 %v462, %v458
  %v691 = vpack.c.b16 %v463, %v459
  %v692 = vpack.c.b16 %v464, %v460
  %v693 = vpack.c.b16 %v469, %v465
  %v694 = vpack.c.b16 %v470, %v466
  %v695 = vpack.c.b16 %v471, %v467
  %v696 = vpack.c.b16 %v472, %v468
  %v697 = vpack.c.b16 %v477, %v473
  %v698 = vpack.c.b16 %v478, %v474
  %v699 = vpack.c.b16 %v479, %v475
  %v700 = vpack.c.b16 %v480, %v476
  %v701 = vpack.c.b16 %v485, %v481
  %v702 = vpack.c.b16 %v486, %v482
  %v703 = vpack.c.b16 %v487, %v483
  %v704 = vpack.c.b16 %v488, %v484
  %v705 = vpack.c.b16 %v493, %v489
  %v706 = vpack.c.b16 %v494, %v490
  %v707 = vpack.c.b16 %v495, %v491
  %v708 = vpack.c.b16 %v496, %v492
  %v709 = vpack.c.b16 %v501, %v497
  %v710 = vpack.c.b16 %v502, %v498
  %v711 = vpack.c.b16 %v503, %v499
  %v712 = vpack.c.b16 %v504, %v500
  %v713 = vpack.c.b16 %v509, %v505
  %v714 = vpack.c.b16 %v510, %v506
  %v715 = vpack.c.b16 %v511, %v507
  %v716 = vpack.c.b16 %v512, %v508
  %v717 = vpack.c.b16 %v517, %v513
  %v718 = vpack.c.b16 %v518, %v514
  %v719 = vpack.c.b16 %v519, %v515
  %v720 = vpack.c.b16 %v520, %v516
  %v721 = vpack.c.b16 %v525, %v521
  %v722 = vpack.c.b16 %v526, %v522
  %v723 = vpack.c.b16 %v527, %v523
  %v724 = vpack.c.b16 %v528, %v524
  %v725 = vpack.c.b16 %v533, %v529
  %v726 = vpack.c.b16 %v534, %v530
  %v727 = vpack.c.b16 %v535, %v531
  %v728 = vpack.c.b16 %v536, %v532
  %v729 = vpack.c.b16 %v541, %v537
  %v730 = vpack.c.b16 %v542, %v538
  %v731 = vpack.c.b16 %v543, %v539
  %v732 = vpack.c.b16 %v544, %v540
  %v733 = vpack.c.b16 %v549, %v545
  %v734 = vpack.c.b16 %v550, %v546
  %v735 = vpack.c.b16 %v551, %v547
  %v736 = vpack.c.b16 %v552, %v548
  %v737 = vpack.c.b16 %v557, %v553
  %v738 = vpack.c.b16 %v558, %v554
  %v739 = vpack.c.b16 %v559, %v555
  %v740 = vpack.c.b16 %v560, %v556
  %v741 = vpack.c.b16 %v565, %v561
  %v742 = vpack.c.b16 %v566, %v562
  %v743 = vpack.c.b16 %v567, %v563
  %v744 = vpack.c.b16 %v568, %v564
  %v745 = vpack.c.b16 %v573, %v569
  %v746 = vpack.c.b16 %v574, %v570
  %v747 = vpack.c.b16 %v575, %v571
  %v748 = vpack.c.b16 %v576, %v572
  %v749 = vpack.c.b16 %v581, %v577
  %v750 = vpack.c.b16 %v582, %v578
  %v751 = vpack.c.b16 %v583, %v579
  %v752 = vpack.c.b16 %v584, %v580
  %v753 = vpack.c.b16 %v589, %v585
  %v754 = vpack.c.b16 %v590, %v586
  %v755 = vpack.c.b16 %v591, %v587
  %v756 = vpack.c.b16 %v592, %v588
  %v757 = vpack.c.b16 %v597, %v593
  %v758 = vpack.c.b16 %v598, %v594
  %v759 = vpack.c.b16 %v599, %v595
  %v760 = vpack.c.b16 %v600, %v596
  %v761 = vpack.c.b16 %v605, %v601
  %v762 = vpack.c.b16 %v606, %v602
  %v763 = vpack.c.b16 %v607, %v603
  %v764 = vpack.c.b16 %v608, %v604
  %v765 = vpack.c.b16 %v613, %v609
  %v766 = vpack.c.b16 %v614, %v610
  %v767 = vpack.c.b16 %v615, %v611
  %v768 = vpack.c.b16 %v616, %v612
  %v769 = vpack.c.b16 %v621, %v617
  %v770 = vpack.c.b16 %v622, %v618
  %v771 = vpack.c.b16 %v623, %v619
  %v772 = vpack.c.b16 %v624, %v620
  %v773 = vpack.c.b16 %v629, %v625
  %v774 = vpack.c.b16 %v630, %v626
  %v775 = vpack.c.b16 %v631, %v627
  %v776 = vpack.c.b16 %v632, %v628
  %vm921 = vcmask 523264
  %v923 = vsel %vm921, %v196, 0
  %925 = vmatprep.subr.bf16.mxu0 %v634
  %926 = vmatpush1.bf16.msra.mxu0 %v633
  %927 = vmatprep.subr.bf16.mxu0 %v638
  %928 = vmatpush1.bf16.msra.mxu0 %v637
  %929 = vmatprep.subr.bf16.mxu0 %v642
  %930 = vmatpush1.bf16.msra.mxu0 %v641
  %931 = vmatprep.subr.bf16.mxu0 %v646
  %932 = vmatpush1.bf16.msra.mxu0 %v645
  %933 = vmatprep.subr.bf16.mxu0 %v650
  %934 = vmatpush1.bf16.msra.mxu0 %v649
  %935 = vmatprep.subr.bf16.mxu0 %v654
  %936 = vmatpush1.bf16.msra.mxu0 %v653
  %937 = vmatprep.subr.bf16.mxu0 %v658
  %938 = vmatpush1.bf16.msra.mxu0 %v657
  %939 = vmatprep.subr.bf16.mxu0 %v662
  %940 = vmatpush1.bf16.msra.mxu0 %v661
  %941 = vmatprep.subr.bf16.mxu0 %v666
  %942 = vmatpush1.bf16.msra.mxu0 %v665
  %943 = vmatprep.subr.bf16.mxu0 %v670
  %944 = vmatpush1.bf16.msra.mxu0 %v669
  %945 = vmatprep.subr.bf16.mxu0 %v674
  %946 = vmatpush1.bf16.msra.mxu0 %v673
  %947 = vmatprep.subr.bf16.mxu0 %v678
  %948 = vmatpush1.bf16.msra.mxu0 %v677
  %949 = vmatprep.subr.bf16.mxu0 %v682
  %950 = vmatpush1.bf16.msra.mxu0 %v681
  %951 = vmatprep.subr.bf16.mxu0 %v686
  %952 = vmatpush1.bf16.msra.mxu0 %v685
  %953 = vmatprep.subr.bf16.mxu0 %v690
  %954 = vmatpush1.bf16.msra.mxu0 %v689
  %955 = vmatprep.subr.bf16.mxu0 %v694
  %956 = vmatpush1.bf16.msra.mxu0 %v693
  %957 = vmatprep.mubr.bf16.mxu0 %v193
  %958 = vmatmul.mubr.bf16.gmra.mrb[0].mxu0 %v192
  %v959 = vpop.f32.mrb[0].mxu0
  %v960 = vadd.f32 %v167, %v959
  %v961 = vpop.f32.mrb[0].mxu0
  %v962 = vadd.f32 %v171, %v961
  %v963 = vpop.f32.mrb[0].mxu0
  %v964 = vpop.f32.mrb[0].mxu0
  %965 = vdwg.mxu0
  %966 = vmatprep.subr.bf16.mxu0 %v698
  %967 = vmatpush1.bf16.msra.mxu0 %v697
  %968 = vmatprep.subr.bf16.mxu0 %v702
  %969 = vmatpush1.bf16.msra.mxu0 %v701
  %970 = vmatprep.subr.bf16.mxu0 %v706
  %971 = vmatpush1.bf16.msra.mxu0 %v705
  %972 = vmatprep.subr.bf16.mxu0 %v710
  %973 = vmatpush1.bf16.msra.mxu0 %v709
  %974 = vmatprep.subr.bf16.mxu0 %v714
  %975 = vmatpush1.bf16.msra.mxu0 %v713
  %976 = vmatprep.subr.bf16.mxu0 %v718
  %977 = vmatpush1.bf16.msra.mxu0 %v717
  %978 = vmatprep.subr.bf16.mxu0 %v722
  %979 = vmatpush1.bf16.msra.mxu0 %v721
  %980 = vmatprep.subr.bf16.mxu0 %v726
  %981 = vmatpush1.bf16.msra.mxu0 %v725
  %982 = vmatprep.subr.bf16.mxu0 %v730
  %983 = vmatpush1.bf16.msra.mxu0 %v729
  %984 = vmatprep.subr.bf16.mxu0 %v734
  %985 = vmatpush1.bf16.msra.mxu0 %v733
  %986 = vmatprep.subr.bf16.mxu0 %v738
  %987 = vmatpush1.bf16.msra.mxu0 %v737
  %988 = vmatprep.subr.bf16.mxu0 %v742
  %989 = vmatpush1.bf16.msra.mxu0 %v741
  %990 = vmatprep.subr.bf16.mxu0 %v746
  %991 = vmatpush1.bf16.msra.mxu0 %v745
  %992 = vmatprep.subr.bf16.mxu0 %v750
  %993 = vmatpush1.bf16.msra.mxu0 %v749
  %994 = vmatprep.subr.bf16.mxu0 %v754
  %995 = vmatpush1.bf16.msra.mxu0 %v753
  %996 = vmatprep.subr.bf16.mxu0 %v758
  %997 = vmatpush1.bf16.msra.mxu0 %v757
  %998 = vmatprep.mubr.bf16.mxu0 %v195
  %999 = vmatmul.mubr.bf16.gmra.mrb[0].mxu0 %v194
  %v1000 = vpop.f32.mrb[0].mxu0
  %v1001 = vadd.f32 %v960, %v1000
  %v1002 = vpop.f32.mrb[0].mxu0
  %v1003 = vadd.f32 %v962, %v1002
  %v1004 = vpop.f32.mrb[0].mxu0
  %v1005 = vpop.f32.mrb[0].mxu0
  %1006 = vdwg.mxu0
  %1007 = vmatprep.subr.bf16.mxu0 %v762
  %1008 = vmatpush1.bf16.msra.mxu0 %v761
  %1009 = vmatprep.subr.bf16.mxu0 %v766
  %1010 = vmatpush1.bf16.msra.mxu0 %v765
  %1011 = vmatprep.subr.bf16.mxu0 %v770
  %1012 = vmatpush1.bf16.msra.mxu0 %v769
  %1013 = vmatprep.subr.bf16.mxu0 %v774
  %1014 = vmatpush1.bf16.msra.mxu0 %v773
  %1015 = vmatprep.subr.bf16.mxu0 0
  %1016 = vmatpush1.bf16.msra.mxu0 0
  %1017 = vmatprep.subr.bf16.mxu0 0
  %1018 = vmatpush1.bf16.msra.mxu0 0
  %1019 = vmatprep.subr.bf16.mxu0 0
  %1020 = vmatpush1.bf16.msra.mxu0 0
  %1021 = vmatprep.subr.bf16.mxu0 0
  %1022 = vmatpush1.bf16.msra.mxu0 0
  %1023 = vmatprep.subr.bf16.mxu0 0
  %1024 = vmatpush1.bf16.msra.mxu0 0
  %1025 = vmatprep.subr.bf16.mxu0 0
  %1026 = vmatpush1.bf16.msra.mxu0 0
  %1027 = vmatprep.subr.bf16.mxu0 0
  %1028 = vmatpush1.bf16.msra.mxu0 0
  %1029 = vmatprep.subr.bf16.mxu0 0
  %1030 = vmatpush1.bf16.msra.mxu0 0
  %1031 = vmatprep.subr.bf16.mxu0 0
  %1032 = vmatpush1.bf16.msra.mxu0 0
  %1033 = vmatprep.subr.bf16.mxu0 0
  %1034 = vmatpush1.bf16.msra.mxu0 0
  %1035 = vmatprep.subr.bf16.mxu0 0
  %1036 = vmatpush1.bf16.msra.mxu0 0
  %1037 = vmatprep.subr.bf16.mxu0 0
  %1038 = vmatpush1.bf16.msra.mxu0 0
  %1039 = vmatprep.mubr.bf16.mxu0 0
  %1040 = vmatmul.mubr.bf16.gmra.mrb[0].mxu0 %v923
  %v1041 = vpop.f32.mrb[0].mxu0
  %v1042 = vadd.f32 %v1001, %v1041
  %v1043 = vpop.f32.mrb[0].mxu0
  %v1044 = vadd.f32 %v1003, %v1043
  %v1045 = vpop.f32.mrb[0].mxu0
  %v1046 = vpop.f32.mrb[0].mxu0
  %1047 = vdwg.mxu0
  %1048 = vmatprep.subr.bf16.mxu0 %v636
  %1049 = vmatpush1.bf16.msra.mxu0 %v635
  %1050 = vmatprep.subr.bf16.mxu0 %v640
  %1051 = vmatpush1.bf16.msra.mxu0 %v639
  %1052 = vmatprep.subr.bf16.mxu0 %v644
  %1053 = vmatpush1.bf16.msra.mxu0 %v643
  %1054 = vmatprep.subr.bf16.mxu0 %v648
  %1055 = vmatpush1.bf16.msra.mxu0 %v647
  %1056 = vmatprep.subr.bf16.mxu0 %v652
  %1057 = vmatpush1.bf16.msra.mxu0 %v651
  %1058 = vmatprep.subr.bf16.mxu0 %v656
  %1059 = vmatpush1.bf16.msra.mxu0 %v655
  %1060 = vmatprep.subr.bf16.mxu0 %v660
  %1061 = vmatpush1.bf16.msra.mxu0 %v659
  %1062 = vmatprep.subr.bf16.mxu0 %v664
  %1063 = vmatpush1.bf16.msra.mxu0 %v663
  %1064 = vmatprep.subr.bf16.mxu0 %v668
  %1065 = vmatpush1.bf16.msra.mxu0 %v667
  %1066 = vmatprep.subr.bf16.mxu0 %v672
  %1067 = vmatpush1.bf16.msra.mxu0 %v671
  %1068 = vmatprep.subr.bf16.mxu0 %v676
  %1069 = vmatpush1.bf16.msra.mxu0 %v675
  %1070 = vmatprep.subr.bf16.mxu0 %v680
  %1071 = vmatpush1.bf16.msra.mxu0 %v679
  %1072 = vmatprep.subr.bf16.mxu0 %v684
  %1073 = vmatpush1.bf16.msra.mxu0 %v683
  %1074 = vmatprep.subr.bf16.mxu0 %v688
  %1075 = vmatpush1.bf16.msra.mxu0 %v687
  %1076 = vmatprep.subr.bf16.mxu0 %v692
  %1077 = vmatpush1.bf16.msra.mxu0 %v691
  %1078 = vmatprep.subr.bf16.mxu0 %v696
  %1079 = vmatpush1.bf16.msra.mxu0 %v695
  %1080 = vmatprep.mubr.bf16.mxu0 %v193
  %1081 = vmatmul.mubr.bf16.gmra.mrb[0].mxu0 %v192
  %v1082 = vpop.f32.mrb[0].mxu0
  %v1083 = vadd.f32 %v175, %v1082
  %v1084 = vpop.f32.mrb[0].mxu0
  %v1085 = vadd.f32 %v179, %v1084
  %v1086 = vpop.f32.mrb[0].mxu0
  %v1087 = vpop.f32.mrb[0].mxu0
  %1088 = vdwg.mxu0
  %1089 = vmatprep.subr.bf16.mxu0 %v700
  %1090 = vmatpush1.bf16.msra.mxu0 %v699
  %1091 = vmatprep.subr.bf16.mxu0 %v704
  %1092 = vmatpush1.bf16.msra.mxu0 %v703
  %1093 = vmatprep.subr.bf16.mxu0 %v708
  %1094 = vmatpush1.bf16.msra.mxu0 %v707
  %1095 = vmatprep.subr.bf16.mxu0 %v712
  %1096 = vmatpush1.bf16.msra.mxu0 %v711
  %1097 = vmatprep.subr.bf16.mxu0 %v716
  %1098 = vmatpush1.bf16.msra.mxu0 %v715
  %1099 = vmatprep.subr.bf16.mxu0 %v720
  %1100 = vmatpush1.bf16.msra.mxu0 %v719
  %1101 = vmatprep.subr.bf16.mxu0 %v724
  %1102 = vmatpush1.bf16.msra.mxu0 %v723
  %1103 = vmatprep.subr.bf16.mxu0 %v728
  %1104 = vmatpush1.bf16.msra.mxu0 %v727
  %1105 = vmatprep.subr.bf16.mxu0 %v732
  %1106 = vmatpush1.bf16.msra.mxu0 %v731
  %1107 = vmatprep.subr.bf16.mxu0 %v736
  %1108 = vmatpush1.bf16.msra.mxu0 %v735
  %1109 = vmatprep.subr.bf16.mxu0 %v740
  %1110 = vmatpush1.bf16.msra.mxu0 %v739
  %1111 = vmatprep.subr.bf16.mxu0 %v744
  %1112 = vmatpush1.bf16.msra.mxu0 %v743
  %1113 = vmatprep.subr.bf16.mxu0 %v748
  %1114 = vmatpush1.bf16.msra.mxu0 %v747
  %1115 = vmatprep.subr.bf16.mxu0 %v752
  %1116 = vmatpush1.bf16.msra.mxu0 %v751
  %1117 = vmatprep.subr.bf16.mxu0 %v756
  %1118 = vmatpush1.bf16.msra.mxu0 %v755
  %1119 = vmatprep.subr.bf16.mxu0 %v760
  %1120 = vmatpush1.bf16.msra.mxu0 %v759
  %1121 = vmatprep.mubr.bf16.mxu0 %v195
  %1122 = vmatmul.mubr.bf16.gmra.mrb[0].mxu0 %v194
  %v1123 = vpop.f32.mrb[0].mxu0
  %v1124 = vadd.f32 %v1083, %v1123
  %v1125 = vpop.f32.mrb[0].mxu0
  %v1126 = vadd.f32 %v1085, %v1125
  %v1127 = vpop.f32.mrb[0].mxu0
  %v1128 = vpop.f32.mrb[0].mxu0
  %1129 = vdwg.mxu0
  %1130 = vmatprep.subr.bf16.mxu0 %v764
  %1131 = vmatpush1.bf16.msra.mxu0 %v763
  %1132 = vmatprep.subr.bf16.mxu0 %v768
  %1133 = vmatpush1.bf16.msra.mxu0 %v767
  %1134 = vmatprep.subr.bf16.mxu0 %v772
  %1135 = vmatpush1.bf16.msra.mxu0 %v771
  %1136 = vmatprep.subr.bf16.mxu0 %v776
  %1137 = vmatpush1.bf16.msra.mxu0 %v775
  %1138 = vmatprep.subr.bf16.mxu0 0
  %1139 = vmatpush1.bf16.msra.mxu0 0
  %1140 = vmatprep.subr.bf16.mxu0 0
  %1141 = vmatpush1.bf16.msra.mxu0 0
  %1142 = vmatprep.subr.bf16.mxu0 0
  %1143 = vmatpush1.bf16.msra.mxu0 0
  %1144 = vmatprep.subr.bf16.mxu0 0
  %1145 = vmatpush1.bf16.msra.mxu0 0
  %1146 = vmatprep.subr.bf16.mxu0 0
  %1147 = vmatpush1.bf16.msra.mxu0 0
  %1148 = vmatprep.subr.bf16.mxu0 0
  %1149 = vmatpush1.bf16.msra.mxu0 0
  %1150 = vmatprep.subr.bf16.mxu0 0
  %1151 = vmatpush1.bf16.msra.mxu0 0
  %1152 = vmatprep.subr.bf16.mxu0 0
  %1153 = vmatpush1.bf16.msra.mxu0 0
  %1154 = vmatprep.subr.bf16.mxu0 0
  %1155 = vmatpush1.bf16.msra.mxu0 0
  %1156 = vmatprep.subr.bf16.mxu0 0
  %1157 = vmatpush1.bf16.msra.mxu0 0
  %1158 = vmatprep.subr.bf16.mxu0 0
  %1159 = vmatpush1.bf16.msra.mxu0 0
  %1160 = vmatprep.subr.bf16.mxu0 0
  %1161 = vmatpush1.bf16.msra.mxu0 0
  %1162 = vmatprep.mubr.bf16.mxu0 0
  %1163 = vmatmul.mubr.bf16.gmra.mrb[0].mxu0 %v923
  %v1164 = vpop.f32.mrb[0].mxu0
  %v1165 = vadd.f32 %v1124, %v1164
  %v1166 = vpop.f32.mrb[0].mxu0
  %v1167 = vadd.f32 %v1126, %v1166
  %v1168 = vpop.f32.mrb[0].mxu0
  %v1169 = vpop.f32.mrb[0].mxu0
  %1170 = vdwg.mxu0
  %v1171 = vmax.f32 %v1042, 0.0
  %v1172 = vmax.f32 %v1044, 0.0
  %v1173 = vmax.f32 %v1165, 0.0
  %v1174 = vmax.f32 %v1167, 0.0
  %v1175 = vpack.c.bf16 %v1171, %v1171
  %v1176 = vpack.c.bf16 %v1172, %v1172
  %v1177 = vpack.c.bf16 %v1173, %v1173
  %v1178 = vpack.c.bf16 %v1174, %v1174
  %v1183 = vunpack.c.l.b16 %v1175
  %v1184 = vunpack.c.l.b16 %v1176
  %v1185 = vunpack.c.l.b16 %v1177
  %v1186 = vunpack.c.l.b16 %v1178
  %v1187 = vpack.c.b16 %v1184, %v1183
  %v1188 = vpack.c.b16 %v1186, %v1185
  %1191 = vst [vmem:[%s3] sm:$0xff] %v1187
  %1192 = vst [vmem:[%s3 + $0x8] sm:$0xff] %v1188
  // Predicated region
  $region14: #{squeezenet_forward.39} parent=0 // pred_check
    _
  $region15: #{squeezenet_forward.39} parent=0 // pred_check_branch
    %1194 = sbr.rel (0) target = $region17
  $region16: #{squeezenet_forward.39} parent=0 // pred_region
    _
  $region17: #{squeezenet_forward.39} parent=0 // pred_fallthru
    _
  // Predicated region
  $region18: #{squeezenet_forward.39} parent=0 // pred_check
    _
  $region19: #{squeezenet_forward.39} parent=0 // pred_check_branch
    %1196 = sbr.rel (0) target = $region21
  $region20: #{squeezenet_forward.39} parent=0 // pred_region
    _
  $region21: #{squeezenet_forward.39} parent=0 // pred_fallthru
    _

// kernel: squeezenet_forward.43
$region0: #{squeezenet_forward.43}
  #allocation0 [shape = 'u32[]', space=smem, size = 0x4, offset = 0x4, fixed_abs, tag = 'smem constant byte address 0x4 - core index']
  #allocation1 [shape = 'u32[144,128]{1,0:T(1,128)}', space=vmem, size = 0x12000, scoped, tag = 'internal scratch']
  %s0 = inlined_call_operand.vmem [shape: f32[2,4,128], index: 0, kind: input, shape index: {}]
  %s1 = inlined_call_operand.hbm [shape: f32[2,1,128], index: 1, kind: output, shape index: {}]
  %s2 = sld [smem:[#allocation0]]
  $region37: #{squeezenet_forward.43} parent=0
    _
  %s4 = ssub.s32 1, %s2
  %s5 = scalar_select 0, %s4, %s2
  $region1: #{squeezenet_forward.43} parent=0
    #allocation2 [shape = 'u8[1024]{0}', space=vmem, size = 0x400, scoped, tag = 'output window, operand 0']
    #allocation3 [shape = 's32[2]{0}', space=sflag, size = 0x8, scoped, tag = 'scoped memory for squeezenet_forward.43']
    %6 = vsyncpa [#allocation3], 0
    %s7 = scalar_lea.sflag [#allocation3], 1
    %8 = vsyncpa %s7, 0
    loop: start=0, step=1, limit=4
    $region2: #{squeezenet_forward.43} parent=1 // loop_pre_header
      _
    $region3: #{squeezenet_forward.43} parent=1 // loop_header
      %s10 = sphi 0, %s14
      %p11 = scmp.ge.s32.totalorder %s10, 4
      %s20 = sphi 0, %s22
      %s23 = sphi 0, %s20
      %s24 = sphi 0, %s23
      %s40 = sphi 0, %s24
      %s46 = sphi 0, %s48
      %s49 = sphi 0, %s46
      %s50 = sphi 0, %s49
      %s66 = sphi 0, %s50
    $region4: #{squeezenet_forward.43} parent=1 // loop_header_branch
      %13 = sbr.rel (%p11) target = $region8
    $region5: #{squeezenet_forward.43} parent=1 // loop_body
      %s15 = ssub.s32 %s10, 1
      %s16 = ssub.s32 %s10, 2
      %s17 = sadd.s32 %s10, 1
      %s18 = ssub.s32 %s10, %s17
      %p19 = scmp.eq.s32.totalorder %s18, 0
      %s21 = sadd.s32 %s20, 1
      %s22 = scalar_select %p19, %s20, %s21
      %p25 = pneg %p19
      %p26 = scmp.eq.s32.totalorder %s10, 1
      %p27 = por %p25, %p26
      %p28 = scmp.ne.s32.totalorder %s20, %s23
      %p29 = scmp.eq.s32.totalorder %s10, 0
      %p30 = por %p28, %p29
      %p31 = scmp.ne.s32.totalorder %s20, %s23
      %p32 = scmp.eq.s32.totalorder %s15, 1
      %p33 = por %p31, %p32
      %p34 = scmp.ne.s32.totalorder %s23, %s24
      %p35 = scmp.eq.s32.totalorder %s15, 0
      %p36 = por %p34, %p35
      %p37 = scmp.ne.s32.totalorder %s23, %s24
      %p38 = scmp.eq.s32.totalorder %s16, 1
      %p39 = por %p37, %p38
      %p41 = scmp.ne.s32.totalorder %s24, %s40
      %p42 = scmp.eq.s32.totalorder %s16, 0
      %p43 = por %p41, %p42
      %s44 = ssub.s32 %s10, %s17
      %p45 = scmp.eq.s32.totalorder %s44, 0
      %s47 = sadd.s32 %s46, 1
      %s48 = scalar_select %p45, %s46, %s47
      %p51 = pneg %p45
      %p52 = scmp.eq.s32.totalorder %s10, 1
      %p53 = por %p51, %p52
      %p54 = scmp.ne.s32.totalorder %s46, %s49
      %p55 = scmp.eq.s32.totalorder %s10, 0
      %p56 = por %p54, %p55
      %p57 = scmp.ne.s32.totalorder %s46, %s49
      %p58 = scmp.eq.s32.totalorder %s15, 1
      %p59 = por %p57, %p58
      %p60 = scmp.ne.s32.totalorder %s49, %s50
      %p61 = scmp.eq.s32.totalorder %s15, 0
      %p62 = por %p60, %p61
      %p63 = scmp.ne.s32.totalorder %s49, %s50
      %p64 = scmp.eq.s32.totalorder %s16, 1
      %p65 = por %p63, %p64
      %p67 = scmp.ne.s32.totalorder %s50, %s66
      %p68 = scmp.eq.s32.totalorder %s16, 0
      %p69 = por %p67, %p68
      %p70 = scmp.le.s32.totalorder 1, %s10
      %p71 = scmp.lt.s32.totalorder %s10, 3
      %p72 = pnand %p70, %p71
      %p73 = pneg %p72
      // Predicated region
      $region9: #{squeezenet_forward.43} parent=5 // pred_check
        _
      $region10: #{squeezenet_forward.43} parent=5 // pred_check_branch
        %75 = sbr.rel (%p72) target = $region12
      $region11: #{squeezenet_forward.43} parent=5 // pred_region
        %s76 = ssub.s32 %s10, 1
      $region12: #{squeezenet_forward.43} parent=5 // pred_fallthru
        _
      %p77 = scmp.lt.s32.totalorder %s10, 2
      // Predicated region
      $region13: #{squeezenet_forward.43} parent=5 // pred_check
        %p78 = pneg %p77
      $region14: #{squeezenet_forward.43} parent=5 // pred_check_branch
        %80 = sbr.rel (%p78) target = $region16
      $region15: #{squeezenet_forward.43} parent=5 // pred_region
        // Predicated region
        $region17: #{squeezenet_forward.43} parent=15 // pred_check
          %p81 = pneg %p30
        $region18: #{squeezenet_forward.43} parent=15 // pred_check_branch
          %83 = sbr.rel (%p81) target = $region20
        $region19: #{squeezenet_forward.43} parent=15 // pred_region
          %p84 = scmp.lt.s32.totalorder %s10, 1
          %s85 = scalar_select %p84, %s10, 1
          %s86 = smul.addr %s85, 4
          %s87 = scalar_lea.vmem %s0, %s86
        $region20: #{squeezenet_forward.43} parent=15 // pred_fallthru
          _
      $region16: #{squeezenet_forward.43} parent=5 // pred_fallthru
        _
      %p88 = scmp.le.s32.totalorder 1, %s10
      %p89 = scmp.lt.s32.totalorder %s10, 3
      %p90 = pnand %p88, %p89
      %p91 = pneg %p90
      // Predicated region
      $region21: #{squeezenet_forward.43} parent=5 // pred_check
        _
      $region22: #{squeezenet_forward.43} parent=5 // pred_check_branch
        %93 = sbr.rel (%p90) target = $region24
      $region23: #{squeezenet_forward.43} parent=5 // pred_region
        %s94 = ssub.s32 %s10, 1
        %p95 = scmp.lt.s32.totalorder %s15, 1
        %s96 = scalar_select %p95, %s15, 1
        %s97 = smul.addr %s96, 4
        %s98 = scalar_lea.vmem %s0, %s97
        %p99 = pneg %p36
        %p100 = pneg %p33
        %p101 = pneg %p62
        %p102 = pneg %p59
        %s103 = sand.u32 %s49, 1
        %s104 = scalar_lea.sflag [#allocation3], %s103
        %s105 = sand.u32 %s49, 1
        %s106 = scalar_lea.vmem [#allocation2], %s105
        %p107 = scmp.lt.s32.totalorder %s15, 1
        %s108 = scalar_select %p107, %s15, 1
        %s109 = smul.addr %s108, 4
        %s110 = scalar_lea.vmem %s0, %s109
        %v111 = vld [vmem:[%s110] sm:$0xf]
        %vm112 = vcmask 1043456
        %v113 = vsel %vm112, %v111, 0.0
        %v114 = vrot.slane %v113, 4
        %v115 = vadd.f32 %v113, %v114
        %v116 = vrot.slane %v115, 2
        %v117 = vadd.f32 %v115, %v116
        %v118 = vrot.slane %v117, 1
        %v119 = vadd.f32 %v117, %v118
        %v120 = vmul.f32 %v119, 0.25
        %121 = vst [vmem:[%s106] sm:$0x1] %v120
        %s122 = sand.u32 %s49, 1
        %s123 = scalar_lea.sflag [#allocation3], %s122
        %s124 = sand.u32 %s49, 1
        %s125 = scalar_lea.vmem [#allocation2], %s124
        // Predicated region
        $region25: #{squeezenet_forward.43} parent=23 // pred_check
          %p126 = pneg %p59
        $region26: #{squeezenet_forward.43} parent=23 // pred_check_branch
          %128 = sbr.rel (%p126) target = $region28
        $region27: #{squeezenet_forward.43} parent=23 // pred_region
          %s130 = ssub.s32 16, 16
          %131 = vsyncadd %s123, %s130
          %s132 = smul.addr %s15, 16
          %s133 = scalar_lea.hbm %s1, %s132
          %s135 = sshll.u32 %s125, 4
          %s136 = int_to_ptr.vmem [resolvable:$true] %s135
          %138 = dma.vmem_to_hbm [thread:$0]  %s136, 16, %s133, %s123
        $region28: #{squeezenet_forward.43} parent=23 // pred_fallthru
          _
      $region24: #{squeezenet_forward.43} parent=5 // pred_fallthru
        _
      %p139 = scmp.le.s32.totalorder 2, %s10
      // Predicated region
      $region29: #{squeezenet_forward.43} parent=5 // pred_check
        %p140 = pneg %p139
      $region30: #{squeezenet_forward.43} parent=5 // pred_check_branch
        %142 = sbr.rel (%p140) target = $region32
      $region31: #{squeezenet_forward.43} parent=5 // pred_region
        %s143 = ssub.s32 %s10, 2
        // Predicated region
        $region33: #{squeezenet_forward.43} parent=31 // pred_check
          %p144 = pneg %p65
        $region34: #{squeezenet_forward.43} parent=31 // pred_check_branch
          %146 = sbr.rel (%p144) target = $region36
        $region35: #{squeezenet_forward.43} parent=31 // pred_region
          %s147 = sand.u32 %s50, 1
          %s148 = scalar_lea.sflag [#allocation3], %s147
          %s149 = sand.u32 %s50, 1
          %s150 = scalar_lea.vmem [#allocation2], %s149
          %151 = dma.done %s148, 16
        $region36: #{squeezenet_forward.43} parent=31 // pred_fallthru
          _
      $region32: #{squeezenet_forward.43} parent=5 // pred_fallthru
        _
    $region6: #{squeezenet_forward.43} parent=1 // loop_footer
      %s14 = sadd.s32 1, %s10
    $region7: #{squeezenet_forward.43} parent=1 // loop_footer_branch
      %9 = sbr.rel target = $region3
    $region8: #{squeezenet_forward.43} parent=1 // loop_exit
      _
    %152 = vsyncpa [#allocation3], 1
    %s153 = scalar_lea.sflag [#allocation3], 1
    %154 = vsyncpa %s153, 1

</llo_original>
